<compile_context>
chip_gen: v7x
topology: tpu7x:2x2x1
jax: 0.10.0
libtpu: 0.0.40
codegen_flags: <defaults>
</compile_context>

<pallas_src>
import functools

import numpy as np
import jax
import jax.numpy as jnp
from jax import lax
from jax.experimental import pallas as pl
from jax.experimental.pallas import tpu as pltpu

H, W = 6, 7                      # board size implied by Linear(64*6*7, 256)
HP, WP = H + 2, W + 2            # zero-padded grid (8 x 9)
NPOS = HP * WP                   # 72 padded positions
C1, C2, FC1 = 32, 64, 256
XF = 48                          # flattened board features (42) padded to mult of 8
A1W = NPOS * C1                  # 2304 conv1 output lanes (padded grid x 32 ch)
ROW_PAD = 512                    # fc1-slab lanes per board row (7*64 real + 64 pad)
FCW = H * ROW_PAD                # 3072 fc1 input lanes
NA_PAD = 128                     # lane-dense padded action dim
_C1_CHUNK = 768                  # conv1 output-lane chunk (multiple of 128)
_FC1_CHUNK = 1024                # fc1 K chunk (multiple of 128)
BP_TILE = 16                     # batch rows per grid step (bf16 sublane tile)


# ----------------------------------------------------------------------------
# Fused kernel: conv1 + conv2 + fc1 + fc2, all activations stay in VMEM/vregs.
# ----------------------------------------------------------------------------
def _qnet_kernel(x_ref, w1_ref, b1_ref, w2_ref, b2_ref, w3_ref, b3_ref,
                 w4_ref, b4_ref, o_ref, a1_ref, fc_ref, *, bp):
    f32, bf16 = jnp.float32, jnp.bfloat16

    # ---- conv1 (1->32, 3x3, SAME) as a single dense MXU matmul with the
    #      im2col folded into the weight.  Output lanes = (hp*9 + wp)*32 + c
    #      over the zero-padded 8x9 grid; border lanes are exact zeros.
    x = x_ref[...]                                            # (bp, 48) f32
    for cs in range(0, A1W, _C1_CHUNK):
        a1 = jnp.dot(x, w1_ref[:, cs:cs + _C1_CHUNK],
                     preferred_element_type=f32) + b1_ref[:, cs:cs + _C1_CHUNK]
        a1_ref[:, cs:cs + _C1_CHUNK] = jnp.maximum(a1, 0.0).astype(bf16)

    # ---- conv2 (32->64, 3x3, SAME), K fused over taps*channels (K=288).
    #      Per output board row h: 7 im2col rows of 3 contiguous 96-lane windows
    #      are row-stacked into one (7*bp, 288) slab -> one bf16 MXU dot.
    w2 = w2_ref[...]                                          # (288, 64) bf16
    b2 = b2_ref[...]                                          # (1, 64) f32
    zero_pad = jnp.zeros((bp, C2), bf16)
    for h in range(H):
        rows = []
        for w in range(W):
            taps = [a1_ref[:, (hp * WP + w) * C1:(hp * WP + w) * C1 + 3 * C1]
                    for hp in (h, h + 1, h + 2)]              # 3 x (bp, 96)
            rows.append(jnp.concatenate(taps, axis=1))        # (bp, 288)
        lhs = jnp.concatenate(rows, axis=0)                   # (7*bp, 288)
        y = jnp.dot(lhs, w2, preferred_element_type=f32) + b2
        y = jnp.maximum(y, 0.0).astype(bf16)                  # (7*bp, 64)
        # rows -> lanes: lay the 7 positions out as the fc1 slab for this board
        # row (64 zero pad lanes keep the store 128-lane aligned).
        slab = jnp.concatenate(
            [y[w * bp:(w + 1) * bp, :] for w in range(W)] + [zero_pad], axis=1)
        fc_ref[:, h * ROW_PAD:(h + 1) * ROW_PAD] = slab       # (bp, 512) store

    # ---- fc1: Linear(2688 -> 256).  NCHW flatten folded into w3; 3 accumulating
    #      (bp, 1024) x (1024, 256) bf16 dots with a register accumulator.
    acc = jnp.zeros((bp, FC1), f32)
    for ks in range(0, FCW, _FC1_CHUNK):
        acc = acc + jnp.dot(fc_ref[:, ks:ks + _FC1_CHUNK],
                            w3_ref[ks:ks + _FC1_CHUNK, :],
                            preferred_element_type=f32)
    h1 = jnp.maximum(acc + b3_ref[...], 0.0).astype(bf16)     # (bp, 256)

    # ---- fc2: lane-dense padded (bp, 128) output (sliced to n_actions outside).
    o_ref[...] = jnp.dot(h1, w4_ref[...], preferred_element_type=f32) + b4_ref[...]


# ----------------------------------------------------------------------------
# Wrapper: tiny layout glue + one pallas_call with a parallel batch grid.
# ----------------------------------------------------------------------------
def qnetwork_forward(packed, x, n_actions):
    assert n_actions <= NA_PAD
    B = x.shape[0]
    bp_total = max(BP_TILE, ((B + BP_TILE - 1) // BP_TILE) * BP_TILE)
    grid = (bp_total // BP_TILE,)

    # Board -> batch-major, lane-dense (bp_total, 48) f32 (42 real features).
    xf = x.astype(jnp.float32).reshape(B, H * W)
    xf = jnp.pad(xf, ((0, bp_total - B), (0, XF - H * W)))

    const = lambda i: (0, 0)
    q_pad = pl.pallas_call(
        functools.partial(_qnet_kernel, bp=BP_TILE),
        out_shape=jax.ShapeDtypeStruct((bp_total, NA_PAD), jnp.float32),
        grid=grid,
        in_specs=[
            pl.BlockSpec((BP_TILE, XF), lambda i: (i, 0)),    # x tile
            pl.BlockSpec((XF, A1W), const),                   # w1 (folded conv1)
            pl.BlockSpec((1, A1W), const),                    # b1 (masked bias)
            pl.BlockSpec((9 * C1, C2), const),                # w2 tap-major
            pl.BlockSpec((1, C2), const),                     # b2
            pl.BlockSpec((FCW, FC1), const),                  # w3 (flatten folded)
            pl.BlockSpec((1, FC1), const),                    # b3
            pl.BlockSpec((FC1, NA_PAD), const),               # w4 (padded)
            pl.BlockSpec((1, NA_PAD), const),                 # b4 (padded)
        ],
        out_specs=pl.BlockSpec((BP_TILE, NA_PAD), lambda i: (i, 0)),
        scratch_shapes=[
            pltpu.VMEM((BP_TILE, A1W), jnp.bfloat16),         # conv1 activations
            pltpu.VMEM((BP_TILE, FCW), jnp.bfloat16),         # fc1 input slab
        ],
        compiler_params=pltpu.CompilerParams(
            dimension_semantics=("parallel",),
            vmem_limit_bytes=32 * 1024 * 1024),
    )(xf, packed["w1"], packed["b1"], packed["w2"], packed["b2"],
      packed["w3"], packed["b3"], packed["w4"], packed["b4"])
    return q_pad[:B, :n_actions]


# ----------------------------------------------------------------------------
# One-time weight packing (kills all per-forward transposes / reshapes).
# ----------------------------------------------------------------------------
def pack_params(params, n_actions):
    w1 = np.asarray(params["w1"], np.float32)        # (32, 1, 3, 3)
    b1 = np.asarray(params["b1"], np.float32)        # (32,)
    w2 = np.asarray(params["w2"], np.float32)        # (64, 32, 3, 3)
    b2 = np.asarray(params["b2"], np.float32)        # (64,)
    w3 = np.asarray(params["w3"], np.float32)        # (256, 2688) NCHW-flat inputs
    b3 = np.asarray(params["b3"], np.float32)        # (256,)
    w4 = np.asarray(params["w4"], np.float32)        # (n_actions, 256)
    b4 = np.asarray(params["b4"], np.float32)        # (n_actions,)

    # conv1 folded to a dense matmul: rows = board pixel h*7+w (42, padded to 48),
    # columns = padded-grid output (hp*9 + wp)*32 + c_out.  Border columns stay 0.
    w1fold = np.zeros((XF, A1W), np.float32)
    b1fold = np.zeros((1, A1W), np.float32)
    for h in range(H):
        for w in range(W):
            col = ((h + 1) * WP + (w + 1)) * C1
            b1fold[0, col:col + C1] = b1
            for kh in range(3):
                for kw in range(3):
                    hi, wi = h + kh - 1, w + kw - 1
                    if 0 <= hi < H and 0 <= wi < W:
                        w1fold[hi * W + wi, col:col + C1] = w1[:, 0, kh, kw]

    # conv2 weight, tap-major: row = kh*96 + kw*32 + c_in  (matches the kernel's
    # concat order of three contiguous 96-lane windows).
    w2p = w2.transpose(2, 3, 1, 0).reshape(9 * C1, C2)                # (288, 64)

    # fc1 weight: rows re-ordered (c, h, w) -> (h*7+w)*64 + c, then each board
    # row padded with 64 zero rows so the fc1 slab row stride is 512 lanes.
    w3p = (w3.reshape(FC1, C2, H * W).transpose(2, 1, 0)
             .reshape(H, W * C2, FC1))                                # (6, 448, 256)
    w3p = np.pad(w3p, ((0, 0), (0, ROW_PAD - W * C2), (0, 0)))        # (6, 512, 256)
    w3p = w3p.reshape(FCW, FC1)                                       # (3072, 256)

    w4p = np.zeros((FC1, NA_PAD), np.float32)
    w4p[:, :n_actions] = w4.T
    b4p = np.zeros((1, NA_PAD), np.float32)
    b4p[0, :n_actions] = b4

    bf16 = jnp.bfloat16
    return {
        "w1": jnp.asarray(w1fold),                     # (48, 2304) f32
        "b1": jnp.asarray(b1fold),                     # (1, 2304)  f32
        "w2": jnp.asarray(w2p, dtype=bf16),            # (288, 64)  bf16
        "b2": jnp.asarray(b2.reshape(1, C2)),          # (1, 64)    f32
        "w3": jnp.asarray(w3p, dtype=bf16),            # (3072, 256) bf16
        "b3": jnp.asarray(b3.reshape(1, FC1)),         # (1, 256)   f32
        "w4": jnp.asarray(w4p, dtype=bf16),            # (256, 128) bf16
        "b4": jnp.asarray(b4p),                        # (1, 128)   f32
    }


def init_params(key, n_actions):
    ks = jax.random.split(key, 8)

    def uniform(k, shape, fan_in):
        bound = 1.0 / jnp.sqrt(jnp.float32(fan_in))
        return jax.random.uniform(k, shape, jnp.float32, -bound, bound)

    return {
        "w1": uniform(ks[0], (32, 1, 3, 3), 1 * 9),
        "b1": uniform(ks[1], (32,), 1 * 9),
        "w2": uniform(ks[2], (64, 32, 3, 3), 32 * 9),
        "b2": uniform(ks[3], (64,), 32 * 9),
        "w3": uniform(ks[4], (256, 64 * H * W), 64 * H * W),
        "b3": uniform(ks[5], (256,), 64 * H * W),
        "w4": uniform(ks[6], (n_actions, 256), 256),
        "b4": uniform(ks[7], (n_actions,), 256),
    }


# Pure-JAX reference (lax.conv) for a semantics sanity check.
def qnetwork_reference(params, x):
    x = x[:, None, :, :].astype(jnp.float32)
    dn = lax.conv_dimension_numbers(x.shape, params["w1"].shape,
                                    ("NCHW", "OIHW", "NCHW"))
    h = lax.conv_general_dilated(x, params["w1"], (1, 1), "SAME",
                                 dimension_numbers=dn)
    h = jax.nn.relu(h + params["b1"][None, :, None, None])
    dn2 = lax.conv_dimension_numbers(h.shape, params["w2"].shape,
                                     ("NCHW", "OIHW", "NCHW"))
    h = lax.conv_general_dilated(h, params["w2"], (1, 1), "SAME",
                                 dimension_numbers=dn2)
    h = jax.nn.relu(h + params["b2"][None, :, None, None])
    h = h.reshape(h.shape[0], -1)
    h = jax.nn.relu(h @ params["w3"].T + params["b3"])
    return h @ params["w4"].T + params["b4"]


if __name__ == "__main__":
    key = jax.random.PRNGKey(0)
    k_param, k_x = jax.random.split(key)

    n_actions = 7
    batch = 2
    params = init_params(k_param, n_actions)
    packed = pack_params(params, n_actions)
    x = jax.random.normal(k_x, (batch, H, W), dtype=jnp.float32)  # (B, 6, 7) board

    fwd = jax.jit(lambda p, xx: qnetwork_forward(p, xx, n_actions))
    q = jax.block_until_ready(fwd(packed, x))
    assert q.shape == (batch, n_actions), q.shape

    q_ref = jax.block_until_ready(qnetwork_reference(params, x))
    assert jnp.allclose(q, q_ref, rtol=2e-2, atol=2e-2), (q, q_ref)

    print("KERNEL_OK")
</pallas_src>

<mosaic_0001>
module attributes {stable_mosaic.version = 11 : i64} {
  func.func @_qnet_kernel(%arg0: i32, %arg1: memref<16x48xf32, #tpu.memory_space<vmem>>, %arg2: memref<48x2304xf32, #tpu.memory_space<vmem>>, %arg3: memref<1x2304xf32, #tpu.memory_space<vmem>>, %arg4: memref<288x64xbf16, #tpu.memory_space<vmem>>, %arg5: memref<1x64xf32, #tpu.memory_space<vmem>>, %arg6: memref<3072x256xbf16, #tpu.memory_space<vmem>>, %arg7: memref<1x256xf32, #tpu.memory_space<vmem>>, %arg8: memref<256x128xbf16, #tpu.memory_space<vmem>>, %arg9: memref<1x128xf32, #tpu.memory_space<vmem>>, %arg10: memref<16x128xf32, #tpu.memory_space<vmem>>, %arg11: memref<16x2304xbf16, #tpu.memory_space<vmem>>, %arg12: memref<16x3072xbf16, #tpu.memory_space<vmem>>) attributes {dimension_semantics = [#tpu.dimension_semantics<parallel>], iteration_bounds = array<i64: 1>, scalar_prefetch = 0 : i64, scratch_operands = 2 : i64, tpu.core_type = #tpu.core_type<tc>, window_params = [{transform_indices = @transform_0, window_bounds = array<i64: 16, 48>}, {pipeline_mode = #tpu.pipeline_mode<synchronous>, transform_indices = @transform_1, window_bounds = array<i64: 48, 2304>}, {pipeline_mode = #tpu.pipeline_mode<synchronous>, transform_indices = @transform_2, window_bounds = array<i64: 1, 2304>}, {pipeline_mode = #tpu.pipeline_mode<synchronous>, transform_indices = @transform_3, window_bounds = array<i64: 288, 64>}, {pipeline_mode = #tpu.pipeline_mode<synchronous>, transform_indices = @transform_4, window_bounds = array<i64: 1, 64>}, {pipeline_mode = #tpu.pipeline_mode<synchronous>, transform_indices = @transform_5, window_bounds = array<i64: 3072, 256>}, {pipeline_mode = #tpu.pipeline_mode<synchronous>, transform_indices = @transform_6, window_bounds = array<i64: 1, 256>}, {pipeline_mode = #tpu.pipeline_mode<synchronous>, transform_indices = @transform_7, window_bounds = array<i64: 256, 128>}, {pipeline_mode = #tpu.pipeline_mode<synchronous>, transform_indices = @transform_8, window_bounds = array<i64: 1, 128>}, {transform_indices = @transform_9, window_bounds = array<i64: 16, 128>}]} {
    %c0 = arith.constant 0 : index
    %c0_0 = arith.constant 0 : index
    %0 = vector.load %arg1[%c0, %c0_0] : memref<16x48xf32, #tpu.memory_space<vmem>>, vector<16x48xf32>
    %c0_1 = arith.constant 0 : index
    %c0_2 = arith.constant 0 : index
    %1 = vector.load %arg2[%c0_1, %c0_2] : memref<48x2304xf32, #tpu.memory_space<vmem>>, vector<48x768xf32>
    %cst = arith.constant dense<0.000000e+00> : vector<16x768xf32>
    %2 = tpu.matmul %0, %1, %cst {dimension_numbers = #tpu.dot_dimension_numbers<[1], [0], [0], [1], [0, 0, 1, 1], [], []>} : vector<16x48xf32>, vector<48x768xf32>, vector<16x768xf32> -> vector<16x768xf32>
    %c0_3 = arith.constant 0 : index
    %c0_4 = arith.constant 0 : index
    %3 = vector.load %arg3[%c0_3, %c0_4] : memref<1x2304xf32, #tpu.memory_space<vmem>>, vector<1x768xf32>
    %4 = vector.broadcast %3 : vector<1x768xf32> to vector<16x768xf32>
    %5 = arith.addf %2, %4 : vector<16x768xf32>
    %cst_5 = arith.constant 0.000000e+00 : f32
    %6 = vector.broadcast %cst_5 : f32 to vector<16x768xf32>
    %7 = arith.maximumf %5, %6 : vector<16x768xf32>
    %8 = arith.truncf %7 : vector<16x768xf32> to vector<16x768xbf16>
    %c0_6 = arith.constant 0 : index
    %c0_7 = arith.constant 0 : index
    %9 = vector.load %arg11[%c0_6, %c0_7] : memref<16x2304xbf16, #tpu.memory_space<vmem>>, vector<16x768xbf16>
    tpu.vector_store %arg11[%c0_6, %c0_7], %8 {strides = array<i32>} : memref<16x2304xbf16, #tpu.memory_space<vmem>>, vector<16x768xbf16>,
    %c0_8 = arith.constant 0 : index
    %c768 = arith.constant 768 : index
    %10 = vector.load %arg2[%c0_8, %c768] : memref<48x2304xf32, #tpu.memory_space<vmem>>, vector<48x768xf32>
    %cst_9 = arith.constant dense<0.000000e+00> : vector<16x768xf32>
    %11 = tpu.matmul %0, %10, %cst_9 {dimension_numbers = #tpu.dot_dimension_numbers<[1], [0], [0], [1], [0, 0, 1, 1], [], []>} : vector<16x48xf32>, vector<48x768xf32>, vector<16x768xf32> -> vector<16x768xf32>
    %c0_10 = arith.constant 0 : index
    %c768_11 = arith.constant 768 : index
    %12 = vector.load %arg3[%c0_10, %c768_11] : memref<1x2304xf32, #tpu.memory_space<vmem>>, vector<1x768xf32>
    %13 = vector.broadcast %12 : vector<1x768xf32> to vector<16x768xf32>
    %14 = arith.addf %11, %13 : vector<16x768xf32>
    %cst_12 = arith.constant 0.000000e+00 : f32
    %15 = vector.broadcast %cst_12 : f32 to vector<16x768xf32>
    %16 = arith.maximumf %14, %15 : vector<16x768xf32>
    %17 = arith.truncf %16 : vector<16x768xf32> to vector<16x768xbf16>
    %c0_13 = arith.constant 0 : index
    %c768_14 = arith.constant 768 : index
    %18 = vector.load %arg11[%c0_13, %c768_14] : memref<16x2304xbf16, #tpu.memory_space<vmem>>, vector<16x768xbf16>
    tpu.vector_store %arg11[%c0_13, %c768_14], %17 {strides = array<i32>} : memref<16x2304xbf16, #tpu.memory_space<vmem>>, vector<16x768xbf16>,
    %c0_15 = arith.constant 0 : index
    %c1536 = arith.constant 1536 : index
    %19 = vector.load %arg2[%c0_15, %c1536] : memref<48x2304xf32, #tpu.memory_space<vmem>>, vector<48x768xf32>
    %cst_16 = arith.constant dense<0.000000e+00> : vector<16x768xf32>
    %20 = tpu.matmul %0, %19, %cst_16 {dimension_numbers = #tpu.dot_dimension_numbers<[1], [0], [0], [1], [0, 0, 1, 1], [], []>} : vector<16x48xf32>, vector<48x768xf32>, vector<16x768xf32> -> vector<16x768xf32>
    %c0_17 = arith.constant 0 : index
    %c1536_18 = arith.constant 1536 : index
    %21 = vector.load %arg3[%c0_17, %c1536_18] : memref<1x2304xf32, #tpu.memory_space<vmem>>, vector<1x768xf32>
    %22 = vector.broadcast %21 : vector<1x768xf32> to vector<16x768xf32>
    %23 = arith.addf %20, %22 : vector<16x768xf32>
    %cst_19 = arith.constant 0.000000e+00 : f32
    %24 = vector.broadcast %cst_19 : f32 to vector<16x768xf32>
    %25 = arith.maximumf %23, %24 : vector<16x768xf32>
    %26 = arith.truncf %25 : vector<16x768xf32> to vector<16x768xbf16>
    %c0_20 = arith.constant 0 : index
    %c1536_21 = arith.constant 1536 : index
    %27 = vector.load %arg11[%c0_20, %c1536_21] : memref<16x2304xbf16, #tpu.memory_space<vmem>>, vector<16x768xbf16>
    tpu.vector_store %arg11[%c0_20, %c1536_21], %26 {strides = array<i32>} : memref<16x2304xbf16, #tpu.memory_space<vmem>>, vector<16x768xbf16>,
    %c0_22 = arith.constant 0 : index
    %c0_23 = arith.constant 0 : index
    %28 = vector.load %arg4[%c0_22, %c0_23] : memref<288x64xbf16, #tpu.memory_space<vmem>>, vector<288x64xbf16>
    %c0_24 = arith.constant 0 : index
    %c0_25 = arith.constant 0 : index
    %29 = vector.load %arg5[%c0_24, %c0_25] : memref<1x64xf32, #tpu.memory_space<vmem>>, vector<1x64xf32>
    %cst_26 = arith.constant 0.000000e+00 : bf16
    %30 = vector.broadcast %cst_26 : bf16 to vector<16x64xbf16>
    %c0_27 = arith.constant 0 : index
    %c0_28 = arith.constant 0 : index
    %31 = vector.load %arg11[%c0_27, %c0_28] : memref<16x2304xbf16, #tpu.memory_space<vmem>>, vector<16x96xbf16>
    %c0_29 = arith.constant 0 : index
    %c288 = arith.constant 288 : index
    %32 = vector.load %arg11[%c0_29, %c288] : memref<16x2304xbf16, #tpu.memory_space<vmem>>, vector<16x96xbf16>
    %c0_30 = arith.constant 0 : index
    %c576 = arith.constant 576 : index
    %33 = vector.load %arg11[%c0_30, %c576] : memref<16x2304xbf16, #tpu.memory_space<vmem>>, vector<16x96xbf16>
    %34 = tpu.concatenate %31, %32, %33 in 1 : vector<16x96xbf16>, vector<16x96xbf16>, vector<16x96xbf16> -> vector<16x288xbf16>
    %c0_31 = arith.constant 0 : index
    %c32 = arith.constant 32 : index
    %35 = vector.load %arg11[%c0_31, %c32] : memref<16x2304xbf16, #tpu.memory_space<vmem>>, vector<16x96xbf16>
    %c0_32 = arith.constant 0 : index
    %c320 = arith.constant 320 : index
    %36 = vector.load %arg11[%c0_32, %c320] : memref<16x2304xbf16, #tpu.memory_space<vmem>>, vector<16x96xbf16>
    %c0_33 = arith.constant 0 : index
    %c608 = arith.constant 608 : index
    %37 = vector.load %arg11[%c0_33, %c608] : memref<16x2304xbf16, #tpu.memory_space<vmem>>, vector<16x96xbf16>
    %38 = tpu.concatenate %35, %36, %37 in 1 : vector<16x96xbf16>, vector<16x96xbf16>, vector<16x96xbf16> -> vector<16x288xbf16>
    %c0_34 = arith.constant 0 : index
    %c64 = arith.constant 64 : index
    %39 = vector.load %arg11[%c0_34, %c64] : memref<16x2304xbf16, #tpu.memory_space<vmem>>, vector<16x96xbf16>
    %c0_35 = arith.constant 0 : index
    %c352 = arith.constant 352 : index
    %40 = vector.load %arg11[%c0_35, %c352] : memref<16x2304xbf16, #tpu.memory_space<vmem>>, vector<16x96xbf16>
    %c0_36 = arith.constant 0 : index
    %c640 = arith.constant 640 : index
    %41 = vector.load %arg11[%c0_36, %c640] : memref<16x2304xbf16, #tpu.memory_space<vmem>>, vector<16x96xbf16>
    %42 = tpu.concatenate %39, %40, %41 in 1 : vector<16x96xbf16>, vector<16x96xbf16>, vector<16x96xbf16> -> vector<16x288xbf16>
    %c0_37 = arith.constant 0 : index
    %c96 = arith.constant 96 : index
    %43 = vector.load %arg11[%c0_37, %c96] : memref<16x2304xbf16, #tpu.memory_space<vmem>>, vector<16x96xbf16>
    %c0_38 = arith.constant 0 : index
    %c384 = arith.constant 384 : index
    %44 = vector.load %arg11[%c0_38, %c384] : memref<16x2304xbf16, #tpu.memory_space<vmem>>, vector<16x96xbf16>
    %c0_39 = arith.constant 0 : index
    %c672 = arith.constant 672 : index
    %45 = vector.load %arg11[%c0_39, %c672] : memref<16x2304xbf16, #tpu.memory_space<vmem>>, vector<16x96xbf16>
    %46 = tpu.concatenate %43, %44, %45 in 1 : vector<16x96xbf16>, vector<16x96xbf16>, vector<16x96xbf16> -> vector<16x288xbf16>
    %c0_40 = arith.constant 0 : index
    %c128 = arith.constant 128 : index
    %47 = vector.load %arg11[%c0_40, %c128] : memref<16x2304xbf16, #tpu.memory_space<vmem>>, vector<16x96xbf16>
    %c0_41 = arith.constant 0 : index
    %c416 = arith.constant 416 : index
    %48 = vector.load %arg11[%c0_41, %c416] : memref<16x2304xbf16, #tpu.memory_space<vmem>>, vector<16x96xbf16>
    %c0_42 = arith.constant 0 : index
    %c704 = arith.constant 704 : index
    %49 = vector.load %arg11[%c0_42, %c704] : memref<16x2304xbf16, #tpu.memory_space<vmem>>, vector<16x96xbf16>
    %50 = tpu.concatenate %47, %48, %49 in 1 : vector<16x96xbf16>, vector<16x96xbf16>, vector<16x96xbf16> -> vector<16x288xbf16>
    %c0_43 = arith.constant 0 : index
    %c160 = arith.constant 160 : index
    %51 = vector.load %arg11[%c0_43, %c160] : memref<16x2304xbf16, #tpu.memory_space<vmem>>, vector<16x96xbf16>
    %c0_44 = arith.constant 0 : index
    %c448 = arith.constant 448 : index
    %52 = vector.load %arg11[%c0_44, %c448] : memref<16x2304xbf16, #tpu.memory_space<vmem>>, vector<16x96xbf16>
    %c0_45 = arith.constant 0 : index
    %c736 = arith.constant 736 : index
    %53 = vector.load %arg11[%c0_45, %c736] : memref<16x2304xbf16, #tpu.memory_space<vmem>>, vector<16x96xbf16>
    %54 = tpu.concatenate %51, %52, %53 in 1 : vector<16x96xbf16>, vector<16x96xbf16>, vector<16x96xbf16> -> vector<16x288xbf16>
    %c0_46 = arith.constant 0 : index
    %c192 = arith.constant 192 : index
    %55 = vector.load %arg11[%c0_46, %c192] : memref<16x2304xbf16, #tpu.memory_space<vmem>>, vector<16x96xbf16>
    %c0_47 = arith.constant 0 : index
    %c480 = arith.constant 480 : index
    %56 = vector.load %arg11[%c0_47, %c480] : memref<16x2304xbf16, #tpu.memory_space<vmem>>, vector<16x96xbf16>
    %c0_48 = arith.constant 0 : index
    %c768_49 = arith.constant 768 : index
    %57 = vector.load %arg11[%c0_48, %c768_49] : memref<16x2304xbf16, #tpu.memory_space<vmem>>, vector<16x96xbf16>
    %58 = tpu.concatenate %55, %56, %57 in 1 : vector<16x96xbf16>, vector<16x96xbf16>, vector<16x96xbf16> -> vector<16x288xbf16>
    %59 = tpu.concatenate %34, %38, %42, %46, %50, %54, %58 in 0 : vector<16x288xbf16>, vector<16x288xbf16>, vector<16x288xbf16>, vector<16x288xbf16>, vector<16x288xbf16>, vector<16x288xbf16>, vector<16x288xbf16> -> vector<112x288xbf16>
    %cst_50 = arith.constant dense<0.000000e+00> : vector<112x64xf32>
    %60 = tpu.matmul %59, %28, %cst_50 {dimension_numbers = #tpu.dot_dimension_numbers<[1], [0], [0], [1], [0, 0, 1, 1], [], []>} : vector<112x288xbf16>, vector<288x64xbf16>, vector<112x64xf32> -> vector<112x64xf32>
    %61 = vector.broadcast %29 : vector<1x64xf32> to vector<112x64xf32>
    %62 = arith.addf %60, %61 : vector<112x64xf32>
    %cst_51 = arith.constant 0.000000e+00 : f32
    %63 = vector.broadcast %cst_51 : f32 to vector<112x64xf32>
    %64 = arith.maximumf %62, %63 : vector<112x64xf32>
    %65 = arith.truncf %64 : vector<112x64xf32> to vector<112x64xbf16>
    %66 = vector.extract_strided_slice %65 {offsets = [0, 0], sizes = [16, 64], strides = [1, 1]} : vector<112x64xbf16> to vector<16x64xbf16>
    %67 = vector.extract_strided_slice %65 {offsets = [16, 0], sizes = [16, 64], strides = [1, 1]} : vector<112x64xbf16> to vector<16x64xbf16>
    %68 = vector.extract_strided_slice %65 {offsets = [32, 0], sizes = [16, 64], strides = [1, 1]} : vector<112x64xbf16> to vector<16x64xbf16>
    %69 = vector.extract_strided_slice %65 {offsets = [48, 0], sizes = [16, 64], strides = [1, 1]} : vector<112x64xbf16> to vector<16x64xbf16>
    %70 = vector.extract_strided_slice %65 {offsets = [64, 0], sizes = [16, 64], strides = [1, 1]} : vector<112x64xbf16> to vector<16x64xbf16>
    %71 = vector.extract_strided_slice %65 {offsets = [80, 0], sizes = [16, 64], strides = [1, 1]} : vector<112x64xbf16> to vector<16x64xbf16>
    %72 = vector.extract_strided_slice %65 {offsets = [96, 0], sizes = [16, 64], strides = [1, 1]} : vector<112x64xbf16> to vector<16x64xbf16>
    %73 = tpu.concatenate %66, %67, %68, %69, %70, %71, %72, %30 in 1 : vector<16x64xbf16>, vector<16x64xbf16>, vector<16x64xbf16>, vector<16x64xbf16>, vector<16x64xbf16>, vector<16x64xbf16>, vector<16x64xbf16>, vector<16x64xbf16> -> vector<16x512xbf16>
    %c0_52 = arith.constant 0 : index
    %c0_53 = arith.constant 0 : index
    %74 = vector.load %arg12[%c0_52, %c0_53] : memref<16x3072xbf16, #tpu.memory_space<vmem>>, vector<16x512xbf16>
    tpu.vector_store %arg12[%c0_52, %c0_53], %73 {strides = array<i32>} : memref<16x3072xbf16, #tpu.memory_space<vmem>>, vector<16x512xbf16>,
    %c0_54 = arith.constant 0 : index
    %c288_55 = arith.constant 288 : index
    %75 = vector.load %arg11[%c0_54, %c288_55] : memref<16x2304xbf16, #tpu.memory_space<vmem>>, vector<16x96xbf16>
    %c0_56 = arith.constant 0 : index
    %c576_57 = arith.constant 576 : index
    %76 = vector.load %arg11[%c0_56, %c576_57] : memref<16x2304xbf16, #tpu.memory_space<vmem>>, vector<16x96xbf16>
    %c0_58 = arith.constant 0 : index
    %c864 = arith.constant 864 : index
    %77 = vector.load %arg11[%c0_58, %c864] : memref<16x2304xbf16, #tpu.memory_space<vmem>>, vector<16x96xbf16>
    %78 = tpu.concatenate %75, %76, %77 in 1 : vector<16x96xbf16>, vector<16x96xbf16>, vector<16x96xbf16> -> vector<16x288xbf16>
    %c0_59 = arith.constant 0 : index
    %c320_60 = arith.constant 320 : index
    %79 = vector.load %arg11[%c0_59, %c320_60] : memref<16x2304xbf16, #tpu.memory_space<vmem>>, vector<16x96xbf16>
    %c0_61 = arith.constant 0 : index
    %c608_62 = arith.constant 608 : index
    %80 = vector.load %arg11[%c0_61, %c608_62] : memref<16x2304xbf16, #tpu.memory_space<vmem>>, vector<16x96xbf16>
    %c0_63 = arith.constant 0 : index
    %c896 = arith.constant 896 : index
    %81 = vector.load %arg11[%c0_63, %c896] : memref<16x2304xbf16, #tpu.memory_space<vmem>>, vector<16x96xbf16>
    %82 = tpu.concatenate %79, %80, %81 in 1 : vector<16x96xbf16>, vector<16x96xbf16>, vector<16x96xbf16> -> vector<16x288xbf16>
    %c0_64 = arith.constant 0 : index
    %c352_65 = arith.constant 352 : index
    %83 = vector.load %arg11[%c0_64, %c352_65] : memref<16x2304xbf16, #tpu.memory_space<vmem>>, vector<16x96xbf16>
    %c0_66 = arith.constant 0 : index
    %c640_67 = arith.constant 640 : index
    %84 = vector.load %arg11[%c0_66, %c640_67] : memref<16x2304xbf16, #tpu.memory_space<vmem>>, vector<16x96xbf16>
    %c0_68 = arith.constant 0 : index
    %c928 = arith.constant 928 : index
    %85 = vector.load %arg11[%c0_68, %c928] : memref<16x2304xbf16, #tpu.memory_space<vmem>>, vector<16x96xbf16>
    %86 = tpu.concatenate %83, %84, %85 in 1 : vector<16x96xbf16>, vector<16x96xbf16>, vector<16x96xbf16> -> vector<16x288xbf16>
    %c0_69 = arith.constant 0 : index
    %c384_70 = arith.constant 384 : index
    %87 = vector.load %arg11[%c0_69, %c384_70] : memref<16x2304xbf16, #tpu.memory_space<vmem>>, vector<16x96xbf16>
    %c0_71 = arith.constant 0 : index
    %c672_72 = arith.constant 672 : index
    %88 = vector.load %arg11[%c0_71, %c672_72] : memref<16x2304xbf16, #tpu.memory_space<vmem>>, vector<16x96xbf16>
    %c0_73 = arith.constant 0 : index
    %c960 = arith.constant 960 : index
    %89 = vector.load %arg11[%c0_73, %c960] : memref<16x2304xbf16, #tpu.memory_space<vmem>>, vector<16x96xbf16>
    %90 = tpu.concatenate %87, %88, %89 in 1 : vector<16x96xbf16>, vector<16x96xbf16>, vector<16x96xbf16> -> vector<16x288xbf16>
    %c0_74 = arith.constant 0 : index
    %c416_75 = arith.constant 416 : index
    %91 = vector.load %arg11[%c0_74, %c416_75] : memref<16x2304xbf16, #tpu.memory_space<vmem>>, vector<16x96xbf16>
    %c0_76 = arith.constant 0 : index
    %c704_77 = arith.constant 704 : index
    %92 = vector.load %arg11[%c0_76, %c704_77] : memref<16x2304xbf16, #tpu.memory_space<vmem>>, vector<16x96xbf16>
    %c0_78 = arith.constant 0 : index
    %c992 = arith.constant 992 : index
    %93 = vector.load %arg11[%c0_78, %c992] : memref<16x2304xbf16, #tpu.memory_space<vmem>>, vector<16x96xbf16>
    %94 = tpu.concatenate %91, %92, %93 in 1 : vector<16x96xbf16>, vector<16x96xbf16>, vector<16x96xbf16> -> vector<16x288xbf16>
    %c0_79 = arith.constant 0 : index
    %c448_80 = arith.constant 448 : index
    %95 = vector.load %arg11[%c0_79, %c448_80] : memref<16x2304xbf16, #tpu.memory_space<vmem>>, vector<16x96xbf16>
    %c0_81 = arith.constant 0 : index
    %c736_82 = arith.constant 736 : index
    %96 = vector.load %arg11[%c0_81, %c736_82] : memref<16x2304xbf16, #tpu.memory_space<vmem>>, vector<16x96xbf16>
    %c0_83 = arith.constant 0 : index
    %c1024 = arith.constant 1024 : index
    %97 = vector.load %arg11[%c0_83, %c1024] : memref<16x2304xbf16, #tpu.memory_space<vmem>>, vector<16x96xbf16>
    %98 = tpu.concatenate %95, %96, %97 in 1 : vector<16x96xbf16>, vector<16x96xbf16>, vector<16x96xbf16> -> vector<16x288xbf16>
    %c0_84 = arith.constant 0 : index
    %c480_85 = arith.constant 480 : index
    %99 = vector.load %arg11[%c0_84, %c480_85] : memref<16x2304xbf16, #tpu.memory_space<vmem>>, vector<16x96xbf16>
    %c0_86 = arith.constant 0 : index
    %c768_87 = arith.constant 768 : index
    %100 = vector.load %arg11[%c0_86, %c768_87] : memref<16x2304xbf16, #tpu.memory_space<vmem>>, vector<16x96xbf16>
    %c0_88 = arith.constant 0 : index
    %c1056 = arith.constant 1056 : index
    %101 = vector.load %arg11[%c0_88, %c1056] : memref<16x2304xbf16, #tpu.memory_space<vmem>>, vector<16x96xbf16>
    %102 = tpu.concatenate %99, %100, %101 in 1 : vector<16x96xbf16>, vector<16x96xbf16>, vector<16x96xbf16> -> vector<16x288xbf16>
    %103 = tpu.concatenate %78, %82, %86, %90, %94, %98, %102 in 0 : vector<16x288xbf16>, vector<16x288xbf16>, vector<16x288xbf16>, vector<16x288xbf16>, vector<16x288xbf16>, vector<16x288xbf16>, vector<16x288xbf16> -> vector<112x288xbf16>
    %cst_89 = arith.constant dense<0.000000e+00> : vector<112x64xf32>
    %104 = tpu.matmul %103, %28, %cst_89 {dimension_numbers = #tpu.dot_dimension_numbers<[1], [0], [0], [1], [0, 0, 1, 1], [], []>} : vector<112x288xbf16>, vector<288x64xbf16>, vector<112x64xf32> -> vector<112x64xf32>
    %105 = vector.broadcast %29 : vector<1x64xf32> to vector<112x64xf32>
    %106 = arith.addf %104, %105 : vector<112x64xf32>
    %cst_90 = arith.constant 0.000000e+00 : f32
    %107 = vector.broadcast %cst_90 : f32 to vector<112x64xf32>
    %108 = arith.maximumf %106, %107 : vector<112x64xf32>
    %109 = arith.truncf %108 : vector<112x64xf32> to vector<112x64xbf16>
    %110 = vector.extract_strided_slice %109 {offsets = [0, 0], sizes = [16, 64], strides = [1, 1]} : vector<112x64xbf16> to vector<16x64xbf16>
    %111 = vector.extract_strided_slice %109 {offsets = [16, 0], sizes = [16, 64], strides = [1, 1]} : vector<112x64xbf16> to vector<16x64xbf16>
    %112 = vector.extract_strided_slice %109 {offsets = [32, 0], sizes = [16, 64], strides = [1, 1]} : vector<112x64xbf16> to vector<16x64xbf16>
    %113 = vector.extract_strided_slice %109 {offsets = [48, 0], sizes = [16, 64], strides = [1, 1]} : vector<112x64xbf16> to vector<16x64xbf16>
    %114 = vector.extract_strided_slice %109 {offsets = [64, 0], sizes = [16, 64], strides = [1, 1]} : vector<112x64xbf16> to vector<16x64xbf16>
    %115 = vector.extract_strided_slice %109 {offsets = [80, 0], sizes = [16, 64], strides = [1, 1]} : vector<112x64xbf16> to vector<16x64xbf16>
    %116 = vector.extract_strided_slice %109 {offsets = [96, 0], sizes = [16, 64], strides = [1, 1]} : vector<112x64xbf16> to vector<16x64xbf16>
    %117 = tpu.concatenate %110, %111, %112, %113, %114, %115, %116, %30 in 1 : vector<16x64xbf16>, vector<16x64xbf16>, vector<16x64xbf16>, vector<16x64xbf16>, vector<16x64xbf16>, vector<16x64xbf16>, vector<16x64xbf16>, vector<16x64xbf16> -> vector<16x512xbf16>
    %c0_91 = arith.constant 0 : index
    %c512 = arith.constant 512 : index
    %118 = vector.load %arg12[%c0_91, %c512] : memref<16x3072xbf16, #tpu.memory_space<vmem>>, vector<16x512xbf16>
    tpu.vector_store %arg12[%c0_91, %c512], %117 {strides = array<i32>} : memref<16x3072xbf16, #tpu.memory_space<vmem>>, vector<16x512xbf16>,
    %c0_92 = arith.constant 0 : index
    %c576_93 = arith.constant 576 : index
    %119 = vector.load %arg11[%c0_92, %c576_93] : memref<16x2304xbf16, #tpu.memory_space<vmem>>, vector<16x96xbf16>
    %c0_94 = arith.constant 0 : index
    %c864_95 = arith.constant 864 : index
    %120 = vector.load %arg11[%c0_94, %c864_95] : memref<16x2304xbf16, #tpu.memory_space<vmem>>, vector<16x96xbf16>
    %c0_96 = arith.constant 0 : index
    %c1152 = arith.constant 1152 : index
    %121 = vector.load %arg11[%c0_96, %c1152] : memref<16x2304xbf16, #tpu.memory_space<vmem>>, vector<16x96xbf16>
    %122 = tpu.concatenate %119, %120, %121 in 1 : vector<16x96xbf16>, vector<16x96xbf16>, vector<16x96xbf16> -> vector<16x288xbf16>
    %c0_97 = arith.constant 0 : index
    %c608_98 = arith.constant 608 : index
    %123 = vector.load %arg11[%c0_97, %c608_98] : memref<16x2304xbf16, #tpu.memory_space<vmem>>, vector<16x96xbf16>
    %c0_99 = arith.constant 0 : index
    %c896_100 = arith.constant 896 : index
    %124 = vector.load %arg11[%c0_99, %c896_100] : memref<16x2304xbf16, #tpu.memory_space<vmem>>, vector<16x96xbf16>
    %c0_101 = arith.constant 0 : index
    %c1184 = arith.constant 1184 : index
    %125 = vector.load %arg11[%c0_101, %c1184] : memref<16x2304xbf16, #tpu.memory_space<vmem>>, vector<16x96xbf16>
    %126 = tpu.concatenate %123, %124, %125 in 1 : vector<16x96xbf16>, vector<16x96xbf16>, vector<16x96xbf16> -> vector<16x288xbf16>
    %c0_102 = arith.constant 0 : index
    %c640_103 = arith.constant 640 : index
    %127 = vector.load %arg11[%c0_102, %c640_103] : memref<16x2304xbf16, #tpu.memory_space<vmem>>, vector<16x96xbf16>
    %c0_104 = arith.constant 0 : index
    %c928_105 = arith.constant 928 : index
    %128 = vector.load %arg11[%c0_104, %c928_105] : memref<16x2304xbf16, #tpu.memory_space<vmem>>, vector<16x96xbf16>
    %c0_106 = arith.constant 0 : index
    %c1216 = arith.constant 1216 : index
    %129 = vector.load %arg11[%c0_106, %c1216] : memref<16x2304xbf16, #tpu.memory_space<vmem>>, vector<16x96xbf16>
    %130 = tpu.concatenate %127, %128, %129 in 1 : vector<16x96xbf16>, vector<16x96xbf16>, vector<16x96xbf16> -> vector<16x288xbf16>
    %c0_107 = arith.constant 0 : index
    %c672_108 = arith.constant 672 : index
    %131 = vector.load %arg11[%c0_107, %c672_108] : memref<16x2304xbf16, #tpu.memory_space<vmem>>, vector<16x96xbf16>
    %c0_109 = arith.constant 0 : index
    %c960_110 = arith.constant 960 : index
    %132 = vector.load %arg11[%c0_109, %c960_110] : memref<16x2304xbf16, #tpu.memory_space<vmem>>, vector<16x96xbf16>
    %c0_111 = arith.constant 0 : index
    %c1248 = arith.constant 1248 : index
    %133 = vector.load %arg11[%c0_111, %c1248] : memref<16x2304xbf16, #tpu.memory_space<vmem>>, vector<16x96xbf16>
    %134 = tpu.concatenate %131, %132, %133 in 1 : vector<16x96xbf16>, vector<16x96xbf16>, vector<16x96xbf16> -> vector<16x288xbf16>
    %c0_112 = arith.constant 0 : index
    %c704_113 = arith.constant 704 : index
    %135 = vector.load %arg11[%c0_112, %c704_113] : memref<16x2304xbf16, #tpu.memory_space<vmem>>, vector<16x96xbf16>
    %c0_114 = arith.constant 0 : index
    %c992_115 = arith.constant 992 : index
    %136 = vector.load %arg11[%c0_114, %c992_115] : memref<16x2304xbf16, #tpu.memory_space<vmem>>, vector<16x96xbf16>
    %c0_116 = arith.constant 0 : index
    %c1280 = arith.constant 1280 : index
    %137 = vector.load %arg11[%c0_116, %c1280] : memref<16x2304xbf16, #tpu.memory_space<vmem>>, vector<16x96xbf16>
    %138 = tpu.concatenate %135, %136, %137 in 1 : vector<16x96xbf16>, vector<16x96xbf16>, vector<16x96xbf16> -> vector<16x288xbf16>
    %c0_117 = arith.constant 0 : index
    %c736_118 = arith.constant 736 : index
    %139 = vector.load %arg11[%c0_117, %c736_118] : memref<16x2304xbf16, #tpu.memory_space<vmem>>, vector<16x96xbf16>
    %c0_119 = arith.constant 0 : index
    %c1024_120 = arith.constant 1024 : index
    %140 = vector.load %arg11[%c0_119, %c1024_120] : memref<16x2304xbf16, #tpu.memory_space<vmem>>, vector<16x96xbf16>
    %c0_121 = arith.constant 0 : index
    %c1312 = arith.constant 1312 : index
    %141 = vector.load %arg11[%c0_121, %c1312] : memref<16x2304xbf16, #tpu.memory_space<vmem>>, vector<16x96xbf16>
    %142 = tpu.concatenate %139, %140, %141 in 1 : vector<16x96xbf16>, vector<16x96xbf16>, vector<16x96xbf16> -> vector<16x288xbf16>
    %c0_122 = arith.constant 0 : index
    %c768_123 = arith.constant 768 : index
    %143 = vector.load %arg11[%c0_122, %c768_123] : memref<16x2304xbf16, #tpu.memory_space<vmem>>, vector<16x96xbf16>
    %c0_124 = arith.constant 0 : index
    %c1056_125 = arith.constant 1056 : index
    %144 = vector.load %arg11[%c0_124, %c1056_125] : memref<16x2304xbf16, #tpu.memory_space<vmem>>, vector<16x96xbf16>
    %c0_126 = arith.constant 0 : index
    %c1344 = arith.constant 1344 : index
    %145 = vector.load %arg11[%c0_126, %c1344] : memref<16x2304xbf16, #tpu.memory_space<vmem>>, vector<16x96xbf16>
    %146 = tpu.concatenate %143, %144, %145 in 1 : vector<16x96xbf16>, vector<16x96xbf16>, vector<16x96xbf16> -> vector<16x288xbf16>
    %147 = tpu.concatenate %122, %126, %130, %134, %138, %142, %146 in 0 : vector<16x288xbf16>, vector<16x288xbf16>, vector<16x288xbf16>, vector<16x288xbf16>, vector<16x288xbf16>, vector<16x288xbf16>, vector<16x288xbf16> -> vector<112x288xbf16>
    %cst_127 = arith.constant dense<0.000000e+00> : vector<112x64xf32>
    %148 = tpu.matmul %147, %28, %cst_127 {dimension_numbers = #tpu.dot_dimension_numbers<[1], [0], [0], [1], [0, 0, 1, 1], [], []>} : vector<112x288xbf16>, vector<288x64xbf16>, vector<112x64xf32> -> vector<112x64xf32>
    %149 = vector.broadcast %29 : vector<1x64xf32> to vector<112x64xf32>
    %150 = arith.addf %148, %149 : vector<112x64xf32>
    %cst_128 = arith.constant 0.000000e+00 : f32
    %151 = vector.broadcast %cst_128 : f32 to vector<112x64xf32>
    %152 = arith.maximumf %150, %151 : vector<112x64xf32>
    %153 = arith.truncf %152 : vector<112x64xf32> to vector<112x64xbf16>
    %154 = vector.extract_strided_slice %153 {offsets = [0, 0], sizes = [16, 64], strides = [1, 1]} : vector<112x64xbf16> to vector<16x64xbf16>
    %155 = vector.extract_strided_slice %153 {offsets = [16, 0], sizes = [16, 64], strides = [1, 1]} : vector<112x64xbf16> to vector<16x64xbf16>
    %156 = vector.extract_strided_slice %153 {offsets = [32, 0], sizes = [16, 64], strides = [1, 1]} : vector<112x64xbf16> to vector<16x64xbf16>
    %157 = vector.extract_strided_slice %153 {offsets = [48, 0], sizes = [16, 64], strides = [1, 1]} : vector<112x64xbf16> to vector<16x64xbf16>
    %158 = vector.extract_strided_slice %153 {offsets = [64, 0], sizes = [16, 64], strides = [1, 1]} : vector<112x64xbf16> to vector<16x64xbf16>
    %159 = vector.extract_strided_slice %153 {offsets = [80, 0], sizes = [16, 64], strides = [1, 1]} : vector<112x64xbf16> to vector<16x64xbf16>
    %160 = vector.extract_strided_slice %153 {offsets = [96, 0], sizes = [16, 64], strides = [1, 1]} : vector<112x64xbf16> to vector<16x64xbf16>
    %161 = tpu.concatenate %154, %155, %156, %157, %158, %159, %160, %30 in 1 : vector<16x64xbf16>, vector<16x64xbf16>, vector<16x64xbf16>, vector<16x64xbf16>, vector<16x64xbf16>, vector<16x64xbf16>, vector<16x64xbf16>, vector<16x64xbf16> -> vector<16x512xbf16>
    %c0_129 = arith.constant 0 : index
    %c1024_130 = arith.constant 1024 : index
    %162 = vector.load %arg12[%c0_129, %c1024_130] : memref<16x3072xbf16, #tpu.memory_space<vmem>>, vector<16x512xbf16>
    tpu.vector_store %arg12[%c0_129, %c1024_130], %161 {strides = array<i32>} : memref<16x3072xbf16, #tpu.memory_space<vmem>>, vector<16x512xbf16>,
    %c0_131 = arith.constant 0 : index
    %c864_132 = arith.constant 864 : index
    %163 = vector.load %arg11[%c0_131, %c864_132] : memref<16x2304xbf16, #tpu.memory_space<vmem>>, vector<16x96xbf16>
    %c0_133 = arith.constant 0 : index
    %c1152_134 = arith.constant 1152 : index
    %164 = vector.load %arg11[%c0_133, %c1152_134] : memref<16x2304xbf16, #tpu.memory_space<vmem>>, vector<16x96xbf16>
    %c0_135 = arith.constant 0 : index
    %c1440 = arith.constant 1440 : index
    %165 = vector.load %arg11[%c0_135, %c1440] : memref<16x2304xbf16, #tpu.memory_space<vmem>>, vector<16x96xbf16>
    %166 = tpu.concatenate %163, %164, %165 in 1 : vector<16x96xbf16>, vector<16x96xbf16>, vector<16x96xbf16> -> vector<16x288xbf16>
    %c0_136 = arith.constant 0 : index
    %c896_137 = arith.constant 896 : index
    %167 = vector.load %arg11[%c0_136, %c896_137] : memref<16x2304xbf16, #tpu.memory_space<vmem>>, vector<16x96xbf16>
    %c0_138 = arith.constant 0 : index
    %c1184_139 = arith.constant 1184 : index
    %168 = vector.load %arg11[%c0_138, %c1184_139] : memref<16x2304xbf16, #tpu.memory_space<vmem>>, vector<16x96xbf16>
    %c0_140 = arith.constant 0 : index
    %c1472 = arith.constant 1472 : index
    %169 = vector.load %arg11[%c0_140, %c1472] : memref<16x2304xbf16, #tpu.memory_space<vmem>>, vector<16x96xbf16>
    %170 = tpu.concatenate %167, %168, %169 in 1 : vector<16x96xbf16>, vector<16x96xbf16>, vector<16x96xbf16> -> vector<16x288xbf16>
    %c0_141 = arith.constant 0 : index
    %c928_142 = arith.constant 928 : index
    %171 = vector.load %arg11[%c0_141, %c928_142] : memref<16x2304xbf16, #tpu.memory_space<vmem>>, vector<16x96xbf16>
    %c0_143 = arith.constant 0 : index
    %c1216_144 = arith.constant 1216 : index
    %172 = vector.load %arg11[%c0_143, %c1216_144] : memref<16x2304xbf16, #tpu.memory_space<vmem>>, vector<16x96xbf16>
    %c0_145 = arith.constant 0 : index
    %c1504 = arith.constant 1504 : index
    %173 = vector.load %arg11[%c0_145, %c1504] : memref<16x2304xbf16, #tpu.memory_space<vmem>>, vector<16x96xbf16>
    %174 = tpu.concatenate %171, %172, %173 in 1 : vector<16x96xbf16>, vector<16x96xbf16>, vector<16x96xbf16> -> vector<16x288xbf16>
    %c0_146 = arith.constant 0 : index
    %c960_147 = arith.constant 960 : index
    %175 = vector.load %arg11[%c0_146, %c960_147] : memref<16x2304xbf16, #tpu.memory_space<vmem>>, vector<16x96xbf16>
    %c0_148 = arith.constant 0 : index
    %c1248_149 = arith.constant 1248 : index
    %176 = vector.load %arg11[%c0_148, %c1248_149] : memref<16x2304xbf16, #tpu.memory_space<vmem>>, vector<16x96xbf16>
    %c0_150 = arith.constant 0 : index
    %c1536_151 = arith.constant 1536 : index
    %177 = vector.load %arg11[%c0_150, %c1536_151] : memref<16x2304xbf16, #tpu.memory_space<vmem>>, vector<16x96xbf16>
    %178 = tpu.concatenate %175, %176, %177 in 1 : vector<16x96xbf16>, vector<16x96xbf16>, vector<16x96xbf16> -> vector<16x288xbf16>
    %c0_152 = arith.constant 0 : index
    %c992_153 = arith.constant 992 : index
    %179 = vector.load %arg11[%c0_152, %c992_153] : memref<16x2304xbf16, #tpu.memory_space<vmem>>, vector<16x96xbf16>
    %c0_154 = arith.constant 0 : index
    %c1280_155 = arith.constant 1280 : index
    %180 = vector.load %arg11[%c0_154, %c1280_155] : memref<16x2304xbf16, #tpu.memory_space<vmem>>, vector<16x96xbf16>
    %c0_156 = arith.constant 0 : index
    %c1568 = arith.constant 1568 : index
    %181 = vector.load %arg11[%c0_156, %c1568] : memref<16x2304xbf16, #tpu.memory_space<vmem>>, vector<16x96xbf16>
    %182 = tpu.concatenate %179, %180, %181 in 1 : vector<16x96xbf16>, vector<16x96xbf16>, vector<16x96xbf16> -> vector<16x288xbf16>
    %c0_157 = arith.constant 0 : index
    %c1024_158 = arith.constant 1024 : index
    %183 = vector.load %arg11[%c0_157, %c1024_158] : memref<16x2304xbf16, #tpu.memory_space<vmem>>, vector<16x96xbf16>
    %c0_159 = arith.constant 0 : index
    %c1312_160 = arith.constant 1312 : index
    %184 = vector.load %arg11[%c0_159, %c1312_160] : memref<16x2304xbf16, #tpu.memory_space<vmem>>, vector<16x96xbf16>
    %c0_161 = arith.constant 0 : index
    %c1600 = arith.constant 1600 : index
    %185 = vector.load %arg11[%c0_161, %c1600] : memref<16x2304xbf16, #tpu.memory_space<vmem>>, vector<16x96xbf16>
    %186 = tpu.concatenate %183, %184, %185 in 1 : vector<16x96xbf16>, vector<16x96xbf16>, vector<16x96xbf16> -> vector<16x288xbf16>
    %c0_162 = arith.constant 0 : index
    %c1056_163 = arith.constant 1056 : index
    %187 = vector.load %arg11[%c0_162, %c1056_163] : memref<16x2304xbf16, #tpu.memory_space<vmem>>, vector<16x96xbf16>
    %c0_164 = arith.constant 0 : index
    %c1344_165 = arith.constant 1344 : index
    %188 = vector.load %arg11[%c0_164, %c1344_165] : memref<16x2304xbf16, #tpu.memory_space<vmem>>, vector<16x96xbf16>
    %c0_166 = arith.constant 0 : index
    %c1632 = arith.constant 1632 : index
    %189 = vector.load %arg11[%c0_166, %c1632] : memref<16x2304xbf16, #tpu.memory_space<vmem>>, vector<16x96xbf16>
    %190 = tpu.concatenate %187, %188, %189 in 1 : vector<16x96xbf16>, vector<16x96xbf16>, vector<16x96xbf16> -> vector<16x288xbf16>
    %191 = tpu.concatenate %166, %170, %174, %178, %182, %186, %190 in 0 : vector<16x288xbf16>, vector<16x288xbf16>, vector<16x288xbf16>, vector<16x288xbf16>, vector<16x288xbf16>, vector<16x288xbf16>, vector<16x288xbf16> -> vector<112x288xbf16>
    %cst_167 = arith.constant dense<0.000000e+00> : vector<112x64xf32>
    %192 = tpu.matmul %191, %28, %cst_167 {dimension_numbers = #tpu.dot_dimension_numbers<[1], [0], [0], [1], [0, 0, 1, 1], [], []>} : vector<112x288xbf16>, vector<288x64xbf16>, vector<112x64xf32> -> vector<112x64xf32>
    %193 = vector.broadcast %29 : vector<1x64xf32> to vector<112x64xf32>
    %194 = arith.addf %192, %193 : vector<112x64xf32>
    %cst_168 = arith.constant 0.000000e+00 : f32
    %195 = vector.broadcast %cst_168 : f32 to vector<112x64xf32>
    %196 = arith.maximumf %194, %195 : vector<112x64xf32>
    %197 = arith.truncf %196 : vector<112x64xf32> to vector<112x64xbf16>
    %198 = vector.extract_strided_slice %197 {offsets = [0, 0], sizes = [16, 64], strides = [1, 1]} : vector<112x64xbf16> to vector<16x64xbf16>
    %199 = vector.extract_strided_slice %197 {offsets = [16, 0], sizes = [16, 64], strides = [1, 1]} : vector<112x64xbf16> to vector<16x64xbf16>
    %200 = vector.extract_strided_slice %197 {offsets = [32, 0], sizes = [16, 64], strides = [1, 1]} : vector<112x64xbf16> to vector<16x64xbf16>
    %201 = vector.extract_strided_slice %197 {offsets = [48, 0], sizes = [16, 64], strides = [1, 1]} : vector<112x64xbf16> to vector<16x64xbf16>
    %202 = vector.extract_strided_slice %197 {offsets = [64, 0], sizes = [16, 64], strides = [1, 1]} : vector<112x64xbf16> to vector<16x64xbf16>
    %203 = vector.extract_strided_slice %197 {offsets = [80, 0], sizes = [16, 64], strides = [1, 1]} : vector<112x64xbf16> to vector<16x64xbf16>
    %204 = vector.extract_strided_slice %197 {offsets = [96, 0], sizes = [16, 64], strides = [1, 1]} : vector<112x64xbf16> to vector<16x64xbf16>
    %205 = tpu.concatenate %198, %199, %200, %201, %202, %203, %204, %30 in 1 : vector<16x64xbf16>, vector<16x64xbf16>, vector<16x64xbf16>, vector<16x64xbf16>, vector<16x64xbf16>, vector<16x64xbf16>, vector<16x64xbf16>, vector<16x64xbf16> -> vector<16x512xbf16>
    %c0_169 = arith.constant 0 : index
    %c1536_170 = arith.constant 1536 : index
    %206 = vector.load %arg12[%c0_169, %c1536_170] : memref<16x3072xbf16, #tpu.memory_space<vmem>>, vector<16x512xbf16>
    tpu.vector_store %arg12[%c0_169, %c1536_170], %205 {strides = array<i32>} : memref<16x3072xbf16, #tpu.memory_space<vmem>>, vector<16x512xbf16>,
    %c0_171 = arith.constant 0 : index
    %c1152_172 = arith.constant 1152 : index
    %207 = vector.load %arg11[%c0_171, %c1152_172] : memref<16x2304xbf16, #tpu.memory_space<vmem>>, vector<16x96xbf16>
    %c0_173 = arith.constant 0 : index
    %c1440_174 = arith.constant 1440 : index
    %208 = vector.load %arg11[%c0_173, %c1440_174] : memref<16x2304xbf16, #tpu.memory_space<vmem>>, vector<16x96xbf16>
    %c0_175 = arith.constant 0 : index
    %c1728 = arith.constant 1728 : index
    %209 = vector.load %arg11[%c0_175, %c1728] : memref<16x2304xbf16, #tpu.memory_space<vmem>>, vector<16x96xbf16>
    %210 = tpu.concatenate %207, %208, %209 in 1 : vector<16x96xbf16>, vector<16x96xbf16>, vector<16x96xbf16> -> vector<16x288xbf16>
    %c0_176 = arith.constant 0 : index
    %c1184_177 = arith.constant 1184 : index
    %211 = vector.load %arg11[%c0_176, %c1184_177] : memref<16x2304xbf16, #tpu.memory_space<vmem>>, vector<16x96xbf16>
    %c0_178 = arith.constant 0 : index
    %c1472_179 = arith.constant 1472 : index
    %212 = vector.load %arg11[%c0_178, %c1472_179] : memref<16x2304xbf16, #tpu.memory_space<vmem>>, vector<16x96xbf16>
    %c0_180 = arith.constant 0 : index
    %c1760 = arith.constant 1760 : index
    %213 = vector.load %arg11[%c0_180, %c1760] : memref<16x2304xbf16, #tpu.memory_space<vmem>>, vector<16x96xbf16>
    %214 = tpu.concatenate %211, %212, %213 in 1 : vector<16x96xbf16>, vector<16x96xbf16>, vector<16x96xbf16> -> vector<16x288xbf16>
    %c0_181 = arith.constant 0 : index
    %c1216_182 = arith.constant 1216 : index
    %215 = vector.load %arg11[%c0_181, %c1216_182] : memref<16x2304xbf16, #tpu.memory_space<vmem>>, vector<16x96xbf16>
    %c0_183 = arith.constant 0 : index
    %c1504_184 = arith.constant 1504 : index
    %216 = vector.load %arg11[%c0_183, %c1504_184] : memref<16x2304xbf16, #tpu.memory_space<vmem>>, vector<16x96xbf16>
    %c0_185 = arith.constant 0 : index
    %c1792 = arith.constant 1792 : index
    %217 = vector.load %arg11[%c0_185, %c1792] : memref<16x2304xbf16, #tpu.memory_space<vmem>>, vector<16x96xbf16>
    %218 = tpu.concatenate %215, %216, %217 in 1 : vector<16x96xbf16>, vector<16x96xbf16>, vector<16x96xbf16> -> vector<16x288xbf16>
    %c0_186 = arith.constant 0 : index
    %c1248_187 = arith.constant 1248 : index
    %219 = vector.load %arg11[%c0_186, %c1248_187] : memref<16x2304xbf16, #tpu.memory_space<vmem>>, vector<16x96xbf16>
    %c0_188 = arith.constant 0 : index
    %c1536_189 = arith.constant 1536 : index
    %220 = vector.load %arg11[%c0_188, %c1536_189] : memref<16x2304xbf16, #tpu.memory_space<vmem>>, vector<16x96xbf16>
    %c0_190 = arith.constant 0 : index
    %c1824 = arith.constant 1824 : index
    %221 = vector.load %arg11[%c0_190, %c1824] : memref<16x2304xbf16, #tpu.memory_space<vmem>>, vector<16x96xbf16>
    %222 = tpu.concatenate %219, %220, %221 in 1 : vector<16x96xbf16>, vector<16x96xbf16>, vector<16x96xbf16> -> vector<16x288xbf16>
    %c0_191 = arith.constant 0 : index
    %c1280_192 = arith.constant 1280 : index
    %223 = vector.load %arg11[%c0_191, %c1280_192] : memref<16x2304xbf16, #tpu.memory_space<vmem>>, vector<16x96xbf16>
    %c0_193 = arith.constant 0 : index
    %c1568_194 = arith.constant 1568 : index
    %224 = vector.load %arg11[%c0_193, %c1568_194] : memref<16x2304xbf16, #tpu.memory_space<vmem>>, vector<16x96xbf16>
    %c0_195 = arith.constant 0 : index
    %c1856 = arith.constant 1856 : index
    %225 = vector.load %arg11[%c0_195, %c1856] : memref<16x2304xbf16, #tpu.memory_space<vmem>>, vector<16x96xbf16>
    %226 = tpu.concatenate %223, %224, %225 in 1 : vector<16x96xbf16>, vector<16x96xbf16>, vector<16x96xbf16> -> vector<16x288xbf16>
    %c0_196 = arith.constant 0 : index
    %c1312_197 = arith.constant 1312 : index
    %227 = vector.load %arg11[%c0_196, %c1312_197] : memref<16x2304xbf16, #tpu.memory_space<vmem>>, vector<16x96xbf16>
    %c0_198 = arith.constant 0 : index
    %c1600_199 = arith.constant 1600 : index
    %228 = vector.load %arg11[%c0_198, %c1600_199] : memref<16x2304xbf16, #tpu.memory_space<vmem>>, vector<16x96xbf16>
    %c0_200 = arith.constant 0 : index
    %c1888 = arith.constant 1888 : index
    %229 = vector.load %arg11[%c0_200, %c1888] : memref<16x2304xbf16, #tpu.memory_space<vmem>>, vector<16x96xbf16>
    %230 = tpu.concatenate %227, %228, %229 in 1 : vector<16x96xbf16>, vector<16x96xbf16>, vector<16x96xbf16> -> vector<16x288xbf16>
    %c0_201 = arith.constant 0 : index
    %c1344_202 = arith.constant 1344 : index
    %231 = vector.load %arg11[%c0_201, %c1344_202] : memref<16x2304xbf16, #tpu.memory_space<vmem>>, vector<16x96xbf16>
    %c0_203 = arith.constant 0 : index
    %c1632_204 = arith.constant 1632 : index
    %232 = vector.load %arg11[%c0_203, %c1632_204] : memref<16x2304xbf16, #tpu.memory_space<vmem>>, vector<16x96xbf16>
    %c0_205 = arith.constant 0 : index
    %c1920 = arith.constant 1920 : index
    %233 = vector.load %arg11[%c0_205, %c1920] : memref<16x2304xbf16, #tpu.memory_space<vmem>>, vector<16x96xbf16>
    %234 = tpu.concatenate %231, %232, %233 in 1 : vector<16x96xbf16>, vector<16x96xbf16>, vector<16x96xbf16> -> vector<16x288xbf16>
    %235 = tpu.concatenate %210, %214, %218, %222, %226, %230, %234 in 0 : vector<16x288xbf16>, vector<16x288xbf16>, vector<16x288xbf16>, vector<16x288xbf16>, vector<16x288xbf16>, vector<16x288xbf16>, vector<16x288xbf16> -> vector<112x288xbf16>
    %cst_206 = arith.constant dense<0.000000e+00> : vector<112x64xf32>
    %236 = tpu.matmul %235, %28, %cst_206 {dimension_numbers = #tpu.dot_dimension_numbers<[1], [0], [0], [1], [0, 0, 1, 1], [], []>} : vector<112x288xbf16>, vector<288x64xbf16>, vector<112x64xf32> -> vector<112x64xf32>
    %237 = vector.broadcast %29 : vector<1x64xf32> to vector<112x64xf32>
    %238 = arith.addf %236, %237 : vector<112x64xf32>
    %cst_207 = arith.constant 0.000000e+00 : f32
    %239 = vector.broadcast %cst_207 : f32 to vector<112x64xf32>
    %240 = arith.maximumf %238, %239 : vector<112x64xf32>
    %241 = arith.truncf %240 : vector<112x64xf32> to vector<112x64xbf16>
    %242 = vector.extract_strided_slice %241 {offsets = [0, 0], sizes = [16, 64], strides = [1, 1]} : vector<112x64xbf16> to vector<16x64xbf16>
    %243 = vector.extract_strided_slice %241 {offsets = [16, 0], sizes = [16, 64], strides = [1, 1]} : vector<112x64xbf16> to vector<16x64xbf16>
    %244 = vector.extract_strided_slice %241 {offsets = [32, 0], sizes = [16, 64], strides = [1, 1]} : vector<112x64xbf16> to vector<16x64xbf16>
    %245 = vector.extract_strided_slice %241 {offsets = [48, 0], sizes = [16, 64], strides = [1, 1]} : vector<112x64xbf16> to vector<16x64xbf16>
    %246 = vector.extract_strided_slice %241 {offsets = [64, 0], sizes = [16, 64], strides = [1, 1]} : vector<112x64xbf16> to vector<16x64xbf16>
    %247 = vector.extract_strided_slice %241 {offsets = [80, 0], sizes = [16, 64], strides = [1, 1]} : vector<112x64xbf16> to vector<16x64xbf16>
    %248 = vector.extract_strided_slice %241 {offsets = [96, 0], sizes = [16, 64], strides = [1, 1]} : vector<112x64xbf16> to vector<16x64xbf16>
    %249 = tpu.concatenate %242, %243, %244, %245, %246, %247, %248, %30 in 1 : vector<16x64xbf16>, vector<16x64xbf16>, vector<16x64xbf16>, vector<16x64xbf16>, vector<16x64xbf16>, vector<16x64xbf16>, vector<16x64xbf16>, vector<16x64xbf16> -> vector<16x512xbf16>
    %c0_208 = arith.constant 0 : index
    %c2048 = arith.constant 2048 : index
    %250 = vector.load %arg12[%c0_208, %c2048] : memref<16x3072xbf16, #tpu.memory_space<vmem>>, vector<16x512xbf16>
    tpu.vector_store %arg12[%c0_208, %c2048], %249 {strides = array<i32>} : memref<16x3072xbf16, #tpu.memory_space<vmem>>, vector<16x512xbf16>,
    %c0_209 = arith.constant 0 : index
    %c1440_210 = arith.constant 1440 : index
    %251 = vector.load %arg11[%c0_209, %c1440_210] : memref<16x2304xbf16, #tpu.memory_space<vmem>>, vector<16x96xbf16>
    %c0_211 = arith.constant 0 : index
    %c1728_212 = arith.constant 1728 : index
    %252 = vector.load %arg11[%c0_211, %c1728_212] : memref<16x2304xbf16, #tpu.memory_space<vmem>>, vector<16x96xbf16>
    %c0_213 = arith.constant 0 : index
    %c2016 = arith.constant 2016 : index
    %253 = vector.load %arg11[%c0_213, %c2016] : memref<16x2304xbf16, #tpu.memory_space<vmem>>, vector<16x96xbf16>
    %254 = tpu.concatenate %251, %252, %253 in 1 : vector<16x96xbf16>, vector<16x96xbf16>, vector<16x96xbf16> -> vector<16x288xbf16>
    %c0_214 = arith.constant 0 : index
    %c1472_215 = arith.constant 1472 : index
    %255 = vector.load %arg11[%c0_214, %c1472_215] : memref<16x2304xbf16, #tpu.memory_space<vmem>>, vector<16x96xbf16>
    %c0_216 = arith.constant 0 : index
    %c1760_217 = arith.constant 1760 : index
    %256 = vector.load %arg11[%c0_216, %c1760_217] : memref<16x2304xbf16, #tpu.memory_space<vmem>>, vector<16x96xbf16>
    %c0_218 = arith.constant 0 : index
    %c2048_219 = arith.constant 2048 : index
    %257 = vector.load %arg11[%c0_218, %c2048_219] : memref<16x2304xbf16, #tpu.memory_space<vmem>>, vector<16x96xbf16>
    %258 = tpu.concatenate %255, %256, %257 in 1 : vector<16x96xbf16>, vector<16x96xbf16>, vector<16x96xbf16> -> vector<16x288xbf16>
    %c0_220 = arith.constant 0 : index
    %c1504_221 = arith.constant 1504 : index
    %259 = vector.load %arg11[%c0_220, %c1504_221] : memref<16x2304xbf16, #tpu.memory_space<vmem>>, vector<16x96xbf16>
    %c0_222 = arith.constant 0 : index
    %c1792_223 = arith.constant 1792 : index
    %260 = vector.load %arg11[%c0_222, %c1792_223] : memref<16x2304xbf16, #tpu.memory_space<vmem>>, vector<16x96xbf16>
    %c0_224 = arith.constant 0 : index
    %c2080 = arith.constant 2080 : index
    %261 = vector.load %arg11[%c0_224, %c2080] : memref<16x2304xbf16, #tpu.memory_space<vmem>>, vector<16x96xbf16>
    %262 = tpu.concatenate %259, %260, %261 in 1 : vector<16x96xbf16>, vector<16x96xbf16>, vector<16x96xbf16> -> vector<16x288xbf16>
    %c0_225 = arith.constant 0 : index
    %c1536_226 = arith.constant 1536 : index
    %263 = vector.load %arg11[%c0_225, %c1536_226] : memref<16x2304xbf16, #tpu.memory_space<vmem>>, vector<16x96xbf16>
    %c0_227 = arith.constant 0 : index
    %c1824_228 = arith.constant 1824 : index
    %264 = vector.load %arg11[%c0_227, %c1824_228] : memref<16x2304xbf16, #tpu.memory_space<vmem>>, vector<16x96xbf16>
    %c0_229 = arith.constant 0 : index
    %c2112 = arith.constant 2112 : index
    %265 = vector.load %arg11[%c0_229, %c2112] : memref<16x2304xbf16, #tpu.memory_space<vmem>>, vector<16x96xbf16>
    %266 = tpu.concatenate %263, %264, %265 in 1 : vector<16x96xbf16>, vector<16x96xbf16>, vector<16x96xbf16> -> vector<16x288xbf16>
    %c0_230 = arith.constant 0 : index
    %c1568_231 = arith.constant 1568 : index
    %267 = vector.load %arg11[%c0_230, %c1568_231] : memref<16x2304xbf16, #tpu.memory_space<vmem>>, vector<16x96xbf16>
    %c0_232 = arith.constant 0 : index
    %c1856_233 = arith.constant 1856 : index
    %268 = vector.load %arg11[%c0_232, %c1856_233] : memref<16x2304xbf16, #tpu.memory_space<vmem>>, vector<16x96xbf16>
    %c0_234 = arith.constant 0 : index
    %c2144 = arith.constant 2144 : index
    %269 = vector.load %arg11[%c0_234, %c2144] : memref<16x2304xbf16, #tpu.memory_space<vmem>>, vector<16x96xbf16>
    %270 = tpu.concatenate %267, %268, %269 in 1 : vector<16x96xbf16>, vector<16x96xbf16>, vector<16x96xbf16> -> vector<16x288xbf16>
    %c0_235 = arith.constant 0 : index
    %c1600_236 = arith.constant 1600 : index
    %271 = vector.load %arg11[%c0_235, %c1600_236] : memref<16x2304xbf16, #tpu.memory_space<vmem>>, vector<16x96xbf16>
    %c0_237 = arith.constant 0 : index
    %c1888_238 = arith.constant 1888 : index
    %272 = vector.load %arg11[%c0_237, %c1888_238] : memref<16x2304xbf16, #tpu.memory_space<vmem>>, vector<16x96xbf16>
    %c0_239 = arith.constant 0 : index
    %c2176 = arith.constant 2176 : index
    %273 = vector.load %arg11[%c0_239, %c2176] : memref<16x2304xbf16, #tpu.memory_space<vmem>>, vector<16x96xbf16>
    %274 = tpu.concatenate %271, %272, %273 in 1 : vector<16x96xbf16>, vector<16x96xbf16>, vector<16x96xbf16> -> vector<16x288xbf16>
    %c0_240 = arith.constant 0 : index
    %c1632_241 = arith.constant 1632 : index
    %275 = vector.load %arg11[%c0_240, %c1632_241] : memref<16x2304xbf16, #tpu.memory_space<vmem>>, vector<16x96xbf16>
    %c0_242 = arith.constant 0 : index
    %c1920_243 = arith.constant 1920 : index
    %276 = vector.load %arg11[%c0_242, %c1920_243] : memref<16x2304xbf16, #tpu.memory_space<vmem>>, vector<16x96xbf16>
    %c0_244 = arith.constant 0 : index
    %c2208 = arith.constant 2208 : index
    %277 = vector.load %arg11[%c0_244, %c2208] : memref<16x2304xbf16, #tpu.memory_space<vmem>>, vector<16x96xbf16>
    %278 = tpu.concatenate %275, %276, %277 in 1 : vector<16x96xbf16>, vector<16x96xbf16>, vector<16x96xbf16> -> vector<16x288xbf16>
    %279 = tpu.concatenate %254, %258, %262, %266, %270, %274, %278 in 0 : vector<16x288xbf16>, vector<16x288xbf16>, vector<16x288xbf16>, vector<16x288xbf16>, vector<16x288xbf16>, vector<16x288xbf16>, vector<16x288xbf16> -> vector<112x288xbf16>
    %cst_245 = arith.constant dense<0.000000e+00> : vector<112x64xf32>
    %280 = tpu.matmul %279, %28, %cst_245 {dimension_numbers = #tpu.dot_dimension_numbers<[1], [0], [0], [1], [0, 0, 1, 1], [], []>} : vector<112x288xbf16>, vector<288x64xbf16>, vector<112x64xf32> -> vector<112x64xf32>
    %281 = vector.broadcast %29 : vector<1x64xf32> to vector<112x64xf32>
    %282 = arith.addf %280, %281 : vector<112x64xf32>
    %cst_246 = arith.constant 0.000000e+00 : f32
    %283 = vector.broadcast %cst_246 : f32 to vector<112x64xf32>
    %284 = arith.maximumf %282, %283 : vector<112x64xf32>
    %285 = arith.truncf %284 : vector<112x64xf32> to vector<112x64xbf16>
    %286 = vector.extract_strided_slice %285 {offsets = [0, 0], sizes = [16, 64], strides = [1, 1]} : vector<112x64xbf16> to vector<16x64xbf16>
    %287 = vector.extract_strided_slice %285 {offsets = [16, 0], sizes = [16, 64], strides = [1, 1]} : vector<112x64xbf16> to vector<16x64xbf16>
    %288 = vector.extract_strided_slice %285 {offsets = [32, 0], sizes = [16, 64], strides = [1, 1]} : vector<112x64xbf16> to vector<16x64xbf16>
    %289 = vector.extract_strided_slice %285 {offsets = [48, 0], sizes = [16, 64], strides = [1, 1]} : vector<112x64xbf16> to vector<16x64xbf16>
    %290 = vector.extract_strided_slice %285 {offsets = [64, 0], sizes = [16, 64], strides = [1, 1]} : vector<112x64xbf16> to vector<16x64xbf16>
    %291 = vector.extract_strided_slice %285 {offsets = [80, 0], sizes = [16, 64], strides = [1, 1]} : vector<112x64xbf16> to vector<16x64xbf16>
    %292 = vector.extract_strided_slice %285 {offsets = [96, 0], sizes = [16, 64], strides = [1, 1]} : vector<112x64xbf16> to vector<16x64xbf16>
    %293 = tpu.concatenate %286, %287, %288, %289, %290, %291, %292, %30 in 1 : vector<16x64xbf16>, vector<16x64xbf16>, vector<16x64xbf16>, vector<16x64xbf16>, vector<16x64xbf16>, vector<16x64xbf16>, vector<16x64xbf16>, vector<16x64xbf16> -> vector<16x512xbf16>
    %c0_247 = arith.constant 0 : index
    %c2560 = arith.constant 2560 : index
    %294 = vector.load %arg12[%c0_247, %c2560] : memref<16x3072xbf16, #tpu.memory_space<vmem>>, vector<16x512xbf16>
    tpu.vector_store %arg12[%c0_247, %c2560], %293 {strides = array<i32>} : memref<16x3072xbf16, #tpu.memory_space<vmem>>, vector<16x512xbf16>,
    %cst_248 = arith.constant 0.000000e+00 : f32
    %295 = vector.broadcast %cst_248 : f32 to vector<16x256xf32>
    %c0_249 = arith.constant 0 : index
    %c0_250 = arith.constant 0 : index
    %296 = vector.load %arg12[%c0_249, %c0_250] : memref<16x3072xbf16, #tpu.memory_space<vmem>>, vector<16x1024xbf16>
    %c0_251 = arith.constant 0 : index
    %c0_252 = arith.constant 0 : index
    %297 = vector.load %arg6[%c0_251, %c0_252] : memref<3072x256xbf16, #tpu.memory_space<vmem>>, vector<1024x256xbf16>
    %cst_253 = arith.constant dense<0.000000e+00> : vector<16x256xf32>
    %298 = tpu.matmul %296, %297, %cst_253 {dimension_numbers = #tpu.dot_dimension_numbers<[1], [0], [0], [1], [0, 0, 1, 1], [], []>} : vector<16x1024xbf16>, vector<1024x256xbf16>, vector<16x256xf32> -> vector<16x256xf32>
    %299 = arith.addf %295, %298 : vector<16x256xf32>
    %c0_254 = arith.constant 0 : index
    %c1024_255 = arith.constant 1024 : index
    %300 = vector.load %arg12[%c0_254, %c1024_255] : memref<16x3072xbf16, #tpu.memory_space<vmem>>, vector<16x1024xbf16>
    %c1024_256 = arith.constant 1024 : index
    %c0_257 = arith.constant 0 : index
    %301 = vector.load %arg6[%c1024_256, %c0_257] : memref<3072x256xbf16, #tpu.memory_space<vmem>>, vector<1024x256xbf16>
    %cst_258 = arith.constant dense<0.000000e+00> : vector<16x256xf32>
    %302 = tpu.matmul %300, %301, %cst_258 {dimension_numbers = #tpu.dot_dimension_numbers<[1], [0], [0], [1], [0, 0, 1, 1], [], []>} : vector<16x1024xbf16>, vector<1024x256xbf16>, vector<16x256xf32> -> vector<16x256xf32>
    %303 = arith.addf %299, %302 : vector<16x256xf32>
    %c0_259 = arith.constant 0 : index
    %c2048_260 = arith.constant 2048 : index
    %304 = vector.load %arg12[%c0_259, %c2048_260] : memref<16x3072xbf16, #tpu.memory_space<vmem>>, vector<16x1024xbf16>
    %c2048_261 = arith.constant 2048 : index
    %c0_262 = arith.constant 0 : index
    %305 = vector.load %arg6[%c2048_261, %c0_262] : memref<3072x256xbf16, #tpu.memory_space<vmem>>, vector<1024x256xbf16>
    %cst_263 = arith.constant dense<0.000000e+00> : vector<16x256xf32>
    %306 = tpu.matmul %304, %305, %cst_263 {dimension_numbers = #tpu.dot_dimension_numbers<[1], [0], [0], [1], [0, 0, 1, 1], [], []>} : vector<16x1024xbf16>, vector<1024x256xbf16>, vector<16x256xf32> -> vector<16x256xf32>
    %307 = arith.addf %303, %306 : vector<16x256xf32>
    %c0_264 = arith.constant 0 : index
    %c0_265 = arith.constant 0 : index
    %308 = vector.load %arg7[%c0_264, %c0_265] : memref<1x256xf32, #tpu.memory_space<vmem>>, vector<1x256xf32>
    %309 = vector.broadcast %308 : vector<1x256xf32> to vector<16x256xf32>
    %310 = arith.addf %307, %309 : vector<16x256xf32>
    %cst_266 = arith.constant 0.000000e+00 : f32
    %311 = vector.broadcast %cst_266 : f32 to vector<16x256xf32>
    %312 = arith.maximumf %310, %311 : vector<16x256xf32>
    %313 = arith.truncf %312 : vector<16x256xf32> to vector<16x256xbf16>
    %c0_267 = arith.constant 0 : index
    %c0_268 = arith.constant 0 : index
    %314 = vector.load %arg8[%c0_267, %c0_268] : memref<256x128xbf16, #tpu.memory_space<vmem>>, vector<256x128xbf16>
    %cst_269 = arith.constant dense<0.000000e+00> : vector<16x128xf32>
    %315 = tpu.matmul %313, %314, %cst_269 {dimension_numbers = #tpu.dot_dimension_numbers<[1], [0], [0], [1], [0, 0, 1, 1], [], []>} : vector<16x256xbf16>, vector<256x128xbf16>, vector<16x128xf32> -> vector<16x128xf32>
    %c0_270 = arith.constant 0 : index
    %c0_271 = arith.constant 0 : index
    %316 = vector.load %arg9[%c0_270, %c0_271] : memref<1x128xf32, #tpu.memory_space<vmem>>, vector<1x128xf32>
    %317 = vector.broadcast %316 : vector<1x128xf32> to vector<16x128xf32>
    %318 = arith.addf %315, %317 : vector<16x128xf32>
    %c0_272 = arith.constant 0 : index
    %c0_273 = arith.constant 0 : index
    %319 = vector.load %arg10[%c0_272, %c0_273] : memref<16x128xf32, #tpu.memory_space<vmem>>, vector<16x128xf32>
    tpu.vector_store %arg10[%c0_272, %c0_273], %318 {strides = array<i32>} : memref<16x128xf32, #tpu.memory_space<vmem>>, vector<16x128xf32>,
    return
  }
  func.func @transform_0(%arg0: i32) -> (i32, i32) {
    %c0_i32 = arith.constant 0 : i32
    %c0_i32_0 = arith.constant 0 : i32
    return %arg0, %c0_i32 : i32, i32
  }
  func.func @transform_1(%arg0: i32) -> (i32, i32) {
    %c0_i32 = arith.constant 0 : i32
    %c0_i32_0 = arith.constant 0 : i32
    %c0_i32_1 = arith.constant 0 : i32
    return %c0_i32, %c0_i32_0 : i32, i32
  }
  func.func @transform_2(%arg0: i32) -> (i32, i32) {
    %c0_i32 = arith.constant 0 : i32
    %c0_i32_0 = arith.constant 0 : i32
    %c0_i32_1 = arith.constant 0 : i32
    return %c0_i32, %c0_i32_0 : i32, i32
  }
  func.func @transform_3(%arg0: i32) -> (i32, i32) {
    %c0_i32 = arith.constant 0 : i32
    %c0_i32_0 = arith.constant 0 : i32
    %c0_i32_1 = arith.constant 0 : i32
    return %c0_i32, %c0_i32_0 : i32, i32
  }
  func.func @transform_4(%arg0: i32) -> (i32, i32) {
    %c0_i32 = arith.constant 0 : i32
    %c0_i32_0 = arith.constant 0 : i32
    %c0_i32_1 = arith.constant 0 : i32
    return %c0_i32, %c0_i32_0 : i32, i32
  }
  func.func @transform_5(%arg0: i32) -> (i32, i32) {
    %c0_i32 = arith.constant 0 : i32
    %c0_i32_0 = arith.constant 0 : i32
    %c0_i32_1 = arith.constant 0 : i32
    return %c0_i32, %c0_i32_0 : i32, i32
  }
  func.func @transform_6(%arg0: i32) -> (i32, i32) {
    %c0_i32 = arith.constant 0 : i32
    %c0_i32_0 = arith.constant 0 : i32
    %c0_i32_1 = arith.constant 0 : i32
    return %c0_i32, %c0_i32_0 : i32, i32
  }
  func.func @transform_7(%arg0: i32) -> (i32, i32) {
    %c0_i32 = arith.constant 0 : i32
    %c0_i32_0 = arith.constant 0 : i32
    %c0_i32_1 = arith.constant 0 : i32
    return %c0_i32, %c0_i32_0 : i32, i32
  }
  func.func @transform_8(%arg0: i32) -> (i32, i32) {
    %c0_i32 = arith.constant 0 : i32
    %c0_i32_0 = arith.constant 0 : i32
    %c0_i32_1 = arith.constant 0 : i32
    return %c0_i32, %c0_i32_0 : i32, i32
  }
  func.func @transform_9(%arg0: i32) -> (i32, i32) {
    %c0_i32 = arith.constant 0 : i32
    %c0_i32_0 = arith.constant 0 : i32
    return %arg0, %c0_i32 : i32, i32
  }
}

</mosaic_0001>

<llo_original>
// kernel: _lambda_.1
$region0: #{_lambda_.1}
  #allocation0 [shape = 'u32[]', space=smem, size = 0x4, offset = 0x4, fixed_abs, tag = 'smem constant byte address 0x4 - core index']
  #allocation1 [shape = 'u32[144,128]{1,0:T(1,128)}', space=vmem, size = 0x12000, scoped, tag = 'internal scratch']
  #allocation2 [shape = 'bf16[16,2304]{1,0:T(16,128)(2,1)}', space=vmem, size = 0x12000, scoped, tag = 'scratch operand']
  #allocation3 [shape = 'bf16[16,3072]{1,0:T(16,128)(2,1)}', space=vmem, size = 0x18000, scoped, tag = 'scratch operand']
  %s0 = inlined_call_operand.vmem [shape: f32[16,48], index: 0, kind: input, shape index: {}]
  %s1 = inlined_call_operand.hbm [shape: f32[48,2304], index: 1, kind: input, shape index: {}]
  %s2 = inlined_call_operand.hbm [shape: f32[1,2304], index: 2, kind: input, shape index: {}]
  %s3 = inlined_call_operand.vmem [shape: bf16[288,64], index: 3, kind: input, shape index: {}]
  %s4 = inlined_call_operand.hbm [shape: f32[1,64], index: 4, kind: input, shape index: {}]
  %s5 = inlined_call_operand.hbm [shape: bf16[3072,256], index: 5, kind: input, shape index: {}]
  %s6 = inlined_call_operand.hbm [shape: f32[1,256], index: 6, kind: input, shape index: {}]
  %s7 = inlined_call_operand.hbm [shape: bf16[256,128], index: 7, kind: input, shape index: {}]
  %s8 = inlined_call_operand.hbm [shape: f32[1,128], index: 8, kind: input, shape index: {}]
  %s9 = inlined_call_operand.vmem [shape: f32[16,128], index: 9, kind: output, shape index: {}]
  %s10 = sld [smem:[#allocation0]]
  $region74: #{_lambda_.1} parent=0
    _
  %s12 = ssub.s32 1, %s10
  %s13 = scalar_select 0, %s12, %s10
  $region1: #{_lambda_.1} parent=0
    #allocation4 [shape = 'u8[442368]{0}', space=vmem, size = 0x6c000, scoped, tag = 'input window, operand 1, single buffered']
    #allocation5 [shape = 's32[1]{0}', space=sflag, size = 0x4, scoped, tag = 'scoped memory for _lambda_.1']
    #allocation6 [shape = 'u8[9216]{0}', space=vmem, size = 0x2400, scoped, tag = 'input window, operand 2, single buffered']
    #allocation7 [shape = 's32[1]{0}', space=sflag, size = 0x4, scoped, tag = 'scoped memory for _lambda_.1']
    #allocation8 [shape = 'u8[512]{0}', space=vmem, size = 0x400, scoped, tag = 'input window, operand 4, single buffered']
    #allocation9 [shape = 'u8[1572864]{0}', space=vmem, size = 0x180000, scoped, tag = 'input window, operand 5, single buffered']
    #allocation10 [shape = 's32[1]{0}', space=sflag, size = 0x4, scoped, tag = 'scoped memory for _lambda_.1']
    #allocation11 [shape = 'u8[1024]{0}', space=vmem, size = 0x400, scoped, tag = 'input window, operand 6, single buffered']
    #allocation12 [shape = 'u8[65536]{0}', space=vmem, size = 0x10000, scoped, tag = 'input window, operand 7, single buffered']
    #allocation13 [shape = 's32[1]{0}', space=sflag, size = 0x4, scoped, tag = 'scoped memory for _lambda_.1']
    #allocation14 [shape = 'u8[512]{0}', space=vmem, size = 0x400, scoped, tag = 'input window, operand 8, single buffered']
    %14 = vsyncpa [#allocation5], 0
    %15 = vsyncpa [#allocation7], 0
    %16 = vsyncpa [#allocation10], 0
    %17 = vsyncpa [#allocation13], 0
    // Predicated region
    $region2: #{_lambda_.1} parent=1 // pred_check
      _
    $region3: #{_lambda_.1} parent=1 // pred_check_branch
      %19 = sbr.rel (0) target = $region5
    $region4: #{_lambda_.1} parent=1 // pred_region
      _
    $region5: #{_lambda_.1} parent=1 // pred_fallthru
      _
    // Predicated region
    $region6: #{_lambda_.1} parent=1 // pred_check
      _
    $region7: #{_lambda_.1} parent=1 // pred_check_branch
      %21 = sbr.rel (0) target = $region9
    $region8: #{_lambda_.1} parent=1 // pred_region
      %s23 = ssub.s32 13824, 13824
      %24 = vsyncadd [#allocation5], %s23
      %s25 = sshll.u32 [#allocation4], 4
      %s26 = int_to_ptr.vmem [resolvable:$true] %s25
      %31 = dma.hbm_to_vmem [thread:$0]  %s1, 13824, %s26, [#allocation5], 2304, 2304, 144
    $region9: #{_lambda_.1} parent=1 // pred_fallthru
      _
    // Predicated region
    $region10: #{_lambda_.1} parent=1 // pred_check
      _
    $region11: #{_lambda_.1} parent=1 // pred_check_branch
      %33 = sbr.rel (0) target = $region13
    $region12: #{_lambda_.1} parent=1 // pred_region
      %s35 = ssub.s32 288, 288
      %36 = vsyncadd [#allocation7], %s35
      %s38 = sshll.u32 [#allocation6], 4
      %s39 = int_to_ptr.vmem [resolvable:$true] %s38
      %41 = dma.hbm_to_vmem [thread:$0]  %s2, 288, %s39, [#allocation7]
    $region13: #{_lambda_.1} parent=1 // pred_fallthru
      _
    // Predicated region
    $region14: #{_lambda_.1} parent=1 // pred_check
      _
    $region15: #{_lambda_.1} parent=1 // pred_check_branch
      %43 = sbr.rel (0) target = $region17
    $region16: #{_lambda_.1} parent=1 // pred_region
      _
    $region17: #{_lambda_.1} parent=1 // pred_fallthru
      _
    // Predicated region
    $region18: #{_lambda_.1} parent=1 // pred_check
      _
    $region19: #{_lambda_.1} parent=1 // pred_check_branch
      %45 = sbr.rel (0) target = $region21
    $region20: #{_lambda_.1} parent=1 // pred_region
      %s47 = ssub.s32 16, 16
      %48 = vsyncadd [#allocation7], %s47
      %s50 = sshll.u32 [#allocation8], 4
      %s51 = int_to_ptr.vmem [resolvable:$true] %s50
      %53 = dma.hbm_to_vmem [thread:$0]  %s4, 16, %s51, [#allocation7]
    $region21: #{_lambda_.1} parent=1 // pred_fallthru
      _
    // Predicated region
    $region22: #{_lambda_.1} parent=1 // pred_check
      _
    $region23: #{_lambda_.1} parent=1 // pred_check_branch
      %55 = sbr.rel (0) target = $region25
    $region24: #{_lambda_.1} parent=1 // pred_region
      %s57 = ssub.s32 49152, 49152
      %58 = vsyncadd [#allocation10], %s57
      %s59 = sshll.u32 [#allocation9], 4
      %s60 = int_to_ptr.vmem [resolvable:$true] %s59
      %65 = dma.hbm_to_vmem [thread:$0]  %s5, 49152, %s60, [#allocation10], 128, 128, 8
    $region25: #{_lambda_.1} parent=1 // pred_fallthru
      _
    // Predicated region
    $region26: #{_lambda_.1} parent=1 // pred_check
      _
    $region27: #{_lambda_.1} parent=1 // pred_check_branch
      %67 = sbr.rel (0) target = $region29
    $region28: #{_lambda_.1} parent=1 // pred_region
      %s69 = ssub.s32 32, 32
      %70 = vsyncadd [#allocation10], %s69
      %s72 = sshll.u32 [#allocation11], 4
      %s73 = int_to_ptr.vmem [resolvable:$true] %s72
      %75 = dma.hbm_to_vmem [thread:$0]  %s6, 32, %s73, [#allocation10]
    $region29: #{_lambda_.1} parent=1 // pred_fallthru
      _
    // Predicated region
    $region30: #{_lambda_.1} parent=1 // pred_check
      _
    $region31: #{_lambda_.1} parent=1 // pred_check_branch
      %77 = sbr.rel (0) target = $region33
    $region32: #{_lambda_.1} parent=1 // pred_region
      %s79 = ssub.s32 2048, 2048
      %80 = vsyncadd [#allocation13], %s79
      %s81 = sshll.u32 [#allocation12], 4
      %s82 = int_to_ptr.vmem [resolvable:$true] %s81
      %87 = dma.hbm_to_vmem [thread:$0]  %s7, 2048, %s82, [#allocation13], 64, 64, 4
    $region33: #{_lambda_.1} parent=1 // pred_fallthru
      _
    // Predicated region
    $region34: #{_lambda_.1} parent=1 // pred_check
      _
    $region35: #{_lambda_.1} parent=1 // pred_check_branch
      %89 = sbr.rel (0) target = $region37
    $region36: #{_lambda_.1} parent=1 // pred_region
      %s91 = ssub.s32 16, 16
      %92 = vsyncadd [#allocation13], %s91
      %s94 = sshll.u32 [#allocation14], 4
      %s95 = int_to_ptr.vmem [resolvable:$true] %s94
      %97 = dma.hbm_to_vmem [thread:$0]  %s8, 16, %s95, [#allocation13]
    $region37: #{_lambda_.1} parent=1 // pred_fallthru
      _
    // Predicated region
    $region38: #{_lambda_.1} parent=1 // pred_check
      _
    $region39: #{_lambda_.1} parent=1 // pred_check_branch
      %99 = sbr.rel (0) target = $region41
    $region40: #{_lambda_.1} parent=1 // pred_region
      %100 = dma.done [#allocation5], 13824
    $region41: #{_lambda_.1} parent=1 // pred_fallthru
      _
    // Predicated region
    $region42: #{_lambda_.1} parent=1 // pred_check
      _
    $region43: #{_lambda_.1} parent=1 // pred_check_branch
      %102 = sbr.rel (0) target = $region45
    $region44: #{_lambda_.1} parent=1 // pred_region
      %103 = dma.done [#allocation7], 288
    $region45: #{_lambda_.1} parent=1 // pred_fallthru
      _
    // Predicated region
    $region46: #{_lambda_.1} parent=1 // pred_check
      _
    $region47: #{_lambda_.1} parent=1 // pred_check_branch
      %105 = sbr.rel (0) target = $region49
    $region48: #{_lambda_.1} parent=1 // pred_region
      %106 = dma.done [#allocation7], 16
    $region49: #{_lambda_.1} parent=1 // pred_fallthru
      _
    // Predicated region
    $region50: #{_lambda_.1} parent=1 // pred_check
      _
    $region51: #{_lambda_.1} parent=1 // pred_check_branch
      %108 = sbr.rel (0) target = $region53
    $region52: #{_lambda_.1} parent=1 // pred_region
      %109 = dma.done [#allocation10], 49152
    $region53: #{_lambda_.1} parent=1 // pred_fallthru
      _
    // Predicated region
    $region54: #{_lambda_.1} parent=1 // pred_check
      _
    $region55: #{_lambda_.1} parent=1 // pred_check_branch
      %111 = sbr.rel (0) target = $region57
    $region56: #{_lambda_.1} parent=1 // pred_region
      %112 = dma.done [#allocation10], 32
    $region57: #{_lambda_.1} parent=1 // pred_fallthru
      _
    // Predicated region
    $region58: #{_lambda_.1} parent=1 // pred_check
      _
    $region59: #{_lambda_.1} parent=1 // pred_check_branch
      %114 = sbr.rel (0) target = $region61
    $region60: #{_lambda_.1} parent=1 // pred_region
      %115 = dma.done [#allocation13], 2048
    $region61: #{_lambda_.1} parent=1 // pred_fallthru
      _
    // Predicated region
    $region62: #{_lambda_.1} parent=1 // pred_check
      _
    $region63: #{_lambda_.1} parent=1 // pred_check_branch
      %117 = sbr.rel (0) target = $region65
    $region64: #{_lambda_.1} parent=1 // pred_region
      %118 = dma.done [#allocation13], 16
    $region65: #{_lambda_.1} parent=1 // pred_fallthru
      _
    %v120 = vld [vmem:[%s0] sm:$0xff]
    %v121 = vld [vmem:[%s0 + $0x8] sm:$0xff]
    %v122 = vld [vmem:[#allocation4] sm:$0xff]
    %v123 = vld [vmem:[#allocation4 + $0x8] sm:$0xff]
    %v124 = vld [vmem:[#allocation4 + $0x10] sm:$0xff]
    %v125 = vld [vmem:[#allocation4 + $0x18] sm:$0xff]
    %v126 = vld [vmem:[#allocation4 + $0x20] sm:$0xff]
    %v127 = vld [vmem:[#allocation4 + $0x28] sm:$0xff]
    %v128 = vld [vmem:[#allocation4 + $0x90] sm:$0xff]
    %v129 = vld [vmem:[#allocation4 + $0x98] sm:$0xff]
    %v130 = vld [vmem:[#allocation4 + $0xa0] sm:$0xff]
    %v131 = vld [vmem:[#allocation4 + $0xa8] sm:$0xff]
    %v132 = vld [vmem:[#allocation4 + $0xb0] sm:$0xff]
    %v133 = vld [vmem:[#allocation4 + $0xb8] sm:$0xff]
    %v134 = vld [vmem:[#allocation4 + $0x120] sm:$0xff]
    %v135 = vld [vmem:[#allocation4 + $0x128] sm:$0xff]
    %v136 = vld [vmem:[#allocation4 + $0x130] sm:$0xff]
    %v137 = vld [vmem:[#allocation4 + $0x138] sm:$0xff]
    %v138 = vld [vmem:[#allocation4 + $0x140] sm:$0xff]
    %v139 = vld [vmem:[#allocation4 + $0x148] sm:$0xff]
    %v140 = vld [vmem:[#allocation4 + $0x1b0] sm:$0xff]
    %v141 = vld [vmem:[#allocation4 + $0x1b8] sm:$0xff]
    %v142 = vld [vmem:[#allocation4 + $0x1c0] sm:$0xff]
    %v143 = vld [vmem:[#allocation4 + $0x1c8] sm:$0xff]
    %v144 = vld [vmem:[#allocation4 + $0x1d0] sm:$0xff]
    %v145 = vld [vmem:[#allocation4 + $0x1d8] sm:$0xff]
    %v146 = vld [vmem:[#allocation4 + $0x240] sm:$0xff]
    %v147 = vld [vmem:[#allocation4 + $0x248] sm:$0xff]
    %v148 = vld [vmem:[#allocation4 + $0x250] sm:$0xff]
    %v149 = vld [vmem:[#allocation4 + $0x258] sm:$0xff]
    %v150 = vld [vmem:[#allocation4 + $0x260] sm:$0xff]
    %v151 = vld [vmem:[#allocation4 + $0x268] sm:$0xff]
    %v152 = vld [vmem:[#allocation4 + $0x2d0] sm:$0xff]
    %v153 = vld [vmem:[#allocation4 + $0x2d8] sm:$0xff]
    %v154 = vld [vmem:[#allocation4 + $0x2e0] sm:$0xff]
    %v155 = vld [vmem:[#allocation4 + $0x2e8] sm:$0xff]
    %v156 = vld [vmem:[#allocation4 + $0x2f0] sm:$0xff]
    %v157 = vld [vmem:[#allocation4 + $0x2f8] sm:$0xff]
    %v158 = vld [vmem:[#allocation6] sm:$0x3f]
    %v160 = vlaneseq
    %v161 = vshrl.u32 %v160, 7
    %v162 = vsub.s32 0, %v161
    %v163 = vrot.slane %v158, %v162
    %v164 = vlaneseq
    %v165 = vshrl.u32 %v164, 7
    %v166 = vsub.s32 1, %v165
    %v167 = vrot.slane %v158, %v166
    %v168 = vlaneseq
    %v169 = vshrl.u32 %v168, 7
    %v170 = vsub.s32 2, %v169
    %v171 = vrot.slane %v158, %v170
    %v172 = vlaneseq
    %v173 = vshrl.u32 %v172, 7
    %v174 = vsub.s32 3, %v173
    %v175 = vrot.slane %v158, %v174
    %v176 = vlaneseq
    %v177 = vshrl.u32 %v176, 7
    %v178 = vsub.s32 4, %v177
    %v179 = vrot.slane %v158, %v178
    %v180 = vlaneseq
    %v181 = vshrl.u32 %v180, 7
    %v182 = vsub.s32 5, %v181
    %v183 = vrot.slane %v158, %v182
    %vm190 = vcmask 392192
    %v192 = vsel %vm190, %v120, 0
    %v195 = vsel %vm190, %v121, 0
    %197 = vmatprep.subr.mxu0 %v123
    %198 = vmatpush1.msra.mxu0 %v122
    %199 = vmatprep.subr.mxu0 %v129
    %200 = vmatpush1.msra.mxu0 %v128
    %201 = vmatprep.subr.mxu0 %v135
    %202 = vmatpush1.msra.mxu0 %v134
    %203 = vmatprep.subr.mxu0 %v141
    %204 = vmatpush1.msra.mxu0 %v140
    %205 = vmatprep.subr.mxu0 %v147
    %206 = vmatpush1.msra.mxu0 %v146
    %207 = vmatprep.subr.mxu0 %v153
    %208 = vmatpush1.msra.mxu0 %v152
    %209 = vmatprep.subr.mxu0 0.0
    %210 = vmatpush1.msra.mxu0 0.0
    %211 = vmatprep.subr.mxu0 0.0
    %212 = vmatpush1.msra.mxu0 0.0
    %213 = vmatprep.subr.mxu0 0.0
    %214 = vmatpush1.msra.mxu0 0.0
    %215 = vmatprep.subr.mxu0 0.0
    %216 = vmatpush1.msra.mxu0 0.0
    %217 = vmatprep.subr.mxu0 0.0
    %218 = vmatpush1.msra.mxu0 0.0
    %219 = vmatprep.subr.mxu0 0.0
    %220 = vmatpush1.msra.mxu0 0.0
    %221 = vmatprep.subr.mxu0 0.0
    %222 = vmatpush1.msra.mxu0 0.0
    %223 = vmatprep.subr.mxu0 0.0
    %224 = vmatpush1.msra.mxu0 0.0
    %225 = vmatprep.subr.mxu0 0.0
    %226 = vmatpush1.msra.mxu0 0.0
    %227 = vmatprep.subr.mxu0 0.0
    %228 = vmatpush1.msra.mxu0 0.0
    %229 = vmatprep.subr.mxu0 0.0
    %230 = vmatpush1.msra.mxu0 0.0
    %231 = vmatprep.subr.mxu0 0.0
    %232 = vmatpush1.msra.mxu0 0.0
    %233 = vmatprep.subr.mxu0 0.0
    %234 = vmatpush1.msra.mxu0 0.0
    %235 = vmatprep.subr.mxu0 0.0
    %236 = vmatpush1.msra.mxu0 0.0
    %237 = vmatprep.subr.mxu0 0.0
    %238 = vmatpush1.msra.mxu0 0.0
    %239 = vmatprep.subr.mxu0 0.0
    %240 = vmatpush1.msra.mxu0 0.0
    %241 = vmatprep.subr.mxu0 0.0
    %242 = vmatpush1.msra.mxu0 0.0
    %243 = vmatprep.subr.mxu0 0.0
    %244 = vmatpush1.msra.mxu0 0.0
    %245 = vmatprep.subr.mxu0 0.0
    %246 = vmatpush1.msra.mxu0 0.0
    %247 = vmatprep.subr.mxu0 0.0
    %248 = vmatpush1.msra.mxu0 0.0
    %249 = vmatprep.subr.mxu0 0.0
    %250 = vmatpush1.msra.mxu0 0.0
    %251 = vmatprep.subr.mxu0 0.0
    %252 = vmatpush1.msra.mxu0 0.0
    %253 = vmatprep.subr.mxu0 0.0
    %254 = vmatpush1.msra.mxu0 0.0
    %255 = vmatprep.subr.mxu0 0.0
    %256 = vmatpush1.msra.mxu0 0.0
    %257 = vmatprep.subr.mxu0 0.0
    %258 = vmatpush1.msra.mxu0 0.0
    %259 = vmatprep.subr.mxu0 0.0
    %260 = vmatpush1.msra.mxu0 0.0
    %261 = vmatprep.mubr.f32.mxu0 0.0
    %262 = vmatmul.mubr.f32.gmra.mrb[0].mxu0 %v192
    %v263 = vpop.f32.mrb[0].mxu0
    %v264 = vadd.f32 %v163, %v263
    %v265 = vpop.f32.mrb[0].mxu0
    %v266 = vadd.f32 %v167, %v265
    %267 = vmatprep.mubr.f32.mxu0 0.0
    %268 = vmatmul.mubr.f32.gmra.mrb[0].mxu0 %v195
    %v269 = vpop.f32.mrb[0].mxu0
    %v270 = vadd.f32 %v163, %v269
    %v271 = vpop.f32.mrb[0].mxu0
    %v272 = vadd.f32 %v167, %v271
    %273 = vdwg.mxu0
    %274 = vmatprep.subr.mxu0 %v125
    %275 = vmatpush1.msra.mxu0 %v124
    %276 = vmatprep.subr.mxu0 %v131
    %277 = vmatpush1.msra.mxu0 %v130
    %278 = vmatprep.subr.mxu0 %v137
    %279 = vmatpush1.msra.mxu0 %v136
    %280 = vmatprep.subr.mxu0 %v143
    %281 = vmatpush1.msra.mxu0 %v142
    %282 = vmatprep.subr.mxu0 %v149
    %283 = vmatpush1.msra.mxu0 %v148
    %284 = vmatprep.subr.mxu0 %v155
    %285 = vmatpush1.msra.mxu0 %v154
    %286 = vmatprep.subr.mxu0 0.0
    %287 = vmatpush1.msra.mxu0 0.0
    %288 = vmatprep.subr.mxu0 0.0
    %289 = vmatpush1.msra.mxu0 0.0
    %290 = vmatprep.subr.mxu0 0.0
    %291 = vmatpush1.msra.mxu0 0.0
    %292 = vmatprep.subr.mxu0 0.0
    %293 = vmatpush1.msra.mxu0 0.0
    %294 = vmatprep.subr.mxu0 0.0
    %295 = vmatpush1.msra.mxu0 0.0
    %296 = vmatprep.subr.mxu0 0.0
    %297 = vmatpush1.msra.mxu0 0.0
    %298 = vmatprep.subr.mxu0 0.0
    %299 = vmatpush1.msra.mxu0 0.0
    %300 = vmatprep.subr.mxu0 0.0
    %301 = vmatpush1.msra.mxu0 0.0
    %302 = vmatprep.subr.mxu0 0.0
    %303 = vmatpush1.msra.mxu0 0.0
    %304 = vmatprep.subr.mxu0 0.0
    %305 = vmatpush1.msra.mxu0 0.0
    %306 = vmatprep.subr.mxu0 0.0
    %307 = vmatpush1.msra.mxu0 0.0
    %308 = vmatprep.subr.mxu0 0.0
    %309 = vmatpush1.msra.mxu0 0.0
    %310 = vmatprep.subr.mxu0 0.0
    %311 = vmatpush1.msra.mxu0 0.0
    %312 = vmatprep.subr.mxu0 0.0
    %313 = vmatpush1.msra.mxu0 0.0
    %314 = vmatprep.subr.mxu0 0.0
    %315 = vmatpush1.msra.mxu0 0.0
    %316 = vmatprep.subr.mxu0 0.0
    %317 = vmatpush1.msra.mxu0 0.0
    %318 = vmatprep.subr.mxu0 0.0
    %319 = vmatpush1.msra.mxu0 0.0
    %320 = vmatprep.subr.mxu0 0.0
    %321 = vmatpush1.msra.mxu0 0.0
    %322 = vmatprep.subr.mxu0 0.0
    %323 = vmatpush1.msra.mxu0 0.0
    %324 = vmatprep.subr.mxu0 0.0
    %325 = vmatpush1.msra.mxu0 0.0
    %326 = vmatprep.subr.mxu0 0.0
    %327 = vmatpush1.msra.mxu0 0.0
    %328 = vmatprep.subr.mxu0 0.0
    %329 = vmatpush1.msra.mxu0 0.0
    %330 = vmatprep.subr.mxu0 0.0
    %331 = vmatpush1.msra.mxu0 0.0
    %332 = vmatprep.subr.mxu0 0.0
    %333 = vmatpush1.msra.mxu0 0.0
    %334 = vmatprep.subr.mxu0 0.0
    %335 = vmatpush1.msra.mxu0 0.0
    %336 = vmatprep.subr.mxu0 0.0
    %337 = vmatpush1.msra.mxu0 0.0
    %338 = vmatprep.mubr.f32.mxu0 0.0
    %339 = vmatmul.mubr.f32.gmra.mrb[0].mxu0 %v192
    %v340 = vpop.f32.mrb[0].mxu0
    %v341 = vadd.f32 %v171, %v340
    %v342 = vpop.f32.mrb[0].mxu0
    %v343 = vadd.f32 %v175, %v342
    %344 = vmatprep.mubr.f32.mxu0 0.0
    %345 = vmatmul.mubr.f32.gmra.mrb[0].mxu0 %v195
    %v346 = vpop.f32.mrb[0].mxu0
    %v347 = vadd.f32 %v171, %v346
    %v348 = vpop.f32.mrb[0].mxu0
    %v349 = vadd.f32 %v175, %v348
    %350 = vdwg.mxu0
    %351 = vmatprep.subr.mxu0 %v127
    %352 = vmatpush1.msra.mxu0 %v126
    %353 = vmatprep.subr.mxu0 %v133
    %354 = vmatpush1.msra.mxu0 %v132
    %355 = vmatprep.subr.mxu0 %v139
    %356 = vmatpush1.msra.mxu0 %v138
    %357 = vmatprep.subr.mxu0 %v145
    %358 = vmatpush1.msra.mxu0 %v144
    %359 = vmatprep.subr.mxu0 %v151
    %360 = vmatpush1.msra.mxu0 %v150
    %361 = vmatprep.subr.mxu0 %v157
    %362 = vmatpush1.msra.mxu0 %v156
    %363 = vmatprep.subr.mxu0 0.0
    %364 = vmatpush1.msra.mxu0 0.0
    %365 = vmatprep.subr.mxu0 0.0
    %366 = vmatpush1.msra.mxu0 0.0
    %367 = vmatprep.subr.mxu0 0.0
    %368 = vmatpush1.msra.mxu0 0.0
    %369 = vmatprep.subr.mxu0 0.0
    %370 = vmatpush1.msra.mxu0 0.0
    %371 = vmatprep.subr.mxu0 0.0
    %372 = vmatpush1.msra.mxu0 0.0
    %373 = vmatprep.subr.mxu0 0.0
    %374 = vmatpush1.msra.mxu0 0.0
    %375 = vmatprep.subr.mxu0 0.0
    %376 = vmatpush1.msra.mxu0 0.0
    %377 = vmatprep.subr.mxu0 0.0
    %378 = vmatpush1.msra.mxu0 0.0
    %379 = vmatprep.subr.mxu0 0.0
    %380 = vmatpush1.msra.mxu0 0.0
    %381 = vmatprep.subr.mxu0 0.0
    %382 = vmatpush1.msra.mxu0 0.0
    %383 = vmatprep.subr.mxu0 0.0
    %384 = vmatpush1.msra.mxu0 0.0
    %385 = vmatprep.subr.mxu0 0.0
    %386 = vmatpush1.msra.mxu0 0.0
    %387 = vmatprep.subr.mxu0 0.0
    %388 = vmatpush1.msra.mxu0 0.0
    %389 = vmatprep.subr.mxu0 0.0
    %390 = vmatpush1.msra.mxu0 0.0
    %391 = vmatprep.subr.mxu0 0.0
    %392 = vmatpush1.msra.mxu0 0.0
    %393 = vmatprep.subr.mxu0 0.0
    %394 = vmatpush1.msra.mxu0 0.0
    %395 = vmatprep.subr.mxu0 0.0
    %396 = vmatpush1.msra.mxu0 0.0
    %397 = vmatprep.subr.mxu0 0.0
    %398 = vmatpush1.msra.mxu0 0.0
    %399 = vmatprep.subr.mxu0 0.0
    %400 = vmatpush1.msra.mxu0 0.0
    %401 = vmatprep.subr.mxu0 0.0
    %402 = vmatpush1.msra.mxu0 0.0
    %403 = vmatprep.subr.mxu0 0.0
    %404 = vmatpush1.msra.mxu0 0.0
    %405 = vmatprep.subr.mxu0 0.0
    %406 = vmatpush1.msra.mxu0 0.0
    %407 = vmatprep.subr.mxu0 0.0
    %408 = vmatpush1.msra.mxu0 0.0
    %409 = vmatprep.subr.mxu0 0.0
    %410 = vmatpush1.msra.mxu0 0.0
    %411 = vmatprep.subr.mxu0 0.0
    %412 = vmatpush1.msra.mxu0 0.0
    %413 = vmatprep.subr.mxu0 0.0
    %414 = vmatpush1.msra.mxu0 0.0
    %415 = vmatprep.mubr.f32.mxu0 0.0
    %416 = vmatmul.mubr.f32.gmra.mrb[0].mxu0 %v192
    %v417 = vpop.f32.mrb[0].mxu0
    %v418 = vadd.f32 %v179, %v417
    %v419 = vpop.f32.mrb[0].mxu0
    %v420 = vadd.f32 %v183, %v419
    %421 = vmatprep.mubr.f32.mxu0 0.0
    %422 = vmatmul.mubr.f32.gmra.mrb[0].mxu0 %v195
    %v423 = vpop.f32.mrb[0].mxu0
    %v424 = vadd.f32 %v179, %v423
    %v425 = vpop.f32.mrb[0].mxu0
    %v426 = vadd.f32 %v183, %v425
    %427 = vdwg.mxu0
    %v428 = vmax.f32 %v264, 0.0
    %v429 = vmax.f32 %v266, 0.0
    %v430 = vmax.f32 %v341, 0.0
    %v431 = vmax.f32 %v343, 0.0
    %v432 = vmax.f32 %v418, 0.0
    %v433 = vmax.f32 %v420, 0.0
    %v434 = vmax.f32 %v270, 0.0
    %v435 = vmax.f32 %v272, 0.0
    %v436 = vmax.f32 %v347, 0.0
    %v437 = vmax.f32 %v349, 0.0
    %v438 = vmax.f32 %v424, 0.0
    %v439 = vmax.f32 %v426, 0.0
    %v440 = vpack.c.bf16 %v434, %v428
    %v441 = vpack.c.bf16 %v435, %v429
    %v442 = vpack.c.bf16 %v436, %v430
    %v443 = vpack.c.bf16 %v437, %v431
    %v444 = vpack.c.bf16 %v438, %v432
    %v445 = vpack.c.bf16 %v439, %v433
    %446 = vst [vmem:[#allocation2] sm:$0xff] %v440
    %447 = vst [vmem:[#allocation2 + $0x8] sm:$0xff] %v441
    %448 = vst [vmem:[#allocation2 + $0x10] sm:$0xff] %v442
    %449 = vst [vmem:[#allocation2 + $0x18] sm:$0xff] %v443
    %450 = vst [vmem:[#allocation2 + $0x20] sm:$0xff] %v444
    %451 = vst [vmem:[#allocation2 + $0x28] sm:$0xff] %v445
    %v452 = vld [vmem:[#allocation4 + $0x30] sm:$0xff]
    %v453 = vld [vmem:[#allocation4 + $0x38] sm:$0xff]
    %v454 = vld [vmem:[#allocation4 + $0x40] sm:$0xff]
    %v455 = vld [vmem:[#allocation4 + $0x48] sm:$0xff]
    %v456 = vld [vmem:[#allocation4 + $0x50] sm:$0xff]
    %v457 = vld [vmem:[#allocation4 + $0x58] sm:$0xff]
    %v458 = vld [vmem:[#allocation4 + $0xc0] sm:$0xff]
    %v459 = vld [vmem:[#allocation4 + $0xc8] sm:$0xff]
    %v460 = vld [vmem:[#allocation4 + $0xd0] sm:$0xff]
    %v461 = vld [vmem:[#allocation4 + $0xd8] sm:$0xff]
    %v462 = vld [vmem:[#allocation4 + $0xe0] sm:$0xff]
    %v463 = vld [vmem:[#allocation4 + $0xe8] sm:$0xff]
    %v464 = vld [vmem:[#allocation4 + $0x150] sm:$0xff]
    %v465 = vld [vmem:[#allocation4 + $0x158] sm:$0xff]
    %v466 = vld [vmem:[#allocation4 + $0x160] sm:$0xff]
    %v467 = vld [vmem:[#allocation4 + $0x168] sm:$0xff]
    %v468 = vld [vmem:[#allocation4 + $0x170] sm:$0xff]
    %v469 = vld [vmem:[#allocation4 + $0x178] sm:$0xff]
    %v470 = vld [vmem:[#allocation4 + $0x1e0] sm:$0xff]
    %v471 = vld [vmem:[#allocation4 + $0x1e8] sm:$0xff]
    %v472 = vld [vmem:[#allocation4 + $0x1f0] sm:$0xff]
    %v473 = vld [vmem:[#allocation4 + $0x1f8] sm:$0xff]
    %v474 = vld [vmem:[#allocation4 + $0x200] sm:$0xff]
    %v475 = vld [vmem:[#allocation4 + $0x208] sm:$0xff]
    %v476 = vld [vmem:[#allocation4 + $0x270] sm:$0xff]
    %v477 = vld [vmem:[#allocation4 + $0x278] sm:$0xff]
    %v478 = vld [vmem:[#allocation4 + $0x280] sm:$0xff]
    %v479 = vld [vmem:[#allocation4 + $0x288] sm:$0xff]
    %v480 = vld [vmem:[#allocation4 + $0x290] sm:$0xff]
    %v481 = vld [vmem:[#allocation4 + $0x298] sm:$0xff]
    %v482 = vld [vmem:[#allocation4 + $0x300] sm:$0xff]
    %v483 = vld [vmem:[#allocation4 + $0x308] sm:$0xff]
    %v484 = vld [vmem:[#allocation4 + $0x310] sm:$0xff]
    %v485 = vld [vmem:[#allocation4 + $0x318] sm:$0xff]
    %v486 = vld [vmem:[#allocation4 + $0x320] sm:$0xff]
    %v487 = vld [vmem:[#allocation4 + $0x328] sm:$0xff]
    %v488 = vld [vmem:[#allocation6 + $0x6] sm:$0x3f]
    %v490 = vlaneseq
    %v491 = vshrl.u32 %v490, 7
    %v492 = vsub.s32 0, %v491
    %v493 = vrot.slane %v488, %v492
    %v494 = vlaneseq
    %v495 = vshrl.u32 %v494, 7
    %v496 = vsub.s32 1, %v495
    %v497 = vrot.slane %v488, %v496
    %v498 = vlaneseq
    %v499 = vshrl.u32 %v498, 7
    %v500 = vsub.s32 2, %v499
    %v501 = vrot.slane %v488, %v500
    %v502 = vlaneseq
    %v503 = vshrl.u32 %v502, 7
    %v504 = vsub.s32 3, %v503
    %v505 = vrot.slane %v488, %v504
    %v506 = vlaneseq
    %v507 = vshrl.u32 %v506, 7
    %v508 = vsub.s32 4, %v507
    %v509 = vrot.slane %v488, %v508
    %v510 = vlaneseq
    %v511 = vshrl.u32 %v510, 7
    %v512 = vsub.s32 5, %v511
    %v513 = vrot.slane %v488, %v512
    %520 = vmatprep.subr.mxu0 %v453
    %521 = vmatpush1.msra.mxu0 %v452
    %522 = vmatprep.subr.mxu0 %v459
    %523 = vmatpush1.msra.mxu0 %v458
    %524 = vmatprep.subr.mxu0 %v465
    %525 = vmatpush1.msra.mxu0 %v464
    %526 = vmatprep.subr.mxu0 %v471
    %527 = vmatpush1.msra.mxu0 %v470
    %528 = vmatprep.subr.mxu0 %v477
    %529 = vmatpush1.msra.mxu0 %v476
    %530 = vmatprep.subr.mxu0 %v483
    %531 = vmatpush1.msra.mxu0 %v482
    %532 = vmatprep.subr.mxu0 0.0
    %533 = vmatpush1.msra.mxu0 0.0
    %534 = vmatprep.subr.mxu0 0.0
    %535 = vmatpush1.msra.mxu0 0.0
    %536 = vmatprep.subr.mxu0 0.0
    %537 = vmatpush1.msra.mxu0 0.0
    %538 = vmatprep.subr.mxu0 0.0
    %539 = vmatpush1.msra.mxu0 0.0
    %540 = vmatprep.subr.mxu0 0.0
    %541 = vmatpush1.msra.mxu0 0.0
    %542 = vmatprep.subr.mxu0 0.0
    %543 = vmatpush1.msra.mxu0 0.0
    %544 = vmatprep.subr.mxu0 0.0
    %545 = vmatpush1.msra.mxu0 0.0
    %546 = vmatprep.subr.mxu0 0.0
    %547 = vmatpush1.msra.mxu0 0.0
    %548 = vmatprep.subr.mxu0 0.0
    %549 = vmatpush1.msra.mxu0 0.0
    %550 = vmatprep.subr.mxu0 0.0
    %551 = vmatpush1.msra.mxu0 0.0
    %552 = vmatprep.subr.mxu0 0.0
    %553 = vmatpush1.msra.mxu0 0.0
    %554 = vmatprep.subr.mxu0 0.0
    %555 = vmatpush1.msra.mxu0 0.0
    %556 = vmatprep.subr.mxu0 0.0
    %557 = vmatpush1.msra.mxu0 0.0
    %558 = vmatprep.subr.mxu0 0.0
    %559 = vmatpush1.msra.mxu0 0.0
    %560 = vmatprep.subr.mxu0 0.0
    %561 = vmatpush1.msra.mxu0 0.0
    %562 = vmatprep.subr.mxu0 0.0
    %563 = vmatpush1.msra.mxu0 0.0
    %564 = vmatprep.subr.mxu0 0.0
    %565 = vmatpush1.msra.mxu0 0.0
    %566 = vmatprep.subr.mxu0 0.0
    %567 = vmatpush1.msra.mxu0 0.0
    %568 = vmatprep.subr.mxu0 0.0
    %569 = vmatpush1.msra.mxu0 0.0
    %570 = vmatprep.subr.mxu0 0.0
    %571 = vmatpush1.msra.mxu0 0.0
    %572 = vmatprep.subr.mxu0 0.0
    %573 = vmatpush1.msra.mxu0 0.0
    %574 = vmatprep.subr.mxu0 0.0
    %575 = vmatpush1.msra.mxu0 0.0
    %576 = vmatprep.subr.mxu0 0.0
    %577 = vmatpush1.msra.mxu0 0.0
    %578 = vmatprep.subr.mxu0 0.0
    %579 = vmatpush1.msra.mxu0 0.0
    %580 = vmatprep.subr.mxu0 0.0
    %581 = vmatpush1.msra.mxu0 0.0
    %582 = vmatprep.subr.mxu0 0.0
    %583 = vmatpush1.msra.mxu0 0.0
    %584 = vmatprep.mubr.f32.mxu0 0.0
    %585 = vmatmul.mubr.f32.gmra.mrb[0].mxu0 %v192
    %v586 = vpop.f32.mrb[0].mxu0
    %v587 = vadd.f32 %v493, %v586
    %v588 = vpop.f32.mrb[0].mxu0
    %v589 = vadd.f32 %v497, %v588
    %590 = vmatprep.mubr.f32.mxu0 0.0
    %591 = vmatmul.mubr.f32.gmra.mrb[0].mxu0 %v195
    %v592 = vpop.f32.mrb[0].mxu0
    %v593 = vadd.f32 %v493, %v592
    %v594 = vpop.f32.mrb[0].mxu0
    %v595 = vadd.f32 %v497, %v594
    %596 = vdwg.mxu0
    %597 = vmatprep.subr.mxu0 %v455
    %598 = vmatpush1.msra.mxu0 %v454
    %599 = vmatprep.subr.mxu0 %v461
    %600 = vmatpush1.msra.mxu0 %v460
    %601 = vmatprep.subr.mxu0 %v467
    %602 = vmatpush1.msra.mxu0 %v466
    %603 = vmatprep.subr.mxu0 %v473
    %604 = vmatpush1.msra.mxu0 %v472
    %605 = vmatprep.subr.mxu0 %v479
    %606 = vmatpush1.msra.mxu0 %v478
    %607 = vmatprep.subr.mxu0 %v485
    %608 = vmatpush1.msra.mxu0 %v484
    %609 = vmatprep.subr.mxu0 0.0
    %610 = vmatpush1.msra.mxu0 0.0
    %611 = vmatprep.subr.mxu0 0.0
    %612 = vmatpush1.msra.mxu0 0.0
    %613 = vmatprep.subr.mxu0 0.0
    %614 = vmatpush1.msra.mxu0 0.0
    %615 = vmatprep.subr.mxu0 0.0
    %616 = vmatpush1.msra.mxu0 0.0
    %617 = vmatprep.subr.mxu0 0.0
    %618 = vmatpush1.msra.mxu0 0.0
    %619 = vmatprep.subr.mxu0 0.0
    %620 = vmatpush1.msra.mxu0 0.0
    %621 = vmatprep.subr.mxu0 0.0
    %622 = vmatpush1.msra.mxu0 0.0
    %623 = vmatprep.subr.mxu0 0.0
    %624 = vmatpush1.msra.mxu0 0.0
    %625 = vmatprep.subr.mxu0 0.0
    %626 = vmatpush1.msra.mxu0 0.0
    %627 = vmatprep.subr.mxu0 0.0
    %628 = vmatpush1.msra.mxu0 0.0
    %629 = vmatprep.subr.mxu0 0.0
    %630 = vmatpush1.msra.mxu0 0.0
    %631 = vmatprep.subr.mxu0 0.0
    %632 = vmatpush1.msra.mxu0 0.0
    %633 = vmatprep.subr.mxu0 0.0
    %634 = vmatpush1.msra.mxu0 0.0
    %635 = vmatprep.subr.mxu0 0.0
    %636 = vmatpush1.msra.mxu0 0.0
    %637 = vmatprep.subr.mxu0 0.0
    %638 = vmatpush1.msra.mxu0 0.0
    %639 = vmatprep.subr.mxu0 0.0
    %640 = vmatpush1.msra.mxu0 0.0
    %641 = vmatprep.subr.mxu0 0.0
    %642 = vmatpush1.msra.mxu0 0.0
    %643 = vmatprep.subr.mxu0 0.0
    %644 = vmatpush1.msra.mxu0 0.0
    %645 = vmatprep.subr.mxu0 0.0
    %646 = vmatpush1.msra.mxu0 0.0
    %647 = vmatprep.subr.mxu0 0.0
    %648 = vmatpush1.msra.mxu0 0.0
    %649 = vmatprep.subr.mxu0 0.0
    %650 = vmatpush1.msra.mxu0 0.0
    %651 = vmatprep.subr.mxu0 0.0
    %652 = vmatpush1.msra.mxu0 0.0
    %653 = vmatprep.subr.mxu0 0.0
    %654 = vmatpush1.msra.mxu0 0.0
    %655 = vmatprep.subr.mxu0 0.0
    %656 = vmatpush1.msra.mxu0 0.0
    %657 = vmatprep.subr.mxu0 0.0
    %658 = vmatpush1.msra.mxu0 0.0
    %659 = vmatprep.subr.mxu0 0.0
    %660 = vmatpush1.msra.mxu0 0.0
    %661 = vmatprep.mubr.f32.mxu0 0.0
    %662 = vmatmul.mubr.f32.gmra.mrb[0].mxu0 %v192
    %v663 = vpop.f32.mrb[0].mxu0
    %v664 = vadd.f32 %v501, %v663
    %v665 = vpop.f32.mrb[0].mxu0
    %v666 = vadd.f32 %v505, %v665
    %667 = vmatprep.mubr.f32.mxu0 0.0
    %668 = vmatmul.mubr.f32.gmra.mrb[0].mxu0 %v195
    %v669 = vpop.f32.mrb[0].mxu0
    %v670 = vadd.f32 %v501, %v669
    %v671 = vpop.f32.mrb[0].mxu0
    %v672 = vadd.f32 %v505, %v671
    %673 = vdwg.mxu0
    %674 = vmatprep.subr.mxu0 %v457
    %675 = vmatpush1.msra.mxu0 %v456
    %676 = vmatprep.subr.mxu0 %v463
    %677 = vmatpush1.msra.mxu0 %v462
    %678 = vmatprep.subr.mxu0 %v469
    %679 = vmatpush1.msra.mxu0 %v468
    %680 = vmatprep.subr.mxu0 %v475
    %681 = vmatpush1.msra.mxu0 %v474
    %682 = vmatprep.subr.mxu0 %v481
    %683 = vmatpush1.msra.mxu0 %v480
    %684 = vmatprep.subr.mxu0 %v487
    %685 = vmatpush1.msra.mxu0 %v486
    %686 = vmatprep.subr.mxu0 0.0
    %687 = vmatpush1.msra.mxu0 0.0
    %688 = vmatprep.subr.mxu0 0.0
    %689 = vmatpush1.msra.mxu0 0.0
    %690 = vmatprep.subr.mxu0 0.0
    %691 = vmatpush1.msra.mxu0 0.0
    %692 = vmatprep.subr.mxu0 0.0
    %693 = vmatpush1.msra.mxu0 0.0
    %694 = vmatprep.subr.mxu0 0.0
    %695 = vmatpush1.msra.mxu0 0.0
    %696 = vmatprep.subr.mxu0 0.0
    %697 = vmatpush1.msra.mxu0 0.0
    %698 = vmatprep.subr.mxu0 0.0
    %699 = vmatpush1.msra.mxu0 0.0
    %700 = vmatprep.subr.mxu0 0.0
    %701 = vmatpush1.msra.mxu0 0.0
    %702 = vmatprep.subr.mxu0 0.0
    %703 = vmatpush1.msra.mxu0 0.0
    %704 = vmatprep.subr.mxu0 0.0
    %705 = vmatpush1.msra.mxu0 0.0
    %706 = vmatprep.subr.mxu0 0.0
    %707 = vmatpush1.msra.mxu0 0.0
    %708 = vmatprep.subr.mxu0 0.0
    %709 = vmatpush1.msra.mxu0 0.0
    %710 = vmatprep.subr.mxu0 0.0
    %711 = vmatpush1.msra.mxu0 0.0
    %712 = vmatprep.subr.mxu0 0.0
    %713 = vmatpush1.msra.mxu0 0.0
    %714 = vmatprep.subr.mxu0 0.0
    %715 = vmatpush1.msra.mxu0 0.0
    %716 = vmatprep.subr.mxu0 0.0
    %717 = vmatpush1.msra.mxu0 0.0
    %718 = vmatprep.subr.mxu0 0.0
    %719 = vmatpush1.msra.mxu0 0.0
    %720 = vmatprep.subr.mxu0 0.0
    %721 = vmatpush1.msra.mxu0 0.0
    %722 = vmatprep.subr.mxu0 0.0
    %723 = vmatpush1.msra.mxu0 0.0
    %724 = vmatprep.subr.mxu0 0.0
    %725 = vmatpush1.msra.mxu0 0.0
    %726 = vmatprep.subr.mxu0 0.0
    %727 = vmatpush1.msra.mxu0 0.0
    %728 = vmatprep.subr.mxu0 0.0
    %729 = vmatpush1.msra.mxu0 0.0
    %730 = vmatprep.subr.mxu0 0.0
    %731 = vmatpush1.msra.mxu0 0.0
    %732 = vmatprep.subr.mxu0 0.0
    %733 = vmatpush1.msra.mxu0 0.0
    %734 = vmatprep.subr.mxu0 0.0
    %735 = vmatpush1.msra.mxu0 0.0
    %736 = vmatprep.subr.mxu0 0.0
    %737 = vmatpush1.msra.mxu0 0.0
    %738 = vmatprep.mubr.f32.mxu0 0.0
    %739 = vmatmul.mubr.f32.gmra.mrb[0].mxu0 %v192
    %v740 = vpop.f32.mrb[0].mxu0
    %v741 = vadd.f32 %v509, %v740
    %v742 = vpop.f32.mrb[0].mxu0
    %v743 = vadd.f32 %v513, %v742
    %744 = vmatprep.mubr.f32.mxu0 0.0
    %745 = vmatmul.mubr.f32.gmra.mrb[0].mxu0 %v195
    %v746 = vpop.f32.mrb[0].mxu0
    %v747 = vadd.f32 %v509, %v746
    %v748 = vpop.f32.mrb[0].mxu0
    %v749 = vadd.f32 %v513, %v748
    %750 = vdwg.mxu0
    %v751 = vmax.f32 %v587, 0.0
    %v752 = vmax.f32 %v589, 0.0
    %v753 = vmax.f32 %v664, 0.0
    %v754 = vmax.f32 %v666, 0.0
    %v755 = vmax.f32 %v741, 0.0
    %v756 = vmax.f32 %v743, 0.0
    %v757 = vmax.f32 %v593, 0.0
    %v758 = vmax.f32 %v595, 0.0
    %v759 = vmax.f32 %v670, 0.0
    %v760 = vmax.f32 %v672, 0.0
    %v761 = vmax.f32 %v747, 0.0
    %v762 = vmax.f32 %v749, 0.0
    %v763 = vpack.c.bf16 %v757, %v751
    %v764 = vpack.c.bf16 %v758, %v752
    %v765 = vpack.c.bf16 %v759, %v753
    %v766 = vpack.c.bf16 %v760, %v754
    %v767 = vpack.c.bf16 %v761, %v755
    %v768 = vpack.c.bf16 %v762, %v756
    %769 = vst [vmem:[#allocation2 + $0x30] sm:$0xff] %v763
    %770 = vst [vmem:[#allocation2 + $0x38] sm:$0xff] %v764
    %771 = vst [vmem:[#allocation2 + $0x40] sm:$0xff] %v765
    %772 = vst [vmem:[#allocation2 + $0x48] sm:$0xff] %v766
    %773 = vst [vmem:[#allocation2 + $0x50] sm:$0xff] %v767
    %774 = vst [vmem:[#allocation2 + $0x58] sm:$0xff] %v768
    %v775 = vld [vmem:[#allocation4 + $0x60] sm:$0xff]
    %v776 = vld [vmem:[#allocation4 + $0x68] sm:$0xff]
    %v777 = vld [vmem:[#allocation4 + $0x70] sm:$0xff]
    %v778 = vld [vmem:[#allocation4 + $0x78] sm:$0xff]
    %v779 = vld [vmem:[#allocation4 + $0x80] sm:$0xff]
    %v780 = vld [vmem:[#allocation4 + $0x88] sm:$0xff]
    %v781 = vld [vmem:[#allocation4 + $0xf0] sm:$0xff]
    %v782 = vld [vmem:[#allocation4 + $0xf8] sm:$0xff]
    %v783 = vld [vmem:[#allocation4 + $0x100] sm:$0xff]
    %v784 = vld [vmem:[#allocation4 + $0x108] sm:$0xff]
    %v785 = vld [vmem:[#allocation4 + $0x110] sm:$0xff]
    %v786 = vld [vmem:[#allocation4 + $0x118] sm:$0xff]
    %v787 = vld [vmem:[#allocation4 + $0x180] sm:$0xff]
    %v788 = vld [vmem:[#allocation4 + $0x188] sm:$0xff]
    %v789 = vld [vmem:[#allocation4 + $0x190] sm:$0xff]
    %v790 = vld [vmem:[#allocation4 + $0x198] sm:$0xff]
    %v791 = vld [vmem:[#allocation4 + $0x1a0] sm:$0xff]
    %v792 = vld [vmem:[#allocation4 + $0x1a8] sm:$0xff]
    %v793 = vld [vmem:[#allocation4 + $0x210] sm:$0xff]
    %v794 = vld [vmem:[#allocation4 + $0x218] sm:$0xff]
    %v795 = vld [vmem:[#allocation4 + $0x220] sm:$0xff]
    %v796 = vld [vmem:[#allocation4 + $0x228] sm:$0xff]
    %v797 = vld [vmem:[#allocation4 + $0x230] sm:$0xff]
    %v798 = vld [vmem:[#allocation4 + $0x238] sm:$0xff]
    %v799 = vld [vmem:[#allocation4 + $0x2a0] sm:$0xff]
    %v800 = vld [vmem:[#allocation4 + $0x2a8] sm:$0xff]
    %v801 = vld [vmem:[#allocation4 + $0x2b0] sm:$0xff]
    %v802 = vld [vmem:[#allocation4 + $0x2b8] sm:$0xff]
    %v803 = vld [vmem:[#allocation4 + $0x2c0] sm:$0xff]
    %v804 = vld [vmem:[#allocation4 + $0x2c8] sm:$0xff]
    %v805 = vld [vmem:[#allocation4 + $0x330] sm:$0xff]
    %v806 = vld [vmem:[#allocation4 + $0x338] sm:$0xff]
    %v807 = vld [vmem:[#allocation4 + $0x340] sm:$0xff]
    %v808 = vld [vmem:[#allocation4 + $0x348] sm:$0xff]
    %v809 = vld [vmem:[#allocation4 + $0x350] sm:$0xff]
    %v810 = vld [vmem:[#allocation4 + $0x358] sm:$0xff]
    %v811 = vld [vmem:[#allocation6 + $0xc] sm:$0x3f]
    %v813 = vlaneseq
    %v814 = vshrl.u32 %v813, 7
    %v815 = vsub.s32 0, %v814
    %v816 = vrot.slane %v811, %v815
    %v817 = vlaneseq
    %v818 = vshrl.u32 %v817, 7
    %v819 = vsub.s32 1, %v818
    %v820 = vrot.slane %v811, %v819
    %v821 = vlaneseq
    %v822 = vshrl.u32 %v821, 7
    %v823 = vsub.s32 2, %v822
    %v824 = vrot.slane %v811, %v823
    %v825 = vlaneseq
    %v826 = vshrl.u32 %v825, 7
    %v827 = vsub.s32 3, %v826
    %v828 = vrot.slane %v811, %v827
    %v829 = vlaneseq
    %v830 = vshrl.u32 %v829, 7
    %v831 = vsub.s32 4, %v830
    %v832 = vrot.slane %v811, %v831
    %v833 = vlaneseq
    %v834 = vshrl.u32 %v833, 7
    %v835 = vsub.s32 5, %v834
    %v836 = vrot.slane %v811, %v835
    %843 = vmatprep.subr.mxu0 %v776
    %844 = vmatpush1.msra.mxu0 %v775
    %845 = vmatprep.subr.mxu0 %v782
    %846 = vmatpush1.msra.mxu0 %v781
    %847 = vmatprep.subr.mxu0 %v788
    %848 = vmatpush1.msra.mxu0 %v787
    %849 = vmatprep.subr.mxu0 %v794
    %850 = vmatpush1.msra.mxu0 %v793
    %851 = vmatprep.subr.mxu0 %v800
    %852 = vmatpush1.msra.mxu0 %v799
    %853 = vmatprep.subr.mxu0 %v806
    %854 = vmatpush1.msra.mxu0 %v805
    %855 = vmatprep.subr.mxu0 0.0
    %856 = vmatpush1.msra.mxu0 0.0
    %857 = vmatprep.subr.mxu0 0.0
    %858 = vmatpush1.msra.mxu0 0.0
    %859 = vmatprep.subr.mxu0 0.0
    %860 = vmatpush1.msra.mxu0 0.0
    %861 = vmatprep.subr.mxu0 0.0
    %862 = vmatpush1.msra.mxu0 0.0
    %863 = vmatprep.subr.mxu0 0.0
    %864 = vmatpush1.msra.mxu0 0.0
    %865 = vmatprep.subr.mxu0 0.0
    %866 = vmatpush1.msra.mxu0 0.0
    %867 = vmatprep.subr.mxu0 0.0
    %868 = vmatpush1.msra.mxu0 0.0
    %869 = vmatprep.subr.mxu0 0.0
    %870 = vmatpush1.msra.mxu0 0.0
    %871 = vmatprep.subr.mxu0 0.0
    %872 = vmatpush1.msra.mxu0 0.0
    %873 = vmatprep.subr.mxu0 0.0
    %874 = vmatpush1.msra.mxu0 0.0
    %875 = vmatprep.subr.mxu0 0.0
    %876 = vmatpush1.msra.mxu0 0.0
    %877 = vmatprep.subr.mxu0 0.0
    %878 = vmatpush1.msra.mxu0 0.0
    %879 = vmatprep.subr.mxu0 0.0
    %880 = vmatpush1.msra.mxu0 0.0
    %881 = vmatprep.subr.mxu0 0.0
    %882 = vmatpush1.msra.mxu0 0.0
    %883 = vmatprep.subr.mxu0 0.0
    %884 = vmatpush1.msra.mxu0 0.0
    %885 = vmatprep.subr.mxu0 0.0
    %886 = vmatpush1.msra.mxu0 0.0
    %887 = vmatprep.subr.mxu0 0.0
    %888 = vmatpush1.msra.mxu0 0.0
    %889 = vmatprep.subr.mxu0 0.0
    %890 = vmatpush1.msra.mxu0 0.0
    %891 = vmatprep.subr.mxu0 0.0
    %892 = vmatpush1.msra.mxu0 0.0
    %893 = vmatprep.subr.mxu0 0.0
    %894 = vmatpush1.msra.mxu0 0.0
    %895 = vmatprep.subr.mxu0 0.0
    %896 = vmatpush1.msra.mxu0 0.0
    %897 = vmatprep.subr.mxu0 0.0
    %898 = vmatpush1.msra.mxu0 0.0
    %899 = vmatprep.subr.mxu0 0.0
    %900 = vmatpush1.msra.mxu0 0.0
    %901 = vmatprep.subr.mxu0 0.0
    %902 = vmatpush1.msra.mxu0 0.0
    %903 = vmatprep.subr.mxu0 0.0
    %904 = vmatpush1.msra.mxu0 0.0
    %905 = vmatprep.subr.mxu0 0.0
    %906 = vmatpush1.msra.mxu0 0.0
    %907 = vmatprep.mubr.f32.mxu0 0.0
    %908 = vmatmul.mubr.f32.gmra.mrb[0].mxu0 %v192
    %v909 = vpop.f32.mrb[0].mxu0
    %v910 = vadd.f32 %v816, %v909
    %v911 = vpop.f32.mrb[0].mxu0
    %v912 = vadd.f32 %v820, %v911
    %913 = vmatprep.mubr.f32.mxu0 0.0
    %914 = vmatmul.mubr.f32.gmra.mrb[0].mxu0 %v195
    %v915 = vpop.f32.mrb[0].mxu0
    %v916 = vadd.f32 %v816, %v915
    %v917 = vpop.f32.mrb[0].mxu0
    %v918 = vadd.f32 %v820, %v917
    %919 = vdwg.mxu0
    %920 = vmatprep.subr.mxu0 %v778
    %921 = vmatpush1.msra.mxu0 %v777
    %922 = vmatprep.subr.mxu0 %v784
    %923 = vmatpush1.msra.mxu0 %v783
    %924 = vmatprep.subr.mxu0 %v790
    %925 = vmatpush1.msra.mxu0 %v789
    %926 = vmatprep.subr.mxu0 %v796
    %927 = vmatpush1.msra.mxu0 %v795
    %928 = vmatprep.subr.mxu0 %v802
    %929 = vmatpush1.msra.mxu0 %v801
    %930 = vmatprep.subr.mxu0 %v808
    %931 = vmatpush1.msra.mxu0 %v807
    %932 = vmatprep.subr.mxu0 0.0
    %933 = vmatpush1.msra.mxu0 0.0
    %934 = vmatprep.subr.mxu0 0.0
    %935 = vmatpush1.msra.mxu0 0.0
    %936 = vmatprep.subr.mxu0 0.0
    %937 = vmatpush1.msra.mxu0 0.0
    %938 = vmatprep.subr.mxu0 0.0
    %939 = vmatpush1.msra.mxu0 0.0
    %940 = vmatprep.subr.mxu0 0.0
    %941 = vmatpush1.msra.mxu0 0.0
    %942 = vmatprep.subr.mxu0 0.0
    %943 = vmatpush1.msra.mxu0 0.0
    %944 = vmatprep.subr.mxu0 0.0
    %945 = vmatpush1.msra.mxu0 0.0
    %946 = vmatprep.subr.mxu0 0.0
    %947 = vmatpush1.msra.mxu0 0.0
    %948 = vmatprep.subr.mxu0 0.0
    %949 = vmatpush1.msra.mxu0 0.0
    %950 = vmatprep.subr.mxu0 0.0
    %951 = vmatpush1.msra.mxu0 0.0
    %952 = vmatprep.subr.mxu0 0.0
    %953 = vmatpush1.msra.mxu0 0.0
    %954 = vmatprep.subr.mxu0 0.0
    %955 = vmatpush1.msra.mxu0 0.0
    %956 = vmatprep.subr.mxu0 0.0
    %957 = vmatpush1.msra.mxu0 0.0
    %958 = vmatprep.subr.mxu0 0.0
    %959 = vmatpush1.msra.mxu0 0.0
    %960 = vmatprep.subr.mxu0 0.0
    %961 = vmatpush1.msra.mxu0 0.0
    %962 = vmatprep.subr.mxu0 0.0
    %963 = vmatpush1.msra.mxu0 0.0
    %964 = vmatprep.subr.mxu0 0.0
    %965 = vmatpush1.msra.mxu0 0.0
    %966 = vmatprep.subr.mxu0 0.0
    %967 = vmatpush1.msra.mxu0 0.0
    %968 = vmatprep.subr.mxu0 0.0
    %969 = vmatpush1.msra.mxu0 0.0
    %970 = vmatprep.subr.mxu0 0.0
    %971 = vmatpush1.msra.mxu0 0.0
    %972 = vmatprep.subr.mxu0 0.0
    %973 = vmatpush1.msra.mxu0 0.0
    %974 = vmatprep.subr.mxu0 0.0
    %975 = vmatpush1.msra.mxu0 0.0
    %976 = vmatprep.subr.mxu0 0.0
    %977 = vmatpush1.msra.mxu0 0.0
    %978 = vmatprep.subr.mxu0 0.0
    %979 = vmatpush1.msra.mxu0 0.0
    %980 = vmatprep.subr.mxu0 0.0
    %981 = vmatpush1.msra.mxu0 0.0
    %982 = vmatprep.subr.mxu0 0.0
    %983 = vmatpush1.msra.mxu0 0.0
    %984 = vmatprep.mubr.f32.mxu0 0.0
    %985 = vmatmul.mubr.f32.gmra.mrb[0].mxu0 %v192
    %v986 = vpop.f32.mrb[0].mxu0
    %v987 = vadd.f32 %v824, %v986
    %v988 = vpop.f32.mrb[0].mxu0
    %v989 = vadd.f32 %v828, %v988
    %990 = vmatprep.mubr.f32.mxu0 0.0
    %991 = vmatmul.mubr.f32.gmra.mrb[0].mxu0 %v195
    %v992 = vpop.f32.mrb[0].mxu0
    %v993 = vadd.f32 %v824, %v992
    %v994 = vpop.f32.mrb[0].mxu0
    %v995 = vadd.f32 %v828, %v994
    %996 = vdwg.mxu0
    %997 = vmatprep.subr.mxu0 %v780
    %998 = vmatpush1.msra.mxu0 %v779
    %999 = vmatprep.subr.mxu0 %v786
    %1000 = vmatpush1.msra.mxu0 %v785
    %1001 = vmatprep.subr.mxu0 %v792
    %1002 = vmatpush1.msra.mxu0 %v791
    %1003 = vmatprep.subr.mxu0 %v798
    %1004 = vmatpush1.msra.mxu0 %v797
    %1005 = vmatprep.subr.mxu0 %v804
    %1006 = vmatpush1.msra.mxu0 %v803
    %1007 = vmatprep.subr.mxu0 %v810
    %1008 = vmatpush1.msra.mxu0 %v809
    %1009 = vmatprep.subr.mxu0 0.0
    %1010 = vmatpush1.msra.mxu0 0.0
    %1011 = vmatprep.subr.mxu0 0.0
    %1012 = vmatpush1.msra.mxu0 0.0
    %1013 = vmatprep.subr.mxu0 0.0
    %1014 = vmatpush1.msra.mxu0 0.0
    %1015 = vmatprep.subr.mxu0 0.0
    %1016 = vmatpush1.msra.mxu0 0.0
    %1017 = vmatprep.subr.mxu0 0.0
    %1018 = vmatpush1.msra.mxu0 0.0
    %1019 = vmatprep.subr.mxu0 0.0
    %1020 = vmatpush1.msra.mxu0 0.0
    %1021 = vmatprep.subr.mxu0 0.0
    %1022 = vmatpush1.msra.mxu0 0.0
    %1023 = vmatprep.subr.mxu0 0.0
    %1024 = vmatpush1.msra.mxu0 0.0
    %1025 = vmatprep.subr.mxu0 0.0
    %1026 = vmatpush1.msra.mxu0 0.0
    %1027 = vmatprep.subr.mxu0 0.0
    %1028 = vmatpush1.msra.mxu0 0.0
    %1029 = vmatprep.subr.mxu0 0.0
    %1030 = vmatpush1.msra.mxu0 0.0
    %1031 = vmatprep.subr.mxu0 0.0
    %1032 = vmatpush1.msra.mxu0 0.0
    %1033 = vmatprep.subr.mxu0 0.0
    %1034 = vmatpush1.msra.mxu0 0.0
    %1035 = vmatprep.subr.mxu0 0.0
    %1036 = vmatpush1.msra.mxu0 0.0
    %1037 = vmatprep.subr.mxu0 0.0
    %1038 = vmatpush1.msra.mxu0 0.0
    %1039 = vmatprep.subr.mxu0 0.0
    %1040 = vmatpush1.msra.mxu0 0.0
    %1041 = vmatprep.subr.mxu0 0.0
    %1042 = vmatpush1.msra.mxu0 0.0
    %1043 = vmatprep.subr.mxu0 0.0
    %1044 = vmatpush1.msra.mxu0 0.0
    %1045 = vmatprep.subr.mxu0 0.0
    %1046 = vmatpush1.msra.mxu0 0.0
    %1047 = vmatprep.subr.mxu0 0.0
    %1048 = vmatpush1.msra.mxu0 0.0
    %1049 = vmatprep.subr.mxu0 0.0
    %1050 = vmatpush1.msra.mxu0 0.0
    %1051 = vmatprep.subr.mxu0 0.0
    %1052 = vmatpush1.msra.mxu0 0.0
    %1053 = vmatprep.subr.mxu0 0.0
    %1054 = vmatpush1.msra.mxu0 0.0
    %1055 = vmatprep.subr.mxu0 0.0
    %1056 = vmatpush1.msra.mxu0 0.0
    %1057 = vmatprep.subr.mxu0 0.0
    %1058 = vmatpush1.msra.mxu0 0.0
    %1059 = vmatprep.subr.mxu0 0.0
    %1060 = vmatpush1.msra.mxu0 0.0
    %1061 = vmatprep.mubr.f32.mxu0 0.0
    %1062 = vmatmul.mubr.f32.gmra.mrb[0].mxu0 %v192
    %v1063 = vpop.f32.mrb[0].mxu0
    %v1064 = vadd.f32 %v832, %v1063
    %v1065 = vpop.f32.mrb[0].mxu0
    %v1066 = vadd.f32 %v836, %v1065
    %1067 = vmatprep.mubr.f32.mxu0 0.0
    %1068 = vmatmul.mubr.f32.gmra.mrb[0].mxu0 %v195
    %v1069 = vpop.f32.mrb[0].mxu0
    %v1070 = vadd.f32 %v832, %v1069
    %v1071 = vpop.f32.mrb[0].mxu0
    %v1072 = vadd.f32 %v836, %v1071
    %1073 = vdwg.mxu0
    %v1074 = vmax.f32 %v910, 0.0
    %v1075 = vmax.f32 %v912, 0.0
    %v1076 = vmax.f32 %v987, 0.0
    %v1077 = vmax.f32 %v989, 0.0
    %v1078 = vmax.f32 %v1064, 0.0
    %v1079 = vmax.f32 %v1066, 0.0
    %v1080 = vmax.f32 %v916, 0.0
    %v1081 = vmax.f32 %v918, 0.0
    %v1082 = vmax.f32 %v993, 0.0
    %v1083 = vmax.f32 %v995, 0.0
    %v1084 = vmax.f32 %v1070, 0.0
    %v1085 = vmax.f32 %v1072, 0.0
    %v1086 = vpack.c.bf16 %v1080, %v1074
    %v1087 = vpack.c.bf16 %v1081, %v1075
    %v1088 = vpack.c.bf16 %v1082, %v1076
    %v1089 = vpack.c.bf16 %v1083, %v1077
    %v1090 = vpack.c.bf16 %v1084, %v1078
    %v1091 = vpack.c.bf16 %v1085, %v1079
    %1092 = vst [vmem:[#allocation2 + $0x60] sm:$0xff] %v1086
    %1093 = vst [vmem:[#allocation2 + $0x68] sm:$0xff] %v1087
    %1094 = vst [vmem:[#allocation2 + $0x70] sm:$0xff] %v1088
    %1095 = vst [vmem:[#allocation2 + $0x78] sm:$0xff] %v1089
    %1096 = vst [vmem:[#allocation2 + $0x80] sm:$0xff] %v1090
    %1097 = vst [vmem:[#allocation2 + $0x88] sm:$0xff] %v1091
    %v1098 = vld [vmem:[%s3] sm:$0xf]
    %v1099 = vld [vmem:[%s3 + $0x4] sm:$0xf]
    %v1100 = vld [vmem:[%s3 + $0x8] sm:$0xf]
    %v1101 = vld [vmem:[%s3 + $0xc] sm:$0xf]
    %v1102 = vld [vmem:[%s3 + $0x10] sm:$0xf]
    %v1103 = vld [vmem:[%s3 + $0x14] sm:$0xf]
    %v1104 = vld [vmem:[%s3 + $0x18] sm:$0xf]
    %v1105 = vld [vmem:[%s3 + $0x1c] sm:$0xf]
    %v1106 = vld [vmem:[%s3 + $0x20] sm:$0xf]
    %v1107 = vld [vmem:[%s3 + $0x24] sm:$0xf]
    %v1108 = vld [vmem:[%s3 + $0x28] sm:$0xf]
    %v1109 = vld [vmem:[%s3 + $0x2c] sm:$0xf]
    %v1110 = vld [vmem:[%s3 + $0x30] sm:$0xf]
    %v1111 = vld [vmem:[%s3 + $0x34] sm:$0xf]
    %v1112 = vld [vmem:[%s3 + $0x38] sm:$0xf]
    %v1113 = vld [vmem:[%s3 + $0x3c] sm:$0xf]
    %v1114 = vld [vmem:[%s3 + $0x40] sm:$0xf]
    %v1115 = vld [vmem:[%s3 + $0x44] sm:$0xf]
    %v1116 = vld [vmem:[%s3 + $0x48] sm:$0xf]
    %v1117 = vld [vmem:[%s3 + $0x4c] sm:$0xf]
    %v1118 = vld [vmem:[%s3 + $0x50] sm:$0xf]
    %v1119 = vld [vmem:[%s3 + $0x54] sm:$0xf]
    %v1120 = vld [vmem:[%s3 + $0x58] sm:$0xf]
    %v1121 = vld [vmem:[%s3 + $0x5c] sm:$0xf]
    %v1122 = vld [vmem:[%s3 + $0x60] sm:$0xf]
    %v1123 = vld [vmem:[%s3 + $0x64] sm:$0xf]
    %v1124 = vld [vmem:[%s3 + $0x68] sm:$0xf]
    %v1125 = vld [vmem:[%s3 + $0x6c] sm:$0xf]
    %v1126 = vld [vmem:[%s3 + $0x70] sm:$0xf]
    %v1127 = vld [vmem:[%s3 + $0x74] sm:$0xf]
    %v1128 = vld [vmem:[%s3 + $0x78] sm:$0xf]
    %v1129 = vld [vmem:[%s3 + $0x7c] sm:$0xf]
    %v1130 = vld [vmem:[%s3 + $0x80] sm:$0xf]
    %v1131 = vld [vmem:[%s3 + $0x84] sm:$0xf]
    %v1132 = vld [vmem:[%s3 + $0x88] sm:$0xf]
    %v1133 = vld [vmem:[%s3 + $0x8c] sm:$0xf]
    %v1134 = vld [vmem:[#allocation8] sm:$0x1]
    %v1135 = vld [vmem:[#allocation2] sm:$0xff]
    %v1136 = vld [vmem:[#allocation2 + $0x10] sm:$0xff]
    %v1137 = vld [vmem:[#allocation2 + $0x20] sm:$0xff]
    %v1138 = vld [vmem:[#allocation2 + $0x28] sm:$0xff]
    %1140 = vrot.lane.b32.xlu0 %v1136, 64
    %v1141 = vpop.permute.xlu0 %1140
    %vm1142 = vcmask 785408
    %v1145 = vsel %vm1142, %v1135, %v1141
    %vm1147 = vcmask 523264
    %v1149 = vsel %vm1147, %v1141, %v1137
    %v1151 = vld [vmem:[#allocation2 + $0x18] sm:$0xff]
    %1153 = vrot.lane.b32.xlu0 %v1135, 96
    %v1154 = vpop.permute.xlu0 %1153
    %1156 = vrot.lane.b32.xlu0 %v1136, 32
    %v1157 = vpop.permute.xlu0 %1156
    %1158 = vrot.lane.b32.xlu0 %v1151, 32
    %v1159 = vpop.permute.xlu0 %1158
    %vm1160 = vcmask 261120
    %v1161 = vsel %vm1160, %v1157, %v1159
    %1164 = vrot.lane.b32.xlu0 %v1137, 96
    %v1165 = vpop.permute.xlu0 %1164
    %1166 = vrot.lane.b32.xlu0 %v1138, 96
    %v1167 = vpop.permute.xlu0 %1166
    %vm1168 = vcmask 785408
    %v1169 = vsel %vm1168, %v1165, %v1167
    %v1172 = vsel %vm1142, %v1154, %v1157
    %v1176 = vsel %vm1147, %v1161, %v1169
    %v1178 = vld [vmem:[#allocation2 + $0x8] sm:$0xff]
    %1180 = vrot.lane.b32.xlu0 %v1135, 64
    %v1181 = vpop.permute.xlu0 %1180
    %1182 = vrot.lane.b32.xlu0 %v1178, 64
    %v1183 = vpop.permute.xlu0 %1182
    %vm1184 = vcmask 523264
    %v1185 = vsel %vm1184, %v1181, %v1183
    %1186 = vrot.lane.b32.xlu0 %v1138, 64
    %v1187 = vpop.permute.xlu0 %1186
    %v1190 = vsel %vm1142, %v1185, %v1136
    %v1194 = vsel %vm1147, %v1151, %v1187
    %1196 = vrot.lane.b32.xlu0 %v1135, 32
    %v1197 = vpop.permute.xlu0 %1196
    %1198 = vrot.lane.b32.xlu0 %v1178, 32
    %v1199 = vpop.permute.xlu0 %1198
    %v1200 = vsel %vm1160, %v1197, %v1199
    %1201 = vrot.lane.b32.xlu0 %v1151, 96
    %v1202 = vpop.permute.xlu0 %1201
    %1203 = vrot.lane.b32.xlu0 %v1138, 32
    %v1204 = vpop.permute.xlu0 %1203
    %v1207 = vsel %vm1142, %v1200, %v1202
    %v1210 = vsel %vm1147, %v1202, %v1204
    %v1212 = vld [vmem:[#allocation2 + $0x30] sm:$0xff]
    %1213 = vrot.lane.b32.xlu0 %v1151, 64
    %v1214 = vpop.permute.xlu0 %1213
    %v1217 = vsel %vm1142, %v1178, %v1214
    %v1220 = vsel %vm1147, %v1214, %v1138
    %1222 = vrot.lane.b32.xlu0 %v1178, 96
    %v1223 = vpop.permute.xlu0 %1222
    %1224 = vrot.lane.b32.xlu0 %v1137, 32
    %v1225 = vpop.permute.xlu0 %1224
    %v1226 = vsel %vm1160, %v1159, %v1225
    %1228 = vrot.lane.b32.xlu0 %v1212, 96
    %v1229 = vpop.permute.xlu0 %1228
    %v1230 = vsel %vm1168, %v1167, %v1229
    %v1233 = vsel %vm1142, %v1223, %v1159
    %v1237 = vsel %vm1147, %v1226, %v1230
    %v1239 = vsel %vm1184, %v1183, %v1141
    %1240 = vrot.lane.b32.xlu0 %v1212, 64
    %v1241 = vpop.permute.xlu0 %1240
    %v1243 = vsel %vm1142, %v1239, %v1151
    %v1246 = vsel %vm1147, %v1137, %v1241
    %v1249 = vlaneseq
    %v1250 = vshrl.u32 %v1249, 7
    %v1251 = vsub.s32 0, %v1250
    %v1252 = vrot.slane %v1134, %v1251
    %v1290 = vunpack.c.l.b16 %v1098
    %v1291 = vunpack.c.l.b16 %v1099
    %v1292 = vunpack.c.l.b16 %v1100
    %v1293 = vunpack.c.l.b16 %v1101
    %v1294 = vunpack.c.l.b16 %v1102
    %v1295 = vunpack.c.l.b16 %v1103
    %v1296 = vunpack.c.l.b16 %v1104
    %v1297 = vunpack.c.l.b16 %v1105
    %v1298 = vunpack.c.l.b16 %v1106
    %v1299 = vunpack.c.l.b16 %v1107
    %v1300 = vunpack.c.l.b16 %v1108
    %v1301 = vunpack.c.l.b16 %v1109
    %v1302 = vunpack.c.l.b16 %v1110
    %v1303 = vunpack.c.l.b16 %v1111
    %v1304 = vunpack.c.l.b16 %v1112
    %v1305 = vunpack.c.l.b16 %v1113
    %v1306 = vunpack.c.l.b16 %v1114
    %v1307 = vunpack.c.l.b16 %v1115
    %v1308 = vunpack.c.l.b16 %v1116
    %v1309 = vunpack.c.l.b16 %v1117
    %v1310 = vunpack.c.l.b16 %v1118
    %v1311 = vunpack.c.l.b16 %v1119
    %v1312 = vunpack.c.l.b16 %v1120
    %v1313 = vunpack.c.l.b16 %v1121
    %v1314 = vunpack.c.l.b16 %v1122
    %v1315 = vunpack.c.l.b16 %v1123
    %v1316 = vunpack.c.l.b16 %v1124
    %v1317 = vunpack.c.l.b16 %v1125
    %v1318 = vunpack.c.l.b16 %v1126
    %v1319 = vunpack.c.l.b16 %v1127
    %v1320 = vunpack.c.l.b16 %v1128
    %v1321 = vunpack.c.l.b16 %v1129
    %v1322 = vunpack.c.l.b16 %v1130
    %v1323 = vunpack.c.l.b16 %v1131
    %v1324 = vunpack.c.l.b16 %v1132
    %v1325 = vunpack.c.l.b16 %v1133
    %v1326 = vpack.c.b16 %v1291, %v1290
    %v1327 = vpack.c.b16 %v1293, %v1292
    %v1328 = vpack.c.b16 %v1295, %v1294
    %v1329 = vpack.c.b16 %v1297, %v1296
    %v1330 = vpack.c.b16 %v1299, %v1298
    %v1331 = vpack.c.b16 %v1301, %v1300
    %v1332 = vpack.c.b16 %v1303, %v1302
    %v1333 = vpack.c.b16 %v1305, %v1304
    %v1334 = vpack.c.b16 %v1307, %v1306
    %v1335 = vpack.c.b16 %v1309, %v1308
    %v1336 = vpack.c.b16 %v1311, %v1310
    %v1337 = vpack.c.b16 %v1313, %v1312
    %v1338 = vpack.c.b16 %v1315, %v1314
    %v1339 = vpack.c.b16 %v1317, %v1316
    %v1340 = vpack.c.b16 %v1319, %v1318
    %v1341 = vpack.c.b16 %v1321, %v1320
    %v1342 = vpack.c.b16 %v1323, %v1322
    %v1343 = vpack.c.b16 %v1325, %v1324
    %vm1362 = vcmask 261120
    %v1363 = vsel %vm1362, %v1138, 0
    %v1366 = vsel %vm1362, %v1167, 0
    %v1368 = vsel %vm1362, %v1187, 0
    %v1370 = vsel %vm1362, %v1204, 0
    %v1373 = vsel %vm1362, %v1212, 0
    %v1376 = vsel %vm1362, %v1229, 0
    %v1378 = vsel %vm1362, %v1241, 0
    %1380 = vmatprep.subr.bf16.mxu0 0
    %1381 = vmatpush1.bf16.msra.mxu0 %v1326
    %1382 = vmatprep.subr.bf16.mxu0 0
    %1383 = vmatpush1.bf16.msra.mxu0 %v1327
    %1384 = vmatprep.subr.bf16.mxu0 0
    %1385 = vmatpush1.bf16.msra.mxu0 %v1328
    %1386 = vmatprep.subr.bf16.mxu0 0
    %1387 = vmatpush1.bf16.msra.mxu0 %v1329
    %1388 = vmatprep.subr.bf16.mxu0 0
    %1389 = vmatpush1.bf16.msra.mxu0 %v1330
    %1390 = vmatprep.subr.bf16.mxu0 0
    %1391 = vmatpush1.bf16.msra.mxu0 %v1331
    %1392 = vmatprep.subr.bf16.mxu0 0
    %1393 = vmatpush1.bf16.msra.mxu0 %v1332
    %1394 = vmatprep.subr.bf16.mxu0 0
    %1395 = vmatpush1.bf16.msra.mxu0 %v1333
    %1396 = vmatprep.subr.bf16.mxu0 0
    %1397 = vmatpush1.bf16.msra.mxu0 %v1334
    %1398 = vmatprep.subr.bf16.mxu0 0
    %1399 = vmatpush1.bf16.msra.mxu0 %v1335
    %1400 = vmatprep.subr.bf16.mxu0 0
    %1401 = vmatpush1.bf16.msra.mxu0 %v1336
    %1402 = vmatprep.subr.bf16.mxu0 0
    %1403 = vmatpush1.bf16.msra.mxu0 %v1337
    %1404 = vmatprep.subr.bf16.mxu0 0
    %1405 = vmatpush1.bf16.msra.mxu0 %v1338
    %1406 = vmatprep.subr.bf16.mxu0 0
    %1407 = vmatpush1.bf16.msra.mxu0 %v1339
    %1408 = vmatprep.subr.bf16.mxu0 0
    %1409 = vmatpush1.bf16.msra.mxu0 %v1340
    %1410 = vmatprep.subr.bf16.mxu0 0
    %1411 = vmatpush1.bf16.msra.mxu0 %v1341
    %1412 = vmatprep.mubr.bf16.mxu0 %v1149
    %1413 = vmatmul.mubr.bf16.gmra.mrb[0].mxu0 %v1145
    %v1414 = vpop.f32.mrb[0].mxu0
    %v1415 = vadd.f32 %v1252, %v1414
    %v1416 = vpop.f32.mrb[0].mxu0
    %v1417 = vpop.f32.mrb[0].mxu0
    %v1418 = vadd.f32 %v1252, %v1417
    %v1419 = vpop.f32.mrb[0].mxu0
    %1420 = vmatprep.mubr.bf16.mxu0 %v1176
    %1421 = vmatmul.mubr.bf16.gmra.mrb[0].mxu0 %v1172
    %v1422 = vpop.f32.mrb[0].mxu0
    %v1423 = vadd.f32 %v1252, %v1422
    %v1424 = vpop.f32.mrb[0].mxu0
    %v1425 = vpop.f32.mrb[0].mxu0
    %v1426 = vadd.f32 %v1252, %v1425
    %v1427 = vpop.f32.mrb[0].mxu0
    %1428 = vmatprep.mubr.bf16.mxu0 %v1194
    %1429 = vmatmul.mubr.bf16.gmra.mrb[0].mxu0 %v1190
    %v1430 = vpop.f32.mrb[0].mxu0
    %v1431 = vadd.f32 %v1252, %v1430
    %v1432 = vpop.f32.mrb[0].mxu0
    %v1433 = vpop.f32.mrb[0].mxu0
    %v1434 = vadd.f32 %v1252, %v1433
    %v1435 = vpop.f32.mrb[0].mxu0
    %1436 = vmatprep.mubr.bf16.mxu0 %v1210
    %1437 = vmatmul.mubr.bf16.gmra.mrb[0].mxu0 %v1207
    %v1438 = vpop.f32.mrb[0].mxu0
    %v1439 = vadd.f32 %v1252, %v1438
    %v1440 = vpop.f32.mrb[0].mxu0
    %v1441 = vpop.f32.mrb[0].mxu0
    %v1442 = vadd.f32 %v1252, %v1441
    %v1443 = vpop.f32.mrb[0].mxu0
    %1444 = vmatprep.mubr.bf16.mxu0 %v1220
    %1445 = vmatmul.mubr.bf16.gmra.mrb[0].mxu0 %v1217
    %v1446 = vpop.f32.mrb[0].mxu0
    %v1447 = vadd.f32 %v1252, %v1446
    %v1448 = vpop.f32.mrb[0].mxu0
    %v1449 = vpop.f32.mrb[0].mxu0
    %v1450 = vadd.f32 %v1252, %v1449
    %v1451 = vpop.f32.mrb[0].mxu0
    %1452 = vmatprep.mubr.bf16.mxu0 %v1237
    %1453 = vmatmul.mubr.bf16.gmra.mrb[0].mxu0 %v1233
    %v1454 = vpop.f32.mrb[0].mxu0
    %v1455 = vadd.f32 %v1252, %v1454
    %v1456 = vpop.f32.mrb[0].mxu0
    %v1457 = vpop.f32.mrb[0].mxu0
    %v1458 = vadd.f32 %v1252, %v1457
    %v1459 = vpop.f32.mrb[0].mxu0
    %1460 = vmatprep.mubr.bf16.mxu0 %v1246
    %1461 = vmatmul.mubr.bf16.gmra.mrb[0].mxu0 %v1243
    %v1462 = vpop.f32.mrb[0].mxu0
    %v1463 = vadd.f32 %v1252, %v1462
    %v1464 = vpop.f32.mrb[0].mxu0
    %v1465 = vpop.f32.mrb[0].mxu0
    %v1466 = vadd.f32 %v1252, %v1465
    %v1467 = vpop.f32.mrb[0].mxu0
    %1468 = vdwg.mxu0
    %1469 = vmatprep.subr.bf16.mxu0 0
    %1470 = vmatpush1.bf16.msra.mxu0 %v1342
    %1471 = vmatprep.subr.bf16.mxu0 0
    %1472 = vmatpush1.bf16.msra.mxu0 %v1343
    %1473 = vmatprep.subr.bf16.mxu0 0
    %1474 = vmatpush1.bf16.msra.mxu0 0
    %1475 = vmatprep.subr.bf16.mxu0 0
    %1476 = vmatpush1.bf16.msra.mxu0 0
    %1477 = vmatprep.subr.bf16.mxu0 0
    %1478 = vmatpush1.bf16.msra.mxu0 0
    %1479 = vmatprep.subr.bf16.mxu0 0
    %1480 = vmatpush1.bf16.msra.mxu0 0
    %1481 = vmatprep.subr.bf16.mxu0 0
    %1482 = vmatpush1.bf16.msra.mxu0 0
    %1483 = vmatprep.subr.bf16.mxu0 0
    %1484 = vmatpush1.bf16.msra.mxu0 0
    %1485 = vmatprep.subr.bf16.mxu0 0
    %1486 = vmatpush1.bf16.msra.mxu0 0
    %1487 = vmatprep.subr.bf16.mxu0 0
    %1488 = vmatpush1.bf16.msra.mxu0 0
    %1489 = vmatprep.subr.bf16.mxu0 0
    %1490 = vmatpush1.bf16.msra.mxu0 0
    %1491 = vmatprep.subr.bf16.mxu0 0
    %1492 = vmatpush1.bf16.msra.mxu0 0
    %1493 = vmatprep.subr.bf16.mxu0 0
    %1494 = vmatpush1.bf16.msra.mxu0 0
    %1495 = vmatprep.subr.bf16.mxu0 0
    %1496 = vmatpush1.bf16.msra.mxu0 0
    %1497 = vmatprep.subr.bf16.mxu0 0
    %1498 = vmatpush1.bf16.msra.mxu0 0
    %1499 = vmatprep.subr.bf16.mxu0 0
    %1500 = vmatpush1.bf16.msra.mxu0 0
    %1501 = vmatprep.mubr.bf16.mxu0 0
    %1502 = vmatmul.mubr.bf16.gmra.mrb[0].mxu0 %v1363
    %v1503 = vpop.f32.mrb[0].mxu0
    %v1504 = vadd.f32 %v1415, %v1503
    %v1505 = vpop.f32.mrb[0].mxu0
    %v1506 = vpop.f32.mrb[0].mxu0
    %v1507 = vadd.f32 %v1418, %v1506
    %v1508 = vpop.f32.mrb[0].mxu0
    %1509 = vmatprep.mubr.bf16.mxu0 0
    %1510 = vmatmul.mubr.bf16.gmra.mrb[0].mxu0 %v1366
    %v1511 = vpop.f32.mrb[0].mxu0
    %v1512 = vadd.f32 %v1423, %v1511
    %v1513 = vpop.f32.mrb[0].mxu0
    %v1514 = vpop.f32.mrb[0].mxu0
    %v1515 = vadd.f32 %v1426, %v1514
    %v1516 = vpop.f32.mrb[0].mxu0
    %1517 = vmatprep.mubr.bf16.mxu0 0
    %1518 = vmatmul.mubr.bf16.gmra.mrb[0].mxu0 %v1368
    %v1519 = vpop.f32.mrb[0].mxu0
    %v1520 = vadd.f32 %v1431, %v1519
    %v1521 = vpop.f32.mrb[0].mxu0
    %v1522 = vpop.f32.mrb[0].mxu0
    %v1523 = vadd.f32 %v1434, %v1522
    %v1524 = vpop.f32.mrb[0].mxu0
    %1525 = vmatprep.mubr.bf16.mxu0 0
    %1526 = vmatmul.mubr.bf16.gmra.mrb[0].mxu0 %v1370
    %v1527 = vpop.f32.mrb[0].mxu0
    %v1528 = vadd.f32 %v1439, %v1527
    %v1529 = vpop.f32.mrb[0].mxu0
    %v1530 = vpop.f32.mrb[0].mxu0
    %v1531 = vadd.f32 %v1442, %v1530
    %v1532 = vpop.f32.mrb[0].mxu0
    %1533 = vmatprep.mubr.bf16.mxu0 0
    %1534 = vmatmul.mubr.bf16.gmra.mrb[0].mxu0 %v1373
    %v1535 = vpop.f32.mrb[0].mxu0
    %v1536 = vadd.f32 %v1447, %v1535
    %v1537 = vpop.f32.mrb[0].mxu0
    %v1538 = vpop.f32.mrb[0].mxu0
    %v1539 = vadd.f32 %v1450, %v1538
    %v1540 = vpop.f32.mrb[0].mxu0
    %1541 = vmatprep.mubr.bf16.mxu0 0
    %1542 = vmatmul.mubr.bf16.gmra.mrb[0].mxu0 %v1376
    %v1543 = vpop.f32.mrb[0].mxu0
    %v1544 = vadd.f32 %v1455, %v1543
    %v1545 = vpop.f32.mrb[0].mxu0
    %v1546 = vpop.f32.mrb[0].mxu0
    %v1547 = vadd.f32 %v1458, %v1546
    %v1548 = vpop.f32.mrb[0].mxu0
    %1549 = vmatprep.mubr.bf16.mxu0 0
    %1550 = vmatmul.mubr.bf16.gmra.mrb[0].mxu0 %v1378
    %v1551 = vpop.f32.mrb[0].mxu0
    %v1552 = vadd.f32 %v1463, %v1551
    %v1553 = vpop.f32.mrb[0].mxu0
    %v1554 = vpop.f32.mrb[0].mxu0
    %v1555 = vadd.f32 %v1466, %v1554
    %v1556 = vpop.f32.mrb[0].mxu0
    %1557 = vdwg.mxu0
    %v1558 = vmax.f32 %v1504, 0.0
    %v1559 = vmax.f32 %v1507, 0.0
    %v1560 = vmax.f32 %v1512, 0.0
    %v1561 = vmax.f32 %v1515, 0.0
    %v1562 = vmax.f32 %v1520, 0.0
    %v1563 = vmax.f32 %v1523, 0.0
    %v1564 = vmax.f32 %v1528, 0.0
    %v1565 = vmax.f32 %v1531, 0.0
    %v1566 = vmax.f32 %v1536, 0.0
    %v1567 = vmax.f32 %v1539, 0.0
    %v1568 = vmax.f32 %v1544, 0.0
    %v1569 = vmax.f32 %v1547, 0.0
    %v1570 = vmax.f32 %v1552, 0.0
    %v1571 = vmax.f32 %v1555, 0.0
    %v1572 = vpack.c.bf16 %v1559, %v1558
    %v1573 = vpack.c.bf16 %v1561, %v1560
    %v1574 = vpack.c.bf16 %v1563, %v1562
    %v1575 = vpack.c.bf16 %v1565, %v1564
    %v1576 = vpack.c.bf16 %v1567, %v1566
    %v1577 = vpack.c.bf16 %v1569, %v1568
    %v1578 = vpack.c.bf16 %v1571, %v1570
    %1580 = vrot.lane.b32.xlu0 %v1573, 64
    %v1581 = vpop.permute.xlu0 %1580
    %1583 = vrot.lane.b32.xlu0 %v1575, 64
    %v1584 = vpop.permute.xlu0 %1583
    %1586 = vrot.lane.b32.xlu0 %v1577, 64
    %v1587 = vpop.permute.xlu0 %1586
    %v1590 = vsel %vm1147, %v1572, %v1581
    %v1594 = vsel %vm1147, %v1574, %v1584
    %v1598 = vsel %vm1147, %v1576, %v1587
    %v1602 = vsel %vm1147, %v1578, 0
    %1604 = vst [vmem:[#allocation3] sm:$0xff] %v1590
    %1605 = vst [vmem:[#allocation3 + $0x8] sm:$0xff] %v1594
    %1606 = vst [vmem:[#allocation3 + $0x10] sm:$0xff] %v1598
    %1607 = vst [vmem:[#allocation3 + $0x18] sm:$0xff] %v1602
    %v1608 = vld [vmem:[#allocation2 + $0x10] sm:$0xff]
    %v1609 = vld [vmem:[#allocation2 + $0x20] sm:$0xff]
    %v1610 = vld [vmem:[#allocation2 + $0x28] sm:$0xff]
    %v1611 = vld [vmem:[#allocation2 + $0x30] sm:$0xff]
    %v1612 = vld [vmem:[#allocation2 + $0x38] sm:$0xff]
    %1614 = vrot.lane.b32.xlu0 %v1608, 96
    %v1615 = vpop.permute.xlu0 %1614
    %1618 = vrot.lane.b32.xlu0 %v1609, 32
    %v1619 = vpop.permute.xlu0 %1618
    %1620 = vrot.lane.b32.xlu0 %v1610, 32
    %v1621 = vpop.permute.xlu0 %1620
    %v1622 = vsel %vm1160, %v1619, %v1621
    %1625 = vrot.lane.b32.xlu0 %v1611, 96
    %v1626 = vpop.permute.xlu0 %1625
    %1627 = vrot.lane.b32.xlu0 %v1612, 96
    %v1628 = vpop.permute.xlu0 %1627
    %v1629 = vsel %vm1168, %v1626, %v1628
    %v1632 = vsel %vm1142, %v1615, %v1619
    %v1636 = vsel %vm1147, %v1622, %v1629
    %v1638 = vld [vmem:[#allocation2 + $0x18] sm:$0xff]
    %1640 = vrot.lane.b32.xlu0 %v1608, 64
    %v1641 = vpop.permute.xlu0 %1640
    %1642 = vrot.lane.b32.xlu0 %v1638, 64
    %v1643 = vpop.permute.xlu0 %1642
    %v1644 = vsel %vm1184, %v1641, %v1643
    %1645 = vrot.lane.b32.xlu0 %v1612, 64
    %v1646 = vpop.permute.xlu0 %1645
    %v1649 = vsel %vm1142, %v1644, %v1609
    %v1653 = vsel %vm1147, %v1610, %v1646
    %1655 = vrot.lane.b32.xlu0 %v1608, 32
    %v1656 = vpop.permute.xlu0 %1655
    %1657 = vrot.lane.b32.xlu0 %v1638, 32
    %v1658 = vpop.permute.xlu0 %1657
    %v1659 = vsel %vm1160, %v1656, %v1658
    %1660 = vrot.lane.b32.xlu0 %v1610, 96
    %v1661 = vpop.permute.xlu0 %1660
    %1662 = vrot.lane.b32.xlu0 %v1612, 32
    %v1663 = vpop.permute.xlu0 %1662
    %v1666 = vsel %vm1142, %v1659, %v1661
    %v1669 = vsel %vm1147, %v1661, %v1663
    %v1671 = vld [vmem:[#allocation2 + $0x40] sm:$0xff]
    %1672 = vrot.lane.b32.xlu0 %v1610, 64
    %v1673 = vpop.permute.xlu0 %1672
    %v1676 = vsel %vm1142, %v1638, %v1673
    %v1679 = vsel %vm1147, %v1673, %v1612
    %1681 = vrot.lane.b32.xlu0 %v1638, 96
    %v1682 = vpop.permute.xlu0 %1681
    %1683 = vrot.lane.b32.xlu0 %v1611, 32
    %v1684 = vpop.permute.xlu0 %1683
    %v1685 = vsel %vm1160, %v1621, %v1684
    %1687 = vrot.lane.b32.xlu0 %v1671, 96
    %v1688 = vpop.permute.xlu0 %1687
    %v1689 = vsel %vm1168, %v1628, %v1688
    %v1692 = vsel %vm1142, %v1682, %v1621
    %v1696 = vsel %vm1147, %v1685, %v1689
    %1698 = vrot.lane.b32.xlu0 %v1609, 64
    %v1699 = vpop.permute.xlu0 %1698
    %v1700 = vsel %vm1184, %v1643, %v1699
    %1701 = vrot.lane.b32.xlu0 %v1671, 64
    %v1702 = vpop.permute.xlu0 %1701
    %v1704 = vsel %vm1142, %v1700, %v1610
    %v1708 = vsel %vm1147, %v1611, %v1702
    %v1710 = vsel %vm1160, %v1658, %v1619
    %1711 = vrot.lane.b32.xlu0 %v1671, 32
    %v1712 = vpop.permute.xlu0 %1711
    %v1715 = vsel %vm1142, %v1710, %v1626
    %v1718 = vsel %vm1147, %v1626, %v1712
    %v1721 = vsel %vm1362, %v1628, 0
    %v1723 = vsel %vm1362, %v1646, 0
    %v1725 = vsel %vm1362, %v1663, 0
    %v1728 = vsel %vm1362, %v1671, 0
    %v1731 = vsel %vm1362, %v1688, 0
    %v1733 = vsel %vm1362, %v1702, 0
    %v1735 = vsel %vm1362, %v1712, 0
    %1737 = vmatprep.subr.bf16.mxu0 0
    %1738 = vmatpush1.bf16.msra.mxu0 %v1326
    %1739 = vmatprep.subr.bf16.mxu0 0
    %1740 = vmatpush1.bf16.msra.mxu0 %v1327
    %1741 = vmatprep.subr.bf16.mxu0 0
    %1742 = vmatpush1.bf16.msra.mxu0 %v1328
    %1743 = vmatprep.subr.bf16.mxu0 0
    %1744 = vmatpush1.bf16.msra.mxu0 %v1329
    %1745 = vmatprep.subr.bf16.mxu0 0
    %1746 = vmatpush1.bf16.msra.mxu0 %v1330
    %1747 = vmatprep.subr.bf16.mxu0 0
    %1748 = vmatpush1.bf16.msra.mxu0 %v1331
    %1749 = vmatprep.subr.bf16.mxu0 0
    %1750 = vmatpush1.bf16.msra.mxu0 %v1332
    %1751 = vmatprep.subr.bf16.mxu0 0
    %1752 = vmatpush1.bf16.msra.mxu0 %v1333
    %1753 = vmatprep.subr.bf16.mxu0 0
    %1754 = vmatpush1.bf16.msra.mxu0 %v1334
    %1755 = vmatprep.subr.bf16.mxu0 0
    %1756 = vmatpush1.bf16.msra.mxu0 %v1335
    %1757 = vmatprep.subr.bf16.mxu0 0
    %1758 = vmatpush1.bf16.msra.mxu0 %v1336
    %1759 = vmatprep.subr.bf16.mxu0 0
    %1760 = vmatpush1.bf16.msra.mxu0 %v1337
    %1761 = vmatprep.subr.bf16.mxu0 0
    %1762 = vmatpush1.bf16.msra.mxu0 %v1338
    %1763 = vmatprep.subr.bf16.mxu0 0
    %1764 = vmatpush1.bf16.msra.mxu0 %v1339
    %1765 = vmatprep.subr.bf16.mxu0 0
    %1766 = vmatpush1.bf16.msra.mxu0 %v1340
    %1767 = vmatprep.subr.bf16.mxu0 0
    %1768 = vmatpush1.bf16.msra.mxu0 %v1341
    %1769 = vmatprep.mubr.bf16.mxu0 %v1636
    %1770 = vmatmul.mubr.bf16.gmra.mrb[0].mxu0 %v1632
    %v1771 = vpop.f32.mrb[0].mxu0
    %v1772 = vadd.f32 %v1252, %v1771
    %v1773 = vpop.f32.mrb[0].mxu0
    %v1774 = vpop.f32.mrb[0].mxu0
    %v1775 = vadd.f32 %v1252, %v1774
    %v1776 = vpop.f32.mrb[0].mxu0
    %1777 = vmatprep.mubr.bf16.mxu0 %v1653
    %1778 = vmatmul.mubr.bf16.gmra.mrb[0].mxu0 %v1649
    %v1779 = vpop.f32.mrb[0].mxu0
    %v1780 = vadd.f32 %v1252, %v1779
    %v1781 = vpop.f32.mrb[0].mxu0
    %v1782 = vpop.f32.mrb[0].mxu0
    %v1783 = vadd.f32 %v1252, %v1782
    %v1784 = vpop.f32.mrb[0].mxu0
    %1785 = vmatprep.mubr.bf16.mxu0 %v1669
    %1786 = vmatmul.mubr.bf16.gmra.mrb[0].mxu0 %v1666
    %v1787 = vpop.f32.mrb[0].mxu0
    %v1788 = vadd.f32 %v1252, %v1787
    %v1789 = vpop.f32.mrb[0].mxu0
    %v1790 = vpop.f32.mrb[0].mxu0
    %v1791 = vadd.f32 %v1252, %v1790
    %v1792 = vpop.f32.mrb[0].mxu0
    %1793 = vmatprep.mubr.bf16.mxu0 %v1679
    %1794 = vmatmul.mubr.bf16.gmra.mrb[0].mxu0 %v1676
    %v1795 = vpop.f32.mrb[0].mxu0
    %v1796 = vadd.f32 %v1252, %v1795
    %v1797 = vpop.f32.mrb[0].mxu0
    %v1798 = vpop.f32.mrb[0].mxu0
    %v1799 = vadd.f32 %v1252, %v1798
    %v1800 = vpop.f32.mrb[0].mxu0
    %1801 = vmatprep.mubr.bf16.mxu0 %v1696
    %1802 = vmatmul.mubr.bf16.gmra.mrb[0].mxu0 %v1692
    %v1803 = vpop.f32.mrb[0].mxu0
    %v1804 = vadd.f32 %v1252, %v1803
    %v1805 = vpop.f32.mrb[0].mxu0
    %v1806 = vpop.f32.mrb[0].mxu0
    %v1807 = vadd.f32 %v1252, %v1806
    %v1808 = vpop.f32.mrb[0].mxu0
    %1809 = vmatprep.mubr.bf16.mxu0 %v1708
    %1810 = vmatmul.mubr.bf16.gmra.mrb[0].mxu0 %v1704
    %v1811 = vpop.f32.mrb[0].mxu0
    %v1812 = vadd.f32 %v1252, %v1811
    %v1813 = vpop.f32.mrb[0].mxu0
    %v1814 = vpop.f32.mrb[0].mxu0
    %v1815 = vadd.f32 %v1252, %v1814
    %v1816 = vpop.f32.mrb[0].mxu0
    %1817 = vmatprep.mubr.bf16.mxu0 %v1718
    %1818 = vmatmul.mubr.bf16.gmra.mrb[0].mxu0 %v1715
    %v1819 = vpop.f32.mrb[0].mxu0
    %v1820 = vadd.f32 %v1252, %v1819
    %v1821 = vpop.f32.mrb[0].mxu0
    %v1822 = vpop.f32.mrb[0].mxu0
    %v1823 = vadd.f32 %v1252, %v1822
    %v1824 = vpop.f32.mrb[0].mxu0
    %1825 = vdwg.mxu0
    %1826 = vmatprep.subr.bf16.mxu0 0
    %1827 = vmatpush1.bf16.msra.mxu0 %v1342
    %1828 = vmatprep.subr.bf16.mxu0 0
    %1829 = vmatpush1.bf16.msra.mxu0 %v1343
    %1830 = vmatprep.subr.bf16.mxu0 0
    %1831 = vmatpush1.bf16.msra.mxu0 0
    %1832 = vmatprep.subr.bf16.mxu0 0
    %1833 = vmatpush1.bf16.msra.mxu0 0
    %1834 = vmatprep.subr.bf16.mxu0 0
    %1835 = vmatpush1.bf16.msra.mxu0 0
    %1836 = vmatprep.subr.bf16.mxu0 0
    %1837 = vmatpush1.bf16.msra.mxu0 0
    %1838 = vmatprep.subr.bf16.mxu0 0
    %1839 = vmatpush1.bf16.msra.mxu0 0
    %1840 = vmatprep.subr.bf16.mxu0 0
    %1841 = vmatpush1.bf16.msra.mxu0 0
    %1842 = vmatprep.subr.bf16.mxu0 0
    %1843 = vmatpush1.bf16.msra.mxu0 0
    %1844 = vmatprep.subr.bf16.mxu0 0
    %1845 = vmatpush1.bf16.msra.mxu0 0
    %1846 = vmatprep.subr.bf16.mxu0 0
    %1847 = vmatpush1.bf16.msra.mxu0 0
    %1848 = vmatprep.subr.bf16.mxu0 0
    %1849 = vmatpush1.bf16.msra.mxu0 0
    %1850 = vmatprep.subr.bf16.mxu0 0
    %1851 = vmatpush1.bf16.msra.mxu0 0
    %1852 = vmatprep.subr.bf16.mxu0 0
    %1853 = vmatpush1.bf16.msra.mxu0 0
    %1854 = vmatprep.subr.bf16.mxu0 0
    %1855 = vmatpush1.bf16.msra.mxu0 0
    %1856 = vmatprep.subr.bf16.mxu0 0
    %1857 = vmatpush1.bf16.msra.mxu0 0
    %1858 = vmatprep.mubr.bf16.mxu0 0
    %1859 = vmatmul.mubr.bf16.gmra.mrb[0].mxu0 %v1721
    %v1860 = vpop.f32.mrb[0].mxu0
    %v1861 = vadd.f32 %v1772, %v1860
    %v1862 = vpop.f32.mrb[0].mxu0
    %v1863 = vpop.f32.mrb[0].mxu0
    %v1864 = vadd.f32 %v1775, %v1863
    %v1865 = vpop.f32.mrb[0].mxu0
    %1866 = vmatprep.mubr.bf16.mxu0 0
    %1867 = vmatmul.mubr.bf16.gmra.mrb[0].mxu0 %v1723
    %v1868 = vpop.f32.mrb[0].mxu0
    %v1869 = vadd.f32 %v1780, %v1868
    %v1870 = vpop.f32.mrb[0].mxu0
    %v1871 = vpop.f32.mrb[0].mxu0
    %v1872 = vadd.f32 %v1783, %v1871
    %v1873 = vpop.f32.mrb[0].mxu0
    %1874 = vmatprep.mubr.bf16.mxu0 0
    %1875 = vmatmul.mubr.bf16.gmra.mrb[0].mxu0 %v1725
    %v1876 = vpop.f32.mrb[0].mxu0
    %v1877 = vadd.f32 %v1788, %v1876
    %v1878 = vpop.f32.mrb[0].mxu0
    %v1879 = vpop.f32.mrb[0].mxu0
    %v1880 = vadd.f32 %v1791, %v1879
    %v1881 = vpop.f32.mrb[0].mxu0
    %1882 = vmatprep.mubr.bf16.mxu0 0
    %1883 = vmatmul.mubr.bf16.gmra.mrb[0].mxu0 %v1728
    %v1884 = vpop.f32.mrb[0].mxu0
    %v1885 = vadd.f32 %v1796, %v1884
    %v1886 = vpop.f32.mrb[0].mxu0
    %v1887 = vpop.f32.mrb[0].mxu0
    %v1888 = vadd.f32 %v1799, %v1887
    %v1889 = vpop.f32.mrb[0].mxu0
    %1890 = vmatprep.mubr.bf16.mxu0 0
    %1891 = vmatmul.mubr.bf16.gmra.mrb[0].mxu0 %v1731
    %v1892 = vpop.f32.mrb[0].mxu0
    %v1893 = vadd.f32 %v1804, %v1892
    %v1894 = vpop.f32.mrb[0].mxu0
    %v1895 = vpop.f32.mrb[0].mxu0
    %v1896 = vadd.f32 %v1807, %v1895
    %v1897 = vpop.f32.mrb[0].mxu0
    %1898 = vmatprep.mubr.bf16.mxu0 0
    %1899 = vmatmul.mubr.bf16.gmra.mrb[0].mxu0 %v1733
    %v1900 = vpop.f32.mrb[0].mxu0
    %v1901 = vadd.f32 %v1812, %v1900
    %v1902 = vpop.f32.mrb[0].mxu0
    %v1903 = vpop.f32.mrb[0].mxu0
    %v1904 = vadd.f32 %v1815, %v1903
    %v1905 = vpop.f32.mrb[0].mxu0
    %1906 = vmatprep.mubr.bf16.mxu0 0
    %1907 = vmatmul.mubr.bf16.gmra.mrb[0].mxu0 %v1735
    %v1908 = vpop.f32.mrb[0].mxu0
    %v1909 = vadd.f32 %v1820, %v1908
    %v1910 = vpop.f32.mrb[0].mxu0
    %v1911 = vpop.f32.mrb[0].mxu0
    %v1912 = vadd.f32 %v1823, %v1911
    %v1913 = vpop.f32.mrb[0].mxu0
    %1914 = vdwg.mxu0
    %v1915 = vmax.f32 %v1861, 0.0
    %v1916 = vmax.f32 %v1864, 0.0
    %v1917 = vmax.f32 %v1869, 0.0
    %v1918 = vmax.f32 %v1872, 0.0
    %v1919 = vmax.f32 %v1877, 0.0
    %v1920 = vmax.f32 %v1880, 0.0
    %v1921 = vmax.f32 %v1885, 0.0
    %v1922 = vmax.f32 %v1888, 0.0
    %v1923 = vmax.f32 %v1893, 0.0
    %v1924 = vmax.f32 %v1896, 0.0
    %v1925 = vmax.f32 %v1901, 0.0
    %v1926 = vmax.f32 %v1904, 0.0
    %v1927 = vmax.f32 %v1909, 0.0
    %v1928 = vmax.f32 %v1912, 0.0
    %v1929 = vpack.c.bf16 %v1916, %v1915
    %v1930 = vpack.c.bf16 %v1918, %v1917
    %v1931 = vpack.c.bf16 %v1920, %v1919
    %v1932 = vpack.c.bf16 %v1922, %v1921
    %v1933 = vpack.c.bf16 %v1924, %v1923
    %v1934 = vpack.c.bf16 %v1926, %v1925
    %v1935 = vpack.c.bf16 %v1928, %v1927
    %1937 = vrot.lane.b32.xlu0 %v1930, 64
    %v1938 = vpop.permute.xlu0 %1937
    %1940 = vrot.lane.b32.xlu0 %v1932, 64
    %v1941 = vpop.permute.xlu0 %1940
    %1943 = vrot.lane.b32.xlu0 %v1934, 64
    %v1944 = vpop.permute.xlu0 %1943
    %v1947 = vsel %vm1147, %v1929, %v1938
    %v1951 = vsel %vm1147, %v1931, %v1941
    %v1955 = vsel %vm1147, %v1933, %v1944
    %v1958 = vsel %vm1147, %v1935, 0
    %1960 = vst [vmem:[#allocation3 + $0x20] sm:$0xff] %v1947
    %1961 = vst [vmem:[#allocation3 + $0x28] sm:$0xff] %v1951
    %1962 = vst [vmem:[#allocation3 + $0x30] sm:$0xff] %v1955
    %1963 = vst [vmem:[#allocation3 + $0x38] sm:$0xff] %v1958
    %v1964 = vld [vmem:[#allocation2 + $0x20] sm:$0xff]
    %v1965 = vld [vmem:[#allocation2 + $0x28] sm:$0xff]
    %v1966 = vld [vmem:[#allocation2 + $0x30] sm:$0xff]
    %v1967 = vld [vmem:[#allocation2 + $0x38] sm:$0xff]
    %v1968 = vld [vmem:[#allocation2 + $0x48] sm:$0xff]
    %1971 = vrot.lane.b32.xlu0 %v1964, 64
    %v1972 = vpop.permute.xlu0 %1971
    %1973 = vrot.lane.b32.xlu0 %v1965, 64
    %v1974 = vpop.permute.xlu0 %1973
    %v1975 = vsel %vm1184, %v1972, %v1974
    %1977 = vrot.lane.b32.xlu0 %v1968, 64
    %v1978 = vpop.permute.xlu0 %1977
    %v1981 = vsel %vm1142, %v1975, %v1966
    %v1985 = vsel %vm1147, %v1967, %v1978
    %1987 = vrot.lane.b32.xlu0 %v1964, 32
    %v1988 = vpop.permute.xlu0 %1987
    %1989 = vrot.lane.b32.xlu0 %v1965, 32
    %v1990 = vpop.permute.xlu0 %1989
    %v1991 = vsel %vm1160, %v1988, %v1990
    %1993 = vrot.lane.b32.xlu0 %v1967, 96
    %v1994 = vpop.permute.xlu0 %1993
    %1995 = vrot.lane.b32.xlu0 %v1968, 32
    %v1996 = vpop.permute.xlu0 %1995
    %v1999 = vsel %vm1142, %v1991, %v1994
    %v2002 = vsel %vm1147, %v1994, %v1996
    %v2004 = vld [vmem:[#allocation2 + $0x50] sm:$0xff]
    %2005 = vrot.lane.b32.xlu0 %v1967, 64
    %v2006 = vpop.permute.xlu0 %2005
    %v2009 = vsel %vm1142, %v1965, %v2006
    %v2012 = vsel %vm1147, %v2006, %v1968
    %v2014 = vld [vmem:[#allocation2 + $0x40] sm:$0xff]
    %2015 = vrot.lane.b32.xlu0 %v1965, 96
    %v2016 = vpop.permute.xlu0 %2015
    %2018 = vrot.lane.b32.xlu0 %v1967, 32
    %v2019 = vpop.permute.xlu0 %2018
    %2020 = vrot.lane.b32.xlu0 %v2014, 32
    %v2021 = vpop.permute.xlu0 %2020
    %v2022 = vsel %vm1160, %v2019, %v2021
    %2024 = vrot.lane.b32.xlu0 %v1968, 96
    %v2025 = vpop.permute.xlu0 %2024
    %2026 = vrot.lane.b32.xlu0 %v2004, 96
    %v2027 = vpop.permute.xlu0 %2026
    %v2028 = vsel %vm1168, %v2025, %v2027
    %v2031 = vsel %vm1142, %v2016, %v2019
    %v2035 = vsel %vm1147, %v2022, %v2028
    %2038 = vrot.lane.b32.xlu0 %v1966, 64
    %v2039 = vpop.permute.xlu0 %2038
    %v2040 = vsel %vm1184, %v1974, %v2039
    %2041 = vrot.lane.b32.xlu0 %v2004, 64
    %v2042 = vpop.permute.xlu0 %2041
    %v2044 = vsel %vm1142, %v2040, %v1967
    %v2048 = vsel %vm1147, %v2014, %v2042
    %2050 = vrot.lane.b32.xlu0 %v1966, 32
    %v2051 = vpop.permute.xlu0 %2050
    %v2052 = vsel %vm1160, %v1990, %v2051
    %2053 = vrot.lane.b32.xlu0 %v2014, 96
    %v2054 = vpop.permute.xlu0 %2053
    %2055 = vrot.lane.b32.xlu0 %v2004, 32
    %v2056 = vpop.permute.xlu0 %2055
    %v2059 = vsel %vm1142, %v2052, %v2054
    %v2062 = vsel %vm1147, %v2054, %v2056
    %v2064 = vld [vmem:[#allocation2 + $0x58] sm:$0xff]
    %2065 = vrot.lane.b32.xlu0 %v2014, 64
    %v2066 = vpop.permute.xlu0 %2065
    %v2068 = vsel %vm1142, %v1966, %v2066
    %v2071 = vsel %vm1147, %v2066, %v2004
    %v2073 = vsel %vm1362, %v1978, 0
    %v2075 = vsel %vm1362, %v1996, 0
    %v2077 = vsel %vm1362, %v2004, 0
    %v2080 = vsel %vm1362, %v2027, 0
    %v2082 = vsel %vm1362, %v2042, 0
    %v2084 = vsel %vm1362, %v2056, 0
    %v2087 = vsel %vm1362, %v2064, 0
    %2089 = vmatprep.subr.bf16.mxu0 0
    %2090 = vmatpush1.bf16.msra.mxu0 %v1326
    %2091 = vmatprep.subr.bf16.mxu0 0
    %2092 = vmatpush1.bf16.msra.mxu0 %v1327
    %2093 = vmatprep.subr.bf16.mxu0 0
    %2094 = vmatpush1.bf16.msra.mxu0 %v1328
    %2095 = vmatprep.subr.bf16.mxu0 0
    %2096 = vmatpush1.bf16.msra.mxu0 %v1329
    %2097 = vmatprep.subr.bf16.mxu0 0
    %2098 = vmatpush1.bf16.msra.mxu0 %v1330
    %2099 = vmatprep.subr.bf16.mxu0 0
    %2100 = vmatpush1.bf16.msra.mxu0 %v1331
    %2101 = vmatprep.subr.bf16.mxu0 0
    %2102 = vmatpush1.bf16.msra.mxu0 %v1332
    %2103 = vmatprep.subr.bf16.mxu0 0
    %2104 = vmatpush1.bf16.msra.mxu0 %v1333
    %2105 = vmatprep.subr.bf16.mxu0 0
    %2106 = vmatpush1.bf16.msra.mxu0 %v1334
    %2107 = vmatprep.subr.bf16.mxu0 0
    %2108 = vmatpush1.bf16.msra.mxu0 %v1335
    %2109 = vmatprep.subr.bf16.mxu0 0
    %2110 = vmatpush1.bf16.msra.mxu0 %v1336
    %2111 = vmatprep.subr.bf16.mxu0 0
    %2112 = vmatpush1.bf16.msra.mxu0 %v1337
    %2113 = vmatprep.subr.bf16.mxu0 0
    %2114 = vmatpush1.bf16.msra.mxu0 %v1338
    %2115 = vmatprep.subr.bf16.mxu0 0
    %2116 = vmatpush1.bf16.msra.mxu0 %v1339
    %2117 = vmatprep.subr.bf16.mxu0 0
    %2118 = vmatpush1.bf16.msra.mxu0 %v1340
    %2119 = vmatprep.subr.bf16.mxu0 0
    %2120 = vmatpush1.bf16.msra.mxu0 %v1341
    %2121 = vmatprep.mubr.bf16.mxu0 %v1985
    %2122 = vmatmul.mubr.bf16.gmra.mrb[0].mxu0 %v1981
    %v2123 = vpop.f32.mrb[0].mxu0
    %v2124 = vadd.f32 %v1252, %v2123
    %v2125 = vpop.f32.mrb[0].mxu0
    %v2126 = vpop.f32.mrb[0].mxu0
    %v2127 = vadd.f32 %v1252, %v2126
    %v2128 = vpop.f32.mrb[0].mxu0
    %2129 = vmatprep.mubr.bf16.mxu0 %v2002
    %2130 = vmatmul.mubr.bf16.gmra.mrb[0].mxu0 %v1999
    %v2131 = vpop.f32.mrb[0].mxu0
    %v2132 = vadd.f32 %v1252, %v2131
    %v2133 = vpop.f32.mrb[0].mxu0
    %v2134 = vpop.f32.mrb[0].mxu0
    %v2135 = vadd.f32 %v1252, %v2134
    %v2136 = vpop.f32.mrb[0].mxu0
    %2137 = vmatprep.mubr.bf16.mxu0 %v2012
    %2138 = vmatmul.mubr.bf16.gmra.mrb[0].mxu0 %v2009
    %v2139 = vpop.f32.mrb[0].mxu0
    %v2140 = vadd.f32 %v1252, %v2139
    %v2141 = vpop.f32.mrb[0].mxu0
    %v2142 = vpop.f32.mrb[0].mxu0
    %v2143 = vadd.f32 %v1252, %v2142
    %v2144 = vpop.f32.mrb[0].mxu0
    %2145 = vmatprep.mubr.bf16.mxu0 %v2035
    %2146 = vmatmul.mubr.bf16.gmra.mrb[0].mxu0 %v2031
    %v2147 = vpop.f32.mrb[0].mxu0
    %v2148 = vadd.f32 %v1252, %v2147
    %v2149 = vpop.f32.mrb[0].mxu0
    %v2150 = vpop.f32.mrb[0].mxu0
    %v2151 = vadd.f32 %v1252, %v2150
    %v2152 = vpop.f32.mrb[0].mxu0
    %2153 = vmatprep.mubr.bf16.mxu0 %v2048
    %2154 = vmatmul.mubr.bf16.gmra.mrb[0].mxu0 %v2044
    %v2155 = vpop.f32.mrb[0].mxu0
    %v2156 = vadd.f32 %v1252, %v2155
    %v2157 = vpop.f32.mrb[0].mxu0
    %v2158 = vpop.f32.mrb[0].mxu0
    %v2159 = vadd.f32 %v1252, %v2158
    %v2160 = vpop.f32.mrb[0].mxu0
    %2161 = vmatprep.mubr.bf16.mxu0 %v2062
    %2162 = vmatmul.mubr.bf16.gmra.mrb[0].mxu0 %v2059
    %v2163 = vpop.f32.mrb[0].mxu0
    %v2164 = vadd.f32 %v1252, %v2163
    %v2165 = vpop.f32.mrb[0].mxu0
    %v2166 = vpop.f32.mrb[0].mxu0
    %v2167 = vadd.f32 %v1252, %v2166
    %v2168 = vpop.f32.mrb[0].mxu0
    %2169 = vmatprep.mubr.bf16.mxu0 %v2071
    %2170 = vmatmul.mubr.bf16.gmra.mrb[0].mxu0 %v2068
    %v2171 = vpop.f32.mrb[0].mxu0
    %v2172 = vadd.f32 %v1252, %v2171
    %v2173 = vpop.f32.mrb[0].mxu0
    %v2174 = vpop.f32.mrb[0].mxu0
    %v2175 = vadd.f32 %v1252, %v2174
    %v2176 = vpop.f32.mrb[0].mxu0
    %2177 = vdwg.mxu0
    %2178 = vmatprep.subr.bf16.mxu0 0
    %2179 = vmatpush1.bf16.msra.mxu0 %v1342
    %2180 = vmatprep.subr.bf16.mxu0 0
    %2181 = vmatpush1.bf16.msra.mxu0 %v1343
    %2182 = vmatprep.subr.bf16.mxu0 0
    %2183 = vmatpush1.bf16.msra.mxu0 0
    %2184 = vmatprep.subr.bf16.mxu0 0
    %2185 = vmatpush1.bf16.msra.mxu0 0
    %2186 = vmatprep.subr.bf16.mxu0 0
    %2187 = vmatpush1.bf16.msra.mxu0 0
    %2188 = vmatprep.subr.bf16.mxu0 0
    %2189 = vmatpush1.bf16.msra.mxu0 0
    %2190 = vmatprep.subr.bf16.mxu0 0
    %2191 = vmatpush1.bf16.msra.mxu0 0
    %2192 = vmatprep.subr.bf16.mxu0 0
    %2193 = vmatpush1.bf16.msra.mxu0 0
    %2194 = vmatprep.subr.bf16.mxu0 0
    %2195 = vmatpush1.bf16.msra.mxu0 0
    %2196 = vmatprep.subr.bf16.mxu0 0
    %2197 = vmatpush1.bf16.msra.mxu0 0
    %2198 = vmatprep.subr.bf16.mxu0 0
    %2199 = vmatpush1.bf16.msra.mxu0 0
    %2200 = vmatprep.subr.bf16.mxu0 0
    %2201 = vmatpush1.bf16.msra.mxu0 0
    %2202 = vmatprep.subr.bf16.mxu0 0
    %2203 = vmatpush1.bf16.msra.mxu0 0
    %2204 = vmatprep.subr.bf16.mxu0 0
    %2205 = vmatpush1.bf16.msra.mxu0 0
    %2206 = vmatprep.subr.bf16.mxu0 0
    %2207 = vmatpush1.bf16.msra.mxu0 0
    %2208 = vmatprep.subr.bf16.mxu0 0
    %2209 = vmatpush1.bf16.msra.mxu0 0
    %2210 = vmatprep.mubr.bf16.mxu0 0
    %2211 = vmatmul.mubr.bf16.gmra.mrb[0].mxu0 %v2073
    %v2212 = vpop.f32.mrb[0].mxu0
    %v2213 = vadd.f32 %v2124, %v2212
    %v2214 = vpop.f32.mrb[0].mxu0
    %v2215 = vpop.f32.mrb[0].mxu0
    %v2216 = vadd.f32 %v2127, %v2215
    %v2217 = vpop.f32.mrb[0].mxu0
    %2218 = vmatprep.mubr.bf16.mxu0 0
    %2219 = vmatmul.mubr.bf16.gmra.mrb[0].mxu0 %v2075
    %v2220 = vpop.f32.mrb[0].mxu0
    %v2221 = vadd.f32 %v2132, %v2220
    %v2222 = vpop.f32.mrb[0].mxu0
    %v2223 = vpop.f32.mrb[0].mxu0
    %v2224 = vadd.f32 %v2135, %v2223
    %v2225 = vpop.f32.mrb[0].mxu0
    %2226 = vmatprep.mubr.bf16.mxu0 0
    %2227 = vmatmul.mubr.bf16.gmra.mrb[0].mxu0 %v2077
    %v2228 = vpop.f32.mrb[0].mxu0
    %v2229 = vadd.f32 %v2140, %v2228
    %v2230 = vpop.f32.mrb[0].mxu0
    %v2231 = vpop.f32.mrb[0].mxu0
    %v2232 = vadd.f32 %v2143, %v2231
    %v2233 = vpop.f32.mrb[0].mxu0
    %2234 = vmatprep.mubr.bf16.mxu0 0
    %2235 = vmatmul.mubr.bf16.gmra.mrb[0].mxu0 %v2080
    %v2236 = vpop.f32.mrb[0].mxu0
    %v2237 = vadd.f32 %v2148, %v2236
    %v2238 = vpop.f32.mrb[0].mxu0
    %v2239 = vpop.f32.mrb[0].mxu0
    %v2240 = vadd.f32 %v2151, %v2239
    %v2241 = vpop.f32.mrb[0].mxu0
    %2242 = vmatprep.mubr.bf16.mxu0 0
    %2243 = vmatmul.mubr.bf16.gmra.mrb[0].mxu0 %v2082
    %v2244 = vpop.f32.mrb[0].mxu0
    %v2245 = vadd.f32 %v2156, %v2244
    %v2246 = vpop.f32.mrb[0].mxu0
    %v2247 = vpop.f32.mrb[0].mxu0
    %v2248 = vadd.f32 %v2159, %v2247
    %v2249 = vpop.f32.mrb[0].mxu0
    %2250 = vmatprep.mubr.bf16.mxu0 0
    %2251 = vmatmul.mubr.bf16.gmra.mrb[0].mxu0 %v2084
    %v2252 = vpop.f32.mrb[0].mxu0
    %v2253 = vadd.f32 %v2164, %v2252
    %v2254 = vpop.f32.mrb[0].mxu0
    %v2255 = vpop.f32.mrb[0].mxu0
    %v2256 = vadd.f32 %v2167, %v2255
    %v2257 = vpop.f32.mrb[0].mxu0
    %2258 = vmatprep.mubr.bf16.mxu0 0
    %2259 = vmatmul.mubr.bf16.gmra.mrb[0].mxu0 %v2087
    %v2260 = vpop.f32.mrb[0].mxu0
    %v2261 = vadd.f32 %v2172, %v2260
    %v2262 = vpop.f32.mrb[0].mxu0
    %v2263 = vpop.f32.mrb[0].mxu0
    %v2264 = vadd.f32 %v2175, %v2263
    %v2265 = vpop.f32.mrb[0].mxu0
    %2266 = vdwg.mxu0
    %v2267 = vmax.f32 %v2213, 0.0
    %v2268 = vmax.f32 %v2216, 0.0
    %v2269 = vmax.f32 %v2221, 0.0
    %v2270 = vmax.f32 %v2224, 0.0
    %v2271 = vmax.f32 %v2229, 0.0
    %v2272 = vmax.f32 %v2232, 0.0
    %v2273 = vmax.f32 %v2237, 0.0
    %v2274 = vmax.f32 %v2240, 0.0
    %v2275 = vmax.f32 %v2245, 0.0
    %v2276 = vmax.f32 %v2248, 0.0
    %v2277 = vmax.f32 %v2253, 0.0
    %v2278 = vmax.f32 %v2256, 0.0
    %v2279 = vmax.f32 %v2261, 0.0
    %v2280 = vmax.f32 %v2264, 0.0
    %v2281 = vpack.c.bf16 %v2268, %v2267
    %v2282 = vpack.c.bf16 %v2270, %v2269
    %v2283 = vpack.c.bf16 %v2272, %v2271
    %v2284 = vpack.c.bf16 %v2274, %v2273
    %v2285 = vpack.c.bf16 %v2276, %v2275
    %v2286 = vpack.c.bf16 %v2278, %v2277
    %v2287 = vpack.c.bf16 %v2280, %v2279
    %2289 = vrot.lane.b32.xlu0 %v2282, 64
    %v2290 = vpop.permute.xlu0 %2289
    %2292 = vrot.lane.b32.xlu0 %v2284, 64
    %v2293 = vpop.permute.xlu0 %2292
    %2295 = vrot.lane.b32.xlu0 %v2286, 64
    %v2296 = vpop.permute.xlu0 %2295
    %v2299 = vsel %vm1147, %v2281, %v2290
    %v2303 = vsel %vm1147, %v2283, %v2293
    %v2307 = vsel %vm1147, %v2285, %v2296
    %v2310 = vsel %vm1147, %v2287, 0
    %2312 = vst [vmem:[#allocation3 + $0x40] sm:$0xff] %v2299
    %2313 = vst [vmem:[#allocation3 + $0x48] sm:$0xff] %v2303
    %2314 = vst [vmem:[#allocation3 + $0x50] sm:$0xff] %v2307
    %2315 = vst [vmem:[#allocation3 + $0x58] sm:$0xff] %v2310
    %v2316 = vld [vmem:[#allocation2 + $0x30] sm:$0xff]
    %v2317 = vld [vmem:[#allocation2 + $0x38] sm:$0xff]
    %v2318 = vld [vmem:[#allocation2 + $0x48] sm:$0xff]
    %v2319 = vld [vmem:[#allocation2 + $0x58] sm:$0xff]
    %2322 = vrot.lane.b32.xlu0 %v2316, 32
    %v2323 = vpop.permute.xlu0 %2322
    %2324 = vrot.lane.b32.xlu0 %v2317, 32
    %v2325 = vpop.permute.xlu0 %2324
    %v2326 = vsel %vm1160, %v2323, %v2325
    %2328 = vrot.lane.b32.xlu0 %v2318, 96
    %v2329 = vpop.permute.xlu0 %2328
    %2331 = vrot.lane.b32.xlu0 %v2319, 32
    %v2332 = vpop.permute.xlu0 %2331
    %v2335 = vsel %vm1142, %v2326, %v2329
    %v2338 = vsel %vm1147, %v2329, %v2332
    %v2340 = vld [vmem:[#allocation2 + $0x60] sm:$0xff]
    %2341 = vrot.lane.b32.xlu0 %v2318, 64
    %v2342 = vpop.permute.xlu0 %2341
    %v2345 = vsel %vm1142, %v2317, %v2342
    %v2348 = vsel %vm1147, %v2342, %v2319
    %v2350 = vld [vmem:[#allocation2 + $0x50] sm:$0xff]
    %2351 = vrot.lane.b32.xlu0 %v2317, 96
    %v2352 = vpop.permute.xlu0 %2351
    %2354 = vrot.lane.b32.xlu0 %v2318, 32
    %v2355 = vpop.permute.xlu0 %2354
    %2356 = vrot.lane.b32.xlu0 %v2350, 32
    %v2357 = vpop.permute.xlu0 %2356
    %v2358 = vsel %vm1160, %v2355, %v2357
    %2360 = vrot.lane.b32.xlu0 %v2319, 96
    %v2361 = vpop.permute.xlu0 %2360
    %2362 = vrot.lane.b32.xlu0 %v2340, 96
    %v2363 = vpop.permute.xlu0 %2362
    %v2364 = vsel %vm1168, %v2361, %v2363
    %v2367 = vsel %vm1142, %v2352, %v2355
    %v2371 = vsel %vm1147, %v2358, %v2364
    %v2373 = vld [vmem:[#allocation2 + $0x40] sm:$0xff]
    %2375 = vrot.lane.b32.xlu0 %v2317, 64
    %v2376 = vpop.permute.xlu0 %2375
    %2377 = vrot.lane.b32.xlu0 %v2373, 64
    %v2378 = vpop.permute.xlu0 %2377
    %v2379 = vsel %vm1184, %v2376, %v2378
    %2380 = vrot.lane.b32.xlu0 %v2340, 64
    %v2381 = vpop.permute.xlu0 %2380
    %v2384 = vsel %vm1142, %v2379, %v2318
    %v2388 = vsel %vm1147, %v2350, %v2381
    %2390 = vrot.lane.b32.xlu0 %v2373, 32
    %v2391 = vpop.permute.xlu0 %2390
    %v2392 = vsel %vm1160, %v2325, %v2391
    %2393 = vrot.lane.b32.xlu0 %v2350, 96
    %v2394 = vpop.permute.xlu0 %2393
    %2395 = vrot.lane.b32.xlu0 %v2340, 32
    %v2396 = vpop.permute.xlu0 %2395
    %v2399 = vsel %vm1142, %v2392, %v2394
    %v2402 = vsel %vm1147, %v2394, %v2396
    %v2404 = vld [vmem:[#allocation2 + $0x68] sm:$0xff]
    %2405 = vrot.lane.b32.xlu0 %v2350, 64
    %v2406 = vpop.permute.xlu0 %2405
    %v2409 = vsel %vm1142, %v2373, %v2406
    %v2412 = vsel %vm1147, %v2406, %v2340
    %2414 = vrot.lane.b32.xlu0 %v2373, 96
    %v2415 = vpop.permute.xlu0 %2414
    %v2416 = vsel %vm1160, %v2357, %v2332
    %2418 = vrot.lane.b32.xlu0 %v2404, 96
    %v2419 = vpop.permute.xlu0 %2418
    %v2420 = vsel %vm1168, %v2363, %v2419
    %v2423 = vsel %vm1142, %v2415, %v2357
    %v2427 = vsel %vm1147, %v2416, %v2420
    %v2429 = vsel %vm1362, %v2332, 0
    %v2431 = vsel %vm1362, %v2340, 0
    %v2434 = vsel %vm1362, %v2363, 0
    %v2436 = vsel %vm1362, %v2381, 0
    %v2438 = vsel %vm1362, %v2396, 0
    %v2441 = vsel %vm1362, %v2404, 0
    %v2444 = vsel %vm1362, %v2419, 0
    %2446 = vmatprep.subr.bf16.mxu0 0
    %2447 = vmatpush1.bf16.msra.mxu0 %v1326
    %2448 = vmatprep.subr.bf16.mxu0 0
    %2449 = vmatpush1.bf16.msra.mxu0 %v1327
    %2450 = vmatprep.subr.bf16.mxu0 0
    %2451 = vmatpush1.bf16.msra.mxu0 %v1328
    %2452 = vmatprep.subr.bf16.mxu0 0
    %2453 = vmatpush1.bf16.msra.mxu0 %v1329
    %2454 = vmatprep.subr.bf16.mxu0 0
    %2455 = vmatpush1.bf16.msra.mxu0 %v1330
    %2456 = vmatprep.subr.bf16.mxu0 0
    %2457 = vmatpush1.bf16.msra.mxu0 %v1331
    %2458 = vmatprep.subr.bf16.mxu0 0
    %2459 = vmatpush1.bf16.msra.mxu0 %v1332
    %2460 = vmatprep.subr.bf16.mxu0 0
    %2461 = vmatpush1.bf16.msra.mxu0 %v1333
    %2462 = vmatprep.subr.bf16.mxu0 0
    %2463 = vmatpush1.bf16.msra.mxu0 %v1334
    %2464 = vmatprep.subr.bf16.mxu0 0
    %2465 = vmatpush1.bf16.msra.mxu0 %v1335
    %2466 = vmatprep.subr.bf16.mxu0 0
    %2467 = vmatpush1.bf16.msra.mxu0 %v1336
    %2468 = vmatprep.subr.bf16.mxu0 0
    %2469 = vmatpush1.bf16.msra.mxu0 %v1337
    %2470 = vmatprep.subr.bf16.mxu0 0
    %2471 = vmatpush1.bf16.msra.mxu0 %v1338
    %2472 = vmatprep.subr.bf16.mxu0 0
    %2473 = vmatpush1.bf16.msra.mxu0 %v1339
    %2474 = vmatprep.subr.bf16.mxu0 0
    %2475 = vmatpush1.bf16.msra.mxu0 %v1340
    %2476 = vmatprep.subr.bf16.mxu0 0
    %2477 = vmatpush1.bf16.msra.mxu0 %v1341
    %2478 = vmatprep.mubr.bf16.mxu0 %v2338
    %2479 = vmatmul.mubr.bf16.gmra.mrb[0].mxu0 %v2335
    %v2480 = vpop.f32.mrb[0].mxu0
    %v2481 = vadd.f32 %v1252, %v2480
    %v2482 = vpop.f32.mrb[0].mxu0
    %v2483 = vpop.f32.mrb[0].mxu0
    %v2484 = vadd.f32 %v1252, %v2483
    %v2485 = vpop.f32.mrb[0].mxu0
    %2486 = vmatprep.mubr.bf16.mxu0 %v2348
    %2487 = vmatmul.mubr.bf16.gmra.mrb[0].mxu0 %v2345
    %v2488 = vpop.f32.mrb[0].mxu0
    %v2489 = vadd.f32 %v1252, %v2488
    %v2490 = vpop.f32.mrb[0].mxu0
    %v2491 = vpop.f32.mrb[0].mxu0
    %v2492 = vadd.f32 %v1252, %v2491
    %v2493 = vpop.f32.mrb[0].mxu0
    %2494 = vmatprep.mubr.bf16.mxu0 %v2371
    %2495 = vmatmul.mubr.bf16.gmra.mrb[0].mxu0 %v2367
    %v2496 = vpop.f32.mrb[0].mxu0
    %v2497 = vadd.f32 %v1252, %v2496
    %v2498 = vpop.f32.mrb[0].mxu0
    %v2499 = vpop.f32.mrb[0].mxu0
    %v2500 = vadd.f32 %v1252, %v2499
    %v2501 = vpop.f32.mrb[0].mxu0
    %2502 = vmatprep.mubr.bf16.mxu0 %v2388
    %2503 = vmatmul.mubr.bf16.gmra.mrb[0].mxu0 %v2384
    %v2504 = vpop.f32.mrb[0].mxu0
    %v2505 = vadd.f32 %v1252, %v2504
    %v2506 = vpop.f32.mrb[0].mxu0
    %v2507 = vpop.f32.mrb[0].mxu0
    %v2508 = vadd.f32 %v1252, %v2507
    %v2509 = vpop.f32.mrb[0].mxu0
    %2510 = vmatprep.mubr.bf16.mxu0 %v2402
    %2511 = vmatmul.mubr.bf16.gmra.mrb[0].mxu0 %v2399
    %v2512 = vpop.f32.mrb[0].mxu0
    %v2513 = vadd.f32 %v1252, %v2512
    %v2514 = vpop.f32.mrb[0].mxu0
    %v2515 = vpop.f32.mrb[0].mxu0
    %v2516 = vadd.f32 %v1252, %v2515
    %v2517 = vpop.f32.mrb[0].mxu0
    %2518 = vmatprep.mubr.bf16.mxu0 %v2412
    %2519 = vmatmul.mubr.bf16.gmra.mrb[0].mxu0 %v2409
    %v2520 = vpop.f32.mrb[0].mxu0
    %v2521 = vadd.f32 %v1252, %v2520
    %v2522 = vpop.f32.mrb[0].mxu0
    %v2523 = vpop.f32.mrb[0].mxu0
    %v2524 = vadd.f32 %v1252, %v2523
    %v2525 = vpop.f32.mrb[0].mxu0
    %2526 = vmatprep.mubr.bf16.mxu0 %v2427
    %2527 = vmatmul.mubr.bf16.gmra.mrb[0].mxu0 %v2423
    %v2528 = vpop.f32.mrb[0].mxu0
    %v2529 = vadd.f32 %v1252, %v2528
    %v2530 = vpop.f32.mrb[0].mxu0
    %v2531 = vpop.f32.mrb[0].mxu0
    %v2532 = vadd.f32 %v1252, %v2531
    %v2533 = vpop.f32.mrb[0].mxu0
    %2534 = vdwg.mxu0
    %2535 = vmatprep.subr.bf16.mxu0 0
    %2536 = vmatpush1.bf16.msra.mxu0 %v1342
    %2537 = vmatprep.subr.bf16.mxu0 0
    %2538 = vmatpush1.bf16.msra.mxu0 %v1343
    %2539 = vmatprep.subr.bf16.mxu0 0
    %2540 = vmatpush1.bf16.msra.mxu0 0
    %2541 = vmatprep.subr.bf16.mxu0 0
    %2542 = vmatpush1.bf16.msra.mxu0 0
    %2543 = vmatprep.subr.bf16.mxu0 0
    %2544 = vmatpush1.bf16.msra.mxu0 0
    %2545 = vmatprep.subr.bf16.mxu0 0
    %2546 = vmatpush1.bf16.msra.mxu0 0
    %2547 = vmatprep.subr.bf16.mxu0 0
    %2548 = vmatpush1.bf16.msra.mxu0 0
    %2549 = vmatprep.subr.bf16.mxu0 0
    %2550 = vmatpush1.bf16.msra.mxu0 0
    %2551 = vmatprep.subr.bf16.mxu0 0
    %2552 = vmatpush1.bf16.msra.mxu0 0
    %2553 = vmatprep.subr.bf16.mxu0 0
    %2554 = vmatpush1.bf16.msra.mxu0 0
    %2555 = vmatprep.subr.bf16.mxu0 0
    %2556 = vmatpush1.bf16.msra.mxu0 0
    %2557 = vmatprep.subr.bf16.mxu0 0
    %2558 = vmatpush1.bf16.msra.mxu0 0
    %2559 = vmatprep.subr.bf16.mxu0 0
    %2560 = vmatpush1.bf16.msra.mxu0 0
    %2561 = vmatprep.subr.bf16.mxu0 0
    %2562 = vmatpush1.bf16.msra.mxu0 0
    %2563 = vmatprep.subr.bf16.mxu0 0
    %2564 = vmatpush1.bf16.msra.mxu0 0
    %2565 = vmatprep.subr.bf16.mxu0 0
    %2566 = vmatpush1.bf16.msra.mxu0 0
    %2567 = vmatprep.mubr.bf16.mxu0 0
    %2568 = vmatmul.mubr.bf16.gmra.mrb[0].mxu0 %v2429
    %v2569 = vpop.f32.mrb[0].mxu0
    %v2570 = vadd.f32 %v2481, %v2569
    %v2571 = vpop.f32.mrb[0].mxu0
    %v2572 = vpop.f32.mrb[0].mxu0
    %v2573 = vadd.f32 %v2484, %v2572
    %v2574 = vpop.f32.mrb[0].mxu0
    %2575 = vmatprep.mubr.bf16.mxu0 0
    %2576 = vmatmul.mubr.bf16.gmra.mrb[0].mxu0 %v2431
    %v2577 = vpop.f32.mrb[0].mxu0
    %v2578 = vadd.f32 %v2489, %v2577
    %v2579 = vpop.f32.mrb[0].mxu0
    %v2580 = vpop.f32.mrb[0].mxu0
    %v2581 = vadd.f32 %v2492, %v2580
    %v2582 = vpop.f32.mrb[0].mxu0
    %2583 = vmatprep.mubr.bf16.mxu0 0
    %2584 = vmatmul.mubr.bf16.gmra.mrb[0].mxu0 %v2434
    %v2585 = vpop.f32.mrb[0].mxu0
    %v2586 = vadd.f32 %v2497, %v2585
    %v2587 = vpop.f32.mrb[0].mxu0
    %v2588 = vpop.f32.mrb[0].mxu0
    %v2589 = vadd.f32 %v2500, %v2588
    %v2590 = vpop.f32.mrb[0].mxu0
    %2591 = vmatprep.mubr.bf16.mxu0 0
    %2592 = vmatmul.mubr.bf16.gmra.mrb[0].mxu0 %v2436
    %v2593 = vpop.f32.mrb[0].mxu0
    %v2594 = vadd.f32 %v2505, %v2593
    %v2595 = vpop.f32.mrb[0].mxu0
    %v2596 = vpop.f32.mrb[0].mxu0
    %v2597 = vadd.f32 %v2508, %v2596
    %v2598 = vpop.f32.mrb[0].mxu0
    %2599 = vmatprep.mubr.bf16.mxu0 0
    %2600 = vmatmul.mubr.bf16.gmra.mrb[0].mxu0 %v2438
    %v2601 = vpop.f32.mrb[0].mxu0
    %v2602 = vadd.f32 %v2513, %v2601
    %v2603 = vpop.f32.mrb[0].mxu0
    %v2604 = vpop.f32.mrb[0].mxu0
    %v2605 = vadd.f32 %v2516, %v2604
    %v2606 = vpop.f32.mrb[0].mxu0
    %2607 = vmatprep.mubr.bf16.mxu0 0
    %2608 = vmatmul.mubr.bf16.gmra.mrb[0].mxu0 %v2441
    %v2609 = vpop.f32.mrb[0].mxu0
    %v2610 = vadd.f32 %v2521, %v2609
    %v2611 = vpop.f32.mrb[0].mxu0
    %v2612 = vpop.f32.mrb[0].mxu0
    %v2613 = vadd.f32 %v2524, %v2612
    %v2614 = vpop.f32.mrb[0].mxu0
    %2615 = vmatprep.mubr.bf16.mxu0 0
    %2616 = vmatmul.mubr.bf16.gmra.mrb[0].mxu0 %v2444
    %v2617 = vpop.f32.mrb[0].mxu0
    %v2618 = vadd.f32 %v2529, %v2617
    %v2619 = vpop.f32.mrb[0].mxu0
    %v2620 = vpop.f32.mrb[0].mxu0
    %v2621 = vadd.f32 %v2532, %v2620
    %v2622 = vpop.f32.mrb[0].mxu0
    %2623 = vdwg.mxu0
    %v2624 = vmax.f32 %v2570, 0.0
    %v2625 = vmax.f32 %v2573, 0.0
    %v2626 = vmax.f32 %v2578, 0.0
    %v2627 = vmax.f32 %v2581, 0.0
    %v2628 = vmax.f32 %v2586, 0.0
    %v2629 = vmax.f32 %v2589, 0.0
    %v2630 = vmax.f32 %v2594, 0.0
    %v2631 = vmax.f32 %v2597, 0.0
    %v2632 = vmax.f32 %v2602, 0.0
    %v2633 = vmax.f32 %v2605, 0.0
    %v2634 = vmax.f32 %v2610, 0.0
    %v2635 = vmax.f32 %v2613, 0.0
    %v2636 = vmax.f32 %v2618, 0.0
    %v2637 = vmax.f32 %v2621, 0.0
    %v2638 = vpack.c.bf16 %v2625, %v2624
    %v2639 = vpack.c.bf16 %v2627, %v2626
    %v2640 = vpack.c.bf16 %v2629, %v2628
    %v2641 = vpack.c.bf16 %v2631, %v2630
    %v2642 = vpack.c.bf16 %v2633, %v2632
    %v2643 = vpack.c.bf16 %v2635, %v2634
    %v2644 = vpack.c.bf16 %v2637, %v2636
    %2646 = vrot.lane.b32.xlu0 %v2639, 64
    %v2647 = vpop.permute.xlu0 %2646
    %2649 = vrot.lane.b32.xlu0 %v2641, 64
    %v2650 = vpop.permute.xlu0 %2649
    %2652 = vrot.lane.b32.xlu0 %v2643, 64
    %v2653 = vpop.permute.xlu0 %2652
    %v2656 = vsel %vm1147, %v2638, %v2647
    %v2660 = vsel %vm1147, %v2640, %v2650
    %v2664 = vsel %vm1147, %v2642, %v2653
    %v2667 = vsel %vm1147, %v2644, 0
    %2669 = vst [vmem:[#allocation3 + $0x60] sm:$0xff] %v2656
    %2670 = vst [vmem:[#allocation3 + $0x68] sm:$0xff] %v2660
    %2671 = vst [vmem:[#allocation3 + $0x70] sm:$0xff] %v2664
    %2672 = vst [vmem:[#allocation3 + $0x78] sm:$0xff] %v2667
    %v2673 = vld [vmem:[#allocation2 + $0x48] sm:$0xff]
    %v2674 = vld [vmem:[#allocation2 + $0x58] sm:$0xff]
    %v2675 = vld [vmem:[#allocation2 + $0x68] sm:$0xff]
    %v2676 = vld [vmem:[#allocation2 + $0x70] sm:$0xff]
    %2678 = vrot.lane.b32.xlu0 %v2674, 64
    %v2679 = vpop.permute.xlu0 %2678
    %v2682 = vsel %vm1142, %v2673, %v2679
    %v2685 = vsel %vm1147, %v2679, %v2675
    %v2687 = vld [vmem:[#allocation2 + $0x60] sm:$0xff]
    %2689 = vrot.lane.b32.xlu0 %v2673, 96
    %v2690 = vpop.permute.xlu0 %2689
    %2692 = vrot.lane.b32.xlu0 %v2674, 32
    %v2693 = vpop.permute.xlu0 %2692
    %2694 = vrot.lane.b32.xlu0 %v2687, 32
    %v2695 = vpop.permute.xlu0 %2694
    %v2696 = vsel %vm1160, %v2693, %v2695
    %2699 = vrot.lane.b32.xlu0 %v2675, 96
    %v2700 = vpop.permute.xlu0 %2699
    %2701 = vrot.lane.b32.xlu0 %v2676, 96
    %v2702 = vpop.permute.xlu0 %2701
    %v2703 = vsel %vm1168, %v2700, %v2702
    %v2706 = vsel %vm1142, %v2690, %v2693
    %v2710 = vsel %vm1147, %v2696, %v2703
    %v2712 = vld [vmem:[#allocation2 + $0x50] sm:$0xff]
    %2714 = vrot.lane.b32.xlu0 %v2673, 64
    %v2715 = vpop.permute.xlu0 %2714
    %2716 = vrot.lane.b32.xlu0 %v2712, 64
    %v2717 = vpop.permute.xlu0 %2716
    %v2718 = vsel %vm1184, %v2715, %v2717
    %2719 = vrot.lane.b32.xlu0 %v2676, 64
    %v2720 = vpop.permute.xlu0 %2719
    %v2723 = vsel %vm1142, %v2718, %v2674
    %v2727 = vsel %vm1147, %v2687, %v2720
    %2729 = vrot.lane.b32.xlu0 %v2673, 32
    %v2730 = vpop.permute.xlu0 %2729
    %2731 = vrot.lane.b32.xlu0 %v2712, 32
    %v2732 = vpop.permute.xlu0 %2731
    %v2733 = vsel %vm1160, %v2730, %v2732
    %2734 = vrot.lane.b32.xlu0 %v2687, 96
    %v2735 = vpop.permute.xlu0 %2734
    %2736 = vrot.lane.b32.xlu0 %v2676, 32
    %v2737 = vpop.permute.xlu0 %2736
    %v2740 = vsel %vm1142, %v2733, %v2735
    %v2743 = vsel %vm1147, %v2735, %v2737
    %v2745 = vld [vmem:[#allocation2 + $0x78] sm:$0xff]
    %2746 = vrot.lane.b32.xlu0 %v2687, 64
    %v2747 = vpop.permute.xlu0 %2746
    %v2750 = vsel %vm1142, %v2712, %v2747
    %v2753 = vsel %vm1147, %v2747, %v2676
    %2755 = vrot.lane.b32.xlu0 %v2712, 96
    %v2756 = vpop.permute.xlu0 %2755
    %2757 = vrot.lane.b32.xlu0 %v2675, 32
    %v2758 = vpop.permute.xlu0 %2757
    %v2759 = vsel %vm1160, %v2695, %v2758
    %2761 = vrot.lane.b32.xlu0 %v2745, 96
    %v2762 = vpop.permute.xlu0 %2761
    %v2763 = vsel %vm1168, %v2702, %v2762
    %v2766 = vsel %vm1142, %v2756, %v2695
    %v2770 = vsel %vm1147, %v2759, %v2763
    %v2772 = vsel %vm1184, %v2717, %v2679
    %2773 = vrot.lane.b32.xlu0 %v2745, 64
    %v2774 = vpop.permute.xlu0 %2773
    %v2776 = vsel %vm1142, %v2772, %v2687
    %v2779 = vsel %vm1147, %v2675, %v2774
    %v2781 = vsel %vm1362, %v2676, 0
    %v2784 = vsel %vm1362, %v2702, 0
    %v2786 = vsel %vm1362, %v2720, 0
    %v2788 = vsel %vm1362, %v2737, 0
    %v2791 = vsel %vm1362, %v2745, 0
    %v2794 = vsel %vm1362, %v2762, 0
    %v2796 = vsel %vm1362, %v2774, 0
    %2798 = vmatprep.subr.bf16.mxu0 0
    %2799 = vmatpush1.bf16.msra.mxu0 %v1326
    %2800 = vmatprep.subr.bf16.mxu0 0
    %2801 = vmatpush1.bf16.msra.mxu0 %v1327
    %2802 = vmatprep.subr.bf16.mxu0 0
    %2803 = vmatpush1.bf16.msra.mxu0 %v1328
    %2804 = vmatprep.subr.bf16.mxu0 0
    %2805 = vmatpush1.bf16.msra.mxu0 %v1329
    %2806 = vmatprep.subr.bf16.mxu0 0
    %2807 = vmatpush1.bf16.msra.mxu0 %v1330
    %2808 = vmatprep.subr.bf16.mxu0 0
    %2809 = vmatpush1.bf16.msra.mxu0 %v1331
    %2810 = vmatprep.subr.bf16.mxu0 0
    %2811 = vmatpush1.bf16.msra.mxu0 %v1332
    %2812 = vmatprep.subr.bf16.mxu0 0
    %2813 = vmatpush1.bf16.msra.mxu0 %v1333
    %2814 = vmatprep.subr.bf16.mxu0 0
    %2815 = vmatpush1.bf16.msra.mxu0 %v1334
    %2816 = vmatprep.subr.bf16.mxu0 0
    %2817 = vmatpush1.bf16.msra.mxu0 %v1335
    %2818 = vmatprep.subr.bf16.mxu0 0
    %2819 = vmatpush1.bf16.msra.mxu0 %v1336
    %2820 = vmatprep.subr.bf16.mxu0 0
    %2821 = vmatpush1.bf16.msra.mxu0 %v1337
    %2822 = vmatprep.subr.bf16.mxu0 0
    %2823 = vmatpush1.bf16.msra.mxu0 %v1338
    %2824 = vmatprep.subr.bf16.mxu0 0
    %2825 = vmatpush1.bf16.msra.mxu0 %v1339
    %2826 = vmatprep.subr.bf16.mxu0 0
    %2827 = vmatpush1.bf16.msra.mxu0 %v1340
    %2828 = vmatprep.subr.bf16.mxu0 0
    %2829 = vmatpush1.bf16.msra.mxu0 %v1341
    %2830 = vmatprep.mubr.bf16.mxu0 %v2685
    %2831 = vmatmul.mubr.bf16.gmra.mrb[0].mxu0 %v2682
    %v2832 = vpop.f32.mrb[0].mxu0
    %v2833 = vadd.f32 %v1252, %v2832
    %v2834 = vpop.f32.mrb[0].mxu0
    %v2835 = vpop.f32.mrb[0].mxu0
    %v2836 = vadd.f32 %v1252, %v2835
    %v2837 = vpop.f32.mrb[0].mxu0
    %2838 = vmatprep.mubr.bf16.mxu0 %v2710
    %2839 = vmatmul.mubr.bf16.gmra.mrb[0].mxu0 %v2706
    %v2840 = vpop.f32.mrb[0].mxu0
    %v2841 = vadd.f32 %v1252, %v2840
    %v2842 = vpop.f32.mrb[0].mxu0
    %v2843 = vpop.f32.mrb[0].mxu0
    %v2844 = vadd.f32 %v1252, %v2843
    %v2845 = vpop.f32.mrb[0].mxu0
    %2846 = vmatprep.mubr.bf16.mxu0 %v2727
    %2847 = vmatmul.mubr.bf16.gmra.mrb[0].mxu0 %v2723
    %v2848 = vpop.f32.mrb[0].mxu0
    %v2849 = vadd.f32 %v1252, %v2848
    %v2850 = vpop.f32.mrb[0].mxu0
    %v2851 = vpop.f32.mrb[0].mxu0
    %v2852 = vadd.f32 %v1252, %v2851
    %v2853 = vpop.f32.mrb[0].mxu0
    %2854 = vmatprep.mubr.bf16.mxu0 %v2743
    %2855 = vmatmul.mubr.bf16.gmra.mrb[0].mxu0 %v2740
    %v2856 = vpop.f32.mrb[0].mxu0
    %v2857 = vadd.f32 %v1252, %v2856
    %v2858 = vpop.f32.mrb[0].mxu0
    %v2859 = vpop.f32.mrb[0].mxu0
    %v2860 = vadd.f32 %v1252, %v2859
    %v2861 = vpop.f32.mrb[0].mxu0
    %2862 = vmatprep.mubr.bf16.mxu0 %v2753
    %2863 = vmatmul.mubr.bf16.gmra.mrb[0].mxu0 %v2750
    %v2864 = vpop.f32.mrb[0].mxu0
    %v2865 = vadd.f32 %v1252, %v2864
    %v2866 = vpop.f32.mrb[0].mxu0
    %v2867 = vpop.f32.mrb[0].mxu0
    %v2868 = vadd.f32 %v1252, %v2867
    %v2869 = vpop.f32.mrb[0].mxu0
    %2870 = vmatprep.mubr.bf16.mxu0 %v2770
    %2871 = vmatmul.mubr.bf16.gmra.mrb[0].mxu0 %v2766
    %v2872 = vpop.f32.mrb[0].mxu0
    %v2873 = vadd.f32 %v1252, %v2872
    %v2874 = vpop.f32.mrb[0].mxu0
    %v2875 = vpop.f32.mrb[0].mxu0
    %v2876 = vadd.f32 %v1252, %v2875
    %v2877 = vpop.f32.mrb[0].mxu0
    %2878 = vmatprep.mubr.bf16.mxu0 %v2779
    %2879 = vmatmul.mubr.bf16.gmra.mrb[0].mxu0 %v2776
    %v2880 = vpop.f32.mrb[0].mxu0
    %v2881 = vadd.f32 %v1252, %v2880
    %v2882 = vpop.f32.mrb[0].mxu0
    %v2883 = vpop.f32.mrb[0].mxu0
    %v2884 = vadd.f32 %v1252, %v2883
    %v2885 = vpop.f32.mrb[0].mxu0
    %2886 = vdwg.mxu0
    %2887 = vmatprep.subr.bf16.mxu0 0
    %2888 = vmatpush1.bf16.msra.mxu0 %v1342
    %2889 = vmatprep.subr.bf16.mxu0 0
    %2890 = vmatpush1.bf16.msra.mxu0 %v1343
    %2891 = vmatprep.subr.bf16.mxu0 0
    %2892 = vmatpush1.bf16.msra.mxu0 0
    %2893 = vmatprep.subr.bf16.mxu0 0
    %2894 = vmatpush1.bf16.msra.mxu0 0
    %2895 = vmatprep.subr.bf16.mxu0 0
    %2896 = vmatpush1.bf16.msra.mxu0 0
    %2897 = vmatprep.subr.bf16.mxu0 0
    %2898 = vmatpush1.bf16.msra.mxu0 0
    %2899 = vmatprep.subr.bf16.mxu0 0
    %2900 = vmatpush1.bf16.msra.mxu0 0
    %2901 = vmatprep.subr.bf16.mxu0 0
    %2902 = vmatpush1.bf16.msra.mxu0 0
    %2903 = vmatprep.subr.bf16.mxu0 0
    %2904 = vmatpush1.bf16.msra.mxu0 0
    %2905 = vmatprep.subr.bf16.mxu0 0
    %2906 = vmatpush1.bf16.msra.mxu0 0
    %2907 = vmatprep.subr.bf16.mxu0 0
    %2908 = vmatpush1.bf16.msra.mxu0 0
    %2909 = vmatprep.subr.bf16.mxu0 0
    %2910 = vmatpush1.bf16.msra.mxu0 0
    %2911 = vmatprep.subr.bf16.mxu0 0
    %2912 = vmatpush1.bf16.msra.mxu0 0
    %2913 = vmatprep.subr.bf16.mxu0 0
    %2914 = vmatpush1.bf16.msra.mxu0 0
    %2915 = vmatprep.subr.bf16.mxu0 0
    %2916 = vmatpush1.bf16.msra.mxu0 0
    %2917 = vmatprep.subr.bf16.mxu0 0
    %2918 = vmatpush1.bf16.msra.mxu0 0
    %2919 = vmatprep.mubr.bf16.mxu0 0
    %2920 = vmatmul.mubr.bf16.gmra.mrb[0].mxu0 %v2781
    %v2921 = vpop.f32.mrb[0].mxu0
    %v2922 = vadd.f32 %v2833, %v2921
    %v2923 = vpop.f32.mrb[0].mxu0
    %v2924 = vpop.f32.mrb[0].mxu0
    %v2925 = vadd.f32 %v2836, %v2924
    %v2926 = vpop.f32.mrb[0].mxu0
    %2927 = vmatprep.mubr.bf16.mxu0 0
    %2928 = vmatmul.mubr.bf16.gmra.mrb[0].mxu0 %v2784
    %v2929 = vpop.f32.mrb[0].mxu0
    %v2930 = vadd.f32 %v2841, %v2929
    %v2931 = vpop.f32.mrb[0].mxu0
    %v2932 = vpop.f32.mrb[0].mxu0
    %v2933 = vadd.f32 %v2844, %v2932
    %v2934 = vpop.f32.mrb[0].mxu0
    %2935 = vmatprep.mubr.bf16.mxu0 0
    %2936 = vmatmul.mubr.bf16.gmra.mrb[0].mxu0 %v2786
    %v2937 = vpop.f32.mrb[0].mxu0
    %v2938 = vadd.f32 %v2849, %v2937
    %v2939 = vpop.f32.mrb[0].mxu0
    %v2940 = vpop.f32.mrb[0].mxu0
    %v2941 = vadd.f32 %v2852, %v2940
    %v2942 = vpop.f32.mrb[0].mxu0
    %2943 = vmatprep.mubr.bf16.mxu0 0
    %2944 = vmatmul.mubr.bf16.gmra.mrb[0].mxu0 %v2788
    %v2945 = vpop.f32.mrb[0].mxu0
    %v2946 = vadd.f32 %v2857, %v2945
    %v2947 = vpop.f32.mrb[0].mxu0
    %v2948 = vpop.f32.mrb[0].mxu0
    %v2949 = vadd.f32 %v2860, %v2948
    %v2950 = vpop.f32.mrb[0].mxu0
    %2951 = vmatprep.mubr.bf16.mxu0 0
    %2952 = vmatmul.mubr.bf16.gmra.mrb[0].mxu0 %v2791
    %v2953 = vpop.f32.mrb[0].mxu0
    %v2954 = vadd.f32 %v2865, %v2953
    %v2955 = vpop.f32.mrb[0].mxu0
    %v2956 = vpop.f32.mrb[0].mxu0
    %v2957 = vadd.f32 %v2868, %v2956
    %v2958 = vpop.f32.mrb[0].mxu0
    %2959 = vmatprep.mubr.bf16.mxu0 0
    %2960 = vmatmul.mubr.bf16.gmra.mrb[0].mxu0 %v2794
    %v2961 = vpop.f32.mrb[0].mxu0
    %v2962 = vadd.f32 %v2873, %v2961
    %v2963 = vpop.f32.mrb[0].mxu0
    %v2964 = vpop.f32.mrb[0].mxu0
    %v2965 = vadd.f32 %v2876, %v2964
    %v2966 = vpop.f32.mrb[0].mxu0
    %2967 = vmatprep.mubr.bf16.mxu0 0
    %2968 = vmatmul.mubr.bf16.gmra.mrb[0].mxu0 %v2796
    %v2969 = vpop.f32.mrb[0].mxu0
    %v2970 = vadd.f32 %v2881, %v2969
    %v2971 = vpop.f32.mrb[0].mxu0
    %v2972 = vpop.f32.mrb[0].mxu0
    %v2973 = vadd.f32 %v2884, %v2972
    %v2974 = vpop.f32.mrb[0].mxu0
    %2975 = vdwg.mxu0
    %v2976 = vmax.f32 %v2922, 0.0
    %v2977 = vmax.f32 %v2925, 0.0
    %v2978 = vmax.f32 %v2930, 0.0
    %v2979 = vmax.f32 %v2933, 0.0
    %v2980 = vmax.f32 %v2938, 0.0
    %v2981 = vmax.f32 %v2941, 0.0
    %v2982 = vmax.f32 %v2946, 0.0
    %v2983 = vmax.f32 %v2949, 0.0
    %v2984 = vmax.f32 %v2954, 0.0
    %v2985 = vmax.f32 %v2957, 0.0
    %v2986 = vmax.f32 %v2962, 0.0
    %v2987 = vmax.f32 %v2965, 0.0
    %v2988 = vmax.f32 %v2970, 0.0
    %v2989 = vmax.f32 %v2973, 0.0
    %v2990 = vpack.c.bf16 %v2977, %v2976
    %v2991 = vpack.c.bf16 %v2979, %v2978
    %v2992 = vpack.c.bf16 %v2981, %v2980
    %v2993 = vpack.c.bf16 %v2983, %v2982
    %v2994 = vpack.c.bf16 %v2985, %v2984
    %v2995 = vpack.c.bf16 %v2987, %v2986
    %v2996 = vpack.c.bf16 %v2989, %v2988
    %2998 = vrot.lane.b32.xlu0 %v2991, 64
    %v2999 = vpop.permute.xlu0 %2998
    %3001 = vrot.lane.b32.xlu0 %v2993, 64
    %v3002 = vpop.permute.xlu0 %3001
    %3004 = vrot.lane.b32.xlu0 %v2995, 64
    %v3005 = vpop.permute.xlu0 %3004
    %v3008 = vsel %vm1147, %v2990, %v2999
    %v3012 = vsel %vm1147, %v2992, %v3002
    %v3016 = vsel %vm1147, %v2994, %v3005
    %v3019 = vsel %vm1147, %v2996, 0
    %3021 = vst [vmem:[#allocation3 + $0x80] sm:$0xff] %v3008
    %3022 = vst [vmem:[#allocation3 + $0x88] sm:$0xff] %v3012
    %3023 = vst [vmem:[#allocation3 + $0x90] sm:$0xff] %v3016
    %3024 = vst [vmem:[#allocation3 + $0x98] sm:$0xff] %v3019
    %v3025 = vld [vmem:[#allocation2 + $0x58] sm:$0xff]
    %v3026 = vld [vmem:[#allocation2 + $0x68] sm:$0xff]
    %v3027 = vld [vmem:[#allocation2 + $0x70] sm:$0xff]
    %v3028 = vld [vmem:[#allocation2 + $0x78] sm:$0xff]
    %v3029 = vld [vmem:[#allocation2 + $0x80] sm:$0xff]
    %3031 = vrot.lane.b32.xlu0 %v3025, 96
    %v3032 = vpop.permute.xlu0 %3031
    %3035 = vrot.lane.b32.xlu0 %v3026, 32
    %v3036 = vpop.permute.xlu0 %3035
    %3037 = vrot.lane.b32.xlu0 %v3027, 32
    %v3038 = vpop.permute.xlu0 %3037
    %v3039 = vsel %vm1160, %v3036, %v3038
    %3042 = vrot.lane.b32.xlu0 %v3028, 96
    %v3043 = vpop.permute.xlu0 %3042
    %3044 = vrot.lane.b32.xlu0 %v3029, 96
    %v3045 = vpop.permute.xlu0 %3044
    %v3046 = vsel %vm1168, %v3043, %v3045
    %v3049 = vsel %vm1142, %v3032, %v3036
    %v3053 = vsel %vm1147, %v3039, %v3046
    %v3055 = vld [vmem:[#allocation2 + $0x60] sm:$0xff]
    %3057 = vrot.lane.b32.xlu0 %v3025, 64
    %v3058 = vpop.permute.xlu0 %3057
    %3059 = vrot.lane.b32.xlu0 %v3055, 64
    %v3060 = vpop.permute.xlu0 %3059
    %v3061 = vsel %vm1184, %v3058, %v3060
    %3062 = vrot.lane.b32.xlu0 %v3029, 64
    %v3063 = vpop.permute.xlu0 %3062
    %v3066 = vsel %vm1142, %v3061, %v3026
    %v3070 = vsel %vm1147, %v3027, %v3063
    %3072 = vrot.lane.b32.xlu0 %v3025, 32
    %v3073 = vpop.permute.xlu0 %3072
    %3074 = vrot.lane.b32.xlu0 %v3055, 32
    %v3075 = vpop.permute.xlu0 %3074
    %v3076 = vsel %vm1160, %v3073, %v3075
    %3077 = vrot.lane.b32.xlu0 %v3027, 96
    %v3078 = vpop.permute.xlu0 %3077
    %3079 = vrot.lane.b32.xlu0 %v3029, 32
    %v3080 = vpop.permute.xlu0 %3079
    %v3083 = vsel %vm1142, %v3076, %v3078
    %v3086 = vsel %vm1147, %v3078, %v3080
    %v3088 = vld [vmem:[#allocation2 + $0x80] sm:$0xff]
    %v3089 = vld [vmem:[#allocation2 + $0x88] sm:$0xff]
    %3090 = vrot.lane.b32.xlu0 %v3027, 64
    %v3091 = vpop.permute.xlu0 %3090
    %v3094 = vsel %vm1142, %v3055, %v3091
    %v3097 = vsel %vm1147, %v3091, %v3088
    %3099 = vrot.lane.b32.xlu0 %v3055, 96
    %v3100 = vpop.permute.xlu0 %3099
    %3101 = vrot.lane.b32.xlu0 %v3028, 32
    %v3102 = vpop.permute.xlu0 %3101
    %v3103 = vsel %vm1160, %v3038, %v3102
    %3106 = vrot.lane.b32.xlu0 %v3088, 96
    %v3107 = vpop.permute.xlu0 %3106
    %3108 = vrot.lane.b32.xlu0 %v3089, 96
    %v3109 = vpop.permute.xlu0 %3108
    %v3110 = vsel %vm1168, %v3107, %v3109
    %v3113 = vsel %vm1142, %v3100, %v3038
    %v3117 = vsel %vm1147, %v3103, %v3110
    %3119 = vrot.lane.b32.xlu0 %v3026, 64
    %v3120 = vpop.permute.xlu0 %3119
    %v3121 = vsel %vm1184, %v3060, %v3120
    %3122 = vrot.lane.b32.xlu0 %v3089, 64
    %v3123 = vpop.permute.xlu0 %3122
    %v3125 = vsel %vm1142, %v3121, %v3027
    %v3129 = vsel %vm1147, %v3028, %v3123
    %v3131 = vsel %vm1160, %v3075, %v3036
    %3132 = vrot.lane.b32.xlu0 %v3089, 32
    %v3133 = vpop.permute.xlu0 %3132
    %v3136 = vsel %vm1142, %v3131, %v3043
    %v3139 = vsel %vm1147, %v3043, %v3133
    %v3142 = vsel %vm1362, %v3045, 0
    %v3144 = vsel %vm1362, %v3063, 0
    %v3146 = vsel %vm1362, %v3080, 0
    %v3149 = vsel %vm1362, %v3089, 0
    %v3152 = vsel %vm1362, %v3109, 0
    %v3154 = vsel %vm1362, %v3123, 0
    %v3156 = vsel %vm1362, %v3133, 0
    %3158 = vmatprep.subr.bf16.mxu0 0
    %3159 = vmatpush1.bf16.msra.mxu0 %v1326
    %3160 = vmatprep.subr.bf16.mxu0 0
    %3161 = vmatpush1.bf16.msra.mxu0 %v1327
    %3162 = vmatprep.subr.bf16.mxu0 0
    %3163 = vmatpush1.bf16.msra.mxu0 %v1328
    %3164 = vmatprep.subr.bf16.mxu0 0
    %3165 = vmatpush1.bf16.msra.mxu0 %v1329
    %3166 = vmatprep.subr.bf16.mxu0 0
    %3167 = vmatpush1.bf16.msra.mxu0 %v1330
    %3168 = vmatprep.subr.bf16.mxu0 0
    %3169 = vmatpush1.bf16.msra.mxu0 %v1331
    %3170 = vmatprep.subr.bf16.mxu0 0
    %3171 = vmatpush1.bf16.msra.mxu0 %v1332
    %3172 = vmatprep.subr.bf16.mxu0 0
    %3173 = vmatpush1.bf16.msra.mxu0 %v1333
    %3174 = vmatprep.subr.bf16.mxu0 0
    %3175 = vmatpush1.bf16.msra.mxu0 %v1334
    %3176 = vmatprep.subr.bf16.mxu0 0
    %3177 = vmatpush1.bf16.msra.mxu0 %v1335
    %3178 = vmatprep.subr.bf16.mxu0 0
    %3179 = vmatpush1.bf16.msra.mxu0 %v1336
    %3180 = vmatprep.subr.bf16.mxu0 0
    %3181 = vmatpush1.bf16.msra.mxu0 %v1337
    %3182 = vmatprep.subr.bf16.mxu0 0
    %3183 = vmatpush1.bf16.msra.mxu0 %v1338
    %3184 = vmatprep.subr.bf16.mxu0 0
    %3185 = vmatpush1.bf16.msra.mxu0 %v1339
    %3186 = vmatprep.subr.bf16.mxu0 0
    %3187 = vmatpush1.bf16.msra.mxu0 %v1340
    %3188 = vmatprep.subr.bf16.mxu0 0
    %3189 = vmatpush1.bf16.msra.mxu0 %v1341
    %3190 = vmatprep.mubr.bf16.mxu0 %v3053
    %3191 = vmatmul.mubr.bf16.gmra.mrb[0].mxu0 %v3049
    %v3192 = vpop.f32.mrb[0].mxu0
    %v3193 = vadd.f32 %v1252, %v3192
    %v3194 = vpop.f32.mrb[0].mxu0
    %v3195 = vpop.f32.mrb[0].mxu0
    %v3196 = vadd.f32 %v1252, %v3195
    %v3197 = vpop.f32.mrb[0].mxu0
    %3198 = vmatprep.mubr.bf16.mxu0 %v3070
    %3199 = vmatmul.mubr.bf16.gmra.mrb[0].mxu0 %v3066
    %v3200 = vpop.f32.mrb[0].mxu0
    %v3201 = vadd.f32 %v1252, %v3200
    %v3202 = vpop.f32.mrb[0].mxu0
    %v3203 = vpop.f32.mrb[0].mxu0
    %v3204 = vadd.f32 %v1252, %v3203
    %v3205 = vpop.f32.mrb[0].mxu0
    %3206 = vmatprep.mubr.bf16.mxu0 %v3086
    %3207 = vmatmul.mubr.bf16.gmra.mrb[0].mxu0 %v3083
    %v3208 = vpop.f32.mrb[0].mxu0
    %v3209 = vadd.f32 %v1252, %v3208
    %v3210 = vpop.f32.mrb[0].mxu0
    %v3211 = vpop.f32.mrb[0].mxu0
    %v3212 = vadd.f32 %v1252, %v3211
    %v3213 = vpop.f32.mrb[0].mxu0
    %3214 = vmatprep.mubr.bf16.mxu0 %v3097
    %3215 = vmatmul.mubr.bf16.gmra.mrb[0].mxu0 %v3094
    %v3216 = vpop.f32.mrb[0].mxu0
    %v3217 = vadd.f32 %v1252, %v3216
    %v3218 = vpop.f32.mrb[0].mxu0
    %v3219 = vpop.f32.mrb[0].mxu0
    %v3220 = vadd.f32 %v1252, %v3219
    %v3221 = vpop.f32.mrb[0].mxu0
    %3222 = vmatprep.mubr.bf16.mxu0 %v3117
    %3223 = vmatmul.mubr.bf16.gmra.mrb[0].mxu0 %v3113
    %v3224 = vpop.f32.mrb[0].mxu0
    %v3225 = vadd.f32 %v1252, %v3224
    %v3226 = vpop.f32.mrb[0].mxu0
    %v3227 = vpop.f32.mrb[0].mxu0
    %v3228 = vadd.f32 %v1252, %v3227
    %v3229 = vpop.f32.mrb[0].mxu0
    %3230 = vmatprep.mubr.bf16.mxu0 %v3129
    %3231 = vmatmul.mubr.bf16.gmra.mrb[0].mxu0 %v3125
    %v3232 = vpop.f32.mrb[0].mxu0
    %v3233 = vadd.f32 %v1252, %v3232
    %v3234 = vpop.f32.mrb[0].mxu0
    %v3235 = vpop.f32.mrb[0].mxu0
    %v3236 = vadd.f32 %v1252, %v3235
    %v3237 = vpop.f32.mrb[0].mxu0
    %3238 = vmatprep.mubr.bf16.mxu0 %v3139
    %3239 = vmatmul.mubr.bf16.gmra.mrb[0].mxu0 %v3136
    %v3240 = vpop.f32.mrb[0].mxu0
    %v3241 = vadd.f32 %v1252, %v3240
    %v3242 = vpop.f32.mrb[0].mxu0
    %v3243 = vpop.f32.mrb[0].mxu0
    %v3244 = vadd.f32 %v1252, %v3243
    %v3245 = vpop.f32.mrb[0].mxu0
    %3246 = vdwg.mxu0
    %3247 = vmatprep.subr.bf16.mxu0 0
    %3248 = vmatpush1.bf16.msra.mxu0 %v1342
    %3249 = vmatprep.subr.bf16.mxu0 0
    %3250 = vmatpush1.bf16.msra.mxu0 %v1343
    %3251 = vmatprep.subr.bf16.mxu0 0
    %3252 = vmatpush1.bf16.msra.mxu0 0
    %3253 = vmatprep.subr.bf16.mxu0 0
    %3254 = vmatpush1.bf16.msra.mxu0 0
    %3255 = vmatprep.subr.bf16.mxu0 0
    %3256 = vmatpush1.bf16.msra.mxu0 0
    %3257 = vmatprep.subr.bf16.mxu0 0
    %3258 = vmatpush1.bf16.msra.mxu0 0
    %3259 = vmatprep.subr.bf16.mxu0 0
    %3260 = vmatpush1.bf16.msra.mxu0 0
    %3261 = vmatprep.subr.bf16.mxu0 0
    %3262 = vmatpush1.bf16.msra.mxu0 0
    %3263 = vmatprep.subr.bf16.mxu0 0
    %3264 = vmatpush1.bf16.msra.mxu0 0
    %3265 = vmatprep.subr.bf16.mxu0 0
    %3266 = vmatpush1.bf16.msra.mxu0 0
    %3267 = vmatprep.subr.bf16.mxu0 0
    %3268 = vmatpush1.bf16.msra.mxu0 0
    %3269 = vmatprep.subr.bf16.mxu0 0
    %3270 = vmatpush1.bf16.msra.mxu0 0
    %3271 = vmatprep.subr.bf16.mxu0 0
    %3272 = vmatpush1.bf16.msra.mxu0 0
    %3273 = vmatprep.subr.bf16.mxu0 0
    %3274 = vmatpush1.bf16.msra.mxu0 0
    %3275 = vmatprep.subr.bf16.mxu0 0
    %3276 = vmatpush1.bf16.msra.mxu0 0
    %3277 = vmatprep.subr.bf16.mxu0 0
    %3278 = vmatpush1.bf16.msra.mxu0 0
    %3279 = vmatprep.mubr.bf16.mxu0 0
    %3280 = vmatmul.mubr.bf16.gmra.mrb[0].mxu0 %v3142
    %v3281 = vpop.f32.mrb[0].mxu0
    %v3282 = vadd.f32 %v3193, %v3281
    %v3283 = vpop.f32.mrb[0].mxu0
    %v3284 = vpop.f32.mrb[0].mxu0
    %v3285 = vadd.f32 %v3196, %v3284
    %v3286 = vpop.f32.mrb[0].mxu0
    %3287 = vmatprep.mubr.bf16.mxu0 0
    %3288 = vmatmul.mubr.bf16.gmra.mrb[0].mxu0 %v3144
    %v3289 = vpop.f32.mrb[0].mxu0
    %v3290 = vadd.f32 %v3201, %v3289
    %v3291 = vpop.f32.mrb[0].mxu0
    %v3292 = vpop.f32.mrb[0].mxu0
    %v3293 = vadd.f32 %v3204, %v3292
    %v3294 = vpop.f32.mrb[0].mxu0
    %3295 = vmatprep.mubr.bf16.mxu0 0
    %3296 = vmatmul.mubr.bf16.gmra.mrb[0].mxu0 %v3146
    %v3297 = vpop.f32.mrb[0].mxu0
    %v3298 = vadd.f32 %v3209, %v3297
    %v3299 = vpop.f32.mrb[0].mxu0
    %v3300 = vpop.f32.mrb[0].mxu0
    %v3301 = vadd.f32 %v3212, %v3300
    %v3302 = vpop.f32.mrb[0].mxu0
    %3303 = vmatprep.mubr.bf16.mxu0 0
    %3304 = vmatmul.mubr.bf16.gmra.mrb[0].mxu0 %v3149
    %v3305 = vpop.f32.mrb[0].mxu0
    %v3306 = vadd.f32 %v3217, %v3305
    %v3307 = vpop.f32.mrb[0].mxu0
    %v3308 = vpop.f32.mrb[0].mxu0
    %v3309 = vadd.f32 %v3220, %v3308
    %v3310 = vpop.f32.mrb[0].mxu0
    %3311 = vmatprep.mubr.bf16.mxu0 0
    %3312 = vmatmul.mubr.bf16.gmra.mrb[0].mxu0 %v3152
    %v3313 = vpop.f32.mrb[0].mxu0
    %v3314 = vadd.f32 %v3225, %v3313
    %v3315 = vpop.f32.mrb[0].mxu0
    %v3316 = vpop.f32.mrb[0].mxu0
    %v3317 = vadd.f32 %v3228, %v3316
    %v3318 = vpop.f32.mrb[0].mxu0
    %3319 = vmatprep.mubr.bf16.mxu0 0
    %3320 = vmatmul.mubr.bf16.gmra.mrb[0].mxu0 %v3154
    %v3321 = vpop.f32.mrb[0].mxu0
    %v3322 = vadd.f32 %v3233, %v3321
    %v3323 = vpop.f32.mrb[0].mxu0
    %v3324 = vpop.f32.mrb[0].mxu0
    %v3325 = vadd.f32 %v3236, %v3324
    %v3326 = vpop.f32.mrb[0].mxu0
    %3327 = vmatprep.mubr.bf16.mxu0 0
    %3328 = vmatmul.mubr.bf16.gmra.mrb[0].mxu0 %v3156
    %v3329 = vpop.f32.mrb[0].mxu0
    %v3330 = vadd.f32 %v3241, %v3329
    %v3331 = vpop.f32.mrb[0].mxu0
    %v3332 = vpop.f32.mrb[0].mxu0
    %v3333 = vadd.f32 %v3244, %v3332
    %v3334 = vpop.f32.mrb[0].mxu0
    %3335 = vdwg.mxu0
    %v3336 = vmax.f32 %v3282, 0.0
    %v3337 = vmax.f32 %v3285, 0.0
    %v3338 = vmax.f32 %v3290, 0.0
    %v3339 = vmax.f32 %v3293, 0.0
    %v3340 = vmax.f32 %v3298, 0.0
    %v3341 = vmax.f32 %v3301, 0.0
    %v3342 = vmax.f32 %v3306, 0.0
    %v3343 = vmax.f32 %v3309, 0.0
    %v3344 = vmax.f32 %v3314, 0.0
    %v3345 = vmax.f32 %v3317, 0.0
    %v3346 = vmax.f32 %v3322, 0.0
    %v3347 = vmax.f32 %v3325, 0.0
    %v3348 = vmax.f32 %v3330, 0.0
    %v3349 = vmax.f32 %v3333, 0.0
    %v3350 = vpack.c.bf16 %v3337, %v3336
    %v3351 = vpack.c.bf16 %v3339, %v3338
    %v3352 = vpack.c.bf16 %v3341, %v3340
    %v3353 = vpack.c.bf16 %v3343, %v3342
    %v3354 = vpack.c.bf16 %v3345, %v3344
    %v3355 = vpack.c.bf16 %v3347, %v3346
    %v3356 = vpack.c.bf16 %v3349, %v3348
    %3358 = vrot.lane.b32.xlu0 %v3351, 64
    %v3359 = vpop.permute.xlu0 %3358
    %3361 = vrot.lane.b32.xlu0 %v3353, 64
    %v3362 = vpop.permute.xlu0 %3361
    %3364 = vrot.lane.b32.xlu0 %v3355, 64
    %v3365 = vpop.permute.xlu0 %3364
    %v3368 = vsel %vm1147, %v3350, %v3359
    %v3372 = vsel %vm1147, %v3352, %v3362
    %v3376 = vsel %vm1147, %v3354, %v3365
    %v3379 = vsel %vm1147, %v3356, 0
    %3381 = vst [vmem:[#allocation3 + $0xa0] sm:$0xff] %v3368
    %3382 = vst [vmem:[#allocation3 + $0xa8] sm:$0xff] %v3372
    %3383 = vst [vmem:[#allocation3 + $0xb0] sm:$0xff] %v3376
    %3384 = vst [vmem:[#allocation3 + $0xb8] sm:$0xff] %v3379
    %v3385 = vld [vmem:[#allocation3] sm:$0xff]
    %v3386 = vld [vmem:[#allocation3 + $0x8] sm:$0xff]
    %v3387 = vld [vmem:[#allocation3 + $0x10] sm:$0xff]
    %v3388 = vld [vmem:[#allocation3 + $0x18] sm:$0xff]
    %v3389 = vld [vmem:[#allocation3 + $0x20] sm:$0xff]
    %v3390 = vld [vmem:[#allocation3 + $0x28] sm:$0xff]
    %v3391 = vld [vmem:[#allocation3 + $0x30] sm:$0xff]
    %v3392 = vld [vmem:[#allocation3 + $0x38] sm:$0xff]
    %v3393 = vld [vmem:[#allocation9] sm:$0xff]
    %v3394 = vld [vmem:[#allocation9 + $0x8] sm:$0xff]
    %v3395 = vld [vmem:[#allocation9 + $0x10] sm:$0xff]
    %v3396 = vld [vmem:[#allocation9 + $0x18] sm:$0xff]
    %v3397 = vld [vmem:[#allocation9 + $0x20] sm:$0xff]
    %v3398 = vld [vmem:[#allocation9 + $0x28] sm:$0xff]
    %v3399 = vld [vmem:[#allocation9 + $0x30] sm:$0xff]
    %v3400 = vld [vmem:[#allocation9 + $0x38] sm:$0xff]
    %v3401 = vld [vmem:[#allocation9 + $0x40] sm:$0xff]
    %v3402 = vld [vmem:[#allocation9 + $0x48] sm:$0xff]
    %v3403 = vld [vmem:[#allocation9 + $0x50] sm:$0xff]
    %v3404 = vld [vmem:[#allocation9 + $0x58] sm:$0xff]
    %v3405 = vld [vmem:[#allocation9 + $0x60] sm:$0xff]
    %v3406 = vld [vmem:[#allocation9 + $0x68] sm:$0xff]
    %v3407 = vld [vmem:[#allocation9 + $0x70] sm:$0xff]
    %v3408 = vld [vmem:[#allocation9 + $0x78] sm:$0xff]
    %v3409 = vld [vmem:[#allocation9 + $0x80] sm:$0xff]
    %v3410 = vld [vmem:[#allocation9 + $0x88] sm:$0xff]
    %v3411 = vld [vmem:[#allocation9 + $0x90] sm:$0xff]
    %v3412 = vld [vmem:[#allocation9 + $0x98] sm:$0xff]
    %v3413 = vld [vmem:[#allocation9 + $0xa0] sm:$0xff]
    %v3414 = vld [vmem:[#allocation9 + $0xa8] sm:$0xff]
    %v3415 = vld [vmem:[#allocation9 + $0xb0] sm:$0xff]
    %v3416 = vld [vmem:[#allocation9 + $0xb8] sm:$0xff]
    %v3417 = vld [vmem:[#allocation9 + $0xc0] sm:$0xff]
    %v3418 = vld [vmem:[#allocation9 + $0xc8] sm:$0xff]
    %v3419 = vld [vmem:[#allocation9 + $0xd0] sm:$0xff]
    %v3420 = vld [vmem:[#allocation9 + $0xd8] sm:$0xff]
    %v3421 = vld [vmem:[#allocation9 + $0xe0] sm:$0xff]
    %v3422 = vld [vmem:[#allocation9 + $0xe8] sm:$0xff]
    %v3423 = vld [vmem:[#allocation9 + $0xf0] sm:$0xff]
    %v3424 = vld [vmem:[#allocation9 + $0xf8] sm:$0xff]
    %v3425 = vld [vmem:[#allocation9 + $0x100] sm:$0xff]
    %v3426 = vld [vmem:[#allocation9 + $0x108] sm:$0xff]
    %v3427 = vld [vmem:[#allocation9 + $0x110] sm:$0xff]
    %v3428 = vld [vmem:[#allocation9 + $0x118] sm:$0xff]
    %v3429 = vld [vmem:[#allocation9 + $0x120] sm:$0xff]
    %v3430 = vld [vmem:[#allocation9 + $0x128] sm:$0xff]
    %v3431 = vld [vmem:[#allocation9 + $0x130] sm:$0xff]
    %v3432 = vld [vmem:[#allocation9 + $0x138] sm:$0xff]
    %v3433 = vld [vmem:[#allocation9 + $0x140] sm:$0xff]
    %v3434 = vld [vmem:[#allocation9 + $0x148] sm:$0xff]
    %v3435 = vld [vmem:[#allocation9 + $0x150] sm:$0xff]
    %v3436 = vld [vmem:[#allocation9 + $0x158] sm:$0xff]
    %v3437 = vld [vmem:[#allocation9 + $0x160] sm:$0xff]
    %v3438 = vld [vmem:[#allocation9 + $0x168] sm:$0xff]
    %v3439 = vld [vmem:[#allocation9 + $0x170] sm:$0xff]
    %v3440 = vld [vmem:[#allocation9 + $0x178] sm:$0xff]
    %v3441 = vld [vmem:[#allocation9 + $0x180] sm:$0xff]
    %v3442 = vld [vmem:[#allocation9 + $0x188] sm:$0xff]
    %v3443 = vld [vmem:[#allocation9 + $0x190] sm:$0xff]
    %v3444 = vld [vmem:[#allocation9 + $0x198] sm:$0xff]
    %v3445 = vld [vmem:[#allocation9 + $0x1a0] sm:$0xff]
    %v3446 = vld [vmem:[#allocation9 + $0x1a8] sm:$0xff]
    %v3447 = vld [vmem:[#allocation9 + $0x1b0] sm:$0xff]
    %v3448 = vld [vmem:[#allocation9 + $0x1b8] sm:$0xff]
    %v3449 = vld [vmem:[#allocation9 + $0x1c0] sm:$0xff]
    %v3450 = vld [vmem:[#allocation9 + $0x1c8] sm:$0xff]
    %v3451 = vld [vmem:[#allocation9 + $0x1d0] sm:$0xff]
    %v3452 = vld [vmem:[#allocation9 + $0x1d8] sm:$0xff]
    %v3453 = vld [vmem:[#allocation9 + $0x1e0] sm:$0xff]
    %v3454 = vld [vmem:[#allocation9 + $0x1e8] sm:$0xff]
    %v3455 = vld [vmem:[#allocation9 + $0x1f0] sm:$0xff]
    %v3456 = vld [vmem:[#allocation9 + $0x1f8] sm:$0xff]
    %v3457 = vld [vmem:[#allocation9 + $0x200] sm:$0xff]
    %v3458 = vld [vmem:[#allocation9 + $0x208] sm:$0xff]
    %v3459 = vld [vmem:[#allocation9 + $0x210] sm:$0xff]
    %v3460 = vld [vmem:[#allocation9 + $0x218] sm:$0xff]
    %v3461 = vld [vmem:[#allocation9 + $0x220] sm:$0xff]
    %v3462 = vld [vmem:[#allocation9 + $0x228] sm:$0xff]
    %v3463 = vld [vmem:[#allocation9 + $0x230] sm:$0xff]
    %v3464 = vld [vmem:[#allocation9 + $0x238] sm:$0xff]
    %v3465 = vld [vmem:[#allocation9 + $0x240] sm:$0xff]
    %v3466 = vld [vmem:[#allocation9 + $0x248] sm:$0xff]
    %v3467 = vld [vmem:[#allocation9 + $0x250] sm:$0xff]
    %v3468 = vld [vmem:[#allocation9 + $0x258] sm:$0xff]
    %v3469 = vld [vmem:[#allocation9 + $0x260] sm:$0xff]
    %v3470 = vld [vmem:[#allocation9 + $0x268] sm:$0xff]
    %v3471 = vld [vmem:[#allocation9 + $0x270] sm:$0xff]
    %v3472 = vld [vmem:[#allocation9 + $0x278] sm:$0xff]
    %v3473 = vld [vmem:[#allocation9 + $0x280] sm:$0xff]
    %v3474 = vld [vmem:[#allocation9 + $0x288] sm:$0xff]
    %v3475 = vld [vmem:[#allocation9 + $0x290] sm:$0xff]
    %v3476 = vld [vmem:[#allocation9 + $0x298] sm:$0xff]
    %v3477 = vld [vmem:[#allocation9 + $0x2a0] sm:$0xff]
    %v3478 = vld [vmem:[#allocation9 + $0x2a8] sm:$0xff]
    %v3479 = vld [vmem:[#allocation9 + $0x2b0] sm:$0xff]
    %v3480 = vld [vmem:[#allocation9 + $0x2b8] sm:$0xff]
    %v3481 = vld [vmem:[#allocation9 + $0x2c0] sm:$0xff]
    %v3482 = vld [vmem:[#allocation9 + $0x2c8] sm:$0xff]
    %v3483 = vld [vmem:[#allocation9 + $0x2d0] sm:$0xff]
    %v3484 = vld [vmem:[#allocation9 + $0x2d8] sm:$0xff]
    %v3485 = vld [vmem:[#allocation9 + $0x2e0] sm:$0xff]
    %v3486 = vld [vmem:[#allocation9 + $0x2e8] sm:$0xff]
    %v3487 = vld [vmem:[#allocation9 + $0x2f0] sm:$0xff]
    %v3488 = vld [vmem:[#allocation9 + $0x2f8] sm:$0xff]
    %v3489 = vld [vmem:[#allocation9 + $0x300] sm:$0xff]
    %v3490 = vld [vmem:[#allocation9 + $0x308] sm:$0xff]
    %v3491 = vld [vmem:[#allocation9 + $0x310] sm:$0xff]
    %v3492 = vld [vmem:[#allocation9 + $0x318] sm:$0xff]
    %v3493 = vld [vmem:[#allocation9 + $0x320] sm:$0xff]
    %v3494 = vld [vmem:[#allocation9 + $0x328] sm:$0xff]
    %v3495 = vld [vmem:[#allocation9 + $0x330] sm:$0xff]
    %v3496 = vld [vmem:[#allocation9 + $0x338] sm:$0xff]
    %v3497 = vld [vmem:[#allocation9 + $0x340] sm:$0xff]
    %v3498 = vld [vmem:[#allocation9 + $0x348] sm:$0xff]
    %v3499 = vld [vmem:[#allocation9 + $0x350] sm:$0xff]
    %v3500 = vld [vmem:[#allocation9 + $0x358] sm:$0xff]
    %v3501 = vld [vmem:[#allocation9 + $0x360] sm:$0xff]
    %v3502 = vld [vmem:[#allocation9 + $0x368] sm:$0xff]
    %v3503 = vld [vmem:[#allocation9 + $0x370] sm:$0xff]
    %v3504 = vld [vmem:[#allocation9 + $0x378] sm:$0xff]
    %v3505 = vld [vmem:[#allocation9 + $0x380] sm:$0xff]
    %v3506 = vld [vmem:[#allocation9 + $0x388] sm:$0xff]
    %v3507 = vld [vmem:[#allocation9 + $0x390] sm:$0xff]
    %v3508 = vld [vmem:[#allocation9 + $0x398] sm:$0xff]
    %v3509 = vld [vmem:[#allocation9 + $0x3a0] sm:$0xff]
    %v3510 = vld [vmem:[#allocation9 + $0x3a8] sm:$0xff]
    %v3511 = vld [vmem:[#allocation9 + $0x3b0] sm:$0xff]
    %v3512 = vld [vmem:[#allocation9 + $0x3b8] sm:$0xff]
    %v3513 = vld [vmem:[#allocation9 + $0x3c0] sm:$0xff]
    %v3514 = vld [vmem:[#allocation9 + $0x3c8] sm:$0xff]
    %v3515 = vld [vmem:[#allocation9 + $0x3d0] sm:$0xff]
    %v3516 = vld [vmem:[#allocation9 + $0x3d8] sm:$0xff]
    %v3517 = vld [vmem:[#allocation9 + $0x3e0] sm:$0xff]
    %v3518 = vld [vmem:[#allocation9 + $0x3e8] sm:$0xff]
    %v3519 = vld [vmem:[#allocation9 + $0x3f0] sm:$0xff]
    %v3520 = vld [vmem:[#allocation9 + $0x3f8] sm:$0xff]
    %v3521 = vld [vmem:[#allocation3 + $0x40] sm:$0xff]
    %v3522 = vld [vmem:[#allocation3 + $0x48] sm:$0xff]
    %v3523 = vld [vmem:[#allocation3 + $0x50] sm:$0xff]
    %v3524 = vld [vmem:[#allocation3 + $0x58] sm:$0xff]
    %v3525 = vld [vmem:[#allocation3 + $0x60] sm:$0xff]
    %v3526 = vld [vmem:[#allocation3 + $0x68] sm:$0xff]
    %v3527 = vld [vmem:[#allocation3 + $0x70] sm:$0xff]
    %v3528 = vld [vmem:[#allocation3 + $0x78] sm:$0xff]
    %v3529 = vld [vmem:[#allocation9 + $0x400] sm:$0xff]
    %v3530 = vld [vmem:[#allocation9 + $0x408] sm:$0xff]
    %v3531 = vld [vmem:[#allocation9 + $0x410] sm:$0xff]
    %v3532 = vld [vmem:[#allocation9 + $0x418] sm:$0xff]
    %v3533 = vld [vmem:[#allocation9 + $0x420] sm:$0xff]
    %v3534 = vld [vmem:[#allocation9 + $0x428] sm:$0xff]
    %v3535 = vld [vmem:[#allocation9 + $0x430] sm:$0xff]
    %v3536 = vld [vmem:[#allocation9 + $0x438] sm:$0xff]
    %v3537 = vld [vmem:[#allocation9 + $0x440] sm:$0xff]
    %v3538 = vld [vmem:[#allocation9 + $0x448] sm:$0xff]
    %v3539 = vld [vmem:[#allocation9 + $0x450] sm:$0xff]
    %v3540 = vld [vmem:[#allocation9 + $0x458] sm:$0xff]
    %v3541 = vld [vmem:[#allocation9 + $0x460] sm:$0xff]
    %v3542 = vld [vmem:[#allocation9 + $0x468] sm:$0xff]
    %v3543 = vld [vmem:[#allocation9 + $0x470] sm:$0xff]
    %v3544 = vld [vmem:[#allocation9 + $0x478] sm:$0xff]
    %v3545 = vld [vmem:[#allocation9 + $0x480] sm:$0xff]
    %v3546 = vld [vmem:[#allocation9 + $0x488] sm:$0xff]
    %v3547 = vld [vmem:[#allocation9 + $0x490] sm:$0xff]
    %v3548 = vld [vmem:[#allocation9 + $0x498] sm:$0xff]
    %v3549 = vld [vmem:[#allocation9 + $0x4a0] sm:$0xff]
    %v3550 = vld [vmem:[#allocation9 + $0x4a8] sm:$0xff]
    %v3551 = vld [vmem:[#allocation9 + $0x4b0] sm:$0xff]
    %v3552 = vld [vmem:[#allocation9 + $0x4b8] sm:$0xff]
    %v3553 = vld [vmem:[#allocation9 + $0x4c0] sm:$0xff]
    %v3554 = vld [vmem:[#allocation9 + $0x4c8] sm:$0xff]
    %v3555 = vld [vmem:[#allocation9 + $0x4d0] sm:$0xff]
    %v3556 = vld [vmem:[#allocation9 + $0x4d8] sm:$0xff]
    %v3557 = vld [vmem:[#allocation9 + $0x4e0] sm:$0xff]
    %v3558 = vld [vmem:[#allocation9 + $0x4e8] sm:$0xff]
    %v3559 = vld [vmem:[#allocation9 + $0x4f0] sm:$0xff]
    %v3560 = vld [vmem:[#allocation9 + $0x4f8] sm:$0xff]
    %v3561 = vld [vmem:[#allocation9 + $0x500] sm:$0xff]
    %v3562 = vld [vmem:[#allocation9 + $0x508] sm:$0xff]
    %v3563 = vld [vmem:[#allocation9 + $0x510] sm:$0xff]
    %v3564 = vld [vmem:[#allocation9 + $0x518] sm:$0xff]
    %v3565 = vld [vmem:[#allocation9 + $0x520] sm:$0xff]
    %v3566 = vld [vmem:[#allocation9 + $0x528] sm:$0xff]
    %v3567 = vld [vmem:[#allocation9 + $0x530] sm:$0xff]
    %v3568 = vld [vmem:[#allocation9 + $0x538] sm:$0xff]
    %v3569 = vld [vmem:[#allocation9 + $0x540] sm:$0xff]
    %v3570 = vld [vmem:[#allocation9 + $0x548] sm:$0xff]
    %v3571 = vld [vmem:[#allocation9 + $0x550] sm:$0xff]
    %v3572 = vld [vmem:[#allocation9 + $0x558] sm:$0xff]
    %v3573 = vld [vmem:[#allocation9 + $0x560] sm:$0xff]
    %v3574 = vld [vmem:[#allocation9 + $0x568] sm:$0xff]
    %v3575 = vld [vmem:[#allocation9 + $0x570] sm:$0xff]
    %v3576 = vld [vmem:[#allocation9 + $0x578] sm:$0xff]
    %v3577 = vld [vmem:[#allocation9 + $0x580] sm:$0xff]
    %v3578 = vld [vmem:[#allocation9 + $0x588] sm:$0xff]
    %v3579 = vld [vmem:[#allocation9 + $0x590] sm:$0xff]
    %v3580 = vld [vmem:[#allocation9 + $0x598] sm:$0xff]
    %v3581 = vld [vmem:[#allocation9 + $0x5a0] sm:$0xff]
    %v3582 = vld [vmem:[#allocation9 + $0x5a8] sm:$0xff]
    %v3583 = vld [vmem:[#allocation9 + $0x5b0] sm:$0xff]
    %v3584 = vld [vmem:[#allocation9 + $0x5b8] sm:$0xff]
    %v3585 = vld [vmem:[#allocation9 + $0x5c0] sm:$0xff]
    %v3586 = vld [vmem:[#allocation9 + $0x5c8] sm:$0xff]
    %v3587 = vld [vmem:[#allocation9 + $0x5d0] sm:$0xff]
    %v3588 = vld [vmem:[#allocation9 + $0x5d8] sm:$0xff]
    %v3589 = vld [vmem:[#allocation9 + $0x5e0] sm:$0xff]
    %v3590 = vld [vmem:[#allocation9 + $0x5e8] sm:$0xff]
    %v3591 = vld [vmem:[#allocation9 + $0x5f0] sm:$0xff]
    %v3592 = vld [vmem:[#allocation9 + $0x5f8] sm:$0xff]
    %v3593 = vld [vmem:[#allocation9 + $0x600] sm:$0xff]
    %v3594 = vld [vmem:[#allocation9 + $0x608] sm:$0xff]
    %v3595 = vld [vmem:[#allocation9 + $0x610] sm:$0xff]
    %v3596 = vld [vmem:[#allocation9 + $0x618] sm:$0xff]
    %v3597 = vld [vmem:[#allocation9 + $0x620] sm:$0xff]
    %v3598 = vld [vmem:[#allocation9 + $0x628] sm:$0xff]
    %v3599 = vld [vmem:[#allocation9 + $0x630] sm:$0xff]
    %v3600 = vld [vmem:[#allocation9 + $0x638] sm:$0xff]
    %v3601 = vld [vmem:[#allocation9 + $0x640] sm:$0xff]
    %v3602 = vld [vmem:[#allocation9 + $0x648] sm:$0xff]
    %v3603 = vld [vmem:[#allocation9 + $0x650] sm:$0xff]
    %v3604 = vld [vmem:[#allocation9 + $0x658] sm:$0xff]
    %v3605 = vld [vmem:[#allocation9 + $0x660] sm:$0xff]
    %v3606 = vld [vmem:[#allocation9 + $0x668] sm:$0xff]
    %v3607 = vld [vmem:[#allocation9 + $0x670] sm:$0xff]
    %v3608 = vld [vmem:[#allocation9 + $0x678] sm:$0xff]
    %v3609 = vld [vmem:[#allocation9 + $0x680] sm:$0xff]
    %v3610 = vld [vmem:[#allocation9 + $0x688] sm:$0xff]
    %v3611 = vld [vmem:[#allocation9 + $0x690] sm:$0xff]
    %v3612 = vld [vmem:[#allocation9 + $0x698] sm:$0xff]
    %v3613 = vld [vmem:[#allocation9 + $0x6a0] sm:$0xff]
    %v3614 = vld [vmem:[#allocation9 + $0x6a8] sm:$0xff]
    %v3615 = vld [vmem:[#allocation9 + $0x6b0] sm:$0xff]
    %v3616 = vld [vmem:[#allocation9 + $0x6b8] sm:$0xff]
    %v3617 = vld [vmem:[#allocation9 + $0x6c0] sm:$0xff]
    %v3618 = vld [vmem:[#allocation9 + $0x6c8] sm:$0xff]
    %v3619 = vld [vmem:[#allocation9 + $0x6d0] sm:$0xff]
    %v3620 = vld [vmem:[#allocation9 + $0x6d8] sm:$0xff]
    %v3621 = vld [vmem:[#allocation9 + $0x6e0] sm:$0xff]
    %v3622 = vld [vmem:[#allocation9 + $0x6e8] sm:$0xff]
    %v3623 = vld [vmem:[#allocation9 + $0x6f0] sm:$0xff]
    %v3624 = vld [vmem:[#allocation9 + $0x6f8] sm:$0xff]
    %v3625 = vld [vmem:[#allocation9 + $0x700] sm:$0xff]
    %v3626 = vld [vmem:[#allocation9 + $0x708] sm:$0xff]
    %v3627 = vld [vmem:[#allocation9 + $0x710] sm:$0xff]
    %v3628 = vld [vmem:[#allocation9 + $0x718] sm:$0xff]
    %v3629 = vld [vmem:[#allocation9 + $0x720] sm:$0xff]
    %v3630 = vld [vmem:[#allocation9 + $0x728] sm:$0xff]
    %v3631 = vld [vmem:[#allocation9 + $0x730] sm:$0xff]
    %v3632 = vld [vmem:[#allocation9 + $0x738] sm:$0xff]
    %v3633 = vld [vmem:[#allocation9 + $0x740] sm:$0xff]
    %v3634 = vld [vmem:[#allocation9 + $0x748] sm:$0xff]
    %v3635 = vld [vmem:[#allocation9 + $0x750] sm:$0xff]
    %v3636 = vld [vmem:[#allocation9 + $0x758] sm:$0xff]
    %v3637 = vld [vmem:[#allocation9 + $0x760] sm:$0xff]
    %v3638 = vld [vmem:[#allocation9 + $0x768] sm:$0xff]
    %v3639 = vld [vmem:[#allocation9 + $0x770] sm:$0xff]
    %v3640 = vld [vmem:[#allocation9 + $0x778] sm:$0xff]
    %v3641 = vld [vmem:[#allocation9 + $0x780] sm:$0xff]
    %v3642 = vld [vmem:[#allocation9 + $0x788] sm:$0xff]
    %v3643 = vld [vmem:[#allocation9 + $0x790] sm:$0xff]
    %v3644 = vld [vmem:[#allocation9 + $0x798] sm:$0xff]
    %v3645 = vld [vmem:[#allocation9 + $0x7a0] sm:$0xff]
    %v3646 = vld [vmem:[#allocation9 + $0x7a8] sm:$0xff]
    %v3647 = vld [vmem:[#allocation9 + $0x7b0] sm:$0xff]
    %v3648 = vld [vmem:[#allocation9 + $0x7b8] sm:$0xff]
    %v3649 = vld [vmem:[#allocation9 + $0x7c0] sm:$0xff]
    %v3650 = vld [vmem:[#allocation9 + $0x7c8] sm:$0xff]
    %v3651 = vld [vmem:[#allocation9 + $0x7d0] sm:$0xff]
    %v3652 = vld [vmem:[#allocation9 + $0x7d8] sm:$0xff]
    %v3653 = vld [vmem:[#allocation9 + $0x7e0] sm:$0xff]
    %v3654 = vld [vmem:[#allocation9 + $0x7e8] sm:$0xff]
    %v3655 = vld [vmem:[#allocation9 + $0x7f0] sm:$0xff]
    %v3656 = vld [vmem:[#allocation9 + $0x7f8] sm:$0xff]
    %v3785 = vunpack.c.l.b16 %v3529
    %v3786 = vunpack.c.h.b16 %v3529
    %v3787 = vunpack.c.l.b16 %v3530
    %v3788 = vunpack.c.h.b16 %v3530
    %v3789 = vunpack.c.l.b16 %v3531
    %v3790 = vunpack.c.h.b16 %v3531
    %v3791 = vunpack.c.l.b16 %v3532
    %v3792 = vunpack.c.h.b16 %v3532
    %v3793 = vunpack.c.l.b16 %v3533
    %v3794 = vunpack.c.h.b16 %v3533
    %v3795 = vunpack.c.l.b16 %v3534
    %v3796 = vunpack.c.h.b16 %v3534
    %v3797 = vunpack.c.l.b16 %v3535
    %v3798 = vunpack.c.h.b16 %v3535
    %v3799 = vunpack.c.l.b16 %v3536
    %v3800 = vunpack.c.h.b16 %v3536
    %v3801 = vunpack.c.l.b16 %v3537
    %v3802 = vunpack.c.h.b16 %v3537
    %v3803 = vunpack.c.l.b16 %v3538
    %v3804 = vunpack.c.h.b16 %v3538
    %v3805 = vunpack.c.l.b16 %v3539
    %v3806 = vunpack.c.h.b16 %v3539
    %v3807 = vunpack.c.l.b16 %v3540
    %v3808 = vunpack.c.h.b16 %v3540
    %v3809 = vunpack.c.l.b16 %v3541
    %v3810 = vunpack.c.h.b16 %v3541
    %v3811 = vunpack.c.l.b16 %v3542
    %v3812 = vunpack.c.h.b16 %v3542
    %v3813 = vunpack.c.l.b16 %v3543
    %v3814 = vunpack.c.h.b16 %v3543
    %v3815 = vunpack.c.l.b16 %v3544
    %v3816 = vunpack.c.h.b16 %v3544
    %v3817 = vunpack.c.l.b16 %v3545
    %v3818 = vunpack.c.h.b16 %v3545
    %v3819 = vunpack.c.l.b16 %v3546
    %v3820 = vunpack.c.h.b16 %v3546
    %v3821 = vunpack.c.l.b16 %v3547
    %v3822 = vunpack.c.h.b16 %v3547
    %v3823 = vunpack.c.l.b16 %v3548
    %v3824 = vunpack.c.h.b16 %v3548
    %v3825 = vunpack.c.l.b16 %v3549
    %v3826 = vunpack.c.h.b16 %v3549
    %v3827 = vunpack.c.l.b16 %v3550
    %v3828 = vunpack.c.h.b16 %v3550
    %v3829 = vunpack.c.l.b16 %v3551
    %v3830 = vunpack.c.h.b16 %v3551
    %v3831 = vunpack.c.l.b16 %v3552
    %v3832 = vunpack.c.h.b16 %v3552
    %v3833 = vunpack.c.l.b16 %v3553
    %v3834 = vunpack.c.h.b16 %v3553
    %v3835 = vunpack.c.l.b16 %v3554
    %v3836 = vunpack.c.h.b16 %v3554
    %v3837 = vunpack.c.l.b16 %v3555
    %v3838 = vunpack.c.h.b16 %v3555
    %v3839 = vunpack.c.l.b16 %v3556
    %v3840 = vunpack.c.h.b16 %v3556
    %v3841 = vunpack.c.l.b16 %v3557
    %v3842 = vunpack.c.h.b16 %v3557
    %v3843 = vunpack.c.l.b16 %v3558
    %v3844 = vunpack.c.h.b16 %v3558
    %v3845 = vunpack.c.l.b16 %v3559
    %v3846 = vunpack.c.h.b16 %v3559
    %v3847 = vunpack.c.l.b16 %v3560
    %v3848 = vunpack.c.h.b16 %v3560
    %v3849 = vunpack.c.l.b16 %v3561
    %v3850 = vunpack.c.h.b16 %v3561
    %v3851 = vunpack.c.l.b16 %v3562
    %v3852 = vunpack.c.h.b16 %v3562
    %v3853 = vunpack.c.l.b16 %v3563
    %v3854 = vunpack.c.h.b16 %v3563
    %v3855 = vunpack.c.l.b16 %v3564
    %v3856 = vunpack.c.h.b16 %v3564
    %v3857 = vunpack.c.l.b16 %v3565
    %v3858 = vunpack.c.h.b16 %v3565
    %v3859 = vunpack.c.l.b16 %v3566
    %v3860 = vunpack.c.h.b16 %v3566
    %v3861 = vunpack.c.l.b16 %v3567
    %v3862 = vunpack.c.h.b16 %v3567
    %v3863 = vunpack.c.l.b16 %v3568
    %v3864 = vunpack.c.h.b16 %v3568
    %v3865 = vunpack.c.l.b16 %v3569
    %v3866 = vunpack.c.h.b16 %v3569
    %v3867 = vunpack.c.l.b16 %v3570
    %v3868 = vunpack.c.h.b16 %v3570
    %v3869 = vunpack.c.l.b16 %v3571
    %v3870 = vunpack.c.h.b16 %v3571
    %v3871 = vunpack.c.l.b16 %v3572
    %v3872 = vunpack.c.h.b16 %v3572
    %v3873 = vunpack.c.l.b16 %v3573
    %v3874 = vunpack.c.h.b16 %v3573
    %v3875 = vunpack.c.l.b16 %v3574
    %v3876 = vunpack.c.h.b16 %v3574
    %v3877 = vunpack.c.l.b16 %v3575
    %v3878 = vunpack.c.h.b16 %v3575
    %v3879 = vunpack.c.l.b16 %v3576
    %v3880 = vunpack.c.h.b16 %v3576
    %v3881 = vunpack.c.l.b16 %v3577
    %v3882 = vunpack.c.h.b16 %v3577
    %v3883 = vunpack.c.l.b16 %v3578
    %v3884 = vunpack.c.h.b16 %v3578
    %v3885 = vunpack.c.l.b16 %v3579
    %v3886 = vunpack.c.h.b16 %v3579
    %v3887 = vunpack.c.l.b16 %v3580
    %v3888 = vunpack.c.h.b16 %v3580
    %v3889 = vunpack.c.l.b16 %v3581
    %v3890 = vunpack.c.h.b16 %v3581
    %v3891 = vunpack.c.l.b16 %v3582
    %v3892 = vunpack.c.h.b16 %v3582
    %v3893 = vunpack.c.l.b16 %v3583
    %v3894 = vunpack.c.h.b16 %v3583
    %v3895 = vunpack.c.l.b16 %v3584
    %v3896 = vunpack.c.h.b16 %v3584
    %v3897 = vunpack.c.l.b16 %v3585
    %v3898 = vunpack.c.h.b16 %v3585
    %v3899 = vunpack.c.l.b16 %v3586
    %v3900 = vunpack.c.h.b16 %v3586
    %v3901 = vunpack.c.l.b16 %v3587
    %v3902 = vunpack.c.h.b16 %v3587
    %v3903 = vunpack.c.l.b16 %v3588
    %v3904 = vunpack.c.h.b16 %v3588
    %v3905 = vunpack.c.l.b16 %v3589
    %v3906 = vunpack.c.h.b16 %v3589
    %v3907 = vunpack.c.l.b16 %v3590
    %v3908 = vunpack.c.h.b16 %v3590
    %v3909 = vunpack.c.l.b16 %v3591
    %v3910 = vunpack.c.h.b16 %v3591
    %v3911 = vunpack.c.l.b16 %v3592
    %v3912 = vunpack.c.h.b16 %v3592
    %v3913 = vunpack.c.l.b16 %v3593
    %v3914 = vunpack.c.h.b16 %v3593
    %v3915 = vunpack.c.l.b16 %v3594
    %v3916 = vunpack.c.h.b16 %v3594
    %v3917 = vunpack.c.l.b16 %v3595
    %v3918 = vunpack.c.h.b16 %v3595
    %v3919 = vunpack.c.l.b16 %v3596
    %v3920 = vunpack.c.h.b16 %v3596
    %v3921 = vunpack.c.l.b16 %v3597
    %v3922 = vunpack.c.h.b16 %v3597
    %v3923 = vunpack.c.l.b16 %v3598
    %v3924 = vunpack.c.h.b16 %v3598
    %v3925 = vunpack.c.l.b16 %v3599
    %v3926 = vunpack.c.h.b16 %v3599
    %v3927 = vunpack.c.l.b16 %v3600
    %v3928 = vunpack.c.h.b16 %v3600
    %v3929 = vunpack.c.l.b16 %v3601
    %v3930 = vunpack.c.h.b16 %v3601
    %v3931 = vunpack.c.l.b16 %v3602
    %v3932 = vunpack.c.h.b16 %v3602
    %v3933 = vunpack.c.l.b16 %v3603
    %v3934 = vunpack.c.h.b16 %v3603
    %v3935 = vunpack.c.l.b16 %v3604
    %v3936 = vunpack.c.h.b16 %v3604
    %v3937 = vunpack.c.l.b16 %v3605
    %v3938 = vunpack.c.h.b16 %v3605
    %v3939 = vunpack.c.l.b16 %v3606
    %v3940 = vunpack.c.h.b16 %v3606
    %v3941 = vunpack.c.l.b16 %v3607
    %v3942 = vunpack.c.h.b16 %v3607
    %v3943 = vunpack.c.l.b16 %v3608
    %v3944 = vunpack.c.h.b16 %v3608
    %v3945 = vunpack.c.l.b16 %v3609
    %v3946 = vunpack.c.h.b16 %v3609
    %v3947 = vunpack.c.l.b16 %v3610
    %v3948 = vunpack.c.h.b16 %v3610
    %v3949 = vunpack.c.l.b16 %v3611
    %v3950 = vunpack.c.h.b16 %v3611
    %v3951 = vunpack.c.l.b16 %v3612
    %v3952 = vunpack.c.h.b16 %v3612
    %v3953 = vunpack.c.l.b16 %v3613
    %v3954 = vunpack.c.h.b16 %v3613
    %v3955 = vunpack.c.l.b16 %v3614
    %v3956 = vunpack.c.h.b16 %v3614
    %v3957 = vunpack.c.l.b16 %v3615
    %v3958 = vunpack.c.h.b16 %v3615
    %v3959 = vunpack.c.l.b16 %v3616
    %v3960 = vunpack.c.h.b16 %v3616
    %v3961 = vunpack.c.l.b16 %v3617
    %v3962 = vunpack.c.h.b16 %v3617
    %v3963 = vunpack.c.l.b16 %v3618
    %v3964 = vunpack.c.h.b16 %v3618
    %v3965 = vunpack.c.l.b16 %v3619
    %v3966 = vunpack.c.h.b16 %v3619
    %v3967 = vunpack.c.l.b16 %v3620
    %v3968 = vunpack.c.h.b16 %v3620
    %v3969 = vunpack.c.l.b16 %v3621
    %v3970 = vunpack.c.h.b16 %v3621
    %v3971 = vunpack.c.l.b16 %v3622
    %v3972 = vunpack.c.h.b16 %v3622
    %v3973 = vunpack.c.l.b16 %v3623
    %v3974 = vunpack.c.h.b16 %v3623
    %v3975 = vunpack.c.l.b16 %v3624
    %v3976 = vunpack.c.h.b16 %v3624
    %v3977 = vunpack.c.l.b16 %v3625
    %v3978 = vunpack.c.h.b16 %v3625
    %v3979 = vunpack.c.l.b16 %v3626
    %v3980 = vunpack.c.h.b16 %v3626
    %v3981 = vunpack.c.l.b16 %v3627
    %v3982 = vunpack.c.h.b16 %v3627
    %v3983 = vunpack.c.l.b16 %v3628
    %v3984 = vunpack.c.h.b16 %v3628
    %v3985 = vunpack.c.l.b16 %v3629
    %v3986 = vunpack.c.h.b16 %v3629
    %v3987 = vunpack.c.l.b16 %v3630
    %v3988 = vunpack.c.h.b16 %v3630
    %v3989 = vunpack.c.l.b16 %v3631
    %v3990 = vunpack.c.h.b16 %v3631
    %v3991 = vunpack.c.l.b16 %v3632
    %v3992 = vunpack.c.h.b16 %v3632
    %v3993 = vunpack.c.l.b16 %v3633
    %v3994 = vunpack.c.h.b16 %v3633
    %v3995 = vunpack.c.l.b16 %v3634
    %v3996 = vunpack.c.h.b16 %v3634
    %v3997 = vunpack.c.l.b16 %v3635
    %v3998 = vunpack.c.h.b16 %v3635
    %v3999 = vunpack.c.l.b16 %v3636
    %v4000 = vunpack.c.h.b16 %v3636
    %v4001 = vunpack.c.l.b16 %v3637
    %v4002 = vunpack.c.h.b16 %v3637
    %v4003 = vunpack.c.l.b16 %v3638
    %v4004 = vunpack.c.h.b16 %v3638
    %v4005 = vunpack.c.l.b16 %v3639
    %v4006 = vunpack.c.h.b16 %v3639
    %v4007 = vunpack.c.l.b16 %v3640
    %v4008 = vunpack.c.h.b16 %v3640
    %v4009 = vunpack.c.l.b16 %v3641
    %v4010 = vunpack.c.h.b16 %v3641
    %v4011 = vunpack.c.l.b16 %v3642
    %v4012 = vunpack.c.h.b16 %v3642
    %v4013 = vunpack.c.l.b16 %v3643
    %v4014 = vunpack.c.h.b16 %v3643
    %v4015 = vunpack.c.l.b16 %v3644
    %v4016 = vunpack.c.h.b16 %v3644
    %v4017 = vunpack.c.l.b16 %v3645
    %v4018 = vunpack.c.h.b16 %v3645
    %v4019 = vunpack.c.l.b16 %v3646
    %v4020 = vunpack.c.h.b16 %v3646
    %v4021 = vunpack.c.l.b16 %v3647
    %v4022 = vunpack.c.h.b16 %v3647
    %v4023 = vunpack.c.l.b16 %v3648
    %v4024 = vunpack.c.h.b16 %v3648
    %v4025 = vunpack.c.l.b16 %v3649
    %v4026 = vunpack.c.h.b16 %v3649
    %v4027 = vunpack.c.l.b16 %v3650
    %v4028 = vunpack.c.h.b16 %v3650
    %v4029 = vunpack.c.l.b16 %v3651
    %v4030 = vunpack.c.h.b16 %v3651
    %v4031 = vunpack.c.l.b16 %v3652
    %v4032 = vunpack.c.h.b16 %v3652
    %v4033 = vunpack.c.l.b16 %v3653
    %v4034 = vunpack.c.h.b16 %v3653
    %v4035 = vunpack.c.l.b16 %v3654
    %v4036 = vunpack.c.h.b16 %v3654
    %v4037 = vunpack.c.l.b16 %v3655
    %v4038 = vunpack.c.h.b16 %v3655
    %v4039 = vunpack.c.l.b16 %v3656
    %v4040 = vunpack.c.h.b16 %v3656
    %v4041 = vpack.c.b16 %v3787, %v3785
    %v4042 = vpack.c.b16 %v3788, %v3786
    %v4043 = vpack.c.b16 %v3791, %v3789
    %v4044 = vpack.c.b16 %v3792, %v3790
    %v4045 = vpack.c.b16 %v3795, %v3793
    %v4046 = vpack.c.b16 %v3796, %v3794
    %v4047 = vpack.c.b16 %v3799, %v3797
    %v4048 = vpack.c.b16 %v3800, %v3798
    %v4049 = vpack.c.b16 %v3803, %v3801
    %v4050 = vpack.c.b16 %v3804, %v3802
    %v4051 = vpack.c.b16 %v3807, %v3805
    %v4052 = vpack.c.b16 %v3808, %v3806
    %v4053 = vpack.c.b16 %v3811, %v3809
    %v4054 = vpack.c.b16 %v3812, %v3810
    %v4055 = vpack.c.b16 %v3815, %v3813
    %v4056 = vpack.c.b16 %v3816, %v3814
    %v4057 = vpack.c.b16 %v3819, %v3817
    %v4058 = vpack.c.b16 %v3820, %v3818
    %v4059 = vpack.c.b16 %v3823, %v3821
    %v4060 = vpack.c.b16 %v3824, %v3822
    %v4061 = vpack.c.b16 %v3827, %v3825
    %v4062 = vpack.c.b16 %v3828, %v3826
    %v4063 = vpack.c.b16 %v3831, %v3829
    %v4064 = vpack.c.b16 %v3832, %v3830
    %v4065 = vpack.c.b16 %v3835, %v3833
    %v4066 = vpack.c.b16 %v3836, %v3834
    %v4067 = vpack.c.b16 %v3839, %v3837
    %v4068 = vpack.c.b16 %v3840, %v3838
    %v4069 = vpack.c.b16 %v3843, %v3841
    %v4070 = vpack.c.b16 %v3844, %v3842
    %v4071 = vpack.c.b16 %v3847, %v3845
    %v4072 = vpack.c.b16 %v3848, %v3846
    %v4073 = vpack.c.b16 %v3851, %v3849
    %v4074 = vpack.c.b16 %v3852, %v3850
    %v4075 = vpack.c.b16 %v3855, %v3853
    %v4076 = vpack.c.b16 %v3856, %v3854
    %v4077 = vpack.c.b16 %v3859, %v3857
    %v4078 = vpack.c.b16 %v3860, %v3858
    %v4079 = vpack.c.b16 %v3863, %v3861
    %v4080 = vpack.c.b16 %v3864, %v3862
    %v4081 = vpack.c.b16 %v3867, %v3865
    %v4082 = vpack.c.b16 %v3868, %v3866
    %v4083 = vpack.c.b16 %v3871, %v3869
    %v4084 = vpack.c.b16 %v3872, %v3870
    %v4085 = vpack.c.b16 %v3875, %v3873
    %v4086 = vpack.c.b16 %v3876, %v3874
    %v4087 = vpack.c.b16 %v3879, %v3877
    %v4088 = vpack.c.b16 %v3880, %v3878
    %v4089 = vpack.c.b16 %v3883, %v3881
    %v4090 = vpack.c.b16 %v3884, %v3882
    %v4091 = vpack.c.b16 %v3887, %v3885
    %v4092 = vpack.c.b16 %v3888, %v3886
    %v4093 = vpack.c.b16 %v3891, %v3889
    %v4094 = vpack.c.b16 %v3892, %v3890
    %v4095 = vpack.c.b16 %v3895, %v3893
    %v4096 = vpack.c.b16 %v3896, %v3894
    %v4097 = vpack.c.b16 %v3899, %v3897
    %v4098 = vpack.c.b16 %v3900, %v3898
    %v4099 = vpack.c.b16 %v3903, %v3901
    %v4100 = vpack.c.b16 %v3904, %v3902
    %v4101 = vpack.c.b16 %v3907, %v3905
    %v4102 = vpack.c.b16 %v3908, %v3906
    %v4103 = vpack.c.b16 %v3911, %v3909
    %v4104 = vpack.c.b16 %v3912, %v3910
    %v4105 = vpack.c.b16 %v3915, %v3913
    %v4106 = vpack.c.b16 %v3916, %v3914
    %v4107 = vpack.c.b16 %v3919, %v3917
    %v4108 = vpack.c.b16 %v3920, %v3918
    %v4109 = vpack.c.b16 %v3923, %v3921
    %v4110 = vpack.c.b16 %v3924, %v3922
    %v4111 = vpack.c.b16 %v3927, %v3925
    %v4112 = vpack.c.b16 %v3928, %v3926
    %v4113 = vpack.c.b16 %v3931, %v3929
    %v4114 = vpack.c.b16 %v3932, %v3930
    %v4115 = vpack.c.b16 %v3935, %v3933
    %v4116 = vpack.c.b16 %v3936, %v3934
    %v4117 = vpack.c.b16 %v3939, %v3937
    %v4118 = vpack.c.b16 %v3940, %v3938
    %v4119 = vpack.c.b16 %v3943, %v3941
    %v4120 = vpack.c.b16 %v3944, %v3942
    %v4121 = vpack.c.b16 %v3947, %v3945
    %v4122 = vpack.c.b16 %v3948, %v3946
    %v4123 = vpack.c.b16 %v3951, %v3949
    %v4124 = vpack.c.b16 %v3952, %v3950
    %v4125 = vpack.c.b16 %v3955, %v3953
    %v4126 = vpack.c.b16 %v3956, %v3954
    %v4127 = vpack.c.b16 %v3959, %v3957
    %v4128 = vpack.c.b16 %v3960, %v3958
    %v4129 = vpack.c.b16 %v3963, %v3961
    %v4130 = vpack.c.b16 %v3964, %v3962
    %v4131 = vpack.c.b16 %v3967, %v3965
    %v4132 = vpack.c.b16 %v3968, %v3966
    %v4133 = vpack.c.b16 %v3971, %v3969
    %v4134 = vpack.c.b16 %v3972, %v3970
    %v4135 = vpack.c.b16 %v3975, %v3973
    %v4136 = vpack.c.b16 %v3976, %v3974
    %v4137 = vpack.c.b16 %v3979, %v3977
    %v4138 = vpack.c.b16 %v3980, %v3978
    %v4139 = vpack.c.b16 %v3983, %v3981
    %v4140 = vpack.c.b16 %v3984, %v3982
    %v4141 = vpack.c.b16 %v3987, %v3985
    %v4142 = vpack.c.b16 %v3988, %v3986
    %v4143 = vpack.c.b16 %v3991, %v3989
    %v4144 = vpack.c.b16 %v3992, %v3990
    %v4145 = vpack.c.b16 %v3995, %v3993
    %v4146 = vpack.c.b16 %v3996, %v3994
    %v4147 = vpack.c.b16 %v3999, %v3997
    %v4148 = vpack.c.b16 %v4000, %v3998
    %v4149 = vpack.c.b16 %v4003, %v4001
    %v4150 = vpack.c.b16 %v4004, %v4002
    %v4151 = vpack.c.b16 %v4007, %v4005
    %v4152 = vpack.c.b16 %v4008, %v4006
    %v4153 = vpack.c.b16 %v4011, %v4009
    %v4154 = vpack.c.b16 %v4012, %v4010
    %v4155 = vpack.c.b16 %v4015, %v4013
    %v4156 = vpack.c.b16 %v4016, %v4014
    %v4157 = vpack.c.b16 %v4019, %v4017
    %v4158 = vpack.c.b16 %v4020, %v4018
    %v4159 = vpack.c.b16 %v4023, %v4021
    %v4160 = vpack.c.b16 %v4024, %v4022
    %v4161 = vpack.c.b16 %v4027, %v4025
    %v4162 = vpack.c.b16 %v4028, %v4026
    %v4163 = vpack.c.b16 %v4031, %v4029
    %v4164 = vpack.c.b16 %v4032, %v4030
    %v4165 = vpack.c.b16 %v4035, %v4033
    %v4166 = vpack.c.b16 %v4036, %v4034
    %v4167 = vpack.c.b16 %v4039, %v4037
    %v4168 = vpack.c.b16 %v4040, %v4038
    %4297 = vmatprep.subr.bf16.mxu0 %v4042
    %4298 = vmatpush1.bf16.msra.mxu0 %v4041
    %4299 = vmatprep.subr.bf16.mxu0 %v4044
    %4300 = vmatpush1.bf16.msra.mxu0 %v4043
    %4301 = vmatprep.subr.bf16.mxu0 %v4046
    %4302 = vmatpush1.bf16.msra.mxu0 %v4045
    %4303 = vmatprep.subr.bf16.mxu0 %v4048
    %4304 = vmatpush1.bf16.msra.mxu0 %v4047
    %4305 = vmatprep.subr.bf16.mxu0 %v4050
    %4306 = vmatpush1.bf16.msra.mxu0 %v4049
    %4307 = vmatprep.subr.bf16.mxu0 %v4052
    %4308 = vmatpush1.bf16.msra.mxu0 %v4051
    %4309 = vmatprep.subr.bf16.mxu0 %v4054
    %4310 = vmatpush1.bf16.msra.mxu0 %v4053
    %4311 = vmatprep.subr.bf16.mxu0 %v4056
    %4312 = vmatpush1.bf16.msra.mxu0 %v4055
    %4313 = vmatprep.subr.bf16.mxu0 %v4058
    %4314 = vmatpush1.bf16.msra.mxu0 %v4057
    %4315 = vmatprep.subr.bf16.mxu0 %v4060
    %4316 = vmatpush1.bf16.msra.mxu0 %v4059
    %4317 = vmatprep.subr.bf16.mxu0 %v4062
    %4318 = vmatpush1.bf16.msra.mxu0 %v4061
    %4319 = vmatprep.subr.bf16.mxu0 %v4064
    %4320 = vmatpush1.bf16.msra.mxu0 %v4063
    %4321 = vmatprep.subr.bf16.mxu0 %v4066
    %4322 = vmatpush1.bf16.msra.mxu0 %v4065
    %4323 = vmatprep.subr.bf16.mxu0 %v4068
    %4324 = vmatpush1.bf16.msra.mxu0 %v4067
    %4325 = vmatprep.subr.bf16.mxu0 %v4070
    %4326 = vmatpush1.bf16.msra.mxu0 %v4069
    %4327 = vmatprep.subr.bf16.mxu0 %v4072
    %4328 = vmatpush1.bf16.msra.mxu0 %v4071
    %4329 = vmatprep.mubr.bf16.mxu0 %v3522
    %4330 = vmatmul.mubr.bf16.gmra.mrb[0].mxu0 %v3521
    %v4331 = vpop.f32.mrb[0].mxu0
    %v4332 = vadd.f32 0.0, %v4331
    %v4333 = vpop.f32.mrb[0].mxu0
    %v4334 = vadd.f32 0.0, %v4333
    %v4335 = vpop.f32.mrb[0].mxu0
    %v4336 = vadd.f32 0.0, %v4335
    %v4337 = vpop.f32.mrb[0].mxu0
    %v4338 = vadd.f32 0.0, %v4337
    %4339 = vdwg.mxu0
    %4340 = vmatprep.subr.bf16.mxu0 %v4074
    %4341 = vmatpush1.bf16.msra.mxu0 %v4073
    %4342 = vmatprep.subr.bf16.mxu0 %v4076
    %4343 = vmatpush1.bf16.msra.mxu0 %v4075
    %4344 = vmatprep.subr.bf16.mxu0 %v4078
    %4345 = vmatpush1.bf16.msra.mxu0 %v4077
    %4346 = vmatprep.subr.bf16.mxu0 %v4080
    %4347 = vmatpush1.bf16.msra.mxu0 %v4079
    %4348 = vmatprep.subr.bf16.mxu0 %v4082
    %4349 = vmatpush1.bf16.msra.mxu0 %v4081
    %4350 = vmatprep.subr.bf16.mxu0 %v4084
    %4351 = vmatpush1.bf16.msra.mxu0 %v4083
    %4352 = vmatprep.subr.bf16.mxu0 %v4086
    %4353 = vmatpush1.bf16.msra.mxu0 %v4085
    %4354 = vmatprep.subr.bf16.mxu0 %v4088
    %4355 = vmatpush1.bf16.msra.mxu0 %v4087
    %4356 = vmatprep.subr.bf16.mxu0 %v4090
    %4357 = vmatpush1.bf16.msra.mxu0 %v4089
    %4358 = vmatprep.subr.bf16.mxu0 %v4092
    %4359 = vmatpush1.bf16.msra.mxu0 %v4091
    %4360 = vmatprep.subr.bf16.mxu0 %v4094
    %4361 = vmatpush1.bf16.msra.mxu0 %v4093
    %4362 = vmatprep.subr.bf16.mxu0 %v4096
    %4363 = vmatpush1.bf16.msra.mxu0 %v4095
    %4364 = vmatprep.subr.bf16.mxu0 %v4098
    %4365 = vmatpush1.bf16.msra.mxu0 %v4097
    %4366 = vmatprep.subr.bf16.mxu0 %v4100
    %4367 = vmatpush1.bf16.msra.mxu0 %v4099
    %4368 = vmatprep.subr.bf16.mxu0 %v4102
    %4369 = vmatpush1.bf16.msra.mxu0 %v4101
    %4370 = vmatprep.subr.bf16.mxu0 %v4104
    %4371 = vmatpush1.bf16.msra.mxu0 %v4103
    %4372 = vmatprep.mubr.bf16.mxu0 %v3524
    %4373 = vmatmul.mubr.bf16.gmra.mrb[0].mxu0 %v3523
    %v4374 = vpop.f32.mrb[0].mxu0
    %v4375 = vadd.f32 %v4332, %v4374
    %v4376 = vpop.f32.mrb[0].mxu0
    %v4377 = vadd.f32 %v4334, %v4376
    %v4378 = vpop.f32.mrb[0].mxu0
    %v4379 = vadd.f32 %v4336, %v4378
    %v4380 = vpop.f32.mrb[0].mxu0
    %v4381 = vadd.f32 %v4338, %v4380
    %4382 = vdwg.mxu0
    %4383 = vmatprep.subr.bf16.mxu0 %v4106
    %4384 = vmatpush1.bf16.msra.mxu0 %v4105
    %4385 = vmatprep.subr.bf16.mxu0 %v4108
    %4386 = vmatpush1.bf16.msra.mxu0 %v4107
    %4387 = vmatprep.subr.bf16.mxu0 %v4110
    %4388 = vmatpush1.bf16.msra.mxu0 %v4109
    %4389 = vmatprep.subr.bf16.mxu0 %v4112
    %4390 = vmatpush1.bf16.msra.mxu0 %v4111
    %4391 = vmatprep.subr.bf16.mxu0 %v4114
    %4392 = vmatpush1.bf16.msra.mxu0 %v4113
    %4393 = vmatprep.subr.bf16.mxu0 %v4116
    %4394 = vmatpush1.bf16.msra.mxu0 %v4115
    %4395 = vmatprep.subr.bf16.mxu0 %v4118
    %4396 = vmatpush1.bf16.msra.mxu0 %v4117
    %4397 = vmatprep.subr.bf16.mxu0 %v4120
    %4398 = vmatpush1.bf16.msra.mxu0 %v4119
    %4399 = vmatprep.subr.bf16.mxu0 %v4122
    %4400 = vmatpush1.bf16.msra.mxu0 %v4121
    %4401 = vmatprep.subr.bf16.mxu0 %v4124
    %4402 = vmatpush1.bf16.msra.mxu0 %v4123
    %4403 = vmatprep.subr.bf16.mxu0 %v4126
    %4404 = vmatpush1.bf16.msra.mxu0 %v4125
    %4405 = vmatprep.subr.bf16.mxu0 %v4128
    %4406 = vmatpush1.bf16.msra.mxu0 %v4127
    %4407 = vmatprep.subr.bf16.mxu0 %v4130
    %4408 = vmatpush1.bf16.msra.mxu0 %v4129
    %4409 = vmatprep.subr.bf16.mxu0 %v4132
    %4410 = vmatpush1.bf16.msra.mxu0 %v4131
    %4411 = vmatprep.subr.bf16.mxu0 %v4134
    %4412 = vmatpush1.bf16.msra.mxu0 %v4133
    %4413 = vmatprep.subr.bf16.mxu0 %v4136
    %4414 = vmatpush1.bf16.msra.mxu0 %v4135
    %4415 = vmatprep.mubr.bf16.mxu0 %v3526
    %4416 = vmatmul.mubr.bf16.gmra.mrb[0].mxu0 %v3525
    %v4417 = vpop.f32.mrb[0].mxu0
    %v4418 = vadd.f32 %v4375, %v4417
    %v4419 = vpop.f32.mrb[0].mxu0
    %v4420 = vadd.f32 %v4377, %v4419
    %v4421 = vpop.f32.mrb[0].mxu0
    %v4422 = vadd.f32 %v4379, %v4421
    %v4423 = vpop.f32.mrb[0].mxu0
    %v4424 = vadd.f32 %v4381, %v4423
    %4425 = vdwg.mxu0
    %4426 = vmatprep.subr.bf16.mxu0 %v4138
    %4427 = vmatpush1.bf16.msra.mxu0 %v4137
    %4428 = vmatprep.subr.bf16.mxu0 %v4140
    %4429 = vmatpush1.bf16.msra.mxu0 %v4139
    %4430 = vmatprep.subr.bf16.mxu0 %v4142
    %4431 = vmatpush1.bf16.msra.mxu0 %v4141
    %4432 = vmatprep.subr.bf16.mxu0 %v4144
    %4433 = vmatpush1.bf16.msra.mxu0 %v4143
    %4434 = vmatprep.subr.bf16.mxu0 %v4146
    %4435 = vmatpush1.bf16.msra.mxu0 %v4145
    %4436 = vmatprep.subr.bf16.mxu0 %v4148
    %4437 = vmatpush1.bf16.msra.mxu0 %v4147
    %4438 = vmatprep.subr.bf16.mxu0 %v4150
    %4439 = vmatpush1.bf16.msra.mxu0 %v4149
    %4440 = vmatprep.subr.bf16.mxu0 %v4152
    %4441 = vmatpush1.bf16.msra.mxu0 %v4151
    %4442 = vmatprep.subr.bf16.mxu0 %v4154
    %4443 = vmatpush1.bf16.msra.mxu0 %v4153
    %4444 = vmatprep.subr.bf16.mxu0 %v4156
    %4445 = vmatpush1.bf16.msra.mxu0 %v4155
    %4446 = vmatprep.subr.bf16.mxu0 %v4158
    %4447 = vmatpush1.bf16.msra.mxu0 %v4157
    %4448 = vmatprep.subr.bf16.mxu0 %v4160
    %4449 = vmatpush1.bf16.msra.mxu0 %v4159
    %4450 = vmatprep.subr.bf16.mxu0 %v4162
    %4451 = vmatpush1.bf16.msra.mxu0 %v4161
    %4452 = vmatprep.subr.bf16.mxu0 %v4164
    %4453 = vmatpush1.bf16.msra.mxu0 %v4163
    %4454 = vmatprep.subr.bf16.mxu0 %v4166
    %4455 = vmatpush1.bf16.msra.mxu0 %v4165
    %4456 = vmatprep.subr.bf16.mxu0 %v4168
    %4457 = vmatpush1.bf16.msra.mxu0 %v4167
    %4458 = vmatprep.mubr.bf16.mxu0 %v3528
    %4459 = vmatmul.mubr.bf16.gmra.mrb[0].mxu0 %v3527
    %v4460 = vpop.f32.mrb[0].mxu0
    %v4461 = vadd.f32 %v4418, %v4460
    %v4462 = vpop.f32.mrb[0].mxu0
    %v4463 = vadd.f32 %v4420, %v4462
    %v4464 = vpop.f32.mrb[0].mxu0
    %v4465 = vadd.f32 %v4422, %v4464
    %v4466 = vpop.f32.mrb[0].mxu0
    %v4467 = vadd.f32 %v4424, %v4466
    %4468 = vdwg.mxu0
    %v4597 = vunpack.c.l.b16 %v3393
    %v4598 = vunpack.c.h.b16 %v3393
    %v4599 = vunpack.c.l.b16 %v3394
    %v4600 = vunpack.c.h.b16 %v3394
    %v4601 = vunpack.c.l.b16 %v3395
    %v4602 = vunpack.c.h.b16 %v3395
    %v4603 = vunpack.c.l.b16 %v3396
    %v4604 = vunpack.c.h.b16 %v3396
    %v4605 = vunpack.c.l.b16 %v3397
    %v4606 = vunpack.c.h.b16 %v3397
    %v4607 = vunpack.c.l.b16 %v3398
    %v4608 = vunpack.c.h.b16 %v3398
    %v4609 = vunpack.c.l.b16 %v3399
    %v4610 = vunpack.c.h.b16 %v3399
    %v4611 = vunpack.c.l.b16 %v3400
    %v4612 = vunpack.c.h.b16 %v3400
    %v4613 = vunpack.c.l.b16 %v3401
    %v4614 = vunpack.c.h.b16 %v3401
    %v4615 = vunpack.c.l.b16 %v3402
    %v4616 = vunpack.c.h.b16 %v3402
    %v4617 = vunpack.c.l.b16 %v3403
    %v4618 = vunpack.c.h.b16 %v3403
    %v4619 = vunpack.c.l.b16 %v3404
    %v4620 = vunpack.c.h.b16 %v3404
    %v4621 = vunpack.c.l.b16 %v3405
    %v4622 = vunpack.c.h.b16 %v3405
    %v4623 = vunpack.c.l.b16 %v3406
    %v4624 = vunpack.c.h.b16 %v3406
    %v4625 = vunpack.c.l.b16 %v3407
    %v4626 = vunpack.c.h.b16 %v3407
    %v4627 = vunpack.c.l.b16 %v3408
    %v4628 = vunpack.c.h.b16 %v3408
    %v4629 = vunpack.c.l.b16 %v3409
    %v4630 = vunpack.c.h.b16 %v3409
    %v4631 = vunpack.c.l.b16 %v3410
    %v4632 = vunpack.c.h.b16 %v3410
    %v4633 = vunpack.c.l.b16 %v3411
    %v4634 = vunpack.c.h.b16 %v3411
    %v4635 = vunpack.c.l.b16 %v3412
    %v4636 = vunpack.c.h.b16 %v3412
    %v4637 = vunpack.c.l.b16 %v3413
    %v4638 = vunpack.c.h.b16 %v3413
    %v4639 = vunpack.c.l.b16 %v3414
    %v4640 = vunpack.c.h.b16 %v3414
    %v4641 = vunpack.c.l.b16 %v3415
    %v4642 = vunpack.c.h.b16 %v3415
    %v4643 = vunpack.c.l.b16 %v3416
    %v4644 = vunpack.c.h.b16 %v3416
    %v4645 = vunpack.c.l.b16 %v3417
    %v4646 = vunpack.c.h.b16 %v3417
    %v4647 = vunpack.c.l.b16 %v3418
    %v4648 = vunpack.c.h.b16 %v3418
    %v4649 = vunpack.c.l.b16 %v3419
    %v4650 = vunpack.c.h.b16 %v3419
    %v4651 = vunpack.c.l.b16 %v3420
    %v4652 = vunpack.c.h.b16 %v3420
    %v4653 = vunpack.c.l.b16 %v3421
    %v4654 = vunpack.c.h.b16 %v3421
    %v4655 = vunpack.c.l.b16 %v3422
    %v4656 = vunpack.c.h.b16 %v3422
    %v4657 = vunpack.c.l.b16 %v3423
    %v4658 = vunpack.c.h.b16 %v3423
    %v4659 = vunpack.c.l.b16 %v3424
    %v4660 = vunpack.c.h.b16 %v3424
    %v4661 = vunpack.c.l.b16 %v3425
    %v4662 = vunpack.c.h.b16 %v3425
    %v4663 = vunpack.c.l.b16 %v3426
    %v4664 = vunpack.c.h.b16 %v3426
    %v4665 = vunpack.c.l.b16 %v3427
    %v4666 = vunpack.c.h.b16 %v3427
    %v4667 = vunpack.c.l.b16 %v3428
    %v4668 = vunpack.c.h.b16 %v3428
    %v4669 = vunpack.c.l.b16 %v3429
    %v4670 = vunpack.c.h.b16 %v3429
    %v4671 = vunpack.c.l.b16 %v3430
    %v4672 = vunpack.c.h.b16 %v3430
    %v4673 = vunpack.c.l.b16 %v3431
    %v4674 = vunpack.c.h.b16 %v3431
    %v4675 = vunpack.c.l.b16 %v3432
    %v4676 = vunpack.c.h.b16 %v3432
    %v4677 = vunpack.c.l.b16 %v3433
    %v4678 = vunpack.c.h.b16 %v3433
    %v4679 = vunpack.c.l.b16 %v3434
    %v4680 = vunpack.c.h.b16 %v3434
    %v4681 = vunpack.c.l.b16 %v3435
    %v4682 = vunpack.c.h.b16 %v3435
    %v4683 = vunpack.c.l.b16 %v3436
    %v4684 = vunpack.c.h.b16 %v3436
    %v4685 = vunpack.c.l.b16 %v3437
    %v4686 = vunpack.c.h.b16 %v3437
    %v4687 = vunpack.c.l.b16 %v3438
    %v4688 = vunpack.c.h.b16 %v3438
    %v4689 = vunpack.c.l.b16 %v3439
    %v4690 = vunpack.c.h.b16 %v3439
    %v4691 = vunpack.c.l.b16 %v3440
    %v4692 = vunpack.c.h.b16 %v3440
    %v4693 = vunpack.c.l.b16 %v3441
    %v4694 = vunpack.c.h.b16 %v3441
    %v4695 = vunpack.c.l.b16 %v3442
    %v4696 = vunpack.c.h.b16 %v3442
    %v4697 = vunpack.c.l.b16 %v3443
    %v4698 = vunpack.c.h.b16 %v3443
    %v4699 = vunpack.c.l.b16 %v3444
    %v4700 = vunpack.c.h.b16 %v3444
    %v4701 = vunpack.c.l.b16 %v3445
    %v4702 = vunpack.c.h.b16 %v3445
    %v4703 = vunpack.c.l.b16 %v3446
    %v4704 = vunpack.c.h.b16 %v3446
    %v4705 = vunpack.c.l.b16 %v3447
    %v4706 = vunpack.c.h.b16 %v3447
    %v4707 = vunpack.c.l.b16 %v3448
    %v4708 = vunpack.c.h.b16 %v3448
    %v4709 = vunpack.c.l.b16 %v3449
    %v4710 = vunpack.c.h.b16 %v3449
    %v4711 = vunpack.c.l.b16 %v3450
    %v4712 = vunpack.c.h.b16 %v3450
    %v4713 = vunpack.c.l.b16 %v3451
    %v4714 = vunpack.c.h.b16 %v3451
    %v4715 = vunpack.c.l.b16 %v3452
    %v4716 = vunpack.c.h.b16 %v3452
    %v4717 = vunpack.c.l.b16 %v3453
    %v4718 = vunpack.c.h.b16 %v3453
    %v4719 = vunpack.c.l.b16 %v3454
    %v4720 = vunpack.c.h.b16 %v3454
    %v4721 = vunpack.c.l.b16 %v3455
    %v4722 = vunpack.c.h.b16 %v3455
    %v4723 = vunpack.c.l.b16 %v3456
    %v4724 = vunpack.c.h.b16 %v3456
    %v4725 = vunpack.c.l.b16 %v3457
    %v4726 = vunpack.c.h.b16 %v3457
    %v4727 = vunpack.c.l.b16 %v3458
    %v4728 = vunpack.c.h.b16 %v3458
    %v4729 = vunpack.c.l.b16 %v3459
    %v4730 = vunpack.c.h.b16 %v3459
    %v4731 = vunpack.c.l.b16 %v3460
    %v4732 = vunpack.c.h.b16 %v3460
    %v4733 = vunpack.c.l.b16 %v3461
    %v4734 = vunpack.c.h.b16 %v3461
    %v4735 = vunpack.c.l.b16 %v3462
    %v4736 = vunpack.c.h.b16 %v3462
    %v4737 = vunpack.c.l.b16 %v3463
    %v4738 = vunpack.c.h.b16 %v3463
    %v4739 = vunpack.c.l.b16 %v3464
    %v4740 = vunpack.c.h.b16 %v3464
    %v4741 = vunpack.c.l.b16 %v3465
    %v4742 = vunpack.c.h.b16 %v3465
    %v4743 = vunpack.c.l.b16 %v3466
    %v4744 = vunpack.c.h.b16 %v3466
    %v4745 = vunpack.c.l.b16 %v3467
    %v4746 = vunpack.c.h.b16 %v3467
    %v4747 = vunpack.c.l.b16 %v3468
    %v4748 = vunpack.c.h.b16 %v3468
    %v4749 = vunpack.c.l.b16 %v3469
    %v4750 = vunpack.c.h.b16 %v3469
    %v4751 = vunpack.c.l.b16 %v3470
    %v4752 = vunpack.c.h.b16 %v3470
    %v4753 = vunpack.c.l.b16 %v3471
    %v4754 = vunpack.c.h.b16 %v3471
    %v4755 = vunpack.c.l.b16 %v3472
    %v4756 = vunpack.c.h.b16 %v3472
    %v4757 = vunpack.c.l.b16 %v3473
    %v4758 = vunpack.c.h.b16 %v3473
    %v4759 = vunpack.c.l.b16 %v3474
    %v4760 = vunpack.c.h.b16 %v3474
    %v4761 = vunpack.c.l.b16 %v3475
    %v4762 = vunpack.c.h.b16 %v3475
    %v4763 = vunpack.c.l.b16 %v3476
    %v4764 = vunpack.c.h.b16 %v3476
    %v4765 = vunpack.c.l.b16 %v3477
    %v4766 = vunpack.c.h.b16 %v3477
    %v4767 = vunpack.c.l.b16 %v3478
    %v4768 = vunpack.c.h.b16 %v3478
    %v4769 = vunpack.c.l.b16 %v3479
    %v4770 = vunpack.c.h.b16 %v3479
    %v4771 = vunpack.c.l.b16 %v3480
    %v4772 = vunpack.c.h.b16 %v3480
    %v4773 = vunpack.c.l.b16 %v3481
    %v4774 = vunpack.c.h.b16 %v3481
    %v4775 = vunpack.c.l.b16 %v3482
    %v4776 = vunpack.c.h.b16 %v3482
    %v4777 = vunpack.c.l.b16 %v3483
    %v4778 = vunpack.c.h.b16 %v3483
    %v4779 = vunpack.c.l.b16 %v3484
    %v4780 = vunpack.c.h.b16 %v3484
    %v4781 = vunpack.c.l.b16 %v3485
    %v4782 = vunpack.c.h.b16 %v3485
    %v4783 = vunpack.c.l.b16 %v3486
    %v4784 = vunpack.c.h.b16 %v3486
    %v4785 = vunpack.c.l.b16 %v3487
    %v4786 = vunpack.c.h.b16 %v3487
    %v4787 = vunpack.c.l.b16 %v3488
    %v4788 = vunpack.c.h.b16 %v3488
    %v4789 = vunpack.c.l.b16 %v3489
    %v4790 = vunpack.c.h.b16 %v3489
    %v4791 = vunpack.c.l.b16 %v3490
    %v4792 = vunpack.c.h.b16 %v3490
    %v4793 = vunpack.c.l.b16 %v3491
    %v4794 = vunpack.c.h.b16 %v3491
    %v4795 = vunpack.c.l.b16 %v3492
    %v4796 = vunpack.c.h.b16 %v3492
    %v4797 = vunpack.c.l.b16 %v3493
    %v4798 = vunpack.c.h.b16 %v3493
    %v4799 = vunpack.c.l.b16 %v3494
    %v4800 = vunpack.c.h.b16 %v3494
    %v4801 = vunpack.c.l.b16 %v3495
    %v4802 = vunpack.c.h.b16 %v3495
    %v4803 = vunpack.c.l.b16 %v3496
    %v4804 = vunpack.c.h.b16 %v3496
    %v4805 = vunpack.c.l.b16 %v3497
    %v4806 = vunpack.c.h.b16 %v3497
    %v4807 = vunpack.c.l.b16 %v3498
    %v4808 = vunpack.c.h.b16 %v3498
    %v4809 = vunpack.c.l.b16 %v3499
    %v4810 = vunpack.c.h.b16 %v3499
    %v4811 = vunpack.c.l.b16 %v3500
    %v4812 = vunpack.c.h.b16 %v3500
    %v4813 = vunpack.c.l.b16 %v3501
    %v4814 = vunpack.c.h.b16 %v3501
    %v4815 = vunpack.c.l.b16 %v3502
    %v4816 = vunpack.c.h.b16 %v3502
    %v4817 = vunpack.c.l.b16 %v3503
    %v4818 = vunpack.c.h.b16 %v3503
    %v4819 = vunpack.c.l.b16 %v3504
    %v4820 = vunpack.c.h.b16 %v3504
    %v4821 = vunpack.c.l.b16 %v3505
    %v4822 = vunpack.c.h.b16 %v3505
    %v4823 = vunpack.c.l.b16 %v3506
    %v4824 = vunpack.c.h.b16 %v3506
    %v4825 = vunpack.c.l.b16 %v3507
    %v4826 = vunpack.c.h.b16 %v3507
    %v4827 = vunpack.c.l.b16 %v3508
    %v4828 = vunpack.c.h.b16 %v3508
    %v4829 = vunpack.c.l.b16 %v3509
    %v4830 = vunpack.c.h.b16 %v3509
    %v4831 = vunpack.c.l.b16 %v3510
    %v4832 = vunpack.c.h.b16 %v3510
    %v4833 = vunpack.c.l.b16 %v3511
    %v4834 = vunpack.c.h.b16 %v3511
    %v4835 = vunpack.c.l.b16 %v3512
    %v4836 = vunpack.c.h.b16 %v3512
    %v4837 = vunpack.c.l.b16 %v3513
    %v4838 = vunpack.c.h.b16 %v3513
    %v4839 = vunpack.c.l.b16 %v3514
    %v4840 = vunpack.c.h.b16 %v3514
    %v4841 = vunpack.c.l.b16 %v3515
    %v4842 = vunpack.c.h.b16 %v3515
    %v4843 = vunpack.c.l.b16 %v3516
    %v4844 = vunpack.c.h.b16 %v3516
    %v4845 = vunpack.c.l.b16 %v3517
    %v4846 = vunpack.c.h.b16 %v3517
    %v4847 = vunpack.c.l.b16 %v3518
    %v4848 = vunpack.c.h.b16 %v3518
    %v4849 = vunpack.c.l.b16 %v3519
    %v4850 = vunpack.c.h.b16 %v3519
    %v4851 = vunpack.c.l.b16 %v3520
    %v4852 = vunpack.c.h.b16 %v3520
    %v4853 = vpack.c.b16 %v4599, %v4597
    %v4854 = vpack.c.b16 %v4600, %v4598
    %v4855 = vpack.c.b16 %v4603, %v4601
    %v4856 = vpack.c.b16 %v4604, %v4602
    %v4857 = vpack.c.b16 %v4607, %v4605
    %v4858 = vpack.c.b16 %v4608, %v4606
    %v4859 = vpack.c.b16 %v4611, %v4609
    %v4860 = vpack.c.b16 %v4612, %v4610
    %v4861 = vpack.c.b16 %v4615, %v4613
    %v4862 = vpack.c.b16 %v4616, %v4614
    %v4863 = vpack.c.b16 %v4619, %v4617
    %v4864 = vpack.c.b16 %v4620, %v4618
    %v4865 = vpack.c.b16 %v4623, %v4621
    %v4866 = vpack.c.b16 %v4624, %v4622
    %v4867 = vpack.c.b16 %v4627, %v4625
    %v4868 = vpack.c.b16 %v4628, %v4626
    %v4869 = vpack.c.b16 %v4631, %v4629
    %v4870 = vpack.c.b16 %v4632, %v4630
    %v4871 = vpack.c.b16 %v4635, %v4633
    %v4872 = vpack.c.b16 %v4636, %v4634
    %v4873 = vpack.c.b16 %v4639, %v4637
    %v4874 = vpack.c.b16 %v4640, %v4638
    %v4875 = vpack.c.b16 %v4643, %v4641
    %v4876 = vpack.c.b16 %v4644, %v4642
    %v4877 = vpack.c.b16 %v4647, %v4645
    %v4878 = vpack.c.b16 %v4648, %v4646
    %v4879 = vpack.c.b16 %v4651, %v4649
    %v4880 = vpack.c.b16 %v4652, %v4650
    %v4881 = vpack.c.b16 %v4655, %v4653
    %v4882 = vpack.c.b16 %v4656, %v4654
    %v4883 = vpack.c.b16 %v4659, %v4657
    %v4884 = vpack.c.b16 %v4660, %v4658
    %v4885 = vpack.c.b16 %v4663, %v4661
    %v4886 = vpack.c.b16 %v4664, %v4662
    %v4887 = vpack.c.b16 %v4667, %v4665
    %v4888 = vpack.c.b16 %v4668, %v4666
    %v4889 = vpack.c.b16 %v4671, %v4669
    %v4890 = vpack.c.b16 %v4672, %v4670
    %v4891 = vpack.c.b16 %v4675, %v4673
    %v4892 = vpack.c.b16 %v4676, %v4674
    %v4893 = vpack.c.b16 %v4679, %v4677
    %v4894 = vpack.c.b16 %v4680, %v4678
    %v4895 = vpack.c.b16 %v4683, %v4681
    %v4896 = vpack.c.b16 %v4684, %v4682
    %v4897 = vpack.c.b16 %v4687, %v4685
    %v4898 = vpack.c.b16 %v4688, %v4686
    %v4899 = vpack.c.b16 %v4691, %v4689
    %v4900 = vpack.c.b16 %v4692, %v4690
    %v4901 = vpack.c.b16 %v4695, %v4693
    %v4902 = vpack.c.b16 %v4696, %v4694
    %v4903 = vpack.c.b16 %v4699, %v4697
    %v4904 = vpack.c.b16 %v4700, %v4698
    %v4905 = vpack.c.b16 %v4703, %v4701
    %v4906 = vpack.c.b16 %v4704, %v4702
    %v4907 = vpack.c.b16 %v4707, %v4705
    %v4908 = vpack.c.b16 %v4708, %v4706
    %v4909 = vpack.c.b16 %v4711, %v4709
    %v4910 = vpack.c.b16 %v4712, %v4710
    %v4911 = vpack.c.b16 %v4715, %v4713
    %v4912 = vpack.c.b16 %v4716, %v4714
    %v4913 = vpack.c.b16 %v4719, %v4717
    %v4914 = vpack.c.b16 %v4720, %v4718
    %v4915 = vpack.c.b16 %v4723, %v4721
    %v4916 = vpack.c.b16 %v4724, %v4722
    %v4917 = vpack.c.b16 %v4727, %v4725
    %v4918 = vpack.c.b16 %v4728, %v4726
    %v4919 = vpack.c.b16 %v4731, %v4729
    %v4920 = vpack.c.b16 %v4732, %v4730
    %v4921 = vpack.c.b16 %v4735, %v4733
    %v4922 = vpack.c.b16 %v4736, %v4734
    %v4923 = vpack.c.b16 %v4739, %v4737
    %v4924 = vpack.c.b16 %v4740, %v4738
    %v4925 = vpack.c.b16 %v4743, %v4741
    %v4926 = vpack.c.b16 %v4744, %v4742
    %v4927 = vpack.c.b16 %v4747, %v4745
    %v4928 = vpack.c.b16 %v4748, %v4746
    %v4929 = vpack.c.b16 %v4751, %v4749
    %v4930 = vpack.c.b16 %v4752, %v4750
    %v4931 = vpack.c.b16 %v4755, %v4753
    %v4932 = vpack.c.b16 %v4756, %v4754
    %v4933 = vpack.c.b16 %v4759, %v4757
    %v4934 = vpack.c.b16 %v4760, %v4758
    %v4935 = vpack.c.b16 %v4763, %v4761
    %v4936 = vpack.c.b16 %v4764, %v4762
    %v4937 = vpack.c.b16 %v4767, %v4765
    %v4938 = vpack.c.b16 %v4768, %v4766
    %v4939 = vpack.c.b16 %v4771, %v4769
    %v4940 = vpack.c.b16 %v4772, %v4770
    %v4941 = vpack.c.b16 %v4775, %v4773
    %v4942 = vpack.c.b16 %v4776, %v4774
    %v4943 = vpack.c.b16 %v4779, %v4777
    %v4944 = vpack.c.b16 %v4780, %v4778
    %v4945 = vpack.c.b16 %v4783, %v4781
    %v4946 = vpack.c.b16 %v4784, %v4782
    %v4947 = vpack.c.b16 %v4787, %v4785
    %v4948 = vpack.c.b16 %v4788, %v4786
    %v4949 = vpack.c.b16 %v4791, %v4789
    %v4950 = vpack.c.b16 %v4792, %v4790
    %v4951 = vpack.c.b16 %v4795, %v4793
    %v4952 = vpack.c.b16 %v4796, %v4794
    %v4953 = vpack.c.b16 %v4799, %v4797
    %v4954 = vpack.c.b16 %v4800, %v4798
    %v4955 = vpack.c.b16 %v4803, %v4801
    %v4956 = vpack.c.b16 %v4804, %v4802
    %v4957 = vpack.c.b16 %v4807, %v4805
    %v4958 = vpack.c.b16 %v4808, %v4806
    %v4959 = vpack.c.b16 %v4811, %v4809
    %v4960 = vpack.c.b16 %v4812, %v4810
    %v4961 = vpack.c.b16 %v4815, %v4813
    %v4962 = vpack.c.b16 %v4816, %v4814
    %v4963 = vpack.c.b16 %v4819, %v4817
    %v4964 = vpack.c.b16 %v4820, %v4818
    %v4965 = vpack.c.b16 %v4823, %v4821
    %v4966 = vpack.c.b16 %v4824, %v4822
    %v4967 = vpack.c.b16 %v4827, %v4825
    %v4968 = vpack.c.b16 %v4828, %v4826
    %v4969 = vpack.c.b16 %v4831, %v4829
    %v4970 = vpack.c.b16 %v4832, %v4830
    %v4971 = vpack.c.b16 %v4835, %v4833
    %v4972 = vpack.c.b16 %v4836, %v4834
    %v4973 = vpack.c.b16 %v4839, %v4837
    %v4974 = vpack.c.b16 %v4840, %v4838
    %v4975 = vpack.c.b16 %v4843, %v4841
    %v4976 = vpack.c.b16 %v4844, %v4842
    %v4977 = vpack.c.b16 %v4847, %v4845
    %v4978 = vpack.c.b16 %v4848, %v4846
    %v4979 = vpack.c.b16 %v4851, %v4849
    %v4980 = vpack.c.b16 %v4852, %v4850
    %5109 = vmatprep.subr.bf16.mxu0 %v4854
    %5110 = vmatpush1.bf16.msra.mxu0 %v4853
    %5111 = vmatprep.subr.bf16.mxu0 %v4856
    %5112 = vmatpush1.bf16.msra.mxu0 %v4855
    %5113 = vmatprep.subr.bf16.mxu0 %v4858
    %5114 = vmatpush1.bf16.msra.mxu0 %v4857
    %5115 = vmatprep.subr.bf16.mxu0 %v4860
    %5116 = vmatpush1.bf16.msra.mxu0 %v4859
    %5117 = vmatprep.subr.bf16.mxu0 %v4862
    %5118 = vmatpush1.bf16.msra.mxu0 %v4861
    %5119 = vmatprep.subr.bf16.mxu0 %v4864
    %5120 = vmatpush1.bf16.msra.mxu0 %v4863
    %5121 = vmatprep.subr.bf16.mxu0 %v4866
    %5122 = vmatpush1.bf16.msra.mxu0 %v4865
    %5123 = vmatprep.subr.bf16.mxu0 %v4868
    %5124 = vmatpush1.bf16.msra.mxu0 %v4867
    %5125 = vmatprep.subr.bf16.mxu0 %v4870
    %5126 = vmatpush1.bf16.msra.mxu0 %v4869
    %5127 = vmatprep.subr.bf16.mxu0 %v4872
    %5128 = vmatpush1.bf16.msra.mxu0 %v4871
    %5129 = vmatprep.subr.bf16.mxu0 %v4874
    %5130 = vmatpush1.bf16.msra.mxu0 %v4873
    %5131 = vmatprep.subr.bf16.mxu0 %v4876
    %5132 = vmatpush1.bf16.msra.mxu0 %v4875
    %5133 = vmatprep.subr.bf16.mxu0 %v4878
    %5134 = vmatpush1.bf16.msra.mxu0 %v4877
    %5135 = vmatprep.subr.bf16.mxu0 %v4880
    %5136 = vmatpush1.bf16.msra.mxu0 %v4879
    %5137 = vmatprep.subr.bf16.mxu0 %v4882
    %5138 = vmatpush1.bf16.msra.mxu0 %v4881
    %5139 = vmatprep.subr.bf16.mxu0 %v4884
    %5140 = vmatpush1.bf16.msra.mxu0 %v4883
    %5141 = vmatprep.mubr.bf16.mxu0 %v3386
    %5142 = vmatmul.mubr.bf16.gmra.mrb[0].mxu0 %v3385
    %v5143 = vpop.f32.mrb[0].mxu0
    %v5144 = vadd.f32 %v4461, %v5143
    %v5145 = vpop.f32.mrb[0].mxu0
    %v5146 = vadd.f32 %v4463, %v5145
    %v5147 = vpop.f32.mrb[0].mxu0
    %v5148 = vadd.f32 %v4465, %v5147
    %v5149 = vpop.f32.mrb[0].mxu0
    %v5150 = vadd.f32 %v4467, %v5149
    %5151 = vdwg.mxu0
    %5152 = vmatprep.subr.bf16.mxu0 %v4886
    %5153 = vmatpush1.bf16.msra.mxu0 %v4885
    %5154 = vmatprep.subr.bf16.mxu0 %v4888
    %5155 = vmatpush1.bf16.msra.mxu0 %v4887
    %5156 = vmatprep.subr.bf16.mxu0 %v4890
    %5157 = vmatpush1.bf16.msra.mxu0 %v4889
    %5158 = vmatprep.subr.bf16.mxu0 %v4892
    %5159 = vmatpush1.bf16.msra.mxu0 %v4891
    %5160 = vmatprep.subr.bf16.mxu0 %v4894
    %5161 = vmatpush1.bf16.msra.mxu0 %v4893
    %5162 = vmatprep.subr.bf16.mxu0 %v4896
    %5163 = vmatpush1.bf16.msra.mxu0 %v4895
    %5164 = vmatprep.subr.bf16.mxu0 %v4898
    %5165 = vmatpush1.bf16.msra.mxu0 %v4897
    %5166 = vmatprep.subr.bf16.mxu0 %v4900
    %5167 = vmatpush1.bf16.msra.mxu0 %v4899
    %5168 = vmatprep.subr.bf16.mxu0 %v4902
    %5169 = vmatpush1.bf16.msra.mxu0 %v4901
    %5170 = vmatprep.subr.bf16.mxu0 %v4904
    %5171 = vmatpush1.bf16.msra.mxu0 %v4903
    %5172 = vmatprep.subr.bf16.mxu0 %v4906
    %5173 = vmatpush1.bf16.msra.mxu0 %v4905
    %5174 = vmatprep.subr.bf16.mxu0 %v4908
    %5175 = vmatpush1.bf16.msra.mxu0 %v4907
    %5176 = vmatprep.subr.bf16.mxu0 %v4910
    %5177 = vmatpush1.bf16.msra.mxu0 %v4909
    %5178 = vmatprep.subr.bf16.mxu0 %v4912
    %5179 = vmatpush1.bf16.msra.mxu0 %v4911
    %5180 = vmatprep.subr.bf16.mxu0 %v4914
    %5181 = vmatpush1.bf16.msra.mxu0 %v4913
    %5182 = vmatprep.subr.bf16.mxu0 %v4916
    %5183 = vmatpush1.bf16.msra.mxu0 %v4915
    %5184 = vmatprep.mubr.bf16.mxu0 %v3388
    %5185 = vmatmul.mubr.bf16.gmra.mrb[0].mxu0 %v3387
    %v5186 = vpop.f32.mrb[0].mxu0
    %v5187 = vadd.f32 %v5144, %v5186
    %v5188 = vpop.f32.mrb[0].mxu0
    %v5189 = vadd.f32 %v5146, %v5188
    %v5190 = vpop.f32.mrb[0].mxu0
    %v5191 = vadd.f32 %v5148, %v5190
    %v5192 = vpop.f32.mrb[0].mxu0
    %v5193 = vadd.f32 %v5150, %v5192
    %5194 = vdwg.mxu0
    %5195 = vmatprep.subr.bf16.mxu0 %v4918
    %5196 = vmatpush1.bf16.msra.mxu0 %v4917
    %5197 = vmatprep.subr.bf16.mxu0 %v4920
    %5198 = vmatpush1.bf16.msra.mxu0 %v4919
    %5199 = vmatprep.subr.bf16.mxu0 %v4922
    %5200 = vmatpush1.bf16.msra.mxu0 %v4921
    %5201 = vmatprep.subr.bf16.mxu0 %v4924
    %5202 = vmatpush1.bf16.msra.mxu0 %v4923
    %5203 = vmatprep.subr.bf16.mxu0 %v4926
    %5204 = vmatpush1.bf16.msra.mxu0 %v4925
    %5205 = vmatprep.subr.bf16.mxu0 %v4928
    %5206 = vmatpush1.bf16.msra.mxu0 %v4927
    %5207 = vmatprep.subr.bf16.mxu0 %v4930
    %5208 = vmatpush1.bf16.msra.mxu0 %v4929
    %5209 = vmatprep.subr.bf16.mxu0 %v4932
    %5210 = vmatpush1.bf16.msra.mxu0 %v4931
    %5211 = vmatprep.subr.bf16.mxu0 %v4934
    %5212 = vmatpush1.bf16.msra.mxu0 %v4933
    %5213 = vmatprep.subr.bf16.mxu0 %v4936
    %5214 = vmatpush1.bf16.msra.mxu0 %v4935
    %5215 = vmatprep.subr.bf16.mxu0 %v4938
    %5216 = vmatpush1.bf16.msra.mxu0 %v4937
    %5217 = vmatprep.subr.bf16.mxu0 %v4940
    %5218 = vmatpush1.bf16.msra.mxu0 %v4939
    %5219 = vmatprep.subr.bf16.mxu0 %v4942
    %5220 = vmatpush1.bf16.msra.mxu0 %v4941
    %5221 = vmatprep.subr.bf16.mxu0 %v4944
    %5222 = vmatpush1.bf16.msra.mxu0 %v4943
    %5223 = vmatprep.subr.bf16.mxu0 %v4946
    %5224 = vmatpush1.bf16.msra.mxu0 %v4945
    %5225 = vmatprep.subr.bf16.mxu0 %v4948
    %5226 = vmatpush1.bf16.msra.mxu0 %v4947
    %5227 = vmatprep.mubr.bf16.mxu0 %v3390
    %5228 = vmatmul.mubr.bf16.gmra.mrb[0].mxu0 %v3389
    %v5229 = vpop.f32.mrb[0].mxu0
    %v5230 = vadd.f32 %v5187, %v5229
    %v5231 = vpop.f32.mrb[0].mxu0
    %v5232 = vadd.f32 %v5189, %v5231
    %v5233 = vpop.f32.mrb[0].mxu0
    %v5234 = vadd.f32 %v5191, %v5233
    %v5235 = vpop.f32.mrb[0].mxu0
    %v5236 = vadd.f32 %v5193, %v5235
    %5237 = vdwg.mxu0
    %5238 = vmatprep.subr.bf16.mxu0 %v4950
    %5239 = vmatpush1.bf16.msra.mxu0 %v4949
    %5240 = vmatprep.subr.bf16.mxu0 %v4952
    %5241 = vmatpush1.bf16.msra.mxu0 %v4951
    %5242 = vmatprep.subr.bf16.mxu0 %v4954
    %5243 = vmatpush1.bf16.msra.mxu0 %v4953
    %5244 = vmatprep.subr.bf16.mxu0 %v4956
    %5245 = vmatpush1.bf16.msra.mxu0 %v4955
    %5246 = vmatprep.subr.bf16.mxu0 %v4958
    %5247 = vmatpush1.bf16.msra.mxu0 %v4957
    %5248 = vmatprep.subr.bf16.mxu0 %v4960
    %5249 = vmatpush1.bf16.msra.mxu0 %v4959
    %5250 = vmatprep.subr.bf16.mxu0 %v4962
    %5251 = vmatpush1.bf16.msra.mxu0 %v4961
    %5252 = vmatprep.subr.bf16.mxu0 %v4964
    %5253 = vmatpush1.bf16.msra.mxu0 %v4963
    %5254 = vmatprep.subr.bf16.mxu0 %v4966
    %5255 = vmatpush1.bf16.msra.mxu0 %v4965
    %5256 = vmatprep.subr.bf16.mxu0 %v4968
    %5257 = vmatpush1.bf16.msra.mxu0 %v4967
    %5258 = vmatprep.subr.bf16.mxu0 %v4970
    %5259 = vmatpush1.bf16.msra.mxu0 %v4969
    %5260 = vmatprep.subr.bf16.mxu0 %v4972
    %5261 = vmatpush1.bf16.msra.mxu0 %v4971
    %5262 = vmatprep.subr.bf16.mxu0 %v4974
    %5263 = vmatpush1.bf16.msra.mxu0 %v4973
    %5264 = vmatprep.subr.bf16.mxu0 %v4976
    %5265 = vmatpush1.bf16.msra.mxu0 %v4975
    %5266 = vmatprep.subr.bf16.mxu0 %v4978
    %5267 = vmatpush1.bf16.msra.mxu0 %v4977
    %5268 = vmatprep.subr.bf16.mxu0 %v4980
    %5269 = vmatpush1.bf16.msra.mxu0 %v4979
    %5270 = vmatprep.mubr.bf16.mxu0 %v3392
    %5271 = vmatmul.mubr.bf16.gmra.mrb[0].mxu0 %v3391
    %v5272 = vpop.f32.mrb[0].mxu0
    %v5273 = vadd.f32 %v5230, %v5272
    %v5274 = vpop.f32.mrb[0].mxu0
    %v5275 = vadd.f32 %v5232, %v5274
    %v5276 = vpop.f32.mrb[0].mxu0
    %v5277 = vadd.f32 %v5234, %v5276
    %v5278 = vpop.f32.mrb[0].mxu0
    %v5279 = vadd.f32 %v5236, %v5278
    %5280 = vdwg.mxu0
    %v5281 = vld [vmem:[#allocation3 + $0x80] sm:$0xff]
    %v5282 = vld [vmem:[#allocation3 + $0x88] sm:$0xff]
    %v5283 = vld [vmem:[#allocation3 + $0x90] sm:$0xff]
    %v5284 = vld [vmem:[#allocation3 + $0x98] sm:$0xff]
    %v5285 = vld [vmem:[#allocation3 + $0xa0] sm:$0xff]
    %v5286 = vld [vmem:[#allocation3 + $0xa8] sm:$0xff]
    %v5287 = vld [vmem:[#allocation3 + $0xb0] sm:$0xff]
    %v5288 = vld [vmem:[#allocation3 + $0xb8] sm:$0xff]
    %v5289 = vld [vmem:[#allocation9 + $0x800] sm:$0xff]
    %v5290 = vld [vmem:[#allocation9 + $0x808] sm:$0xff]
    %v5291 = vld [vmem:[#allocation9 + $0x810] sm:$0xff]
    %v5292 = vld [vmem:[#allocation9 + $0x818] sm:$0xff]
    %v5293 = vld [vmem:[#allocation9 + $0x820] sm:$0xff]
    %v5294 = vld [vmem:[#allocation9 + $0x828] sm:$0xff]
    %v5295 = vld [vmem:[#allocation9 + $0x830] sm:$0xff]
    %v5296 = vld [vmem:[#allocation9 + $0x838] sm:$0xff]
    %v5297 = vld [vmem:[#allocation9 + $0x840] sm:$0xff]
    %v5298 = vld [vmem:[#allocation9 + $0x848] sm:$0xff]
    %v5299 = vld [vmem:[#allocation9 + $0x850] sm:$0xff]
    %v5300 = vld [vmem:[#allocation9 + $0x858] sm:$0xff]
    %v5301 = vld [vmem:[#allocation9 + $0x860] sm:$0xff]
    %v5302 = vld [vmem:[#allocation9 + $0x868] sm:$0xff]
    %v5303 = vld [vmem:[#allocation9 + $0x870] sm:$0xff]
    %v5304 = vld [vmem:[#allocation9 + $0x878] sm:$0xff]
    %v5305 = vld [vmem:[#allocation9 + $0x880] sm:$0xff]
    %v5306 = vld [vmem:[#allocation9 + $0x888] sm:$0xff]
    %v5307 = vld [vmem:[#allocation9 + $0x890] sm:$0xff]
    %v5308 = vld [vmem:[#allocation9 + $0x898] sm:$0xff]
    %v5309 = vld [vmem:[#allocation9 + $0x8a0] sm:$0xff]
    %v5310 = vld [vmem:[#allocation9 + $0x8a8] sm:$0xff]
    %v5311 = vld [vmem:[#allocation9 + $0x8b0] sm:$0xff]
    %v5312 = vld [vmem:[#allocation9 + $0x8b8] sm:$0xff]
    %v5313 = vld [vmem:[#allocation9 + $0x8c0] sm:$0xff]
    %v5314 = vld [vmem:[#allocation9 + $0x8c8] sm:$0xff]
    %v5315 = vld [vmem:[#allocation9 + $0x8d0] sm:$0xff]
    %v5316 = vld [vmem:[#allocation9 + $0x8d8] sm:$0xff]
    %v5317 = vld [vmem:[#allocation9 + $0x8e0] sm:$0xff]
    %v5318 = vld [vmem:[#allocation9 + $0x8e8] sm:$0xff]
    %v5319 = vld [vmem:[#allocation9 + $0x8f0] sm:$0xff]
    %v5320 = vld [vmem:[#allocation9 + $0x8f8] sm:$0xff]
    %v5321 = vld [vmem:[#allocation9 + $0x900] sm:$0xff]
    %v5322 = vld [vmem:[#allocation9 + $0x908] sm:$0xff]
    %v5323 = vld [vmem:[#allocation9 + $0x910] sm:$0xff]
    %v5324 = vld [vmem:[#allocation9 + $0x918] sm:$0xff]
    %v5325 = vld [vmem:[#allocation9 + $0x920] sm:$0xff]
    %v5326 = vld [vmem:[#allocation9 + $0x928] sm:$0xff]
    %v5327 = vld [vmem:[#allocation9 + $0x930] sm:$0xff]
    %v5328 = vld [vmem:[#allocation9 + $0x938] sm:$0xff]
    %v5329 = vld [vmem:[#allocation9 + $0x940] sm:$0xff]
    %v5330 = vld [vmem:[#allocation9 + $0x948] sm:$0xff]
    %v5331 = vld [vmem:[#allocation9 + $0x950] sm:$0xff]
    %v5332 = vld [vmem:[#allocation9 + $0x958] sm:$0xff]
    %v5333 = vld [vmem:[#allocation9 + $0x960] sm:$0xff]
    %v5334 = vld [vmem:[#allocation9 + $0x968] sm:$0xff]
    %v5335 = vld [vmem:[#allocation9 + $0x970] sm:$0xff]
    %v5336 = vld [vmem:[#allocation9 + $0x978] sm:$0xff]
    %v5337 = vld [vmem:[#allocation9 + $0x980] sm:$0xff]
    %v5338 = vld [vmem:[#allocation9 + $0x988] sm:$0xff]
    %v5339 = vld [vmem:[#allocation9 + $0x990] sm:$0xff]
    %v5340 = vld [vmem:[#allocation9 + $0x998] sm:$0xff]
    %v5341 = vld [vmem:[#allocation9 + $0x9a0] sm:$0xff]
    %v5342 = vld [vmem:[#allocation9 + $0x9a8] sm:$0xff]
    %v5343 = vld [vmem:[#allocation9 + $0x9b0] sm:$0xff]
    %v5344 = vld [vmem:[#allocation9 + $0x9b8] sm:$0xff]
    %v5345 = vld [vmem:[#allocation9 + $0x9c0] sm:$0xff]
    %v5346 = vld [vmem:[#allocation9 + $0x9c8] sm:$0xff]
    %v5347 = vld [vmem:[#allocation9 + $0x9d0] sm:$0xff]
    %v5348 = vld [vmem:[#allocation9 + $0x9d8] sm:$0xff]
    %v5349 = vld [vmem:[#allocation9 + $0x9e0] sm:$0xff]
    %v5350 = vld [vmem:[#allocation9 + $0x9e8] sm:$0xff]
    %v5351 = vld [vmem:[#allocation9 + $0x9f0] sm:$0xff]
    %v5352 = vld [vmem:[#allocation9 + $0x9f8] sm:$0xff]
    %v5353 = vld [vmem:[#allocation9 + $0xa00] sm:$0xff]
    %v5354 = vld [vmem:[#allocation9 + $0xa08] sm:$0xff]
    %v5355 = vld [vmem:[#allocation9 + $0xa10] sm:$0xff]
    %v5356 = vld [vmem:[#allocation9 + $0xa18] sm:$0xff]
    %v5357 = vld [vmem:[#allocation9 + $0xa20] sm:$0xff]
    %v5358 = vld [vmem:[#allocation9 + $0xa28] sm:$0xff]
    %v5359 = vld [vmem:[#allocation9 + $0xa30] sm:$0xff]
    %v5360 = vld [vmem:[#allocation9 + $0xa38] sm:$0xff]
    %v5361 = vld [vmem:[#allocation9 + $0xa40] sm:$0xff]
    %v5362 = vld [vmem:[#allocation9 + $0xa48] sm:$0xff]
    %v5363 = vld [vmem:[#allocation9 + $0xa50] sm:$0xff]
    %v5364 = vld [vmem:[#allocation9 + $0xa58] sm:$0xff]
    %v5365 = vld [vmem:[#allocation9 + $0xa60] sm:$0xff]
    %v5366 = vld [vmem:[#allocation9 + $0xa68] sm:$0xff]
    %v5367 = vld [vmem:[#allocation9 + $0xa70] sm:$0xff]
    %v5368 = vld [vmem:[#allocation9 + $0xa78] sm:$0xff]
    %v5369 = vld [vmem:[#allocation9 + $0xa80] sm:$0xff]
    %v5370 = vld [vmem:[#allocation9 + $0xa88] sm:$0xff]
    %v5371 = vld [vmem:[#allocation9 + $0xa90] sm:$0xff]
    %v5372 = vld [vmem:[#allocation9 + $0xa98] sm:$0xff]
    %v5373 = vld [vmem:[#allocation9 + $0xaa0] sm:$0xff]
    %v5374 = vld [vmem:[#allocation9 + $0xaa8] sm:$0xff]
    %v5375 = vld [vmem:[#allocation9 + $0xab0] sm:$0xff]
    %v5376 = vld [vmem:[#allocation9 + $0xab8] sm:$0xff]
    %v5377 = vld [vmem:[#allocation9 + $0xac0] sm:$0xff]
    %v5378 = vld [vmem:[#allocation9 + $0xac8] sm:$0xff]
    %v5379 = vld [vmem:[#allocation9 + $0xad0] sm:$0xff]
    %v5380 = vld [vmem:[#allocation9 + $0xad8] sm:$0xff]
    %v5381 = vld [vmem:[#allocation9 + $0xae0] sm:$0xff]
    %v5382 = vld [vmem:[#allocation9 + $0xae8] sm:$0xff]
    %v5383 = vld [vmem:[#allocation9 + $0xaf0] sm:$0xff]
    %v5384 = vld [vmem:[#allocation9 + $0xaf8] sm:$0xff]
    %v5385 = vld [vmem:[#allocation9 + $0xb00] sm:$0xff]
    %v5386 = vld [vmem:[#allocation9 + $0xb08] sm:$0xff]
    %v5387 = vld [vmem:[#allocation9 + $0xb10] sm:$0xff]
    %v5388 = vld [vmem:[#allocation9 + $0xb18] sm:$0xff]
    %v5389 = vld [vmem:[#allocation9 + $0xb20] sm:$0xff]
    %v5390 = vld [vmem:[#allocation9 + $0xb28] sm:$0xff]
    %v5391 = vld [vmem:[#allocation9 + $0xb30] sm:$0xff]
    %v5392 = vld [vmem:[#allocation9 + $0xb38] sm:$0xff]
    %v5393 = vld [vmem:[#allocation9 + $0xb40] sm:$0xff]
    %v5394 = vld [vmem:[#allocation9 + $0xb48] sm:$0xff]
    %v5395 = vld [vmem:[#allocation9 + $0xb50] sm:$0xff]
    %v5396 = vld [vmem:[#allocation9 + $0xb58] sm:$0xff]
    %v5397 = vld [vmem:[#allocation9 + $0xb60] sm:$0xff]
    %v5398 = vld [vmem:[#allocation9 + $0xb68] sm:$0xff]
    %v5399 = vld [vmem:[#allocation9 + $0xb70] sm:$0xff]
    %v5400 = vld [vmem:[#allocation9 + $0xb78] sm:$0xff]
    %v5401 = vld [vmem:[#allocation9 + $0xb80] sm:$0xff]
    %v5402 = vld [vmem:[#allocation9 + $0xb88] sm:$0xff]
    %v5403 = vld [vmem:[#allocation9 + $0xb90] sm:$0xff]
    %v5404 = vld [vmem:[#allocation9 + $0xb98] sm:$0xff]
    %v5405 = vld [vmem:[#allocation9 + $0xba0] sm:$0xff]
    %v5406 = vld [vmem:[#allocation9 + $0xba8] sm:$0xff]
    %v5407 = vld [vmem:[#allocation9 + $0xbb0] sm:$0xff]
    %v5408 = vld [vmem:[#allocation9 + $0xbb8] sm:$0xff]
    %v5409 = vld [vmem:[#allocation9 + $0xbc0] sm:$0xff]
    %v5410 = vld [vmem:[#allocation9 + $0xbc8] sm:$0xff]
    %v5411 = vld [vmem:[#allocation9 + $0xbd0] sm:$0xff]
    %v5412 = vld [vmem:[#allocation9 + $0xbd8] sm:$0xff]
    %v5413 = vld [vmem:[#allocation9 + $0xbe0] sm:$0xff]
    %v5414 = vld [vmem:[#allocation9 + $0xbe8] sm:$0xff]
    %v5415 = vld [vmem:[#allocation9 + $0xbf0] sm:$0xff]
    %v5416 = vld [vmem:[#allocation9 + $0xbf8] sm:$0xff]
    %v5545 = vunpack.c.l.b16 %v5289
    %v5546 = vunpack.c.h.b16 %v5289
    %v5547 = vunpack.c.l.b16 %v5290
    %v5548 = vunpack.c.h.b16 %v5290
    %v5549 = vunpack.c.l.b16 %v5291
    %v5550 = vunpack.c.h.b16 %v5291
    %v5551 = vunpack.c.l.b16 %v5292
    %v5552 = vunpack.c.h.b16 %v5292
    %v5553 = vunpack.c.l.b16 %v5293
    %v5554 = vunpack.c.h.b16 %v5293
    %v5555 = vunpack.c.l.b16 %v5294
    %v5556 = vunpack.c.h.b16 %v5294
    %v5557 = vunpack.c.l.b16 %v5295
    %v5558 = vunpack.c.h.b16 %v5295
    %v5559 = vunpack.c.l.b16 %v5296
    %v5560 = vunpack.c.h.b16 %v5296
    %v5561 = vunpack.c.l.b16 %v5297
    %v5562 = vunpack.c.h.b16 %v5297
    %v5563 = vunpack.c.l.b16 %v5298
    %v5564 = vunpack.c.h.b16 %v5298
    %v5565 = vunpack.c.l.b16 %v5299
    %v5566 = vunpack.c.h.b16 %v5299
    %v5567 = vunpack.c.l.b16 %v5300
    %v5568 = vunpack.c.h.b16 %v5300
    %v5569 = vunpack.c.l.b16 %v5301
    %v5570 = vunpack.c.h.b16 %v5301
    %v5571 = vunpack.c.l.b16 %v5302
    %v5572 = vunpack.c.h.b16 %v5302
    %v5573 = vunpack.c.l.b16 %v5303
    %v5574 = vunpack.c.h.b16 %v5303
    %v5575 = vunpack.c.l.b16 %v5304
    %v5576 = vunpack.c.h.b16 %v5304
    %v5577 = vunpack.c.l.b16 %v5305
    %v5578 = vunpack.c.h.b16 %v5305
    %v5579 = vunpack.c.l.b16 %v5306
    %v5580 = vunpack.c.h.b16 %v5306
    %v5581 = vunpack.c.l.b16 %v5307
    %v5582 = vunpack.c.h.b16 %v5307
    %v5583 = vunpack.c.l.b16 %v5308
    %v5584 = vunpack.c.h.b16 %v5308
    %v5585 = vunpack.c.l.b16 %v5309
    %v5586 = vunpack.c.h.b16 %v5309
    %v5587 = vunpack.c.l.b16 %v5310
    %v5588 = vunpack.c.h.b16 %v5310
    %v5589 = vunpack.c.l.b16 %v5311
    %v5590 = vunpack.c.h.b16 %v5311
    %v5591 = vunpack.c.l.b16 %v5312
    %v5592 = vunpack.c.h.b16 %v5312
    %v5593 = vunpack.c.l.b16 %v5313
    %v5594 = vunpack.c.h.b16 %v5313
    %v5595 = vunpack.c.l.b16 %v5314
    %v5596 = vunpack.c.h.b16 %v5314
    %v5597 = vunpack.c.l.b16 %v5315
    %v5598 = vunpack.c.h.b16 %v5315
    %v5599 = vunpack.c.l.b16 %v5316
    %v5600 = vunpack.c.h.b16 %v5316
    %v5601 = vunpack.c.l.b16 %v5317
    %v5602 = vunpack.c.h.b16 %v5317
    %v5603 = vunpack.c.l.b16 %v5318
    %v5604 = vunpack.c.h.b16 %v5318
    %v5605 = vunpack.c.l.b16 %v5319
    %v5606 = vunpack.c.h.b16 %v5319
    %v5607 = vunpack.c.l.b16 %v5320
    %v5608 = vunpack.c.h.b16 %v5320
    %v5609 = vunpack.c.l.b16 %v5321
    %v5610 = vunpack.c.h.b16 %v5321
    %v5611 = vunpack.c.l.b16 %v5322
    %v5612 = vunpack.c.h.b16 %v5322
    %v5613 = vunpack.c.l.b16 %v5323
    %v5614 = vunpack.c.h.b16 %v5323
    %v5615 = vunpack.c.l.b16 %v5324
    %v5616 = vunpack.c.h.b16 %v5324
    %v5617 = vunpack.c.l.b16 %v5325
    %v5618 = vunpack.c.h.b16 %v5325
    %v5619 = vunpack.c.l.b16 %v5326
    %v5620 = vunpack.c.h.b16 %v5326
    %v5621 = vunpack.c.l.b16 %v5327
    %v5622 = vunpack.c.h.b16 %v5327
    %v5623 = vunpack.c.l.b16 %v5328
    %v5624 = vunpack.c.h.b16 %v5328
    %v5625 = vunpack.c.l.b16 %v5329
    %v5626 = vunpack.c.h.b16 %v5329
    %v5627 = vunpack.c.l.b16 %v5330
    %v5628 = vunpack.c.h.b16 %v5330
    %v5629 = vunpack.c.l.b16 %v5331
    %v5630 = vunpack.c.h.b16 %v5331
    %v5631 = vunpack.c.l.b16 %v5332
    %v5632 = vunpack.c.h.b16 %v5332
    %v5633 = vunpack.c.l.b16 %v5333
    %v5634 = vunpack.c.h.b16 %v5333
    %v5635 = vunpack.c.l.b16 %v5334
    %v5636 = vunpack.c.h.b16 %v5334
    %v5637 = vunpack.c.l.b16 %v5335
    %v5638 = vunpack.c.h.b16 %v5335
    %v5639 = vunpack.c.l.b16 %v5336
    %v5640 = vunpack.c.h.b16 %v5336
    %v5641 = vunpack.c.l.b16 %v5337
    %v5642 = vunpack.c.h.b16 %v5337
    %v5643 = vunpack.c.l.b16 %v5338
    %v5644 = vunpack.c.h.b16 %v5338
    %v5645 = vunpack.c.l.b16 %v5339
    %v5646 = vunpack.c.h.b16 %v5339
    %v5647 = vunpack.c.l.b16 %v5340
    %v5648 = vunpack.c.h.b16 %v5340
    %v5649 = vunpack.c.l.b16 %v5341
    %v5650 = vunpack.c.h.b16 %v5341
    %v5651 = vunpack.c.l.b16 %v5342
    %v5652 = vunpack.c.h.b16 %v5342
    %v5653 = vunpack.c.l.b16 %v5343
    %v5654 = vunpack.c.h.b16 %v5343
    %v5655 = vunpack.c.l.b16 %v5344
    %v5656 = vunpack.c.h.b16 %v5344
    %v5657 = vunpack.c.l.b16 %v5345
    %v5658 = vunpack.c.h.b16 %v5345
    %v5659 = vunpack.c.l.b16 %v5346
    %v5660 = vunpack.c.h.b16 %v5346
    %v5661 = vunpack.c.l.b16 %v5347
    %v5662 = vunpack.c.h.b16 %v5347
    %v5663 = vunpack.c.l.b16 %v5348
    %v5664 = vunpack.c.h.b16 %v5348
    %v5665 = vunpack.c.l.b16 %v5349
    %v5666 = vunpack.c.h.b16 %v5349
    %v5667 = vunpack.c.l.b16 %v5350
    %v5668 = vunpack.c.h.b16 %v5350
    %v5669 = vunpack.c.l.b16 %v5351
    %v5670 = vunpack.c.h.b16 %v5351
    %v5671 = vunpack.c.l.b16 %v5352
    %v5672 = vunpack.c.h.b16 %v5352
    %v5673 = vunpack.c.l.b16 %v5353
    %v5674 = vunpack.c.h.b16 %v5353
    %v5675 = vunpack.c.l.b16 %v5354
    %v5676 = vunpack.c.h.b16 %v5354
    %v5677 = vunpack.c.l.b16 %v5355
    %v5678 = vunpack.c.h.b16 %v5355
    %v5679 = vunpack.c.l.b16 %v5356
    %v5680 = vunpack.c.h.b16 %v5356
    %v5681 = vunpack.c.l.b16 %v5357
    %v5682 = vunpack.c.h.b16 %v5357
    %v5683 = vunpack.c.l.b16 %v5358
    %v5684 = vunpack.c.h.b16 %v5358
    %v5685 = vunpack.c.l.b16 %v5359
    %v5686 = vunpack.c.h.b16 %v5359
    %v5687 = vunpack.c.l.b16 %v5360
    %v5688 = vunpack.c.h.b16 %v5360
    %v5689 = vunpack.c.l.b16 %v5361
    %v5690 = vunpack.c.h.b16 %v5361
    %v5691 = vunpack.c.l.b16 %v5362
    %v5692 = vunpack.c.h.b16 %v5362
    %v5693 = vunpack.c.l.b16 %v5363
    %v5694 = vunpack.c.h.b16 %v5363
    %v5695 = vunpack.c.l.b16 %v5364
    %v5696 = vunpack.c.h.b16 %v5364
    %v5697 = vunpack.c.l.b16 %v5365
    %v5698 = vunpack.c.h.b16 %v5365
    %v5699 = vunpack.c.l.b16 %v5366
    %v5700 = vunpack.c.h.b16 %v5366
    %v5701 = vunpack.c.l.b16 %v5367
    %v5702 = vunpack.c.h.b16 %v5367
    %v5703 = vunpack.c.l.b16 %v5368
    %v5704 = vunpack.c.h.b16 %v5368
    %v5705 = vunpack.c.l.b16 %v5369
    %v5706 = vunpack.c.h.b16 %v5369
    %v5707 = vunpack.c.l.b16 %v5370
    %v5708 = vunpack.c.h.b16 %v5370
    %v5709 = vunpack.c.l.b16 %v5371
    %v5710 = vunpack.c.h.b16 %v5371
    %v5711 = vunpack.c.l.b16 %v5372
    %v5712 = vunpack.c.h.b16 %v5372
    %v5713 = vunpack.c.l.b16 %v5373
    %v5714 = vunpack.c.h.b16 %v5373
    %v5715 = vunpack.c.l.b16 %v5374
    %v5716 = vunpack.c.h.b16 %v5374
    %v5717 = vunpack.c.l.b16 %v5375
    %v5718 = vunpack.c.h.b16 %v5375
    %v5719 = vunpack.c.l.b16 %v5376
    %v5720 = vunpack.c.h.b16 %v5376
    %v5721 = vunpack.c.l.b16 %v5377
    %v5722 = vunpack.c.h.b16 %v5377
    %v5723 = vunpack.c.l.b16 %v5378
    %v5724 = vunpack.c.h.b16 %v5378
    %v5725 = vunpack.c.l.b16 %v5379
    %v5726 = vunpack.c.h.b16 %v5379
    %v5727 = vunpack.c.l.b16 %v5380
    %v5728 = vunpack.c.h.b16 %v5380
    %v5729 = vunpack.c.l.b16 %v5381
    %v5730 = vunpack.c.h.b16 %v5381
    %v5731 = vunpack.c.l.b16 %v5382
    %v5732 = vunpack.c.h.b16 %v5382
    %v5733 = vunpack.c.l.b16 %v5383
    %v5734 = vunpack.c.h.b16 %v5383
    %v5735 = vunpack.c.l.b16 %v5384
    %v5736 = vunpack.c.h.b16 %v5384
    %v5737 = vunpack.c.l.b16 %v5385
    %v5738 = vunpack.c.h.b16 %v5385
    %v5739 = vunpack.c.l.b16 %v5386
    %v5740 = vunpack.c.h.b16 %v5386
    %v5741 = vunpack.c.l.b16 %v5387
    %v5742 = vunpack.c.h.b16 %v5387
    %v5743 = vunpack.c.l.b16 %v5388
    %v5744 = vunpack.c.h.b16 %v5388
    %v5745 = vunpack.c.l.b16 %v5389
    %v5746 = vunpack.c.h.b16 %v5389
    %v5747 = vunpack.c.l.b16 %v5390
    %v5748 = vunpack.c.h.b16 %v5390
    %v5749 = vunpack.c.l.b16 %v5391
    %v5750 = vunpack.c.h.b16 %v5391
    %v5751 = vunpack.c.l.b16 %v5392
    %v5752 = vunpack.c.h.b16 %v5392
    %v5753 = vunpack.c.l.b16 %v5393
    %v5754 = vunpack.c.h.b16 %v5393
    %v5755 = vunpack.c.l.b16 %v5394
    %v5756 = vunpack.c.h.b16 %v5394
    %v5757 = vunpack.c.l.b16 %v5395
    %v5758 = vunpack.c.h.b16 %v5395
    %v5759 = vunpack.c.l.b16 %v5396
    %v5760 = vunpack.c.h.b16 %v5396
    %v5761 = vunpack.c.l.b16 %v5397
    %v5762 = vunpack.c.h.b16 %v5397
    %v5763 = vunpack.c.l.b16 %v5398
    %v5764 = vunpack.c.h.b16 %v5398
    %v5765 = vunpack.c.l.b16 %v5399
    %v5766 = vunpack.c.h.b16 %v5399
    %v5767 = vunpack.c.l.b16 %v5400
    %v5768 = vunpack.c.h.b16 %v5400
    %v5769 = vunpack.c.l.b16 %v5401
    %v5770 = vunpack.c.h.b16 %v5401
    %v5771 = vunpack.c.l.b16 %v5402
    %v5772 = vunpack.c.h.b16 %v5402
    %v5773 = vunpack.c.l.b16 %v5403
    %v5774 = vunpack.c.h.b16 %v5403
    %v5775 = vunpack.c.l.b16 %v5404
    %v5776 = vunpack.c.h.b16 %v5404
    %v5777 = vunpack.c.l.b16 %v5405
    %v5778 = vunpack.c.h.b16 %v5405
    %v5779 = vunpack.c.l.b16 %v5406
    %v5780 = vunpack.c.h.b16 %v5406
    %v5781 = vunpack.c.l.b16 %v5407
    %v5782 = vunpack.c.h.b16 %v5407
    %v5783 = vunpack.c.l.b16 %v5408
    %v5784 = vunpack.c.h.b16 %v5408
    %v5785 = vunpack.c.l.b16 %v5409
    %v5786 = vunpack.c.h.b16 %v5409
    %v5787 = vunpack.c.l.b16 %v5410
    %v5788 = vunpack.c.h.b16 %v5410
    %v5789 = vunpack.c.l.b16 %v5411
    %v5790 = vunpack.c.h.b16 %v5411
    %v5791 = vunpack.c.l.b16 %v5412
    %v5792 = vunpack.c.h.b16 %v5412
    %v5793 = vunpack.c.l.b16 %v5413
    %v5794 = vunpack.c.h.b16 %v5413
    %v5795 = vunpack.c.l.b16 %v5414
    %v5796 = vunpack.c.h.b16 %v5414
    %v5797 = vunpack.c.l.b16 %v5415
    %v5798 = vunpack.c.h.b16 %v5415
    %v5799 = vunpack.c.l.b16 %v5416
    %v5800 = vunpack.c.h.b16 %v5416
    %v5801 = vpack.c.b16 %v5547, %v5545
    %v5802 = vpack.c.b16 %v5548, %v5546
    %v5803 = vpack.c.b16 %v5551, %v5549
    %v5804 = vpack.c.b16 %v5552, %v5550
    %v5805 = vpack.c.b16 %v5555, %v5553
    %v5806 = vpack.c.b16 %v5556, %v5554
    %v5807 = vpack.c.b16 %v5559, %v5557
    %v5808 = vpack.c.b16 %v5560, %v5558
    %v5809 = vpack.c.b16 %v5563, %v5561
    %v5810 = vpack.c.b16 %v5564, %v5562
    %v5811 = vpack.c.b16 %v5567, %v5565
    %v5812 = vpack.c.b16 %v5568, %v5566
    %v5813 = vpack.c.b16 %v5571, %v5569
    %v5814 = vpack.c.b16 %v5572, %v5570
    %v5815 = vpack.c.b16 %v5575, %v5573
    %v5816 = vpack.c.b16 %v5576, %v5574
    %v5817 = vpack.c.b16 %v5579, %v5577
    %v5818 = vpack.c.b16 %v5580, %v5578
    %v5819 = vpack.c.b16 %v5583, %v5581
    %v5820 = vpack.c.b16 %v5584, %v5582
    %v5821 = vpack.c.b16 %v5587, %v5585
    %v5822 = vpack.c.b16 %v5588, %v5586
    %v5823 = vpack.c.b16 %v5591, %v5589
    %v5824 = vpack.c.b16 %v5592, %v5590
    %v5825 = vpack.c.b16 %v5595, %v5593
    %v5826 = vpack.c.b16 %v5596, %v5594
    %v5827 = vpack.c.b16 %v5599, %v5597
    %v5828 = vpack.c.b16 %v5600, %v5598
    %v5829 = vpack.c.b16 %v5603, %v5601
    %v5830 = vpack.c.b16 %v5604, %v5602
    %v5831 = vpack.c.b16 %v5607, %v5605
    %v5832 = vpack.c.b16 %v5608, %v5606
    %v5833 = vpack.c.b16 %v5611, %v5609
    %v5834 = vpack.c.b16 %v5612, %v5610
    %v5835 = vpack.c.b16 %v5615, %v5613
    %v5836 = vpack.c.b16 %v5616, %v5614
    %v5837 = vpack.c.b16 %v5619, %v5617
    %v5838 = vpack.c.b16 %v5620, %v5618
    %v5839 = vpack.c.b16 %v5623, %v5621
    %v5840 = vpack.c.b16 %v5624, %v5622
    %v5841 = vpack.c.b16 %v5627, %v5625
    %v5842 = vpack.c.b16 %v5628, %v5626
    %v5843 = vpack.c.b16 %v5631, %v5629
    %v5844 = vpack.c.b16 %v5632, %v5630
    %v5845 = vpack.c.b16 %v5635, %v5633
    %v5846 = vpack.c.b16 %v5636, %v5634
    %v5847 = vpack.c.b16 %v5639, %v5637
    %v5848 = vpack.c.b16 %v5640, %v5638
    %v5849 = vpack.c.b16 %v5643, %v5641
    %v5850 = vpack.c.b16 %v5644, %v5642
    %v5851 = vpack.c.b16 %v5647, %v5645
    %v5852 = vpack.c.b16 %v5648, %v5646
    %v5853 = vpack.c.b16 %v5651, %v5649
    %v5854 = vpack.c.b16 %v5652, %v5650
    %v5855 = vpack.c.b16 %v5655, %v5653
    %v5856 = vpack.c.b16 %v5656, %v5654
    %v5857 = vpack.c.b16 %v5659, %v5657
    %v5858 = vpack.c.b16 %v5660, %v5658
    %v5859 = vpack.c.b16 %v5663, %v5661
    %v5860 = vpack.c.b16 %v5664, %v5662
    %v5861 = vpack.c.b16 %v5667, %v5665
    %v5862 = vpack.c.b16 %v5668, %v5666
    %v5863 = vpack.c.b16 %v5671, %v5669
    %v5864 = vpack.c.b16 %v5672, %v5670
    %v5865 = vpack.c.b16 %v5675, %v5673
    %v5866 = vpack.c.b16 %v5676, %v5674
    %v5867 = vpack.c.b16 %v5679, %v5677
    %v5868 = vpack.c.b16 %v5680, %v5678
    %v5869 = vpack.c.b16 %v5683, %v5681
    %v5870 = vpack.c.b16 %v5684, %v5682
    %v5871 = vpack.c.b16 %v5687, %v5685
    %v5872 = vpack.c.b16 %v5688, %v5686
    %v5873 = vpack.c.b16 %v5691, %v5689
    %v5874 = vpack.c.b16 %v5692, %v5690
    %v5875 = vpack.c.b16 %v5695, %v5693
    %v5876 = vpack.c.b16 %v5696, %v5694
    %v5877 = vpack.c.b16 %v5699, %v5697
    %v5878 = vpack.c.b16 %v5700, %v5698
    %v5879 = vpack.c.b16 %v5703, %v5701
    %v5880 = vpack.c.b16 %v5704, %v5702
    %v5881 = vpack.c.b16 %v5707, %v5705
    %v5882 = vpack.c.b16 %v5708, %v5706
    %v5883 = vpack.c.b16 %v5711, %v5709
    %v5884 = vpack.c.b16 %v5712, %v5710
    %v5885 = vpack.c.b16 %v5715, %v5713
    %v5886 = vpack.c.b16 %v5716, %v5714
    %v5887 = vpack.c.b16 %v5719, %v5717
    %v5888 = vpack.c.b16 %v5720, %v5718
    %v5889 = vpack.c.b16 %v5723, %v5721
    %v5890 = vpack.c.b16 %v5724, %v5722
    %v5891 = vpack.c.b16 %v5727, %v5725
    %v5892 = vpack.c.b16 %v5728, %v5726
    %v5893 = vpack.c.b16 %v5731, %v5729
    %v5894 = vpack.c.b16 %v5732, %v5730
    %v5895 = vpack.c.b16 %v5735, %v5733
    %v5896 = vpack.c.b16 %v5736, %v5734
    %v5897 = vpack.c.b16 %v5739, %v5737
    %v5898 = vpack.c.b16 %v5740, %v5738
    %v5899 = vpack.c.b16 %v5743, %v5741
    %v5900 = vpack.c.b16 %v5744, %v5742
    %v5901 = vpack.c.b16 %v5747, %v5745
    %v5902 = vpack.c.b16 %v5748, %v5746
    %v5903 = vpack.c.b16 %v5751, %v5749
    %v5904 = vpack.c.b16 %v5752, %v5750
    %v5905 = vpack.c.b16 %v5755, %v5753
    %v5906 = vpack.c.b16 %v5756, %v5754
    %v5907 = vpack.c.b16 %v5759, %v5757
    %v5908 = vpack.c.b16 %v5760, %v5758
    %v5909 = vpack.c.b16 %v5763, %v5761
    %v5910 = vpack.c.b16 %v5764, %v5762
    %v5911 = vpack.c.b16 %v5767, %v5765
    %v5912 = vpack.c.b16 %v5768, %v5766
    %v5913 = vpack.c.b16 %v5771, %v5769
    %v5914 = vpack.c.b16 %v5772, %v5770
    %v5915 = vpack.c.b16 %v5775, %v5773
    %v5916 = vpack.c.b16 %v5776, %v5774
    %v5917 = vpack.c.b16 %v5779, %v5777
    %v5918 = vpack.c.b16 %v5780, %v5778
    %v5919 = vpack.c.b16 %v5783, %v5781
    %v5920 = vpack.c.b16 %v5784, %v5782
    %v5921 = vpack.c.b16 %v5787, %v5785
    %v5922 = vpack.c.b16 %v5788, %v5786
    %v5923 = vpack.c.b16 %v5791, %v5789
    %v5924 = vpack.c.b16 %v5792, %v5790
    %v5925 = vpack.c.b16 %v5795, %v5793
    %v5926 = vpack.c.b16 %v5796, %v5794
    %v5927 = vpack.c.b16 %v5799, %v5797
    %v5928 = vpack.c.b16 %v5800, %v5798
    %6057 = vmatprep.subr.bf16.mxu0 %v5802
    %6058 = vmatpush1.bf16.msra.mxu0 %v5801
    %6059 = vmatprep.subr.bf16.mxu0 %v5804
    %6060 = vmatpush1.bf16.msra.mxu0 %v5803
    %6061 = vmatprep.subr.bf16.mxu0 %v5806
    %6062 = vmatpush1.bf16.msra.mxu0 %v5805
    %6063 = vmatprep.subr.bf16.mxu0 %v5808
    %6064 = vmatpush1.bf16.msra.mxu0 %v5807
    %6065 = vmatprep.subr.bf16.mxu0 %v5810
    %6066 = vmatpush1.bf16.msra.mxu0 %v5809
    %6067 = vmatprep.subr.bf16.mxu0 %v5812
    %6068 = vmatpush1.bf16.msra.mxu0 %v5811
    %6069 = vmatprep.subr.bf16.mxu0 %v5814
    %6070 = vmatpush1.bf16.msra.mxu0 %v5813
    %6071 = vmatprep.subr.bf16.mxu0 %v5816
    %6072 = vmatpush1.bf16.msra.mxu0 %v5815
    %6073 = vmatprep.subr.bf16.mxu0 %v5818
    %6074 = vmatpush1.bf16.msra.mxu0 %v5817
    %6075 = vmatprep.subr.bf16.mxu0 %v5820
    %6076 = vmatpush1.bf16.msra.mxu0 %v5819
    %6077 = vmatprep.subr.bf16.mxu0 %v5822
    %6078 = vmatpush1.bf16.msra.mxu0 %v5821
    %6079 = vmatprep.subr.bf16.mxu0 %v5824
    %6080 = vmatpush1.bf16.msra.mxu0 %v5823
    %6081 = vmatprep.subr.bf16.mxu0 %v5826
    %6082 = vmatpush1.bf16.msra.mxu0 %v5825
    %6083 = vmatprep.subr.bf16.mxu0 %v5828
    %6084 = vmatpush1.bf16.msra.mxu0 %v5827
    %6085 = vmatprep.subr.bf16.mxu0 %v5830
    %6086 = vmatpush1.bf16.msra.mxu0 %v5829
    %6087 = vmatprep.subr.bf16.mxu0 %v5832
    %6088 = vmatpush1.bf16.msra.mxu0 %v5831
    %6089 = vmatprep.mubr.bf16.mxu0 %v5282
    %6090 = vmatmul.mubr.bf16.gmra.mrb[0].mxu0 %v5281
    %v6091 = vpop.f32.mrb[0].mxu0
    %v6092 = vadd.f32 0.0, %v6091
    %v6093 = vpop.f32.mrb[0].mxu0
    %v6094 = vadd.f32 0.0, %v6093
    %v6095 = vpop.f32.mrb[0].mxu0
    %v6096 = vadd.f32 0.0, %v6095
    %v6097 = vpop.f32.mrb[0].mxu0
    %v6098 = vadd.f32 0.0, %v6097
    %6099 = vdwg.mxu0
    %6100 = vmatprep.subr.bf16.mxu0 %v5834
    %6101 = vmatpush1.bf16.msra.mxu0 %v5833
    %6102 = vmatprep.subr.bf16.mxu0 %v5836
    %6103 = vmatpush1.bf16.msra.mxu0 %v5835
    %6104 = vmatprep.subr.bf16.mxu0 %v5838
    %6105 = vmatpush1.bf16.msra.mxu0 %v5837
    %6106 = vmatprep.subr.bf16.mxu0 %v5840
    %6107 = vmatpush1.bf16.msra.mxu0 %v5839
    %6108 = vmatprep.subr.bf16.mxu0 %v5842
    %6109 = vmatpush1.bf16.msra.mxu0 %v5841
    %6110 = vmatprep.subr.bf16.mxu0 %v5844
    %6111 = vmatpush1.bf16.msra.mxu0 %v5843
    %6112 = vmatprep.subr.bf16.mxu0 %v5846
    %6113 = vmatpush1.bf16.msra.mxu0 %v5845
    %6114 = vmatprep.subr.bf16.mxu0 %v5848
    %6115 = vmatpush1.bf16.msra.mxu0 %v5847
    %6116 = vmatprep.subr.bf16.mxu0 %v5850
    %6117 = vmatpush1.bf16.msra.mxu0 %v5849
    %6118 = vmatprep.subr.bf16.mxu0 %v5852
    %6119 = vmatpush1.bf16.msra.mxu0 %v5851
    %6120 = vmatprep.subr.bf16.mxu0 %v5854
    %6121 = vmatpush1.bf16.msra.mxu0 %v5853
    %6122 = vmatprep.subr.bf16.mxu0 %v5856
    %6123 = vmatpush1.bf16.msra.mxu0 %v5855
    %6124 = vmatprep.subr.bf16.mxu0 %v5858
    %6125 = vmatpush1.bf16.msra.mxu0 %v5857
    %6126 = vmatprep.subr.bf16.mxu0 %v5860
    %6127 = vmatpush1.bf16.msra.mxu0 %v5859
    %6128 = vmatprep.subr.bf16.mxu0 %v5862
    %6129 = vmatpush1.bf16.msra.mxu0 %v5861
    %6130 = vmatprep.subr.bf16.mxu0 %v5864
    %6131 = vmatpush1.bf16.msra.mxu0 %v5863
    %6132 = vmatprep.mubr.bf16.mxu0 %v5284
    %6133 = vmatmul.mubr.bf16.gmra.mrb[0].mxu0 %v5283
    %v6134 = vpop.f32.mrb[0].mxu0
    %v6135 = vadd.f32 %v6092, %v6134
    %v6136 = vpop.f32.mrb[0].mxu0
    %v6137 = vadd.f32 %v6094, %v6136
    %v6138 = vpop.f32.mrb[0].mxu0
    %v6139 = vadd.f32 %v6096, %v6138
    %v6140 = vpop.f32.mrb[0].mxu0
    %v6141 = vadd.f32 %v6098, %v6140
    %6142 = vdwg.mxu0
    %6143 = vmatprep.subr.bf16.mxu0 %v5866
    %6144 = vmatpush1.bf16.msra.mxu0 %v5865
    %6145 = vmatprep.subr.bf16.mxu0 %v5868
    %6146 = vmatpush1.bf16.msra.mxu0 %v5867
    %6147 = vmatprep.subr.bf16.mxu0 %v5870
    %6148 = vmatpush1.bf16.msra.mxu0 %v5869
    %6149 = vmatprep.subr.bf16.mxu0 %v5872
    %6150 = vmatpush1.bf16.msra.mxu0 %v5871
    %6151 = vmatprep.subr.bf16.mxu0 %v5874
    %6152 = vmatpush1.bf16.msra.mxu0 %v5873
    %6153 = vmatprep.subr.bf16.mxu0 %v5876
    %6154 = vmatpush1.bf16.msra.mxu0 %v5875
    %6155 = vmatprep.subr.bf16.mxu0 %v5878
    %6156 = vmatpush1.bf16.msra.mxu0 %v5877
    %6157 = vmatprep.subr.bf16.mxu0 %v5880
    %6158 = vmatpush1.bf16.msra.mxu0 %v5879
    %6159 = vmatprep.subr.bf16.mxu0 %v5882
    %6160 = vmatpush1.bf16.msra.mxu0 %v5881
    %6161 = vmatprep.subr.bf16.mxu0 %v5884
    %6162 = vmatpush1.bf16.msra.mxu0 %v5883
    %6163 = vmatprep.subr.bf16.mxu0 %v5886
    %6164 = vmatpush1.bf16.msra.mxu0 %v5885
    %6165 = vmatprep.subr.bf16.mxu0 %v5888
    %6166 = vmatpush1.bf16.msra.mxu0 %v5887
    %6167 = vmatprep.subr.bf16.mxu0 %v5890
    %6168 = vmatpush1.bf16.msra.mxu0 %v5889
    %6169 = vmatprep.subr.bf16.mxu0 %v5892
    %6170 = vmatpush1.bf16.msra.mxu0 %v5891
    %6171 = vmatprep.subr.bf16.mxu0 %v5894
    %6172 = vmatpush1.bf16.msra.mxu0 %v5893
    %6173 = vmatprep.subr.bf16.mxu0 %v5896
    %6174 = vmatpush1.bf16.msra.mxu0 %v5895
    %6175 = vmatprep.mubr.bf16.mxu0 %v5286
    %6176 = vmatmul.mubr.bf16.gmra.mrb[0].mxu0 %v5285
    %v6177 = vpop.f32.mrb[0].mxu0
    %v6178 = vadd.f32 %v6135, %v6177
    %v6179 = vpop.f32.mrb[0].mxu0
    %v6180 = vadd.f32 %v6137, %v6179
    %v6181 = vpop.f32.mrb[0].mxu0
    %v6182 = vadd.f32 %v6139, %v6181
    %v6183 = vpop.f32.mrb[0].mxu0
    %v6184 = vadd.f32 %v6141, %v6183
    %6185 = vdwg.mxu0
    %6186 = vmatprep.subr.bf16.mxu0 %v5898
    %6187 = vmatpush1.bf16.msra.mxu0 %v5897
    %6188 = vmatprep.subr.bf16.mxu0 %v5900
    %6189 = vmatpush1.bf16.msra.mxu0 %v5899
    %6190 = vmatprep.subr.bf16.mxu0 %v5902
    %6191 = vmatpush1.bf16.msra.mxu0 %v5901
    %6192 = vmatprep.subr.bf16.mxu0 %v5904
    %6193 = vmatpush1.bf16.msra.mxu0 %v5903
    %6194 = vmatprep.subr.bf16.mxu0 %v5906
    %6195 = vmatpush1.bf16.msra.mxu0 %v5905
    %6196 = vmatprep.subr.bf16.mxu0 %v5908
    %6197 = vmatpush1.bf16.msra.mxu0 %v5907
    %6198 = vmatprep.subr.bf16.mxu0 %v5910
    %6199 = vmatpush1.bf16.msra.mxu0 %v5909
    %6200 = vmatprep.subr.bf16.mxu0 %v5912
    %6201 = vmatpush1.bf16.msra.mxu0 %v5911
    %6202 = vmatprep.subr.bf16.mxu0 %v5914
    %6203 = vmatpush1.bf16.msra.mxu0 %v5913
    %6204 = vmatprep.subr.bf16.mxu0 %v5916
    %6205 = vmatpush1.bf16.msra.mxu0 %v5915
    %6206 = vmatprep.subr.bf16.mxu0 %v5918
    %6207 = vmatpush1.bf16.msra.mxu0 %v5917
    %6208 = vmatprep.subr.bf16.mxu0 %v5920
    %6209 = vmatpush1.bf16.msra.mxu0 %v5919
    %6210 = vmatprep.subr.bf16.mxu0 %v5922
    %6211 = vmatpush1.bf16.msra.mxu0 %v5921
    %6212 = vmatprep.subr.bf16.mxu0 %v5924
    %6213 = vmatpush1.bf16.msra.mxu0 %v5923
    %6214 = vmatprep.subr.bf16.mxu0 %v5926
    %6215 = vmatpush1.bf16.msra.mxu0 %v5925
    %6216 = vmatprep.subr.bf16.mxu0 %v5928
    %6217 = vmatpush1.bf16.msra.mxu0 %v5927
    %6218 = vmatprep.mubr.bf16.mxu0 %v5288
    %6219 = vmatmul.mubr.bf16.gmra.mrb[0].mxu0 %v5287
    %v6220 = vpop.f32.mrb[0].mxu0
    %v6221 = vadd.f32 %v6178, %v6220
    %v6222 = vpop.f32.mrb[0].mxu0
    %v6223 = vadd.f32 %v6180, %v6222
    %v6224 = vpop.f32.mrb[0].mxu0
    %v6225 = vadd.f32 %v6182, %v6224
    %v6226 = vpop.f32.mrb[0].mxu0
    %v6227 = vadd.f32 %v6184, %v6226
    %6228 = vdwg.mxu0
    %v6229 = vadd.f32 %v5273, %v6221
    %v6230 = vadd.f32 %v5275, %v6223
    %v6231 = vadd.f32 %v5277, %v6225
    %v6232 = vadd.f32 %v5279, %v6227
    %v6233 = vld [vmem:[#allocation11] sm:$0x3]
    %v6235 = vlaneseq
    %v6236 = vshrl.u32 %v6235, 7
    %v6237 = vsub.s32 0, %v6236
    %v6238 = vrot.slane %v6233, %v6237
    %v6239 = vlaneseq
    %v6240 = vshrl.u32 %v6239, 7
    %v6241 = vsub.s32 1, %v6240
    %v6242 = vrot.slane %v6233, %v6241
    %v6245 = vadd.f32 %v6229, %v6238
    %v6246 = vadd.f32 %v6230, %v6242
    %v6247 = vadd.f32 %v6231, %v6238
    %v6248 = vadd.f32 %v6232, %v6242
    %v6249 = vmax.f32 %v6245, 0.0
    %v6250 = vmax.f32 %v6246, 0.0
    %v6251 = vmax.f32 %v6247, 0.0
    %v6252 = vmax.f32 %v6248, 0.0
    %v6253 = vpack.c.bf16 %v6251, %v6249
    %v6254 = vpack.c.bf16 %v6252, %v6250
    %v6255 = vld [vmem:[#allocation12] sm:$0xf]
    %v6256 = vld [vmem:[#allocation12 + $0x4] sm:$0xf]
    %v6257 = vld [vmem:[#allocation12 + $0x8] sm:$0xf]
    %v6258 = vld [vmem:[#allocation12 + $0xc] sm:$0xf]
    %v6259 = vld [vmem:[#allocation12 + $0x10] sm:$0xf]
    %v6260 = vld [vmem:[#allocation12 + $0x14] sm:$0xf]
    %v6261 = vld [vmem:[#allocation12 + $0x18] sm:$0xf]
    %v6262 = vld [vmem:[#allocation12 + $0x1c] sm:$0xf]
    %v6263 = vld [vmem:[#allocation12 + $0x20] sm:$0xf]
    %v6264 = vld [vmem:[#allocation12 + $0x24] sm:$0xf]
    %v6265 = vld [vmem:[#allocation12 + $0x28] sm:$0xf]
    %v6266 = vld [vmem:[#allocation12 + $0x2c] sm:$0xf]
    %v6267 = vld [vmem:[#allocation12 + $0x30] sm:$0xf]
    %v6268 = vld [vmem:[#allocation12 + $0x34] sm:$0xf]
    %v6269 = vld [vmem:[#allocation12 + $0x38] sm:$0xf]
    %v6270 = vld [vmem:[#allocation12 + $0x3c] sm:$0xf]
    %v6271 = vld [vmem:[#allocation12 + $0x40] sm:$0xf]
    %v6272 = vld [vmem:[#allocation12 + $0x44] sm:$0xf]
    %v6273 = vld [vmem:[#allocation12 + $0x48] sm:$0xf]
    %v6274 = vld [vmem:[#allocation12 + $0x4c] sm:$0xf]
    %v6275 = vld [vmem:[#allocation12 + $0x50] sm:$0xf]
    %v6276 = vld [vmem:[#allocation12 + $0x54] sm:$0xf]
    %v6277 = vld [vmem:[#allocation12 + $0x58] sm:$0xf]
    %v6278 = vld [vmem:[#allocation12 + $0x5c] sm:$0xf]
    %v6279 = vld [vmem:[#allocation12 + $0x60] sm:$0xf]
    %v6280 = vld [vmem:[#allocation12 + $0x64] sm:$0xf]
    %v6281 = vld [vmem:[#allocation12 + $0x68] sm:$0xf]
    %v6282 = vld [vmem:[#allocation12 + $0x6c] sm:$0xf]
    %v6283 = vld [vmem:[#allocation12 + $0x70] sm:$0xf]
    %v6284 = vld [vmem:[#allocation12 + $0x74] sm:$0xf]
    %v6285 = vld [vmem:[#allocation12 + $0x78] sm:$0xf]
    %v6286 = vld [vmem:[#allocation12 + $0x7c] sm:$0xf]
    %v6287 = vld [vmem:[#allocation14] sm:$0x1]
    %v6289 = vlaneseq
    %v6290 = vshrl.u32 %v6289, 7
    %v6291 = vsub.s32 0, %v6290
    %v6292 = vrot.slane %v6287, %v6291
    %v6326 = vunpack.c.l.b16 %v6255
    %v6327 = vunpack.c.l.b16 %v6256
    %v6328 = vunpack.c.l.b16 %v6257
    %v6329 = vunpack.c.l.b16 %v6258
    %v6330 = vunpack.c.l.b16 %v6259
    %v6331 = vunpack.c.l.b16 %v6260
    %v6332 = vunpack.c.l.b16 %v6261
    %v6333 = vunpack.c.l.b16 %v6262
    %v6334 = vunpack.c.l.b16 %v6263
    %v6335 = vunpack.c.l.b16 %v6264
    %v6336 = vunpack.c.l.b16 %v6265
    %v6337 = vunpack.c.l.b16 %v6266
    %v6338 = vunpack.c.l.b16 %v6267
    %v6339 = vunpack.c.l.b16 %v6268
    %v6340 = vunpack.c.l.b16 %v6269
    %v6341 = vunpack.c.l.b16 %v6270
    %v6342 = vunpack.c.l.b16 %v6271
    %v6343 = vunpack.c.l.b16 %v6272
    %v6344 = vunpack.c.l.b16 %v6273
    %v6345 = vunpack.c.l.b16 %v6274
    %v6346 = vunpack.c.l.b16 %v6275
    %v6347 = vunpack.c.l.b16 %v6276
    %v6348 = vunpack.c.l.b16 %v6277
    %v6349 = vunpack.c.l.b16 %v6278
    %v6350 = vunpack.c.l.b16 %v6279
    %v6351 = vunpack.c.l.b16 %v6280
    %v6352 = vunpack.c.l.b16 %v6281
    %v6353 = vunpack.c.l.b16 %v6282
    %v6354 = vunpack.c.l.b16 %v6283
    %v6355 = vunpack.c.l.b16 %v6284
    %v6356 = vunpack.c.l.b16 %v6285
    %v6357 = vunpack.c.l.b16 %v6286
    %v6358 = vpack.c.b16 %v6327, %v6326
    %v6359 = vpack.c.b16 %v6329, %v6328
    %v6360 = vpack.c.b16 %v6331, %v6330
    %v6361 = vpack.c.b16 %v6333, %v6332
    %v6362 = vpack.c.b16 %v6335, %v6334
    %v6363 = vpack.c.b16 %v6337, %v6336
    %v6364 = vpack.c.b16 %v6339, %v6338
    %v6365 = vpack.c.b16 %v6341, %v6340
    %v6366 = vpack.c.b16 %v6343, %v6342
    %v6367 = vpack.c.b16 %v6345, %v6344
    %v6368 = vpack.c.b16 %v6347, %v6346
    %v6369 = vpack.c.b16 %v6349, %v6348
    %v6370 = vpack.c.b16 %v6351, %v6350
    %v6371 = vpack.c.b16 %v6353, %v6352
    %v6372 = vpack.c.b16 %v6355, %v6354
    %v6373 = vpack.c.b16 %v6357, %v6356
    %6390 = vmatprep.subr.bf16.mxu0 0
    %6391 = vmatpush1.bf16.msra.mxu0 %v6358
    %6392 = vmatprep.subr.bf16.mxu0 0
    %6393 = vmatpush1.bf16.msra.mxu0 %v6359
    %6394 = vmatprep.subr.bf16.mxu0 0
    %6395 = vmatpush1.bf16.msra.mxu0 %v6360
    %6396 = vmatprep.subr.bf16.mxu0 0
    %6397 = vmatpush1.bf16.msra.mxu0 %v6361
    %6398 = vmatprep.subr.bf16.mxu0 0
    %6399 = vmatpush1.bf16.msra.mxu0 %v6362
    %6400 = vmatprep.subr.bf16.mxu0 0
    %6401 = vmatpush1.bf16.msra.mxu0 %v6363
    %6402 = vmatprep.subr.bf16.mxu0 0
    %6403 = vmatpush1.bf16.msra.mxu0 %v6364
    %6404 = vmatprep.subr.bf16.mxu0 0
    %6405 = vmatpush1.bf16.msra.mxu0 %v6365
    %6406 = vmatprep.subr.bf16.mxu0 0
    %6407 = vmatpush1.bf16.msra.mxu0 %v6366
    %6408 = vmatprep.subr.bf16.mxu0 0
    %6409 = vmatpush1.bf16.msra.mxu0 %v6367
    %6410 = vmatprep.subr.bf16.mxu0 0
    %6411 = vmatpush1.bf16.msra.mxu0 %v6368
    %6412 = vmatprep.subr.bf16.mxu0 0
    %6413 = vmatpush1.bf16.msra.mxu0 %v6369
    %6414 = vmatprep.subr.bf16.mxu0 0
    %6415 = vmatpush1.bf16.msra.mxu0 %v6370
    %6416 = vmatprep.subr.bf16.mxu0 0
    %6417 = vmatpush1.bf16.msra.mxu0 %v6371
    %6418 = vmatprep.subr.bf16.mxu0 0
    %6419 = vmatpush1.bf16.msra.mxu0 %v6372
    %6420 = vmatprep.subr.bf16.mxu0 0
    %6421 = vmatpush1.bf16.msra.mxu0 %v6373
    %6422 = vmatprep.mubr.bf16.mxu0 %v6254
    %6423 = vmatmul.mubr.bf16.gmra.mrb[0].mxu0 %v6253
    %v6424 = vpop.f32.mrb[0].mxu0
    %v6425 = vadd.f32 %v6292, %v6424
    %v6426 = vpop.f32.mrb[0].mxu0
    %v6427 = vpop.f32.mrb[0].mxu0
    %v6428 = vadd.f32 %v6292, %v6427
    %v6429 = vpop.f32.mrb[0].mxu0
    %6430 = vdwg.mxu0
    %6431 = vst [vmem:[%s9] sm:$0xff] %v6425
    %6432 = vst [vmem:[%s9 + $0x8] sm:$0xff] %v6428
    // Predicated region
    $region66: #{_lambda_.1} parent=1 // pred_check
      _
    $region67: #{_lambda_.1} parent=1 // pred_check_branch
      %6434 = sbr.rel (0) target = $region69
    $region68: #{_lambda_.1} parent=1 // pred_region
      _
    $region69: #{_lambda_.1} parent=1 // pred_fallthru
      _
    // Predicated region
    $region70: #{_lambda_.1} parent=1 // pred_check
      _
    $region71: #{_lambda_.1} parent=1 // pred_check_branch
      %6436 = sbr.rel (0) target = $region73
    $region72: #{_lambda_.1} parent=1 // pred_region
      _
    $region73: #{_lambda_.1} parent=1 // pred_fallthru
      _
    %6437 = vsyncpa [#allocation5], 1
    %6438 = vsyncpa [#allocation7], 1
    %6439 = vsyncpa [#allocation10], 1
    %6440 = vsyncpa [#allocation13], 1

</llo_original>
